<compile_context>
chip_gen: v6e
topology: v6e:2x2x1
jax: 0.10.0
libtpu: 0.0.40
codegen_flags: <defaults>
</compile_context>

<pallas_src>
import math

import jax
import jax.numpy as jnp
from jax.experimental import pallas as pl
from jax.experimental.pallas import tpu as pltpu


# ----------------------------- model config --------------------------------

# conv3x3+ReLU stages with 2x2 maxpools; with a 16x16 input, 4 pools reduce
# spatial to 1x1 and the last stage has 512 channels -> nn.Linear(512, classes).
CFG = [16, 'M', 32, 'M', 64, 'M', 512, 'M']
NUM_CLASSES = 10
IN_CHANNELS = 3

# The fused conv+relu+pool kernel assumes every conv is followed by a pool.
assert all(CFG[i + 1] == 'M' for i, v in enumerate(CFG) if v != 'M')

_LANE = 128
_VMEM = pl.BlockSpec(memory_space=pltpu.MemorySpace.VMEM)
_VMEM_LIMIT = 32 * 1024 * 1024


# ------------------------- Pallas kernels (hot path) ------------------------

def _conv_relu_pool_kernel(x_ref, w_ref, b_ref, o_ref):
    """Fused 3x3 'same' conv + bias + ReLU + 2x2/stride-2 maxpool.

    x_ref: (nb, H+2, W+2, Cin)   spatially pre-padded input block
    w_ref: (9, Cin, Cout)        bf16 taps, tap index t = dh*3 + dw
    b_ref: (1, Cout)             f32 bias
    o_ref: (nb, H//2, W//2, Cout)
    """
    nb, hp, wp, cin = x_ref.shape
    h, w = hp - 2, wp - 2
    hh, wh, cout = o_ref.shape[1], o_ref.shape[2], o_ref.shape[3]
    p = nb * h * w

    # 9-tap accumulate formulation of im2col matmul (f32 accumulator, bf16 MXU).
    acc = jnp.zeros((p, cout), jnp.float32)
    for dh in range(3):
        for dw in range(3):
            patch = x_ref[:, dh:dh + h, dw:dw + w, :]
            patch = patch.reshape(p, cin).astype(jnp.bfloat16)
            acc = acc + jnp.dot(patch, w_ref[dh * 3 + dw],
                                preferred_element_type=jnp.float32)

    acc = jnp.maximum(acc + b_ref[...], 0.0)          # bias + ReLU in f32

    # Fused 2x2 max pool, stride 2. Rows of acc are (n, h, w) row-major and
    # H, W are even, so horizontal pairs are adjacent rows; vertical pairs are
    # adjacent half-width rows.
    r = acc.reshape(p // 2, 2, cout)
    yh = jnp.maximum(r[:, 0, :], r[:, 1, :])          # pool along W
    r2 = yh.reshape(nb * hh, 2, wh, cout)
    yo = jnp.maximum(r2[:, 0], r2[:, 1])              # pool along H
    o_ref[...] = yo.reshape(nb, hh, wh, cout).astype(o_ref.dtype)


def _linear_kernel(x_ref, w_ref, b_ref, o_ref):
    # x: (N, K) -> bf16, w: (K, M) bf16, b: (1, M) f32 -> o: (N, M) f32
    o_ref[...] = jnp.dot(x_ref[...].astype(jnp.bfloat16), w_ref[...],
                         preferred_element_type=jnp.float32) + b_ref[...]


# --------------------------- pallas_call wrappers ---------------------------

def _batch_block(n, hw, max_rows=2048):
    """Images per grid step: keep roughly <=2048 conv rows per step, divide N
    evenly, and keep at least two grid steps when possible so v7x's two
    TensorCores both get work under dimension_semantics=('parallel',)."""
    nb = max(1, min(n, max_rows // max(hw, 1)))
    while n % nb:
        nb -= 1
    if nb == n and n > 1:
        nb = next(d for d in range(n // 2, 0, -1) if n % d == 0)
    return nb


def conv3x3_relu_pool(x_nhwc, w9, b2, out_dtype):
    """x: (N,H,W,Cin); w9: (9,Cin,Cout) bf16; b2: (1,Cout) f32.
    Returns pooled activations (N, H//2, W//2, Cout) in `out_dtype`."""
    n, h, w, cin = x_nhwc.shape
    cout = w9.shape[-1]
    hh, wh = h // 2, w // 2
    xp = jnp.pad(x_nhwc, ((0, 0), (1, 1), (1, 1), (0, 0)))   # 'same' zero pad
    nb = _batch_block(n, h * w)
    return pl.pallas_call(
        _conv_relu_pool_kernel,
        out_shape=jax.ShapeDtypeStruct((n, hh, wh, cout), out_dtype),
        grid=(n // nb,),
        in_specs=[
            pl.BlockSpec((nb, h + 2, w + 2, cin), lambda i: (i, 0, 0, 0)),
            pl.BlockSpec((9, cin, cout), lambda i: (0, 0, 0)),   # weights resident
            pl.BlockSpec((1, cout), lambda i: (0, 0)),
        ],
        out_specs=pl.BlockSpec((nb, hh, wh, cout), lambda i: (i, 0, 0, 0)),
        compiler_params=pltpu.CompilerParams(
            dimension_semantics=("parallel",),
            vmem_limit_bytes=_VMEM_LIMIT),
    )(xp, w9, b2)


def linear(x, w, b):
    """x: (N, K) f32; w: (M, K) torch layout; b: (M,) -> (N, M) f32."""
    n, _ = x.shape
    m = w.shape[0]
    # 10-wide logits mean a masked partial store; negligible at (N, 10) size.
    return pl.pallas_call(
        _linear_kernel,
        out_shape=jax.ShapeDtypeStruct((n, m), jnp.float32),
        in_specs=[_VMEM, _VMEM, _VMEM],
        out_specs=_VMEM,
        compiler_params=pltpu.CompilerParams(vmem_limit_bytes=_VMEM_LIMIT),
    )(x, jnp.transpose(w).astype(jnp.bfloat16),
      b.reshape(1, m).astype(jnp.float32))


# --------------------------- parameter handling -----------------------------

def _round_up(x, m):
    return ((x + m - 1) // m) * m


def _prep_conv(w, b, cin_act):
    """torch (Cout,Cin,3,3) weights -> (9, cin_act, cout_pad) bf16 taps with
    lane-dense (multiple-of-128) output channels. Zero-padded channels stay
    exactly zero through bias+ReLU, so results are unchanged."""
    cout, cin = w.shape[0], w.shape[1]
    cout_pad = _round_up(cout, _LANE)
    w9 = jnp.transpose(w, (2, 3, 1, 0)).reshape(9, cin, cout)   # (dh,dw,Cin,Cout)
    w9 = jnp.pad(w9, ((0, 0), (0, cin_act - cin), (0, cout_pad - cout)))
    b2 = jnp.pad(b, (0, cout_pad - cout)).reshape(1, cout_pad).astype(jnp.float32)
    return w9.astype(jnp.bfloat16), b2


def init_params(key, in_channels=IN_CHANNELS):
    """Deterministic init mirroring VGG._initialize_weights."""
    conv_params = []
    c_in = in_channels
    for v in CFG:
        if v == 'M':
            continue
        key, kw = jax.random.split(key)
        n = 3 * 3 * v                               # kernel_size^2 * out_channels
        w = math.sqrt(2.0 / n) * jax.random.normal(kw, (v, c_in, 3, 3), jnp.float32)
        b = jnp.zeros((v,), jnp.float32)
        conv_params.append((w, b))
        c_in = v
    key, kl = jax.random.split(key)
    wl = 0.01 * jax.random.normal(kl, (NUM_CLASSES, 512), jnp.float32)
    bl = jnp.zeros((NUM_CLASSES,), jnp.float32)
    return conv_params, (wl, bl)


# ------------------------------- VGG forward --------------------------------

def vgg_forward(x_nchw, conv_params, linear_params):
    # External layout is NCHW exactly like the PyTorch module; compute in NHWC.
    x = jnp.transpose(x_nchw, (0, 2, 3, 1)).astype(jnp.float32)
    n_conv = len(conv_params)
    for ci, (w, b) in enumerate(conv_params):
        w9, b2 = _prep_conv(w, b, x.shape[-1])
        last = ci == n_conv - 1
        # Intermediate activations in bf16 (half the DMA bytes); final stage f32.
        x = conv3x3_relu_pool(x, w9, b2,
                              out_dtype=jnp.float32 if last else jnp.bfloat16)
    x = x[..., :conv_params[-1][0].shape[0]]          # drop channel pad (no-op: 512)
    feat_nchw = jnp.transpose(x, (0, 3, 1, 2))        # (N, 512, 1, 1), NCHW like torch
    activation1 = feat_nchw
    activation2 = feat_nchw
    activation3 = feat_nchw
    flat = feat_nchw.reshape(feat_nchw.shape[0], -1)  # x.view(x.size(0), -1) -> (N, 512)
    wl, bl = linear_params
    logits = linear(flat, wl, bl)                     # (N, num_classes)
    return activation1, activation2, activation3, logits


if __name__ == "__main__":
    key = jax.random.PRNGKey(0)
    key, kx = jax.random.split(key)
    x = jax.random.normal(kx, (2, IN_CHANNELS, 16, 16), jnp.float32)

    conv_params, linear_params = init_params(key)

    fwd = jax.jit(vgg_forward)
    a1, a2, a3, logits = fwd(x, conv_params, linear_params)
    jax.block_until_ready((a1, a2, a3, logits))

    assert a1.shape == (2, 512, 1, 1) and a1.dtype == jnp.float32
    assert a2.shape == (2, 512, 1, 1)
    assert a3.shape == (2, 512, 1, 1)
    assert logits.shape == (2, NUM_CLASSES)
    assert logits.dtype == jnp.float32
    assert bool(jnp.all(jnp.isfinite(logits)))

    print("KERNEL_OK")
</pallas_src>

<mosaic_0001>
module attributes {stable_mosaic.version = 11 : i64} {
  func.func @_conv_relu_pool_kernel(%arg0: i32, %arg1: memref<1x18x18x3xf32, #tpu.memory_space<vmem>>, %arg2: memref<9x3x128xbf16, #tpu.memory_space<vmem>>, %arg3: memref<1x128xf32, #tpu.memory_space<vmem>>, %arg4: memref<1x8x8x128xbf16, #tpu.memory_space<vmem>>) attributes {dimension_semantics = [#tpu.dimension_semantics<parallel>], iteration_bounds = array<i64: 2>, scalar_prefetch = 0 : i64, scratch_operands = 0 : i64, tpu.core_type = #tpu.core_type<tc>, window_params = [{transform_indices = @transform_0, window_bounds = array<i64: 1, 18, 18, 3>}, {pipeline_mode = #tpu.pipeline_mode<synchronous>, transform_indices = @transform_1, window_bounds = array<i64: 9, 3, 128>}, {pipeline_mode = #tpu.pipeline_mode<synchronous>, transform_indices = @transform_2, window_bounds = array<i64: 1, 128>}, {transform_indices = @transform_3, window_bounds = array<i64: 1, 8, 8, 128>}]} {
    %cst = arith.constant 0.000000e+00 : f32
    %0 = vector.broadcast %cst : f32 to vector<256x128xf32>
    %c0 = arith.constant 0 : index
    %c0_0 = arith.constant 0 : index
    %c0_1 = arith.constant 0 : index
    %c0_2 = arith.constant 0 : index
    %1 = vector.load %arg1[%c0, %c0_0, %c0_1, %c0_2] : memref<1x18x18x3xf32, #tpu.memory_space<vmem>>, vector<1x16x16x3xf32>
    %2 = vector.shape_cast %1 : vector<1x16x16x3xf32> to vector<256x3xf32>
    %3 = arith.truncf %2 : vector<256x3xf32> to vector<256x3xbf16>
    %c0_3 = arith.constant 0 : index
    %c0_4 = arith.constant 0 : index
    %c0_5 = arith.constant 0 : index
    %4 = vector.load %arg2[%c0_3, %c0_4, %c0_5] : memref<9x3x128xbf16, #tpu.memory_space<vmem>>, vector<1x3x128xbf16>
    %5 = vector.shape_cast %4 : vector<1x3x128xbf16> to vector<3x128xbf16>
    %cst_6 = arith.constant dense<0.000000e+00> : vector<256x128xf32>
    %6 = tpu.matmul %3, %5, %cst_6 {dimension_numbers = #tpu.dot_dimension_numbers<[1], [0], [0], [1], [0, 0, 1, 1], [], []>} : vector<256x3xbf16>, vector<3x128xbf16>, vector<256x128xf32> -> vector<256x128xf32>
    %7 = arith.addf %0, %6 : vector<256x128xf32>
    %c0_7 = arith.constant 0 : index
    %c0_8 = arith.constant 0 : index
    %c1 = arith.constant 1 : index
    %c0_9 = arith.constant 0 : index
    %8 = vector.load %arg1[%c0_7, %c0_8, %c1, %c0_9] : memref<1x18x18x3xf32, #tpu.memory_space<vmem>>, vector<1x16x16x3xf32>
    %9 = vector.shape_cast %8 : vector<1x16x16x3xf32> to vector<256x3xf32>
    %10 = arith.truncf %9 : vector<256x3xf32> to vector<256x3xbf16>
    %c1_10 = arith.constant 1 : index
    %c0_11 = arith.constant 0 : index
    %c0_12 = arith.constant 0 : index
    %11 = vector.load %arg2[%c1_10, %c0_11, %c0_12] : memref<9x3x128xbf16, #tpu.memory_space<vmem>>, vector<1x3x128xbf16>
    %12 = vector.shape_cast %11 : vector<1x3x128xbf16> to vector<3x128xbf16>
    %cst_13 = arith.constant dense<0.000000e+00> : vector<256x128xf32>
    %13 = tpu.matmul %10, %12, %cst_13 {dimension_numbers = #tpu.dot_dimension_numbers<[1], [0], [0], [1], [0, 0, 1, 1], [], []>} : vector<256x3xbf16>, vector<3x128xbf16>, vector<256x128xf32> -> vector<256x128xf32>
    %14 = arith.addf %7, %13 : vector<256x128xf32>
    %c0_14 = arith.constant 0 : index
    %c0_15 = arith.constant 0 : index
    %c2 = arith.constant 2 : index
    %c0_16 = arith.constant 0 : index
    %15 = vector.load %arg1[%c0_14, %c0_15, %c2, %c0_16] : memref<1x18x18x3xf32, #tpu.memory_space<vmem>>, vector<1x16x16x3xf32>
    %16 = vector.shape_cast %15 : vector<1x16x16x3xf32> to vector<256x3xf32>
    %17 = arith.truncf %16 : vector<256x3xf32> to vector<256x3xbf16>
    %c2_17 = arith.constant 2 : index
    %c0_18 = arith.constant 0 : index
    %c0_19 = arith.constant 0 : index
    %18 = vector.load %arg2[%c2_17, %c0_18, %c0_19] : memref<9x3x128xbf16, #tpu.memory_space<vmem>>, vector<1x3x128xbf16>
    %19 = vector.shape_cast %18 : vector<1x3x128xbf16> to vector<3x128xbf16>
    %cst_20 = arith.constant dense<0.000000e+00> : vector<256x128xf32>
    %20 = tpu.matmul %17, %19, %cst_20 {dimension_numbers = #tpu.dot_dimension_numbers<[1], [0], [0], [1], [0, 0, 1, 1], [], []>} : vector<256x3xbf16>, vector<3x128xbf16>, vector<256x128xf32> -> vector<256x128xf32>
    %21 = arith.addf %14, %20 : vector<256x128xf32>
    %c0_21 = arith.constant 0 : index
    %c1_22 = arith.constant 1 : index
    %c0_23 = arith.constant 0 : index
    %c0_24 = arith.constant 0 : index
    %22 = vector.load %arg1[%c0_21, %c1_22, %c0_23, %c0_24] : memref<1x18x18x3xf32, #tpu.memory_space<vmem>>, vector<1x16x16x3xf32>
    %23 = vector.shape_cast %22 : vector<1x16x16x3xf32> to vector<256x3xf32>
    %24 = arith.truncf %23 : vector<256x3xf32> to vector<256x3xbf16>
    %c3 = arith.constant 3 : index
    %c0_25 = arith.constant 0 : index
    %c0_26 = arith.constant 0 : index
    %25 = vector.load %arg2[%c3, %c0_25, %c0_26] : memref<9x3x128xbf16, #tpu.memory_space<vmem>>, vector<1x3x128xbf16>
    %26 = vector.shape_cast %25 : vector<1x3x128xbf16> to vector<3x128xbf16>
    %cst_27 = arith.constant dense<0.000000e+00> : vector<256x128xf32>
    %27 = tpu.matmul %24, %26, %cst_27 {dimension_numbers = #tpu.dot_dimension_numbers<[1], [0], [0], [1], [0, 0, 1, 1], [], []>} : vector<256x3xbf16>, vector<3x128xbf16>, vector<256x128xf32> -> vector<256x128xf32>
    %28 = arith.addf %21, %27 : vector<256x128xf32>
    %c0_28 = arith.constant 0 : index
    %c1_29 = arith.constant 1 : index
    %c1_30 = arith.constant 1 : index
    %c0_31 = arith.constant 0 : index
    %29 = vector.load %arg1[%c0_28, %c1_29, %c1_30, %c0_31] : memref<1x18x18x3xf32, #tpu.memory_space<vmem>>, vector<1x16x16x3xf32>
    %30 = vector.shape_cast %29 : vector<1x16x16x3xf32> to vector<256x3xf32>
    %31 = arith.truncf %30 : vector<256x3xf32> to vector<256x3xbf16>
    %c4 = arith.constant 4 : index
    %c0_32 = arith.constant 0 : index
    %c0_33 = arith.constant 0 : index
    %32 = vector.load %arg2[%c4, %c0_32, %c0_33] : memref<9x3x128xbf16, #tpu.memory_space<vmem>>, vector<1x3x128xbf16>
    %33 = vector.shape_cast %32 : vector<1x3x128xbf16> to vector<3x128xbf16>
    %cst_34 = arith.constant dense<0.000000e+00> : vector<256x128xf32>
    %34 = tpu.matmul %31, %33, %cst_34 {dimension_numbers = #tpu.dot_dimension_numbers<[1], [0], [0], [1], [0, 0, 1, 1], [], []>} : vector<256x3xbf16>, vector<3x128xbf16>, vector<256x128xf32> -> vector<256x128xf32>
    %35 = arith.addf %28, %34 : vector<256x128xf32>
    %c0_35 = arith.constant 0 : index
    %c1_36 = arith.constant 1 : index
    %c2_37 = arith.constant 2 : index
    %c0_38 = arith.constant 0 : index
    %36 = vector.load %arg1[%c0_35, %c1_36, %c2_37, %c0_38] : memref<1x18x18x3xf32, #tpu.memory_space<vmem>>, vector<1x16x16x3xf32>
    %37 = vector.shape_cast %36 : vector<1x16x16x3xf32> to vector<256x3xf32>
    %38 = arith.truncf %37 : vector<256x3xf32> to vector<256x3xbf16>
    %c5 = arith.constant 5 : index
    %c0_39 = arith.constant 0 : index
    %c0_40 = arith.constant 0 : index
    %39 = vector.load %arg2[%c5, %c0_39, %c0_40] : memref<9x3x128xbf16, #tpu.memory_space<vmem>>, vector<1x3x128xbf16>
    %40 = vector.shape_cast %39 : vector<1x3x128xbf16> to vector<3x128xbf16>
    %cst_41 = arith.constant dense<0.000000e+00> : vector<256x128xf32>
    %41 = tpu.matmul %38, %40, %cst_41 {dimension_numbers = #tpu.dot_dimension_numbers<[1], [0], [0], [1], [0, 0, 1, 1], [], []>} : vector<256x3xbf16>, vector<3x128xbf16>, vector<256x128xf32> -> vector<256x128xf32>
    %42 = arith.addf %35, %41 : vector<256x128xf32>
    %c0_42 = arith.constant 0 : index
    %c2_43 = arith.constant 2 : index
    %c0_44 = arith.constant 0 : index
    %c0_45 = arith.constant 0 : index
    %43 = vector.load %arg1[%c0_42, %c2_43, %c0_44, %c0_45] : memref<1x18x18x3xf32, #tpu.memory_space<vmem>>, vector<1x16x16x3xf32>
    %44 = vector.shape_cast %43 : vector<1x16x16x3xf32> to vector<256x3xf32>
    %45 = arith.truncf %44 : vector<256x3xf32> to vector<256x3xbf16>
    %c6 = arith.constant 6 : index
    %c0_46 = arith.constant 0 : index
    %c0_47 = arith.constant 0 : index
    %46 = vector.load %arg2[%c6, %c0_46, %c0_47] : memref<9x3x128xbf16, #tpu.memory_space<vmem>>, vector<1x3x128xbf16>
    %47 = vector.shape_cast %46 : vector<1x3x128xbf16> to vector<3x128xbf16>
    %cst_48 = arith.constant dense<0.000000e+00> : vector<256x128xf32>
    %48 = tpu.matmul %45, %47, %cst_48 {dimension_numbers = #tpu.dot_dimension_numbers<[1], [0], [0], [1], [0, 0, 1, 1], [], []>} : vector<256x3xbf16>, vector<3x128xbf16>, vector<256x128xf32> -> vector<256x128xf32>
    %49 = arith.addf %42, %48 : vector<256x128xf32>
    %c0_49 = arith.constant 0 : index
    %c2_50 = arith.constant 2 : index
    %c1_51 = arith.constant 1 : index
    %c0_52 = arith.constant 0 : index
    %50 = vector.load %arg1[%c0_49, %c2_50, %c1_51, %c0_52] : memref<1x18x18x3xf32, #tpu.memory_space<vmem>>, vector<1x16x16x3xf32>
    %51 = vector.shape_cast %50 : vector<1x16x16x3xf32> to vector<256x3xf32>
    %52 = arith.truncf %51 : vector<256x3xf32> to vector<256x3xbf16>
    %c7 = arith.constant 7 : index
    %c0_53 = arith.constant 0 : index
    %c0_54 = arith.constant 0 : index
    %53 = vector.load %arg2[%c7, %c0_53, %c0_54] : memref<9x3x128xbf16, #tpu.memory_space<vmem>>, vector<1x3x128xbf16>
    %54 = vector.shape_cast %53 : vector<1x3x128xbf16> to vector<3x128xbf16>
    %cst_55 = arith.constant dense<0.000000e+00> : vector<256x128xf32>
    %55 = tpu.matmul %52, %54, %cst_55 {dimension_numbers = #tpu.dot_dimension_numbers<[1], [0], [0], [1], [0, 0, 1, 1], [], []>} : vector<256x3xbf16>, vector<3x128xbf16>, vector<256x128xf32> -> vector<256x128xf32>
    %56 = arith.addf %49, %55 : vector<256x128xf32>
    %c0_56 = arith.constant 0 : index
    %c2_57 = arith.constant 2 : index
    %c2_58 = arith.constant 2 : index
    %c0_59 = arith.constant 0 : index
    %57 = vector.load %arg1[%c0_56, %c2_57, %c2_58, %c0_59] : memref<1x18x18x3xf32, #tpu.memory_space<vmem>>, vector<1x16x16x3xf32>
    %58 = vector.shape_cast %57 : vector<1x16x16x3xf32> to vector<256x3xf32>
    %59 = arith.truncf %58 : vector<256x3xf32> to vector<256x3xbf16>
    %c8 = arith.constant 8 : index
    %c0_60 = arith.constant 0 : index
    %c0_61 = arith.constant 0 : index
    %60 = vector.load %arg2[%c8, %c0_60, %c0_61] : memref<9x3x128xbf16, #tpu.memory_space<vmem>>, vector<1x3x128xbf16>
    %61 = vector.shape_cast %60 : vector<1x3x128xbf16> to vector<3x128xbf16>
    %cst_62 = arith.constant dense<0.000000e+00> : vector<256x128xf32>
    %62 = tpu.matmul %59, %61, %cst_62 {dimension_numbers = #tpu.dot_dimension_numbers<[1], [0], [0], [1], [0, 0, 1, 1], [], []>} : vector<256x3xbf16>, vector<3x128xbf16>, vector<256x128xf32> -> vector<256x128xf32>
    %63 = arith.addf %56, %62 : vector<256x128xf32>
    %c0_63 = arith.constant 0 : index
    %c0_64 = arith.constant 0 : index
    %64 = vector.load %arg3[%c0_63, %c0_64] : memref<1x128xf32, #tpu.memory_space<vmem>>, vector<1x128xf32>
    %65 = vector.broadcast %64 : vector<1x128xf32> to vector<256x128xf32>
    %66 = arith.addf %63, %65 : vector<256x128xf32>
    %cst_65 = arith.constant 0.000000e+00 : f32
    %67 = vector.broadcast %cst_65 : f32 to vector<256x128xf32>
    %68 = arith.maximumf %66, %67 : vector<256x128xf32>
    %69 = vector.shape_cast %68 : vector<256x128xf32> to vector<128x2x128xf32>
    %70 = vector.extract_strided_slice %69 {offsets = [0, 0, 0], sizes = [128, 1, 128], strides = [1, 1, 1]} : vector<128x2x128xf32> to vector<128x1x128xf32>
    %71 = vector.shape_cast %70 : vector<128x1x128xf32> to vector<128x128xf32>
    %72 = vector.extract_strided_slice %69 {offsets = [0, 1, 0], sizes = [128, 1, 128], strides = [1, 1, 1]} : vector<128x2x128xf32> to vector<128x1x128xf32>
    %73 = vector.shape_cast %72 : vector<128x1x128xf32> to vector<128x128xf32>
    %74 = arith.maximumf %71, %73 : vector<128x128xf32>
    %75 = vector.shape_cast %74 : vector<128x128xf32> to vector<8x2x8x128xf32>
    %76 = vector.extract_strided_slice %75 {offsets = [0, 0, 0, 0], sizes = [8, 1, 8, 128], strides = [1, 1, 1, 1]} : vector<8x2x8x128xf32> to vector<8x1x8x128xf32>
    %77 = vector.shape_cast %76 : vector<8x1x8x128xf32> to vector<8x8x128xf32>
    %78 = vector.extract_strided_slice %75 {offsets = [0, 1, 0, 0], sizes = [8, 1, 8, 128], strides = [1, 1, 1, 1]} : vector<8x2x8x128xf32> to vector<8x1x8x128xf32>
    %79 = vector.shape_cast %78 : vector<8x1x8x128xf32> to vector<8x8x128xf32>
    %80 = arith.maximumf %77, %79 : vector<8x8x128xf32>
    %81 = vector.shape_cast %80 : vector<8x8x128xf32> to vector<1x8x8x128xf32>
    %82 = arith.truncf %81 : vector<1x8x8x128xf32> to vector<1x8x8x128xbf16>
    %c0_66 = arith.constant 0 : index
    %c0_67 = arith.constant 0 : index
    %c0_68 = arith.constant 0 : index
    %c0_69 = arith.constant 0 : index
    %83 = vector.load %arg4[%c0_66, %c0_67, %c0_68, %c0_69] : memref<1x8x8x128xbf16, #tpu.memory_space<vmem>>, vector<1x8x8x128xbf16>
    tpu.vector_store %arg4[%c0_66, %c0_67, %c0_68, %c0_69], %82 {strides = array<i32>} : memref<1x8x8x128xbf16, #tpu.memory_space<vmem>>, vector<1x8x8x128xbf16>,
    return
  }
  func.func @transform_0(%arg0: i32) -> (i32, i32, i32, i32) {
    %c0_i32 = arith.constant 0 : i32
    %c0_i32_0 = arith.constant 0 : i32
    %c0_i32_1 = arith.constant 0 : i32
    %c0_i32_2 = arith.constant 0 : i32
    return %arg0, %c0_i32, %c0_i32_0, %c0_i32_1 : i32, i32, i32, i32
  }
  func.func @transform_1(%arg0: i32) -> (i32, i32, i32) {
    %c0_i32 = arith.constant 0 : i32
    %c0_i32_0 = arith.constant 0 : i32
    %c0_i32_1 = arith.constant 0 : i32
    %c0_i32_2 = arith.constant 0 : i32
    return %c0_i32, %c0_i32_0, %c0_i32_1 : i32, i32, i32
  }
  func.func @transform_2(%arg0: i32) -> (i32, i32) {
    %c0_i32 = arith.constant 0 : i32
    %c0_i32_0 = arith.constant 0 : i32
    %c0_i32_1 = arith.constant 0 : i32
    return %c0_i32, %c0_i32_0 : i32, i32
  }
  func.func @transform_3(%arg0: i32) -> (i32, i32, i32, i32) {
    %c0_i32 = arith.constant 0 : i32
    %c0_i32_0 = arith.constant 0 : i32
    %c0_i32_1 = arith.constant 0 : i32
    %c0_i32_2 = arith.constant 0 : i32
    return %arg0, %c0_i32, %c0_i32_0, %c0_i32_1 : i32, i32, i32, i32
  }
}

module attributes {stable_mosaic.version = 11 : i64} {
  func.func @_conv_relu_pool_kernel(%arg0: i32, %arg1: memref<1x10x10x128xbf16, #tpu.memory_space<vmem>>, %arg2: memref<9x128x128xbf16, #tpu.memory_space<vmem>>, %arg3: memref<1x128xf32, #tpu.memory_space<vmem>>, %arg4: memref<1x4x4x128xbf16, #tpu.memory_space<vmem>>) attributes {dimension_semantics = [#tpu.dimension_semantics<parallel>], iteration_bounds = array<i64: 2>, scalar_prefetch = 0 : i64, scratch_operands = 0 : i64, tpu.core_type = #tpu.core_type<tc>, window_params = [{transform_indices = @transform_0, window_bounds = array<i64: 1, 10, 10, 128>}, {pipeline_mode = #tpu.pipeline_mode<synchronous>, transform_indices = @transform_1, window_bounds = array<i64: 9, 128, 128>}, {pipeline_mode = #tpu.pipeline_mode<synchronous>, transform_indices = @transform_2, window_bounds = array<i64: 1, 128>}, {transform_indices = @transform_3, window_bounds = array<i64: 1, 4, 4, 128>}]} {
    %cst = arith.constant 0.000000e+00 : f32
    %0 = vector.broadcast %cst : f32 to vector<64x128xf32>
    %c0 = arith.constant 0 : index
    %c0_0 = arith.constant 0 : index
    %c0_1 = arith.constant 0 : index
    %c0_2 = arith.constant 0 : index
    %1 = vector.load %arg1[%c0, %c0_0, %c0_1, %c0_2] : memref<1x10x10x128xbf16, #tpu.memory_space<vmem>>, vector<1x8x8x128xbf16>
    %2 = vector.shape_cast %1 : vector<1x8x8x128xbf16> to vector<64x128xbf16>
    %c0_3 = arith.constant 0 : index
    %c0_4 = arith.constant 0 : index
    %c0_5 = arith.constant 0 : index
    %3 = vector.load %arg2[%c0_3, %c0_4, %c0_5] : memref<9x128x128xbf16, #tpu.memory_space<vmem>>, vector<1x128x128xbf16>
    %4 = vector.shape_cast %3 : vector<1x128x128xbf16> to vector<128x128xbf16>
    %cst_6 = arith.constant dense<0.000000e+00> : vector<64x128xf32>
    %5 = tpu.matmul %2, %4, %cst_6 {dimension_numbers = #tpu.dot_dimension_numbers<[1], [0], [0], [1], [0, 0, 1, 1], [], []>} : vector<64x128xbf16>, vector<128x128xbf16>, vector<64x128xf32> -> vector<64x128xf32>
    %6 = arith.addf %0, %5 : vector<64x128xf32>
    %c0_7 = arith.constant 0 : index
    %c0_8 = arith.constant 0 : index
    %c1 = arith.constant 1 : index
    %c0_9 = arith.constant 0 : index
    %7 = vector.load %arg1[%c0_7, %c0_8, %c1, %c0_9] : memref<1x10x10x128xbf16, #tpu.memory_space<vmem>>, vector<1x8x8x128xbf16>
    %8 = vector.shape_cast %7 : vector<1x8x8x128xbf16> to vector<64x128xbf16>
    %c1_10 = arith.constant 1 : index
    %c0_11 = arith.constant 0 : index
    %c0_12 = arith.constant 0 : index
    %9 = vector.load %arg2[%c1_10, %c0_11, %c0_12] : memref<9x128x128xbf16, #tpu.memory_space<vmem>>, vector<1x128x128xbf16>
    %10 = vector.shape_cast %9 : vector<1x128x128xbf16> to vector<128x128xbf16>
    %cst_13 = arith.constant dense<0.000000e+00> : vector<64x128xf32>
    %11 = tpu.matmul %8, %10, %cst_13 {dimension_numbers = #tpu.dot_dimension_numbers<[1], [0], [0], [1], [0, 0, 1, 1], [], []>} : vector<64x128xbf16>, vector<128x128xbf16>, vector<64x128xf32> -> vector<64x128xf32>
    %12 = arith.addf %6, %11 : vector<64x128xf32>
    %c0_14 = arith.constant 0 : index
    %c0_15 = arith.constant 0 : index
    %c2 = arith.constant 2 : index
    %c0_16 = arith.constant 0 : index
    %13 = vector.load %arg1[%c0_14, %c0_15, %c2, %c0_16] : memref<1x10x10x128xbf16, #tpu.memory_space<vmem>>, vector<1x8x8x128xbf16>
    %14 = vector.shape_cast %13 : vector<1x8x8x128xbf16> to vector<64x128xbf16>
    %c2_17 = arith.constant 2 : index
    %c0_18 = arith.constant 0 : index
    %c0_19 = arith.constant 0 : index
    %15 = vector.load %arg2[%c2_17, %c0_18, %c0_19] : memref<9x128x128xbf16, #tpu.memory_space<vmem>>, vector<1x128x128xbf16>
    %16 = vector.shape_cast %15 : vector<1x128x128xbf16> to vector<128x128xbf16>
    %cst_20 = arith.constant dense<0.000000e+00> : vector<64x128xf32>
    %17 = tpu.matmul %14, %16, %cst_20 {dimension_numbers = #tpu.dot_dimension_numbers<[1], [0], [0], [1], [0, 0, 1, 1], [], []>} : vector<64x128xbf16>, vector<128x128xbf16>, vector<64x128xf32> -> vector<64x128xf32>
    %18 = arith.addf %12, %17 : vector<64x128xf32>
    %c0_21 = arith.constant 0 : index
    %c1_22 = arith.constant 1 : index
    %c0_23 = arith.constant 0 : index
    %c0_24 = arith.constant 0 : index
    %19 = vector.load %arg1[%c0_21, %c1_22, %c0_23, %c0_24] : memref<1x10x10x128xbf16, #tpu.memory_space<vmem>>, vector<1x8x8x128xbf16>
    %20 = vector.shape_cast %19 : vector<1x8x8x128xbf16> to vector<64x128xbf16>
    %c3 = arith.constant 3 : index
    %c0_25 = arith.constant 0 : index
    %c0_26 = arith.constant 0 : index
    %21 = vector.load %arg2[%c3, %c0_25, %c0_26] : memref<9x128x128xbf16, #tpu.memory_space<vmem>>, vector<1x128x128xbf16>
    %22 = vector.shape_cast %21 : vector<1x128x128xbf16> to vector<128x128xbf16>
    %cst_27 = arith.constant dense<0.000000e+00> : vector<64x128xf32>
    %23 = tpu.matmul %20, %22, %cst_27 {dimension_numbers = #tpu.dot_dimension_numbers<[1], [0], [0], [1], [0, 0, 1, 1], [], []>} : vector<64x128xbf16>, vector<128x128xbf16>, vector<64x128xf32> -> vector<64x128xf32>
    %24 = arith.addf %18, %23 : vector<64x128xf32>
    %c0_28 = arith.constant 0 : index
    %c1_29 = arith.constant 1 : index
    %c1_30 = arith.constant 1 : index
    %c0_31 = arith.constant 0 : index
    %25 = vector.load %arg1[%c0_28, %c1_29, %c1_30, %c0_31] : memref<1x10x10x128xbf16, #tpu.memory_space<vmem>>, vector<1x8x8x128xbf16>
    %26 = vector.shape_cast %25 : vector<1x8x8x128xbf16> to vector<64x128xbf16>
    %c4 = arith.constant 4 : index
    %c0_32 = arith.constant 0 : index
    %c0_33 = arith.constant 0 : index
    %27 = vector.load %arg2[%c4, %c0_32, %c0_33] : memref<9x128x128xbf16, #tpu.memory_space<vmem>>, vector<1x128x128xbf16>
    %28 = vector.shape_cast %27 : vector<1x128x128xbf16> to vector<128x128xbf16>
    %cst_34 = arith.constant dense<0.000000e+00> : vector<64x128xf32>
    %29 = tpu.matmul %26, %28, %cst_34 {dimension_numbers = #tpu.dot_dimension_numbers<[1], [0], [0], [1], [0, 0, 1, 1], [], []>} : vector<64x128xbf16>, vector<128x128xbf16>, vector<64x128xf32> -> vector<64x128xf32>
    %30 = arith.addf %24, %29 : vector<64x128xf32>
    %c0_35 = arith.constant 0 : index
    %c1_36 = arith.constant 1 : index
    %c2_37 = arith.constant 2 : index
    %c0_38 = arith.constant 0 : index
    %31 = vector.load %arg1[%c0_35, %c1_36, %c2_37, %c0_38] : memref<1x10x10x128xbf16, #tpu.memory_space<vmem>>, vector<1x8x8x128xbf16>
    %32 = vector.shape_cast %31 : vector<1x8x8x128xbf16> to vector<64x128xbf16>
    %c5 = arith.constant 5 : index
    %c0_39 = arith.constant 0 : index
    %c0_40 = arith.constant 0 : index
    %33 = vector.load %arg2[%c5, %c0_39, %c0_40] : memref<9x128x128xbf16, #tpu.memory_space<vmem>>, vector<1x128x128xbf16>
    %34 = vector.shape_cast %33 : vector<1x128x128xbf16> to vector<128x128xbf16>
    %cst_41 = arith.constant dense<0.000000e+00> : vector<64x128xf32>
    %35 = tpu.matmul %32, %34, %cst_41 {dimension_numbers = #tpu.dot_dimension_numbers<[1], [0], [0], [1], [0, 0, 1, 1], [], []>} : vector<64x128xbf16>, vector<128x128xbf16>, vector<64x128xf32> -> vector<64x128xf32>
    %36 = arith.addf %30, %35 : vector<64x128xf32>
    %c0_42 = arith.constant 0 : index
    %c2_43 = arith.constant 2 : index
    %c0_44 = arith.constant 0 : index
    %c0_45 = arith.constant 0 : index
    %37 = vector.load %arg1[%c0_42, %c2_43, %c0_44, %c0_45] : memref<1x10x10x128xbf16, #tpu.memory_space<vmem>>, vector<1x8x8x128xbf16>
    %38 = vector.shape_cast %37 : vector<1x8x8x128xbf16> to vector<64x128xbf16>
    %c6 = arith.constant 6 : index
    %c0_46 = arith.constant 0 : index
    %c0_47 = arith.constant 0 : index
    %39 = vector.load %arg2[%c6, %c0_46, %c0_47] : memref<9x128x128xbf16, #tpu.memory_space<vmem>>, vector<1x128x128xbf16>
    %40 = vector.shape_cast %39 : vector<1x128x128xbf16> to vector<128x128xbf16>
    %cst_48 = arith.constant dense<0.000000e+00> : vector<64x128xf32>
    %41 = tpu.matmul %38, %40, %cst_48 {dimension_numbers = #tpu.dot_dimension_numbers<[1], [0], [0], [1], [0, 0, 1, 1], [], []>} : vector<64x128xbf16>, vector<128x128xbf16>, vector<64x128xf32> -> vector<64x128xf32>
    %42 = arith.addf %36, %41 : vector<64x128xf32>
    %c0_49 = arith.constant 0 : index
    %c2_50 = arith.constant 2 : index
    %c1_51 = arith.constant 1 : index
    %c0_52 = arith.constant 0 : index
    %43 = vector.load %arg1[%c0_49, %c2_50, %c1_51, %c0_52] : memref<1x10x10x128xbf16, #tpu.memory_space<vmem>>, vector<1x8x8x128xbf16>
    %44 = vector.shape_cast %43 : vector<1x8x8x128xbf16> to vector<64x128xbf16>
    %c7 = arith.constant 7 : index
    %c0_53 = arith.constant 0 : index
    %c0_54 = arith.constant 0 : index
    %45 = vector.load %arg2[%c7, %c0_53, %c0_54] : memref<9x128x128xbf16, #tpu.memory_space<vmem>>, vector<1x128x128xbf16>
    %46 = vector.shape_cast %45 : vector<1x128x128xbf16> to vector<128x128xbf16>
    %cst_55 = arith.constant dense<0.000000e+00> : vector<64x128xf32>
    %47 = tpu.matmul %44, %46, %cst_55 {dimension_numbers = #tpu.dot_dimension_numbers<[1], [0], [0], [1], [0, 0, 1, 1], [], []>} : vector<64x128xbf16>, vector<128x128xbf16>, vector<64x128xf32> -> vector<64x128xf32>
    %48 = arith.addf %42, %47 : vector<64x128xf32>
    %c0_56 = arith.constant 0 : index
    %c2_57 = arith.constant 2 : index
    %c2_58 = arith.constant 2 : index
    %c0_59 = arith.constant 0 : index
    %49 = vector.load %arg1[%c0_56, %c2_57, %c2_58, %c0_59] : memref<1x10x10x128xbf16, #tpu.memory_space<vmem>>, vector<1x8x8x128xbf16>
    %50 = vector.shape_cast %49 : vector<1x8x8x128xbf16> to vector<64x128xbf16>
    %c8 = arith.constant 8 : index
    %c0_60 = arith.constant 0 : index
    %c0_61 = arith.constant 0 : index
    %51 = vector.load %arg2[%c8, %c0_60, %c0_61] : memref<9x128x128xbf16, #tpu.memory_space<vmem>>, vector<1x128x128xbf16>
    %52 = vector.shape_cast %51 : vector<1x128x128xbf16> to vector<128x128xbf16>
    %cst_62 = arith.constant dense<0.000000e+00> : vector<64x128xf32>
    %53 = tpu.matmul %50, %52, %cst_62 {dimension_numbers = #tpu.dot_dimension_numbers<[1], [0], [0], [1], [0, 0, 1, 1], [], []>} : vector<64x128xbf16>, vector<128x128xbf16>, vector<64x128xf32> -> vector<64x128xf32>
    %54 = arith.addf %48, %53 : vector<64x128xf32>
    %c0_63 = arith.constant 0 : index
    %c0_64 = arith.constant 0 : index
    %55 = vector.load %arg3[%c0_63, %c0_64] : memref<1x128xf32, #tpu.memory_space<vmem>>, vector<1x128xf32>
    %56 = vector.broadcast %55 : vector<1x128xf32> to vector<64x128xf32>
    %57 = arith.addf %54, %56 : vector<64x128xf32>
    %cst_65 = arith.constant 0.000000e+00 : f32
    %58 = vector.broadcast %cst_65 : f32 to vector<64x128xf32>
    %59 = arith.maximumf %57, %58 : vector<64x128xf32>
    %60 = vector.shape_cast %59 : vector<64x128xf32> to vector<32x2x128xf32>
    %61 = vector.extract_strided_slice %60 {offsets = [0, 0, 0], sizes = [32, 1, 128], strides = [1, 1, 1]} : vector<32x2x128xf32> to vector<32x1x128xf32>
    %62 = vector.shape_cast %61 : vector<32x1x128xf32> to vector<32x128xf32>
    %63 = vector.extract_strided_slice %60 {offsets = [0, 1, 0], sizes = [32, 1, 128], strides = [1, 1, 1]} : vector<32x2x128xf32> to vector<32x1x128xf32>
    %64 = vector.shape_cast %63 : vector<32x1x128xf32> to vector<32x128xf32>
    %65 = arith.maximumf %62, %64 : vector<32x128xf32>
    %66 = vector.shape_cast %65 : vector<32x128xf32> to vector<4x2x4x128xf32>
    %67 = vector.extract_strided_slice %66 {offsets = [0, 0, 0, 0], sizes = [4, 1, 4, 128], strides = [1, 1, 1, 1]} : vector<4x2x4x128xf32> to vector<4x1x4x128xf32>
    %68 = vector.shape_cast %67 : vector<4x1x4x128xf32> to vector<4x4x128xf32>
    %69 = vector.extract_strided_slice %66 {offsets = [0, 1, 0, 0], sizes = [4, 1, 4, 128], strides = [1, 1, 1, 1]} : vector<4x2x4x128xf32> to vector<4x1x4x128xf32>
    %70 = vector.shape_cast %69 : vector<4x1x4x128xf32> to vector<4x4x128xf32>
    %71 = arith.maximumf %68, %70 : vector<4x4x128xf32>
    %72 = vector.shape_cast %71 : vector<4x4x128xf32> to vector<1x4x4x128xf32>
    %73 = arith.truncf %72 : vector<1x4x4x128xf32> to vector<1x4x4x128xbf16>
    %c0_66 = arith.constant 0 : index
    %c0_67 = arith.constant 0 : index
    %c0_68 = arith.constant 0 : index
    %c0_69 = arith.constant 0 : index
    %74 = vector.load %arg4[%c0_66, %c0_67, %c0_68, %c0_69] : memref<1x4x4x128xbf16, #tpu.memory_space<vmem>>, vector<1x4x4x128xbf16>
    tpu.vector_store %arg4[%c0_66, %c0_67, %c0_68, %c0_69], %73 {strides = array<i32>} : memref<1x4x4x128xbf16, #tpu.memory_space<vmem>>, vector<1x4x4x128xbf16>,
    return
  }
  func.func @transform_0(%arg0: i32) -> (i32, i32, i32, i32) {
    %c0_i32 = arith.constant 0 : i32
    %c0_i32_0 = arith.constant 0 : i32
    %c0_i32_1 = arith.constant 0 : i32
    %c0_i32_2 = arith.constant 0 : i32
    return %arg0, %c0_i32, %c0_i32_0, %c0_i32_1 : i32, i32, i32, i32
  }
  func.func @transform_1(%arg0: i32) -> (i32, i32, i32) {
    %c0_i32 = arith.constant 0 : i32
    %c0_i32_0 = arith.constant 0 : i32
    %c0_i32_1 = arith.constant 0 : i32
    %c0_i32_2 = arith.constant 0 : i32
    return %c0_i32, %c0_i32_0, %c0_i32_1 : i32, i32, i32
  }
  func.func @transform_2(%arg0: i32) -> (i32, i32) {
    %c0_i32 = arith.constant 0 : i32
    %c0_i32_0 = arith.constant 0 : i32
    %c0_i32_1 = arith.constant 0 : i32
    return %c0_i32, %c0_i32_0 : i32, i32
  }
  func.func @transform_3(%arg0: i32) -> (i32, i32, i32, i32) {
    %c0_i32 = arith.constant 0 : i32
    %c0_i32_0 = arith.constant 0 : i32
    %c0_i32_1 = arith.constant 0 : i32
    %c0_i32_2 = arith.constant 0 : i32
    return %arg0, %c0_i32, %c0_i32_0, %c0_i32_1 : i32, i32, i32, i32
  }
}

module attributes {stable_mosaic.version = 11 : i64} {
  func.func @_conv_relu_pool_kernel(%arg0: i32, %arg1: memref<1x6x6x128xbf16, #tpu.memory_space<vmem>>, %arg2: memref<9x128x128xbf16, #tpu.memory_space<vmem>>, %arg3: memref<1x128xf32, #tpu.memory_space<vmem>>, %arg4: memref<1x2x2x128xbf16, #tpu.memory_space<vmem>>) attributes {dimension_semantics = [#tpu.dimension_semantics<parallel>], iteration_bounds = array<i64: 2>, scalar_prefetch = 0 : i64, scratch_operands = 0 : i64, tpu.core_type = #tpu.core_type<tc>, window_params = [{transform_indices = @transform_0, window_bounds = array<i64: 1, 6, 6, 128>}, {pipeline_mode = #tpu.pipeline_mode<synchronous>, transform_indices = @transform_1, window_bounds = array<i64: 9, 128, 128>}, {pipeline_mode = #tpu.pipeline_mode<synchronous>, transform_indices = @transform_2, window_bounds = array<i64: 1, 128>}, {transform_indices = @transform_3, window_bounds = array<i64: 1, 2, 2, 128>}]} {
    %cst = arith.constant 0.000000e+00 : f32
    %0 = vector.broadcast %cst : f32 to vector<16x128xf32>
    %c0 = arith.constant 0 : index
    %c0_0 = arith.constant 0 : index
    %c0_1 = arith.constant 0 : index
    %c0_2 = arith.constant 0 : index
    %1 = vector.load %arg1[%c0, %c0_0, %c0_1, %c0_2] : memref<1x6x6x128xbf16, #tpu.memory_space<vmem>>, vector<1x4x4x128xbf16>
    %2 = vector.shape_cast %1 : vector<1x4x4x128xbf16> to vector<16x128xbf16>
    %c0_3 = arith.constant 0 : index
    %c0_4 = arith.constant 0 : index
    %c0_5 = arith.constant 0 : index
    %3 = vector.load %arg2[%c0_3, %c0_4, %c0_5] : memref<9x128x128xbf16, #tpu.memory_space<vmem>>, vector<1x128x128xbf16>
    %4 = vector.shape_cast %3 : vector<1x128x128xbf16> to vector<128x128xbf16>
    %cst_6 = arith.constant dense<0.000000e+00> : vector<16x128xf32>
    %5 = tpu.matmul %2, %4, %cst_6 {dimension_numbers = #tpu.dot_dimension_numbers<[1], [0], [0], [1], [0, 0, 1, 1], [], []>} : vector<16x128xbf16>, vector<128x128xbf16>, vector<16x128xf32> -> vector<16x128xf32>
    %6 = arith.addf %0, %5 : vector<16x128xf32>
    %c0_7 = arith.constant 0 : index
    %c0_8 = arith.constant 0 : index
    %c1 = arith.constant 1 : index
    %c0_9 = arith.constant 0 : index
    %7 = vector.load %arg1[%c0_7, %c0_8, %c1, %c0_9] : memref<1x6x6x128xbf16, #tpu.memory_space<vmem>>, vector<1x4x4x128xbf16>
    %8 = vector.shape_cast %7 : vector<1x4x4x128xbf16> to vector<16x128xbf16>
    %c1_10 = arith.constant 1 : index
    %c0_11 = arith.constant 0 : index
    %c0_12 = arith.constant 0 : index
    %9 = vector.load %arg2[%c1_10, %c0_11, %c0_12] : memref<9x128x128xbf16, #tpu.memory_space<vmem>>, vector<1x128x128xbf16>
    %10 = vector.shape_cast %9 : vector<1x128x128xbf16> to vector<128x128xbf16>
    %cst_13 = arith.constant dense<0.000000e+00> : vector<16x128xf32>
    %11 = tpu.matmul %8, %10, %cst_13 {dimension_numbers = #tpu.dot_dimension_numbers<[1], [0], [0], [1], [0, 0, 1, 1], [], []>} : vector<16x128xbf16>, vector<128x128xbf16>, vector<16x128xf32> -> vector<16x128xf32>
    %12 = arith.addf %6, %11 : vector<16x128xf32>
    %c0_14 = arith.constant 0 : index
    %c0_15 = arith.constant 0 : index
    %c2 = arith.constant 2 : index
    %c0_16 = arith.constant 0 : index
    %13 = vector.load %arg1[%c0_14, %c0_15, %c2, %c0_16] : memref<1x6x6x128xbf16, #tpu.memory_space<vmem>>, vector<1x4x4x128xbf16>
    %14 = vector.shape_cast %13 : vector<1x4x4x128xbf16> to vector<16x128xbf16>
    %c2_17 = arith.constant 2 : index
    %c0_18 = arith.constant 0 : index
    %c0_19 = arith.constant 0 : index
    %15 = vector.load %arg2[%c2_17, %c0_18, %c0_19] : memref<9x128x128xbf16, #tpu.memory_space<vmem>>, vector<1x128x128xbf16>
    %16 = vector.shape_cast %15 : vector<1x128x128xbf16> to vector<128x128xbf16>
    %cst_20 = arith.constant dense<0.000000e+00> : vector<16x128xf32>
    %17 = tpu.matmul %14, %16, %cst_20 {dimension_numbers = #tpu.dot_dimension_numbers<[1], [0], [0], [1], [0, 0, 1, 1], [], []>} : vector<16x128xbf16>, vector<128x128xbf16>, vector<16x128xf32> -> vector<16x128xf32>
    %18 = arith.addf %12, %17 : vector<16x128xf32>
    %c0_21 = arith.constant 0 : index
    %c1_22 = arith.constant 1 : index
    %c0_23 = arith.constant 0 : index
    %c0_24 = arith.constant 0 : index
    %19 = vector.load %arg1[%c0_21, %c1_22, %c0_23, %c0_24] : memref<1x6x6x128xbf16, #tpu.memory_space<vmem>>, vector<1x4x4x128xbf16>
    %20 = vector.shape_cast %19 : vector<1x4x4x128xbf16> to vector<16x128xbf16>
    %c3 = arith.constant 3 : index
    %c0_25 = arith.constant 0 : index
    %c0_26 = arith.constant 0 : index
    %21 = vector.load %arg2[%c3, %c0_25, %c0_26] : memref<9x128x128xbf16, #tpu.memory_space<vmem>>, vector<1x128x128xbf16>
    %22 = vector.shape_cast %21 : vector<1x128x128xbf16> to vector<128x128xbf16>
    %cst_27 = arith.constant dense<0.000000e+00> : vector<16x128xf32>
    %23 = tpu.matmul %20, %22, %cst_27 {dimension_numbers = #tpu.dot_dimension_numbers<[1], [0], [0], [1], [0, 0, 1, 1], [], []>} : vector<16x128xbf16>, vector<128x128xbf16>, vector<16x128xf32> -> vector<16x128xf32>
    %24 = arith.addf %18, %23 : vector<16x128xf32>
    %c0_28 = arith.constant 0 : index
    %c1_29 = arith.constant 1 : index
    %c1_30 = arith.constant 1 : index
    %c0_31 = arith.constant 0 : index
    %25 = vector.load %arg1[%c0_28, %c1_29, %c1_30, %c0_31] : memref<1x6x6x128xbf16, #tpu.memory_space<vmem>>, vector<1x4x4x128xbf16>
    %26 = vector.shape_cast %25 : vector<1x4x4x128xbf16> to vector<16x128xbf16>
    %c4 = arith.constant 4 : index
    %c0_32 = arith.constant 0 : index
    %c0_33 = arith.constant 0 : index
    %27 = vector.load %arg2[%c4, %c0_32, %c0_33] : memref<9x128x128xbf16, #tpu.memory_space<vmem>>, vector<1x128x128xbf16>
    %28 = vector.shape_cast %27 : vector<1x128x128xbf16> to vector<128x128xbf16>
    %cst_34 = arith.constant dense<0.000000e+00> : vector<16x128xf32>
    %29 = tpu.matmul %26, %28, %cst_34 {dimension_numbers = #tpu.dot_dimension_numbers<[1], [0], [0], [1], [0, 0, 1, 1], [], []>} : vector<16x128xbf16>, vector<128x128xbf16>, vector<16x128xf32> -> vector<16x128xf32>
    %30 = arith.addf %24, %29 : vector<16x128xf32>
    %c0_35 = arith.constant 0 : index
    %c1_36 = arith.constant 1 : index
    %c2_37 = arith.constant 2 : index
    %c0_38 = arith.constant 0 : index
    %31 = vector.load %arg1[%c0_35, %c1_36, %c2_37, %c0_38] : memref<1x6x6x128xbf16, #tpu.memory_space<vmem>>, vector<1x4x4x128xbf16>
    %32 = vector.shape_cast %31 : vector<1x4x4x128xbf16> to vector<16x128xbf16>
    %c5 = arith.constant 5 : index
    %c0_39 = arith.constant 0 : index
    %c0_40 = arith.constant 0 : index
    %33 = vector.load %arg2[%c5, %c0_39, %c0_40] : memref<9x128x128xbf16, #tpu.memory_space<vmem>>, vector<1x128x128xbf16>
    %34 = vector.shape_cast %33 : vector<1x128x128xbf16> to vector<128x128xbf16>
    %cst_41 = arith.constant dense<0.000000e+00> : vector<16x128xf32>
    %35 = tpu.matmul %32, %34, %cst_41 {dimension_numbers = #tpu.dot_dimension_numbers<[1], [0], [0], [1], [0, 0, 1, 1], [], []>} : vector<16x128xbf16>, vector<128x128xbf16>, vector<16x128xf32> -> vector<16x128xf32>
    %36 = arith.addf %30, %35 : vector<16x128xf32>
    %c0_42 = arith.constant 0 : index
    %c2_43 = arith.constant 2 : index
    %c0_44 = arith.constant 0 : index
    %c0_45 = arith.constant 0 : index
    %37 = vector.load %arg1[%c0_42, %c2_43, %c0_44, %c0_45] : memref<1x6x6x128xbf16, #tpu.memory_space<vmem>>, vector<1x4x4x128xbf16>
    %38 = vector.shape_cast %37 : vector<1x4x4x128xbf16> to vector<16x128xbf16>
    %c6 = arith.constant 6 : index
    %c0_46 = arith.constant 0 : index
    %c0_47 = arith.constant 0 : index
    %39 = vector.load %arg2[%c6, %c0_46, %c0_47] : memref<9x128x128xbf16, #tpu.memory_space<vmem>>, vector<1x128x128xbf16>
    %40 = vector.shape_cast %39 : vector<1x128x128xbf16> to vector<128x128xbf16>
    %cst_48 = arith.constant dense<0.000000e+00> : vector<16x128xf32>
    %41 = tpu.matmul %38, %40, %cst_48 {dimension_numbers = #tpu.dot_dimension_numbers<[1], [0], [0], [1], [0, 0, 1, 1], [], []>} : vector<16x128xbf16>, vector<128x128xbf16>, vector<16x128xf32> -> vector<16x128xf32>
    %42 = arith.addf %36, %41 : vector<16x128xf32>
    %c0_49 = arith.constant 0 : index
    %c2_50 = arith.constant 2 : index
    %c1_51 = arith.constant 1 : index
    %c0_52 = arith.constant 0 : index
    %43 = vector.load %arg1[%c0_49, %c2_50, %c1_51, %c0_52] : memref<1x6x6x128xbf16, #tpu.memory_space<vmem>>, vector<1x4x4x128xbf16>
    %44 = vector.shape_cast %43 : vector<1x4x4x128xbf16> to vector<16x128xbf16>
    %c7 = arith.constant 7 : index
    %c0_53 = arith.constant 0 : index
    %c0_54 = arith.constant 0 : index
    %45 = vector.load %arg2[%c7, %c0_53, %c0_54] : memref<9x128x128xbf16, #tpu.memory_space<vmem>>, vector<1x128x128xbf16>
    %46 = vector.shape_cast %45 : vector<1x128x128xbf16> to vector<128x128xbf16>
    %cst_55 = arith.constant dense<0.000000e+00> : vector<16x128xf32>
    %47 = tpu.matmul %44, %46, %cst_55 {dimension_numbers = #tpu.dot_dimension_numbers<[1], [0], [0], [1], [0, 0, 1, 1], [], []>} : vector<16x128xbf16>, vector<128x128xbf16>, vector<16x128xf32> -> vector<16x128xf32>
    %48 = arith.addf %42, %47 : vector<16x128xf32>
    %c0_56 = arith.constant 0 : index
    %c2_57 = arith.constant 2 : index
    %c2_58 = arith.constant 2 : index
    %c0_59 = arith.constant 0 : index
    %49 = vector.load %arg1[%c0_56, %c2_57, %c2_58, %c0_59] : memref<1x6x6x128xbf16, #tpu.memory_space<vmem>>, vector<1x4x4x128xbf16>
    %50 = vector.shape_cast %49 : vector<1x4x4x128xbf16> to vector<16x128xbf16>
    %c8 = arith.constant 8 : index
    %c0_60 = arith.constant 0 : index
    %c0_61 = arith.constant 0 : index
    %51 = vector.load %arg2[%c8, %c0_60, %c0_61] : memref<9x128x128xbf16, #tpu.memory_space<vmem>>, vector<1x128x128xbf16>
    %52 = vector.shape_cast %51 : vector<1x128x128xbf16> to vector<128x128xbf16>
    %cst_62 = arith.constant dense<0.000000e+00> : vector<16x128xf32>
    %53 = tpu.matmul %50, %52, %cst_62 {dimension_numbers = #tpu.dot_dimension_numbers<[1], [0], [0], [1], [0, 0, 1, 1], [], []>} : vector<16x128xbf16>, vector<128x128xbf16>, vector<16x128xf32> -> vector<16x128xf32>
    %54 = arith.addf %48, %53 : vector<16x128xf32>
    %c0_63 = arith.constant 0 : index
    %c0_64 = arith.constant 0 : index
    %55 = vector.load %arg3[%c0_63, %c0_64] : memref<1x128xf32, #tpu.memory_space<vmem>>, vector<1x128xf32>
    %56 = vector.broadcast %55 : vector<1x128xf32> to vector<16x128xf32>
    %57 = arith.addf %54, %56 : vector<16x128xf32>
    %cst_65 = arith.constant 0.000000e+00 : f32
    %58 = vector.broadcast %cst_65 : f32 to vector<16x128xf32>
    %59 = arith.maximumf %57, %58 : vector<16x128xf32>
    %60 = vector.shape_cast %59 : vector<16x128xf32> to vector<8x2x128xf32>
    %61 = vector.extract_strided_slice %60 {offsets = [0, 0, 0], sizes = [8, 1, 128], strides = [1, 1, 1]} : vector<8x2x128xf32> to vector<8x1x128xf32>
    %62 = vector.shape_cast %61 : vector<8x1x128xf32> to vector<8x128xf32>
    %63 = vector.extract_strided_slice %60 {offsets = [0, 1, 0], sizes = [8, 1, 128], strides = [1, 1, 1]} : vector<8x2x128xf32> to vector<8x1x128xf32>
    %64 = vector.shape_cast %63 : vector<8x1x128xf32> to vector<8x128xf32>
    %65 = arith.maximumf %62, %64 : vector<8x128xf32>
    %66 = vector.shape_cast %65 : vector<8x128xf32> to vector<2x2x2x128xf32>
    %67 = vector.extract_strided_slice %66 {offsets = [0, 0, 0, 0], sizes = [2, 1, 2, 128], strides = [1, 1, 1, 1]} : vector<2x2x2x128xf32> to vector<2x1x2x128xf32>
    %68 = vector.shape_cast %67 : vector<2x1x2x128xf32> to vector<2x2x128xf32>
    %69 = vector.extract_strided_slice %66 {offsets = [0, 1, 0, 0], sizes = [2, 1, 2, 128], strides = [1, 1, 1, 1]} : vector<2x2x2x128xf32> to vector<2x1x2x128xf32>
    %70 = vector.shape_cast %69 : vector<2x1x2x128xf32> to vector<2x2x128xf32>
    %71 = arith.maximumf %68, %70 : vector<2x2x128xf32>
    %72 = vector.shape_cast %71 : vector<2x2x128xf32> to vector<1x2x2x128xf32>
    %73 = arith.truncf %72 : vector<1x2x2x128xf32> to vector<1x2x2x128xbf16>
    %c0_66 = arith.constant 0 : index
    %c0_67 = arith.constant 0 : index
    %c0_68 = arith.constant 0 : index
    %c0_69 = arith.constant 0 : index
    %74 = vector.load %arg4[%c0_66, %c0_67, %c0_68, %c0_69] : memref<1x2x2x128xbf16, #tpu.memory_space<vmem>>, vector<1x2x2x128xbf16>
    tpu.vector_store %arg4[%c0_66, %c0_67, %c0_68, %c0_69], %73 {strides = array<i32>} : memref<1x2x2x128xbf16, #tpu.memory_space<vmem>>, vector<1x2x2x128xbf16>,
    return
  }
  func.func @transform_0(%arg0: i32) -> (i32, i32, i32, i32) {
    %c0_i32 = arith.constant 0 : i32
    %c0_i32_0 = arith.constant 0 : i32
    %c0_i32_1 = arith.constant 0 : i32
    %c0_i32_2 = arith.constant 0 : i32
    return %arg0, %c0_i32, %c0_i32_0, %c0_i32_1 : i32, i32, i32, i32
  }
  func.func @transform_1(%arg0: i32) -> (i32, i32, i32) {
    %c0_i32 = arith.constant 0 : i32
    %c0_i32_0 = arith.constant 0 : i32
    %c0_i32_1 = arith.constant 0 : i32
    %c0_i32_2 = arith.constant 0 : i32
    return %c0_i32, %c0_i32_0, %c0_i32_1 : i32, i32, i32
  }
  func.func @transform_2(%arg0: i32) -> (i32, i32) {
    %c0_i32 = arith.constant 0 : i32
    %c0_i32_0 = arith.constant 0 : i32
    %c0_i32_1 = arith.constant 0 : i32
    return %c0_i32, %c0_i32_0 : i32, i32
  }
  func.func @transform_3(%arg0: i32) -> (i32, i32, i32, i32) {
    %c0_i32 = arith.constant 0 : i32
    %c0_i32_0 = arith.constant 0 : i32
    %c0_i32_1 = arith.constant 0 : i32
    %c0_i32_2 = arith.constant 0 : i32
    return %arg0, %c0_i32, %c0_i32_0, %c0_i32_1 : i32, i32, i32, i32
  }
}

module attributes {stable_mosaic.version = 11 : i64} {
  func.func @_conv_relu_pool_kernel(%arg0: i32, %arg1: memref<1x4x4x128xbf16, #tpu.memory_space<vmem>>, %arg2: memref<9x128x512xbf16, #tpu.memory_space<vmem>>, %arg3: memref<1x512xf32, #tpu.memory_space<vmem>>, %arg4: memref<1x1x1x512xf32, #tpu.memory_space<vmem>>) attributes {dimension_semantics = [#tpu.dimension_semantics<parallel>], iteration_bounds = array<i64: 2>, scalar_prefetch = 0 : i64, scratch_operands = 0 : i64, tpu.core_type = #tpu.core_type<tc>, window_params = [{transform_indices = @transform_0, window_bounds = array<i64: 1, 4, 4, 128>}, {pipeline_mode = #tpu.pipeline_mode<synchronous>, transform_indices = @transform_1, window_bounds = array<i64: 9, 128, 512>}, {pipeline_mode = #tpu.pipeline_mode<synchronous>, transform_indices = @transform_2, window_bounds = array<i64: 1, 512>}, {transform_indices = @transform_3, window_bounds = array<i64: 1, 1, 1, 512>}]} {
    %cst = arith.constant 0.000000e+00 : f32
    %0 = vector.broadcast %cst : f32 to vector<4x512xf32>
    %c0 = arith.constant 0 : index
    %c0_0 = arith.constant 0 : index
    %c0_1 = arith.constant 0 : index
    %c0_2 = arith.constant 0 : index
    %1 = vector.load %arg1[%c0, %c0_0, %c0_1, %c0_2] : memref<1x4x4x128xbf16, #tpu.memory_space<vmem>>, vector<1x2x2x128xbf16>
    %2 = vector.shape_cast %1 : vector<1x2x2x128xbf16> to vector<4x128xbf16>
    %c0_3 = arith.constant 0 : index
    %c0_4 = arith.constant 0 : index
    %c0_5 = arith.constant 0 : index
    %3 = vector.load %arg2[%c0_3, %c0_4, %c0_5] : memref<9x128x512xbf16, #tpu.memory_space<vmem>>, vector<1x128x512xbf16>
    %4 = vector.shape_cast %3 : vector<1x128x512xbf16> to vector<128x512xbf16>
    %cst_6 = arith.constant dense<0.000000e+00> : vector<4x512xf32>
    %5 = tpu.matmul %2, %4, %cst_6 {dimension_numbers = #tpu.dot_dimension_numbers<[1], [0], [0], [1], [0, 0, 1, 1], [], []>} : vector<4x128xbf16>, vector<128x512xbf16>, vector<4x512xf32> -> vector<4x512xf32>
    %6 = arith.addf %0, %5 : vector<4x512xf32>
    %c0_7 = arith.constant 0 : index
    %c0_8 = arith.constant 0 : index
    %c1 = arith.constant 1 : index
    %c0_9 = arith.constant 0 : index
    %7 = vector.load %arg1[%c0_7, %c0_8, %c1, %c0_9] : memref<1x4x4x128xbf16, #tpu.memory_space<vmem>>, vector<1x2x2x128xbf16>
    %8 = vector.shape_cast %7 : vector<1x2x2x128xbf16> to vector<4x128xbf16>
    %c1_10 = arith.constant 1 : index
    %c0_11 = arith.constant 0 : index
    %c0_12 = arith.constant 0 : index
    %9 = vector.load %arg2[%c1_10, %c0_11, %c0_12] : memref<9x128x512xbf16, #tpu.memory_space<vmem>>, vector<1x128x512xbf16>
    %10 = vector.shape_cast %9 : vector<1x128x512xbf16> to vector<128x512xbf16>
    %cst_13 = arith.constant dense<0.000000e+00> : vector<4x512xf32>
    %11 = tpu.matmul %8, %10, %cst_13 {dimension_numbers = #tpu.dot_dimension_numbers<[1], [0], [0], [1], [0, 0, 1, 1], [], []>} : vector<4x128xbf16>, vector<128x512xbf16>, vector<4x512xf32> -> vector<4x512xf32>
    %12 = arith.addf %6, %11 : vector<4x512xf32>
    %c0_14 = arith.constant 0 : index
    %c0_15 = arith.constant 0 : index
    %c2 = arith.constant 2 : index
    %c0_16 = arith.constant 0 : index
    %13 = vector.load %arg1[%c0_14, %c0_15, %c2, %c0_16] : memref<1x4x4x128xbf16, #tpu.memory_space<vmem>>, vector<1x2x2x128xbf16>
    %14 = vector.shape_cast %13 : vector<1x2x2x128xbf16> to vector<4x128xbf16>
    %c2_17 = arith.constant 2 : index
    %c0_18 = arith.constant 0 : index
    %c0_19 = arith.constant 0 : index
    %15 = vector.load %arg2[%c2_17, %c0_18, %c0_19] : memref<9x128x512xbf16, #tpu.memory_space<vmem>>, vector<1x128x512xbf16>
    %16 = vector.shape_cast %15 : vector<1x128x512xbf16> to vector<128x512xbf16>
    %cst_20 = arith.constant dense<0.000000e+00> : vector<4x512xf32>
    %17 = tpu.matmul %14, %16, %cst_20 {dimension_numbers = #tpu.dot_dimension_numbers<[1], [0], [0], [1], [0, 0, 1, 1], [], []>} : vector<4x128xbf16>, vector<128x512xbf16>, vector<4x512xf32> -> vector<4x512xf32>
    %18 = arith.addf %12, %17 : vector<4x512xf32>
    %c0_21 = arith.constant 0 : index
    %c1_22 = arith.constant 1 : index
    %c0_23 = arith.constant 0 : index
    %c0_24 = arith.constant 0 : index
    %19 = vector.load %arg1[%c0_21, %c1_22, %c0_23, %c0_24] : memref<1x4x4x128xbf16, #tpu.memory_space<vmem>>, vector<1x2x2x128xbf16>
    %20 = vector.shape_cast %19 : vector<1x2x2x128xbf16> to vector<4x128xbf16>
    %c3 = arith.constant 3 : index
    %c0_25 = arith.constant 0 : index
    %c0_26 = arith.constant 0 : index
    %21 = vector.load %arg2[%c3, %c0_25, %c0_26] : memref<9x128x512xbf16, #tpu.memory_space<vmem>>, vector<1x128x512xbf16>
    %22 = vector.shape_cast %21 : vector<1x128x512xbf16> to vector<128x512xbf16>
    %cst_27 = arith.constant dense<0.000000e+00> : vector<4x512xf32>
    %23 = tpu.matmul %20, %22, %cst_27 {dimension_numbers = #tpu.dot_dimension_numbers<[1], [0], [0], [1], [0, 0, 1, 1], [], []>} : vector<4x128xbf16>, vector<128x512xbf16>, vector<4x512xf32> -> vector<4x512xf32>
    %24 = arith.addf %18, %23 : vector<4x512xf32>
    %c0_28 = arith.constant 0 : index
    %c1_29 = arith.constant 1 : index
    %c1_30 = arith.constant 1 : index
    %c0_31 = arith.constant 0 : index
    %25 = vector.load %arg1[%c0_28, %c1_29, %c1_30, %c0_31] : memref<1x4x4x128xbf16, #tpu.memory_space<vmem>>, vector<1x2x2x128xbf16>
    %26 = vector.shape_cast %25 : vector<1x2x2x128xbf16> to vector<4x128xbf16>
    %c4 = arith.constant 4 : index
    %c0_32 = arith.constant 0 : index
    %c0_33 = arith.constant 0 : index
    %27 = vector.load %arg2[%c4, %c0_32, %c0_33] : memref<9x128x512xbf16, #tpu.memory_space<vmem>>, vector<1x128x512xbf16>
    %28 = vector.shape_cast %27 : vector<1x128x512xbf16> to vector<128x512xbf16>
    %cst_34 = arith.constant dense<0.000000e+00> : vector<4x512xf32>
    %29 = tpu.matmul %26, %28, %cst_34 {dimension_numbers = #tpu.dot_dimension_numbers<[1], [0], [0], [1], [0, 0, 1, 1], [], []>} : vector<4x128xbf16>, vector<128x512xbf16>, vector<4x512xf32> -> vector<4x512xf32>
    %30 = arith.addf %24, %29 : vector<4x512xf32>
    %c0_35 = arith.constant 0 : index
    %c1_36 = arith.constant 1 : index
    %c2_37 = arith.constant 2 : index
    %c0_38 = arith.constant 0 : index
    %31 = vector.load %arg1[%c0_35, %c1_36, %c2_37, %c0_38] : memref<1x4x4x128xbf16, #tpu.memory_space<vmem>>, vector<1x2x2x128xbf16>
    %32 = vector.shape_cast %31 : vector<1x2x2x128xbf16> to vector<4x128xbf16>
    %c5 = arith.constant 5 : index
    %c0_39 = arith.constant 0 : index
    %c0_40 = arith.constant 0 : index
    %33 = vector.load %arg2[%c5, %c0_39, %c0_40] : memref<9x128x512xbf16, #tpu.memory_space<vmem>>, vector<1x128x512xbf16>
    %34 = vector.shape_cast %33 : vector<1x128x512xbf16> to vector<128x512xbf16>
    %cst_41 = arith.constant dense<0.000000e+00> : vector<4x512xf32>
    %35 = tpu.matmul %32, %34, %cst_41 {dimension_numbers = #tpu.dot_dimension_numbers<[1], [0], [0], [1], [0, 0, 1, 1], [], []>} : vector<4x128xbf16>, vector<128x512xbf16>, vector<4x512xf32> -> vector<4x512xf32>
    %36 = arith.addf %30, %35 : vector<4x512xf32>
    %c0_42 = arith.constant 0 : index
    %c2_43 = arith.constant 2 : index
    %c0_44 = arith.constant 0 : index
    %c0_45 = arith.constant 0 : index
    %37 = vector.load %arg1[%c0_42, %c2_43, %c0_44, %c0_45] : memref<1x4x4x128xbf16, #tpu.memory_space<vmem>>, vector<1x2x2x128xbf16>
    %38 = vector.shape_cast %37 : vector<1x2x2x128xbf16> to vector<4x128xbf16>
    %c6 = arith.constant 6 : index
    %c0_46 = arith.constant 0 : index
    %c0_47 = arith.constant 0 : index
    %39 = vector.load %arg2[%c6, %c0_46, %c0_47] : memref<9x128x512xbf16, #tpu.memory_space<vmem>>, vector<1x128x512xbf16>
    %40 = vector.shape_cast %39 : vector<1x128x512xbf16> to vector<128x512xbf16>
    %cst_48 = arith.constant dense<0.000000e+00> : vector<4x512xf32>
    %41 = tpu.matmul %38, %40, %cst_48 {dimension_numbers = #tpu.dot_dimension_numbers<[1], [0], [0], [1], [0, 0, 1, 1], [], []>} : vector<4x128xbf16>, vector<128x512xbf16>, vector<4x512xf32> -> vector<4x512xf32>
    %42 = arith.addf %36, %41 : vector<4x512xf32>
    %c0_49 = arith.constant 0 : index
    %c2_50 = arith.constant 2 : index
    %c1_51 = arith.constant 1 : index
    %c0_52 = arith.constant 0 : index
    %43 = vector.load %arg1[%c0_49, %c2_50, %c1_51, %c0_52] : memref<1x4x4x128xbf16, #tpu.memory_space<vmem>>, vector<1x2x2x128xbf16>
    %44 = vector.shape_cast %43 : vector<1x2x2x128xbf16> to vector<4x128xbf16>
    %c7 = arith.constant 7 : index
    %c0_53 = arith.constant 0 : index
    %c0_54 = arith.constant 0 : index
    %45 = vector.load %arg2[%c7, %c0_53, %c0_54] : memref<9x128x512xbf16, #tpu.memory_space<vmem>>, vector<1x128x512xbf16>
    %46 = vector.shape_cast %45 : vector<1x128x512xbf16> to vector<128x512xbf16>
    %cst_55 = arith.constant dense<0.000000e+00> : vector<4x512xf32>
    %47 = tpu.matmul %44, %46, %cst_55 {dimension_numbers = #tpu.dot_dimension_numbers<[1], [0], [0], [1], [0, 0, 1, 1], [], []>} : vector<4x128xbf16>, vector<128x512xbf16>, vector<4x512xf32> -> vector<4x512xf32>
    %48 = arith.addf %42, %47 : vector<4x512xf32>
    %c0_56 = arith.constant 0 : index
    %c2_57 = arith.constant 2 : index
    %c2_58 = arith.constant 2 : index
    %c0_59 = arith.constant 0 : index
    %49 = vector.load %arg1[%c0_56, %c2_57, %c2_58, %c0_59] : memref<1x4x4x128xbf16, #tpu.memory_space<vmem>>, vector<1x2x2x128xbf16>
    %50 = vector.shape_cast %49 : vector<1x2x2x128xbf16> to vector<4x128xbf16>
    %c8 = arith.constant 8 : index
    %c0_60 = arith.constant 0 : index
    %c0_61 = arith.constant 0 : index
    %51 = vector.load %arg2[%c8, %c0_60, %c0_61] : memref<9x128x512xbf16, #tpu.memory_space<vmem>>, vector<1x128x512xbf16>
    %52 = vector.shape_cast %51 : vector<1x128x512xbf16> to vector<128x512xbf16>
    %cst_62 = arith.constant dense<0.000000e+00> : vector<4x512xf32>
    %53 = tpu.matmul %50, %52, %cst_62 {dimension_numbers = #tpu.dot_dimension_numbers<[1], [0], [0], [1], [0, 0, 1, 1], [], []>} : vector<4x128xbf16>, vector<128x512xbf16>, vector<4x512xf32> -> vector<4x512xf32>
    %54 = arith.addf %48, %53 : vector<4x512xf32>
    %c0_63 = arith.constant 0 : index
    %c0_64 = arith.constant 0 : index
    %55 = vector.load %arg3[%c0_63, %c0_64] : memref<1x512xf32, #tpu.memory_space<vmem>>, vector<1x512xf32>
    %56 = vector.broadcast %55 : vector<1x512xf32> to vector<4x512xf32>
    %57 = arith.addf %54, %56 : vector<4x512xf32>
    %cst_65 = arith.constant 0.000000e+00 : f32
    %58 = vector.broadcast %cst_65 : f32 to vector<4x512xf32>
    %59 = arith.maximumf %57, %58 : vector<4x512xf32>
    %60 = vector.shape_cast %59 : vector<4x512xf32> to vector<2x2x512xf32>
    %61 = vector.extract_strided_slice %60 {offsets = [0, 0, 0], sizes = [2, 1, 512], strides = [1, 1, 1]} : vector<2x2x512xf32> to vector<2x1x512xf32>
    %62 = vector.shape_cast %61 : vector<2x1x512xf32> to vector<2x512xf32>
    %63 = vector.extract_strided_slice %60 {offsets = [0, 1, 0], sizes = [2, 1, 512], strides = [1, 1, 1]} : vector<2x2x512xf32> to vector<2x1x512xf32>
    %64 = vector.shape_cast %63 : vector<2x1x512xf32> to vector<2x512xf32>
    %65 = arith.maximumf %62, %64 : vector<2x512xf32>
    %66 = vector.shape_cast %65 : vector<2x512xf32> to vector<1x2x1x512xf32>
    %67 = vector.extract_strided_slice %66 {offsets = [0, 0, 0, 0], sizes = [1, 1, 1, 512], strides = [1, 1, 1, 1]} : vector<1x2x1x512xf32> to vector<1x1x1x512xf32>
    %68 = vector.shape_cast %67 : vector<1x1x1x512xf32> to vector<1x1x512xf32>
    %69 = vector.extract_strided_slice %66 {offsets = [0, 1, 0, 0], sizes = [1, 1, 1, 512], strides = [1, 1, 1, 1]} : vector<1x2x1x512xf32> to vector<1x1x1x512xf32>
    %70 = vector.shape_cast %69 : vector<1x1x1x512xf32> to vector<1x1x512xf32>
    %71 = arith.maximumf %68, %70 : vector<1x1x512xf32>
    %72 = vector.shape_cast %71 : vector<1x1x512xf32> to vector<1x1x1x512xf32>
    %c0_66 = arith.constant 0 : index
    %c0_67 = arith.constant 0 : index
    %c0_68 = arith.constant 0 : index
    %c0_69 = arith.constant 0 : index
    %73 = vector.load %arg4[%c0_66, %c0_67, %c0_68, %c0_69] : memref<1x1x1x512xf32, #tpu.memory_space<vmem>>, vector<1x1x1x512xf32>
    tpu.vector_store %arg4[%c0_66, %c0_67, %c0_68, %c0_69], %72 {strides = array<i32>} : memref<1x1x1x512xf32, #tpu.memory_space<vmem>>, vector<1x1x1x512xf32>,
    return
  }
  func.func @transform_0(%arg0: i32) -> (i32, i32, i32, i32) {
    %c0_i32 = arith.constant 0 : i32
    %c0_i32_0 = arith.constant 0 : i32
    %c0_i32_1 = arith.constant 0 : i32
    %c0_i32_2 = arith.constant 0 : i32
    return %arg0, %c0_i32, %c0_i32_0, %c0_i32_1 : i32, i32, i32, i32
  }
  func.func @transform_1(%arg0: i32) -> (i32, i32, i32) {
    %c0_i32 = arith.constant 0 : i32
    %c0_i32_0 = arith.constant 0 : i32
    %c0_i32_1 = arith.constant 0 : i32
    %c0_i32_2 = arith.constant 0 : i32
    return %c0_i32, %c0_i32_0, %c0_i32_1 : i32, i32, i32
  }
  func.func @transform_2(%arg0: i32) -> (i32, i32) {
    %c0_i32 = arith.constant 0 : i32
    %c0_i32_0 = arith.constant 0 : i32
    %c0_i32_1 = arith.constant 0 : i32
    return %c0_i32, %c0_i32_0 : i32, i32
  }
  func.func @transform_3(%arg0: i32) -> (i32, i32, i32, i32) {
    %c0_i32 = arith.constant 0 : i32
    %c0_i32_0 = arith.constant 0 : i32
    %c0_i32_1 = arith.constant 0 : i32
    %c0_i32_2 = arith.constant 0 : i32
    return %arg0, %c0_i32, %c0_i32_0, %c0_i32_1 : i32, i32, i32, i32
  }
}

module attributes {stable_mosaic.version = 11 : i64} {
  func.func @_linear_kernel(%arg0: memref<2x512xf32, #tpu.memory_space<vmem>>, %arg1: memref<512x10xbf16, #tpu.memory_space<vmem>>, %arg2: memref<1x10xf32, #tpu.memory_space<vmem>>, %arg3: memref<2x10xf32, #tpu.memory_space<vmem>>) attributes {dimension_semantics = [], scalar_prefetch = 0 : i64, scratch_operands = 0 : i64, tpu.core_type = #tpu.core_type<tc>} {
    %c0 = arith.constant 0 : index
    %c0_0 = arith.constant 0 : index
    %0 = vector.load %arg0[%c0, %c0_0] : memref<2x512xf32, #tpu.memory_space<vmem>>, vector<2x512xf32>
    %1 = arith.truncf %0 : vector<2x512xf32> to vector<2x512xbf16>
    %c0_1 = arith.constant 0 : index
    %c0_2 = arith.constant 0 : index
    %2 = vector.load %arg1[%c0_1, %c0_2] : memref<512x10xbf16, #tpu.memory_space<vmem>>, vector<512x10xbf16>
    %cst = arith.constant dense<0.000000e+00> : vector<2x10xf32>
    %3 = tpu.matmul %1, %2, %cst {dimension_numbers = #tpu.dot_dimension_numbers<[1], [0], [0], [1], [0, 0, 1, 1], [], []>} : vector<2x512xbf16>, vector<512x10xbf16>, vector<2x10xf32> -> vector<2x10xf32>
    %c0_3 = arith.constant 0 : index
    %c0_4 = arith.constant 0 : index
    %4 = vector.load %arg2[%c0_3, %c0_4] : memref<1x10xf32, #tpu.memory_space<vmem>>, vector<1x10xf32>
    %5 = vector.broadcast %4 : vector<1x10xf32> to vector<2x10xf32>
    %6 = arith.addf %3, %5 : vector<2x10xf32>
    %c0_5 = arith.constant 0 : index
    %c0_6 = arith.constant 0 : index
    %7 = vector.load %arg3[%c0_5, %c0_6] : memref<2x10xf32, #tpu.memory_space<vmem>>, vector<2x10xf32>
    tpu.vector_store %arg3[%c0_5, %c0_6], %6 {strides = array<i32>} : memref<2x10xf32, #tpu.memory_space<vmem>>, vector<2x10xf32>,
    return
  }
}

</mosaic_0001>

<llo_original>
// kernel: vgg_forward.7
$region0: #{vgg_forward.7}
  #allocation0 [shape = 'u32[]', space=smem, size = 0x4, offset = 0x4, fixed_abs, tag = 'smem constant byte address 0x4 - core index']
  #allocation1 [shape = 'u32[144,128]{1,0:T(1,128)}', space=vmem, size = 0x12000, scoped, tag = 'internal scratch']
  %s0 = inlined_call_operand.vmem [shape: bf16[2,6,6,128], index: 0, kind: input, shape index: {}]
  %s1 = inlined_call_operand.vmem [shape: bf16[9,128,128], index: 1, kind: input, shape index: {}]
  %s2 = inlined_call_operand.vmem [shape: f32[1,128], index: 2, kind: input, shape index: {}]
  %s3 = inlined_call_operand.vmem [shape: bf16[2,2,2,128], index: 3, kind: output, shape index: {}]
  %s4 = sld [smem:[#allocation0]]
  $region45: #{vgg_forward.7} parent=0
    _
  %s6 = ssub.s32 1, %s4
  %s7 = scalar_select 0, %s6, %s4
  loop: start=0, step=1, limit=4
  $region2: #{vgg_forward.7} parent=0 // loop_pre_header
    _
  $region3: #{vgg_forward.7} parent=0 // loop_header
    %s9 = sphi 0, %s13
    %p10 = scmp.ge.s32.totalorder %s9, 4
    %s19 = sphi 0, %s21
    %s22 = sphi 0, %s19
    %s23 = sphi 0, %s22
    %s39 = sphi 0, %s23
    %s43 = sphi 0, %s43
    %s45 = sphi 0, %s43
    %s46 = sphi 0, %s45
    %s60 = sphi 0, %s46
    %s64 = sphi 0, %s64
    %s66 = sphi 0, %s64
    %s67 = sphi 0, %s66
    %s81 = sphi 0, %s67
    %s87 = sphi 0, %s89
    %s90 = sphi 0, %s87
    %s91 = sphi 0, %s90
    %s107 = sphi 0, %s91
  $region4: #{vgg_forward.7} parent=0 // loop_header_branch
    %12 = sbr.rel (%p10) target = $region8
  $region5: #{vgg_forward.7} parent=0 // loop_body
    %s14 = ssub.s32 %s9, 1
    %s15 = ssub.s32 %s9, 2
    %s16 = sadd.s32 %s9, 1
    %s17 = ssub.s32 %s9, %s16
    %p18 = scmp.eq.s32.totalorder %s17, 0
    %s20 = sadd.s32 %s19, 1
    %s21 = scalar_select %p18, %s19, %s20
    %p24 = pneg %p18
    %p25 = scmp.eq.s32.totalorder %s9, 1
    %p26 = por %p24, %p25
    %p27 = scmp.ne.s32.totalorder %s19, %s22
    %p28 = scmp.eq.s32.totalorder %s9, 0
    %p29 = por %p27, %p28
    %p30 = scmp.ne.s32.totalorder %s19, %s22
    %p31 = scmp.eq.s32.totalorder %s14, 1
    %p32 = por %p30, %p31
    %p33 = scmp.ne.s32.totalorder %s22, %s23
    %p34 = scmp.eq.s32.totalorder %s14, 0
    %p35 = por %p33, %p34
    %p36 = scmp.ne.s32.totalorder %s22, %s23
    %p37 = scmp.eq.s32.totalorder %s15, 1
    %p38 = por %p36, %p37
    %p40 = scmp.ne.s32.totalorder %s23, %s39
    %p41 = scmp.eq.s32.totalorder %s15, 0
    %p42 = por %p40, %p41
    %s44 = sadd.s32 %s43, 1
    %p47 = scmp.eq.s32.totalorder %s9, 1
    %p48 = scmp.ne.s32.totalorder %s43, %s45
    %p49 = scmp.eq.s32.totalorder %s9, 0
    %p50 = por %p48, %p49
    %p51 = scmp.ne.s32.totalorder %s43, %s45
    %p52 = scmp.eq.s32.totalorder %s14, 1
    %p53 = por %p51, %p52
    %p54 = scmp.ne.s32.totalorder %s45, %s46
    %p55 = scmp.eq.s32.totalorder %s14, 0
    %p56 = por %p54, %p55
    %p57 = scmp.ne.s32.totalorder %s45, %s46
    %p58 = scmp.eq.s32.totalorder %s15, 1
    %p59 = por %p57, %p58
    %p61 = scmp.ne.s32.totalorder %s46, %s60
    %p62 = scmp.eq.s32.totalorder %s15, 0
    %p63 = por %p61, %p62
    %s65 = sadd.s32 %s64, 1
    %p68 = scmp.eq.s32.totalorder %s9, 1
    %p69 = scmp.ne.s32.totalorder %s64, %s66
    %p70 = scmp.eq.s32.totalorder %s9, 0
    %p71 = por %p69, %p70
    %p72 = scmp.ne.s32.totalorder %s64, %s66
    %p73 = scmp.eq.s32.totalorder %s14, 1
    %p74 = por %p72, %p73
    %p75 = scmp.ne.s32.totalorder %s66, %s67
    %p76 = scmp.eq.s32.totalorder %s14, 0
    %p77 = por %p75, %p76
    %p78 = scmp.ne.s32.totalorder %s66, %s67
    %p79 = scmp.eq.s32.totalorder %s15, 1
    %p80 = por %p78, %p79
    %p82 = scmp.ne.s32.totalorder %s67, %s81
    %p83 = scmp.eq.s32.totalorder %s15, 0
    %p84 = por %p82, %p83
    %s85 = ssub.s32 %s9, %s16
    %p86 = scmp.eq.s32.totalorder %s85, 0
    %s88 = sadd.s32 %s87, 1
    %s89 = scalar_select %p86, %s87, %s88
    %p92 = pneg %p86
    %p93 = scmp.eq.s32.totalorder %s9, 1
    %p94 = por %p92, %p93
    %p95 = scmp.ne.s32.totalorder %s87, %s90
    %p96 = scmp.eq.s32.totalorder %s9, 0
    %p97 = por %p95, %p96
    %p98 = scmp.ne.s32.totalorder %s87, %s90
    %p99 = scmp.eq.s32.totalorder %s14, 1
    %p100 = por %p98, %p99
    %p101 = scmp.ne.s32.totalorder %s90, %s91
    %p102 = scmp.eq.s32.totalorder %s14, 0
    %p103 = por %p101, %p102
    %p104 = scmp.ne.s32.totalorder %s90, %s91
    %p105 = scmp.eq.s32.totalorder %s15, 1
    %p106 = por %p104, %p105
    %p108 = scmp.ne.s32.totalorder %s91, %s107
    %p109 = scmp.eq.s32.totalorder %s15, 0
    %p110 = por %p108, %p109
    %p111 = scmp.le.s32.totalorder 1, %s9
    %p112 = scmp.lt.s32.totalorder %s9, 3
    %p113 = pnand %p111, %p112
    %p114 = pneg %p113
    // Predicated region
    $region9: #{vgg_forward.7} parent=5 // pred_check
      _
    $region10: #{vgg_forward.7} parent=5 // pred_check_branch
      %116 = sbr.rel (%p113) target = $region12
    $region11: #{vgg_forward.7} parent=5 // pred_region
      %s117 = ssub.s32 %s9, 1
      // Predicated region
      $region13: #{vgg_forward.7} parent=11 // pred_check
        %p118 = pneg %p56
      $region14: #{vgg_forward.7} parent=11 // pred_check_branch
        %120 = sbr.rel (%p118) target = $region16
      $region15: #{vgg_forward.7} parent=11 // pred_region
        _
      $region16: #{vgg_forward.7} parent=11 // pred_fallthru
        _
      // Predicated region
      $region17: #{vgg_forward.7} parent=11 // pred_check
        %p121 = pneg %p77
      $region18: #{vgg_forward.7} parent=11 // pred_check_branch
        %123 = sbr.rel (%p121) target = $region20
      $region19: #{vgg_forward.7} parent=11 // pred_region
        _
      $region20: #{vgg_forward.7} parent=11 // pred_fallthru
        _
    $region12: #{vgg_forward.7} parent=5 // pred_fallthru
      _
    %p124 = scmp.lt.s32.totalorder %s9, 2
    // Predicated region
    $region21: #{vgg_forward.7} parent=5 // pred_check
      %p125 = pneg %p124
    $region22: #{vgg_forward.7} parent=5 // pred_check_branch
      %127 = sbr.rel (%p125) target = $region24
    $region23: #{vgg_forward.7} parent=5 // pred_region
      // Predicated region
      $region25: #{vgg_forward.7} parent=23 // pred_check
        %p128 = pneg %p29
      $region26: #{vgg_forward.7} parent=23 // pred_check_branch
        %130 = sbr.rel (%p128) target = $region28
      $region27: #{vgg_forward.7} parent=23 // pred_region
        %p131 = scmp.lt.s32.totalorder %s9, 1
        %s132 = scalar_select %p131, %s9, 1
        %s133 = smul.addr %s132, 6
        %s134 = smul.addr %s133, 4
        %s135 = scalar_lea.vmem %s0, %s134
      $region28: #{vgg_forward.7} parent=23 // pred_fallthru
        _
    $region24: #{vgg_forward.7} parent=5 // pred_fallthru
      _
    %p136 = scmp.le.s32.totalorder 1, %s9
    %p137 = scmp.lt.s32.totalorder %s9, 3
    %p138 = pnand %p136, %p137
    %p139 = pneg %p138
    // Predicated region
    $region29: #{vgg_forward.7} parent=5 // pred_check
      _
    $region30: #{vgg_forward.7} parent=5 // pred_check_branch
      %141 = sbr.rel (%p138) target = $region32
    $region31: #{vgg_forward.7} parent=5 // pred_region
      %s142 = ssub.s32 %s9, 1
      %p143 = scmp.lt.s32.totalorder %s14, 1
      %s144 = scalar_select %p143, %s14, 1
      %s145 = smul.addr %s144, 6
      %s146 = smul.addr %s145, 4
      %s147 = scalar_lea.vmem %s0, %s146
      %p148 = pneg %p35
      %p149 = pneg %p32
      %p150 = pneg %p56
      %p151 = pneg %p53
      %p152 = pneg %p77
      %p153 = pneg %p74
      %p154 = pneg %p103
      %p155 = pneg %p100
      %p156 = scmp.lt.s32.totalorder %s14, 1
      %s157 = scalar_select %p156, %s14, 1
      %s158 = smul.addr %s157, 2
      %s159 = scalar_lea.vmem %s3, %s158
      %p160 = scmp.lt.s32.totalorder %s14, 1
      %s161 = scalar_select %p160, %s14, 1
      %s162 = smul.addr %s161, 6
      %s163 = smul.addr %s162, 4
      %s164 = scalar_lea.vmem %s0, %s163
      %p165 = scmp.lt.s32.totalorder %s14, 1
      %s166 = scalar_select %p165, %s14, 1
      %s167 = smul.addr %s166, 2
      %s168 = scalar_lea.vmem %s3, %s167
      %v170 = vld [vmem:[%s164] sm:$0x3]
      %v171 = vld [vmem:[%s164 + $0x4] sm:$0x3]
      %v172 = vld [vmem:[%s164 + $0x8] sm:$0x3]
      %v173 = vld [vmem:[%s164 + $0xc] sm:$0x3]
      %v174 = vld [vmem:[%s1] sm:$0xf]
      %v175 = vld [vmem:[%s1 + $0x4] sm:$0xf]
      %v176 = vld [vmem:[%s1 + $0x8] sm:$0xf]
      %v177 = vld [vmem:[%s1 + $0xc] sm:$0xf]
      %v178 = vld [vmem:[%s1 + $0x10] sm:$0xf]
      %v179 = vld [vmem:[%s1 + $0x14] sm:$0xf]
      %v180 = vld [vmem:[%s1 + $0x18] sm:$0xf]
      %v181 = vld [vmem:[%s1 + $0x1c] sm:$0xf]
      %v182 = vld [vmem:[%s1 + $0x20] sm:$0xf]
      %v183 = vld [vmem:[%s1 + $0x24] sm:$0xf]
      %v184 = vld [vmem:[%s1 + $0x28] sm:$0xf]
      %v185 = vld [vmem:[%s1 + $0x2c] sm:$0xf]
      %v186 = vld [vmem:[%s1 + $0x30] sm:$0xf]
      %v187 = vld [vmem:[%s1 + $0x34] sm:$0xf]
      %v188 = vld [vmem:[%s1 + $0x38] sm:$0xf]
      %v189 = vld [vmem:[%s1 + $0x3c] sm:$0xf]
      %v190 = vld [vmem:[%s164] sm:$0x7]
      %v191 = vld [vmem:[%s164 + $0x4] sm:$0x7]
      %v192 = vld [vmem:[%s164 + $0x8] sm:$0x7]
      %v193 = vld [vmem:[%s164 + $0xc] sm:$0x7]
      %v199 = vunpack.c.l.s4 1983009808
      %v200 = vunpack.c.0.s8 %v199
      %v201 = vlaneseq
      %v202 = vshrl.u32 %v201, 7
      %v203 = vsub.s32 %v200, %v202
      %v204 = vrot.slane %v190, %v203
      %v205 = vcombine.high %v204, %v204
      %v207 = vunpack.c.l.s4 1983009808
      %v208 = vunpack.c.0.s8 %v207
      %v209 = vlaneseq
      %v210 = vshrl.u32 %v209, 7
      %v211 = vsub.s32 %v208, %v210
      %v212 = vrot.slane %v191, %v211
      %v213 = vcombine.high %v212, %v212
      %v215 = vunpack.c.l.s4 1983009808
      %v216 = vunpack.c.0.s8 %v215
      %v217 = vlaneseq
      %v218 = vshrl.u32 %v217, 7
      %v219 = vsub.s32 %v216, %v218
      %v220 = vrot.slane %v192, %v219
      %v221 = vcombine.high %v220, %v220
      %v223 = vunpack.c.l.s4 1983009808
      %v224 = vunpack.c.0.s8 %v223
      %v225 = vlaneseq
      %v226 = vshrl.u32 %v225, 7
      %v227 = vsub.s32 %v224, %v226
      %v228 = vrot.slane %v193, %v227
      %v229 = vcombine.high %v228, %v228
      %vm230 = vsmask.f32 1280
      %vm231 = vsmask.f32 3336
      %vm232 = vmor %vm230, %vm231
      %vm233 = vsmask.f32 5392
      %vm234 = vmor %vm232, %vm233
      %vm235 = vsmask.f32 7448
      %vm236 = vmor %vm234, %vm235
      %v238 = vshrl.u32 %v204, 16
      %v240 = vrot.slane %v238, 6
      %v241 = vshll.u32 %v204, 16
      %v243 = vrot.slane %v241, 7
      %v244 = vor.u32 %v240, %v243
      %v245 = vrot.slane %v244, 2
      %v247 = vshll.u32 %v205, 16
      %v249 = vrot.slane %v247, 7
      %v250 = vsel %vm236, %v245, %v249
      %v252 = vshrl.u32 %v212, 16
      %v254 = vrot.slane %v252, 6
      %v255 = vshll.u32 %v212, 16
      %v257 = vrot.slane %v255, 7
      %v258 = vor.u32 %v254, %v257
      %v259 = vrot.slane %v258, 2
      %v261 = vshll.u32 %v213, 16
      %v263 = vrot.slane %v261, 7
      %v264 = vsel %vm236, %v259, %v263
      %v266 = vshrl.u32 %v220, 16
      %v268 = vrot.slane %v266, 6
      %v269 = vshll.u32 %v220, 16
      %v271 = vrot.slane %v269, 7
      %v272 = vor.u32 %v268, %v271
      %v273 = vrot.slane %v272, 2
      %v275 = vshll.u32 %v221, 16
      %v277 = vrot.slane %v275, 7
      %v278 = vsel %vm236, %v273, %v277
      %v280 = vshrl.u32 %v228, 16
      %v282 = vrot.slane %v280, 6
      %v283 = vshll.u32 %v228, 16
      %v285 = vrot.slane %v283, 7
      %v286 = vor.u32 %v282, %v285
      %v287 = vrot.slane %v286, 2
      %v289 = vshll.u32 %v229, 16
      %v291 = vrot.slane %v289, 7
      %v292 = vsel %vm236, %v287, %v291
      %s293 = scalar_lea.vmem %s1, 64
      %v294 = vld [vmem:[%s293] sm:$0xf]
      %v295 = vld [vmem:[%s293 + $0x4] sm:$0xf]
      %v296 = vld [vmem:[%s293 + $0x8] sm:$0xf]
      %v297 = vld [vmem:[%s293 + $0xc] sm:$0xf]
      %v298 = vld [vmem:[%s293 + $0x10] sm:$0xf]
      %v299 = vld [vmem:[%s293 + $0x14] sm:$0xf]
      %v300 = vld [vmem:[%s293 + $0x18] sm:$0xf]
      %v301 = vld [vmem:[%s293 + $0x1c] sm:$0xf]
      %v302 = vld [vmem:[%s293 + $0x20] sm:$0xf]
      %v303 = vld [vmem:[%s293 + $0x24] sm:$0xf]
      %v304 = vld [vmem:[%s293 + $0x28] sm:$0xf]
      %v305 = vld [vmem:[%s293 + $0x2c] sm:$0xf]
      %v306 = vld [vmem:[%s293 + $0x30] sm:$0xf]
      %v307 = vld [vmem:[%s293 + $0x34] sm:$0xf]
      %v308 = vld [vmem:[%s293 + $0x38] sm:$0xf]
      %v309 = vld [vmem:[%s293 + $0x3c] sm:$0xf]
      %v310 = vcombine.low %v250, %v264
      %v311 = vcombine.low %v278, %v292
      %v313 = vunpack.c.l.s4 1983009808
      %v314 = vunpack.c.0.s8 %v313
      %v315 = vlaneseq
      %v316 = vshrl.u32 %v315, 7
      %v317 = vsub.s32 %v314, %v316
      %v318 = vrot.slane %v310, %v317
      %v320 = vunpack.c.l.s4 1983009808
      %v321 = vunpack.c.0.s8 %v320
      %v322 = vlaneseq
      %v323 = vshrl.u32 %v322, 7
      %v324 = vsub.s32 %v321, %v323
      %v325 = vrot.slane %v311, %v324
      %v326 = vcombine.low %v318, %v325
      %v344 = vunpack.c.l.b16 %v294
      %v345 = vunpack.c.l.b16 %v295
      %v346 = vunpack.c.l.b16 %v296
      %v347 = vunpack.c.l.b16 %v297
      %v348 = vunpack.c.l.b16 %v298
      %v349 = vunpack.c.l.b16 %v299
      %v350 = vunpack.c.l.b16 %v300
      %v351 = vunpack.c.l.b16 %v301
      %v352 = vunpack.c.l.b16 %v302
      %v353 = vunpack.c.l.b16 %v303
      %v354 = vunpack.c.l.b16 %v304
      %v355 = vunpack.c.l.b16 %v305
      %v356 = vunpack.c.l.b16 %v306
      %v357 = vunpack.c.l.b16 %v307
      %v358 = vunpack.c.l.b16 %v308
      %v359 = vunpack.c.l.b16 %v309
      %v360 = vpack.c.b16 %v345, %v344
      %v361 = vpack.c.b16 %v347, %v346
      %v362 = vpack.c.b16 %v349, %v348
      %v363 = vpack.c.b16 %v351, %v350
      %v364 = vpack.c.b16 %v353, %v352
      %v365 = vpack.c.b16 %v355, %v354
      %v366 = vpack.c.b16 %v357, %v356
      %v367 = vpack.c.b16 %v359, %v358
      %376 = vmatprep.subr.bf16.mxu0 0
      %377 = vmatpush1.bf16.msra.mxu0 %v367
      %378 = vmatprep.subr.bf16.mxu0 0
      %379 = vmatpush1.bf16.msra.mxu0 %v366
      %380 = vmatprep.subr.bf16.mxu0 0
      %381 = vmatpush1.bf16.msra.mxu0 %v365
      %382 = vmatprep.subr.bf16.mxu0 0
      %383 = vmatpush1.bf16.msra.mxu0 %v364
      %384 = vmatprep.subr.bf16.mxu0 0
      %385 = vmatpush1.bf16.msra.mxu0 %v363
      %386 = vmatprep.subr.bf16.mxu0 0
      %387 = vmatpush1.bf16.msra.mxu0 %v362
      %388 = vmatprep.subr.bf16.mxu0 0
      %389 = vmatpush1.bf16.msra.mxu0 %v361
      %390 = vmatprep.subr.bf16.mxu0 0
      %391 = vmatpush1.bf16.msra.mxu0 %v360
      %392 = vmatprep.subr.bf16.mxu0 0
      %393 = vmatpush2.bf16.msra.mxu0 0
      %394 = vmatprep.subr.bf16.mxu0 0
      %395 = vmatpush2.bf16.msra.mxu0 0
      %396 = vmatprep.subr.bf16.mxu0 0
      %397 = vmatpush2.bf16.msra.mxu0 0
      %398 = vmatprep.subr.bf16.mxu0 0
      %399 = vmatpush2.bf16.msra.mxu0 0
      %400 = vmatprep.subr.bf16.mxu0 0
      %401 = vmatpush2.bf16.msra.mxu0 0
      %402 = vmatprep.subr.bf16.mxu0 0
      %403 = vmatpush2.bf16.msra.mxu0 0
      %404 = vmatprep.subr.bf16.mxu0 0
      %405 = vmatpush2.bf16.msra.mxu0 0
      %406 = vmatprep.subr.bf16.mxu0 0
      %407 = vmatpush2.bf16.msra.mxu0 0
      %408 = vmatprep.mubr.bf16.mxu0 0
      %409 = vmatmul.mubr.bf16.gmra.mxu0 %v326
      %v410 = vpop.f32.mrf.mxu0
      %v411 = vadd.f32 0.0, %v410
      %v412 = vpop.f32.mrf.mxu0
      %v413 = vpop.f32.mrf.mxu0
      %v414 = vadd.f32 0.0, %v413
      %v415 = vpop.f32.mrf.mxu0
      %416 = vdwg.mxu0
      %v421 = vcombine.low %v170, %v171
      %v422 = vcombine.low %v172, %v173
      %v424 = vunpack.c.l.s4 1983009808
      %v425 = vunpack.c.0.s8 %v424
      %v426 = vlaneseq
      %v427 = vshrl.u32 %v426, 7
      %v428 = vsub.s32 %v425, %v427
      %v429 = vrot.slane %v421, %v428
      %v431 = vunpack.c.l.s4 1983009808
      %v432 = vunpack.c.0.s8 %v431
      %v433 = vlaneseq
      %v434 = vshrl.u32 %v433, 7
      %v435 = vsub.s32 %v432, %v434
      %v436 = vrot.slane %v422, %v435
      %v437 = vcombine.low %v429, %v436
      %v455 = vunpack.c.l.b16 %v174
      %v456 = vunpack.c.l.b16 %v175
      %v457 = vunpack.c.l.b16 %v176
      %v458 = vunpack.c.l.b16 %v177
      %v459 = vunpack.c.l.b16 %v178
      %v460 = vunpack.c.l.b16 %v179
      %v461 = vunpack.c.l.b16 %v180
      %v462 = vunpack.c.l.b16 %v181
      %v463 = vunpack.c.l.b16 %v182
      %v464 = vunpack.c.l.b16 %v183
      %v465 = vunpack.c.l.b16 %v184
      %v466 = vunpack.c.l.b16 %v185
      %v467 = vunpack.c.l.b16 %v186
      %v468 = vunpack.c.l.b16 %v187
      %v469 = vunpack.c.l.b16 %v188
      %v470 = vunpack.c.l.b16 %v189
      %v471 = vpack.c.b16 %v456, %v455
      %v472 = vpack.c.b16 %v458, %v457
      %v473 = vpack.c.b16 %v460, %v459
      %v474 = vpack.c.b16 %v462, %v461
      %v475 = vpack.c.b16 %v464, %v463
      %v476 = vpack.c.b16 %v466, %v465
      %v477 = vpack.c.b16 %v468, %v467
      %v478 = vpack.c.b16 %v470, %v469
      %487 = vmatprep.subr.bf16.mxu0 0
      %488 = vmatpush1.bf16.msra.mxu0 %v478
      %489 = vmatprep.subr.bf16.mxu0 0
      %490 = vmatpush1.bf16.msra.mxu0 %v477
      %491 = vmatprep.subr.bf16.mxu0 0
      %492 = vmatpush1.bf16.msra.mxu0 %v476
      %493 = vmatprep.subr.bf16.mxu0 0
      %494 = vmatpush1.bf16.msra.mxu0 %v475
      %495 = vmatprep.subr.bf16.mxu0 0
      %496 = vmatpush1.bf16.msra.mxu0 %v474
      %497 = vmatprep.subr.bf16.mxu0 0
      %498 = vmatpush1.bf16.msra.mxu0 %v473
      %499 = vmatprep.subr.bf16.mxu0 0
      %500 = vmatpush1.bf16.msra.mxu0 %v472
      %501 = vmatprep.subr.bf16.mxu0 0
      %502 = vmatpush1.bf16.msra.mxu0 %v471
      %503 = vmatprep.subr.bf16.mxu0 0
      %504 = vmatpush2.bf16.msra.mxu0 0
      %505 = vmatprep.subr.bf16.mxu0 0
      %506 = vmatpush2.bf16.msra.mxu0 0
      %507 = vmatprep.subr.bf16.mxu0 0
      %508 = vmatpush2.bf16.msra.mxu0 0
      %509 = vmatprep.subr.bf16.mxu0 0
      %510 = vmatpush2.bf16.msra.mxu0 0
      %511 = vmatprep.subr.bf16.mxu0 0
      %512 = vmatpush2.bf16.msra.mxu0 0
      %513 = vmatprep.subr.bf16.mxu0 0
      %514 = vmatpush2.bf16.msra.mxu0 0
      %515 = vmatprep.subr.bf16.mxu0 0
      %516 = vmatpush2.bf16.msra.mxu0 0
      %517 = vmatprep.subr.bf16.mxu0 0
      %518 = vmatpush2.bf16.msra.mxu0 0
      %519 = vmatprep.mubr.bf16.mxu0 0
      %520 = vmatmul.mubr.bf16.gmra.mxu0 %v437
      %v521 = vpop.f32.mrf.mxu0
      %v522 = vadd.f32 %v411, %v521
      %v523 = vpop.f32.mrf.mxu0
      %v524 = vpop.f32.mrf.mxu0
      %v525 = vadd.f32 %v414, %v524
      %v526 = vpop.f32.mrf.mxu0
      %527 = vdwg.mxu0
      %v528 = vld [vmem:[%s164] sm:$0x6]
      %v529 = vld [vmem:[%s164 + $0x4] sm:$0x6]
      %v530 = vld [vmem:[%s164 + $0x8] sm:$0x6]
      %v531 = vld [vmem:[%s164 + $0xc] sm:$0x6]
      %v537 = vunpack.c.l.s4 1983009808
      %v538 = vunpack.c.0.s8 %v537
      %v539 = vlaneseq
      %v540 = vshrl.u32 %v539, 7
      %v541 = vsub.s32 %v538, %v540
      %v542 = vrot.slane %v528, %v541
      %v543 = vcombine.high %v542, %v542
      %v545 = vunpack.c.l.s4 1983009808
      %v546 = vunpack.c.0.s8 %v545
      %v547 = vlaneseq
      %v548 = vshrl.u32 %v547, 7
      %v549 = vsub.s32 %v546, %v548
      %v550 = vrot.slane %v529, %v549
      %v551 = vcombine.high %v550, %v550
      %v553 = vunpack.c.l.s4 1983009808
      %v554 = vunpack.c.0.s8 %v553
      %v555 = vlaneseq
      %v556 = vshrl.u32 %v555, 7
      %v557 = vsub.s32 %v554, %v556
      %v558 = vrot.slane %v530, %v557
      %v559 = vcombine.high %v558, %v558
      %v561 = vunpack.c.l.s4 1983009808
      %v562 = vunpack.c.0.s8 %v561
      %v563 = vlaneseq
      %v564 = vshrl.u32 %v563, 7
      %v565 = vsub.s32 %v562, %v564
      %v566 = vrot.slane %v531, %v565
      %v567 = vcombine.high %v566, %v566
      %vm568 = vcmask 1040384
      %vm569 = vcmask 1042434
      %vm570 = vmor %vm568, %vm569
      %vm571 = vcmask 1044484
      %vm572 = vmor %vm570, %vm571
      %vm573 = vcmask 1046534
      %vm574 = vmor %vm572, %vm573
      %v575 = vrot.slane %v542, 7
      %v576 = vrot.slane %v575, 2
      %v577 = vrot.slane %v543, 7
      %v578 = vsel %vm574, %v576, %v577
      %v579 = vrot.slane %v550, 7
      %v580 = vrot.slane %v579, 2
      %v581 = vrot.slane %v551, 7
      %v582 = vsel %vm574, %v580, %v581
      %v583 = vrot.slane %v558, 7
      %v584 = vrot.slane %v583, 2
      %v585 = vrot.slane %v559, 7
      %v586 = vsel %vm574, %v584, %v585
      %v587 = vrot.slane %v566, 7
      %v588 = vrot.slane %v587, 2
      %v589 = vrot.slane %v567, 7
      %v590 = vsel %vm574, %v588, %v589
      %s591 = scalar_lea.vmem %s1, 128
      %v592 = vld [vmem:[%s591] sm:$0xf]
      %v593 = vld [vmem:[%s591 + $0x4] sm:$0xf]
      %v594 = vld [vmem:[%s591 + $0x8] sm:$0xf]
      %v595 = vld [vmem:[%s591 + $0xc] sm:$0xf]
      %v596 = vld [vmem:[%s591 + $0x10] sm:$0xf]
      %v597 = vld [vmem:[%s591 + $0x14] sm:$0xf]
      %v598 = vld [vmem:[%s591 + $0x18] sm:$0xf]
      %v599 = vld [vmem:[%s591 + $0x1c] sm:$0xf]
      %v600 = vld [vmem:[%s591 + $0x20] sm:$0xf]
      %v601 = vld [vmem:[%s591 + $0x24] sm:$0xf]
      %v602 = vld [vmem:[%s591 + $0x28] sm:$0xf]
      %v603 = vld [vmem:[%s591 + $0x2c] sm:$0xf]
      %v604 = vld [vmem:[%s591 + $0x30] sm:$0xf]
      %v605 = vld [vmem:[%s591 + $0x34] sm:$0xf]
      %v606 = vld [vmem:[%s591 + $0x38] sm:$0xf]
      %v607 = vld [vmem:[%s591 + $0x3c] sm:$0xf]
      %v608 = vcombine.low %v578, %v582
      %v609 = vcombine.low %v586, %v590
      %v611 = vunpack.c.l.s4 1983009808
      %v612 = vunpack.c.0.s8 %v611
      %v613 = vlaneseq
      %v614 = vshrl.u32 %v613, 7
      %v615 = vsub.s32 %v612, %v614
      %v616 = vrot.slane %v608, %v615
      %v618 = vunpack.c.l.s4 1983009808
      %v619 = vunpack.c.0.s8 %v618
      %v620 = vlaneseq
      %v621 = vshrl.u32 %v620, 7
      %v622 = vsub.s32 %v619, %v621
      %v623 = vrot.slane %v609, %v622
      %v624 = vcombine.low %v616, %v623
      %v642 = vunpack.c.l.b16 %v592
      %v643 = vunpack.c.l.b16 %v593
      %v644 = vunpack.c.l.b16 %v594
      %v645 = vunpack.c.l.b16 %v595
      %v646 = vunpack.c.l.b16 %v596
      %v647 = vunpack.c.l.b16 %v597
      %v648 = vunpack.c.l.b16 %v598
      %v649 = vunpack.c.l.b16 %v599
      %v650 = vunpack.c.l.b16 %v600
      %v651 = vunpack.c.l.b16 %v601
      %v652 = vunpack.c.l.b16 %v602
      %v653 = vunpack.c.l.b16 %v603
      %v654 = vunpack.c.l.b16 %v604
      %v655 = vunpack.c.l.b16 %v605
      %v656 = vunpack.c.l.b16 %v606
      %v657 = vunpack.c.l.b16 %v607
      %v658 = vpack.c.b16 %v643, %v642
      %v659 = vpack.c.b16 %v645, %v644
      %v660 = vpack.c.b16 %v647, %v646
      %v661 = vpack.c.b16 %v649, %v648
      %v662 = vpack.c.b16 %v651, %v650
      %v663 = vpack.c.b16 %v653, %v652
      %v664 = vpack.c.b16 %v655, %v654
      %v665 = vpack.c.b16 %v657, %v656
      %674 = vmatprep.subr.bf16.mxu0 0
      %675 = vmatpush1.bf16.msra.mxu0 %v665
      %676 = vmatprep.subr.bf16.mxu0 0
      %677 = vmatpush1.bf16.msra.mxu0 %v664
      %678 = vmatprep.subr.bf16.mxu0 0
      %679 = vmatpush1.bf16.msra.mxu0 %v663
      %680 = vmatprep.subr.bf16.mxu0 0
      %681 = vmatpush1.bf16.msra.mxu0 %v662
      %682 = vmatprep.subr.bf16.mxu0 0
      %683 = vmatpush1.bf16.msra.mxu0 %v661
      %684 = vmatprep.subr.bf16.mxu0 0
      %685 = vmatpush1.bf16.msra.mxu0 %v660
      %686 = vmatprep.subr.bf16.mxu0 0
      %687 = vmatpush1.bf16.msra.mxu0 %v659
      %688 = vmatprep.subr.bf16.mxu0 0
      %689 = vmatpush1.bf16.msra.mxu0 %v658
      %690 = vmatprep.subr.bf16.mxu0 0
      %691 = vmatpush2.bf16.msra.mxu0 0
      %692 = vmatprep.subr.bf16.mxu0 0
      %693 = vmatpush2.bf16.msra.mxu0 0
      %694 = vmatprep.subr.bf16.mxu0 0
      %695 = vmatpush2.bf16.msra.mxu0 0
      %696 = vmatprep.subr.bf16.mxu0 0
      %697 = vmatpush2.bf16.msra.mxu0 0
      %698 = vmatprep.subr.bf16.mxu0 0
      %699 = vmatpush2.bf16.msra.mxu0 0
      %700 = vmatprep.subr.bf16.mxu0 0
      %701 = vmatpush2.bf16.msra.mxu0 0
      %702 = vmatprep.subr.bf16.mxu0 0
      %703 = vmatpush2.bf16.msra.mxu0 0
      %704 = vmatprep.subr.bf16.mxu0 0
      %705 = vmatpush2.bf16.msra.mxu0 0
      %706 = vmatprep.mubr.bf16.mxu0 0
      %707 = vmatmul.mubr.bf16.gmra.mxu0 %v624
      %v708 = vpop.f32.mrf.mxu0
      %v709 = vadd.f32 0.0, %v708
      %v710 = vpop.f32.mrf.mxu0
      %v711 = vpop.f32.mrf.mxu0
      %v712 = vadd.f32 0.0, %v711
      %v713 = vpop.f32.mrf.mxu0
      %714 = vdwg.mxu0
      %v715 = vadd.f32 %v522, %v709
      %v716 = vadd.f32 %v525, %v712
      %s717 = scalar_lea.vmem %s164, 4
      %v718 = vld [vmem:[%s717] sm:$0x3]
      %v719 = vld [vmem:[%s717 + $0x4] sm:$0x3]
      %v720 = vld [vmem:[%s717 + $0x8] sm:$0x3]
      %v721 = vld [vmem:[%s717 + $0xc] sm:$0x3]
      %s722 = scalar_lea.vmem %s1, 192
      %v723 = vld [vmem:[%s722] sm:$0xf]
      %v724 = vld [vmem:[%s722 + $0x4] sm:$0xf]
      %v725 = vld [vmem:[%s722 + $0x8] sm:$0xf]
      %v726 = vld [vmem:[%s722 + $0xc] sm:$0xf]
      %v727 = vld [vmem:[%s722 + $0x10] sm:$0xf]
      %v728 = vld [vmem:[%s722 + $0x14] sm:$0xf]
      %v729 = vld [vmem:[%s722 + $0x18] sm:$0xf]
      %v730 = vld [vmem:[%s722 + $0x1c] sm:$0xf]
      %v731 = vld [vmem:[%s722 + $0x20] sm:$0xf]
      %v732 = vld [vmem:[%s722 + $0x24] sm:$0xf]
      %v733 = vld [vmem:[%s722 + $0x28] sm:$0xf]
      %v734 = vld [vmem:[%s722 + $0x2c] sm:$0xf]
      %v735 = vld [vmem:[%s722 + $0x30] sm:$0xf]
      %v736 = vld [vmem:[%s722 + $0x34] sm:$0xf]
      %v737 = vld [vmem:[%s722 + $0x38] sm:$0xf]
      %v738 = vld [vmem:[%s722 + $0x3c] sm:$0xf]
      %v743 = vcombine.low %v718, %v719
      %v744 = vcombine.low %v720, %v721
      %v746 = vunpack.c.l.s4 1983009808
      %v747 = vunpack.c.0.s8 %v746
      %v748 = vlaneseq
      %v749 = vshrl.u32 %v748, 7
      %v750 = vsub.s32 %v747, %v749
      %v751 = vrot.slane %v743, %v750
      %v753 = vunpack.c.l.s4 1983009808
      %v754 = vunpack.c.0.s8 %v753
      %v755 = vlaneseq
      %v756 = vshrl.u32 %v755, 7
      %v757 = vsub.s32 %v754, %v756
      %v758 = vrot.slane %v744, %v757
      %v759 = vcombine.low %v751, %v758
      %v777 = vunpack.c.l.b16 %v723
      %v778 = vunpack.c.l.b16 %v724
      %v779 = vunpack.c.l.b16 %v725
      %v780 = vunpack.c.l.b16 %v726
      %v781 = vunpack.c.l.b16 %v727
      %v782 = vunpack.c.l.b16 %v728
      %v783 = vunpack.c.l.b16 %v729
      %v784 = vunpack.c.l.b16 %v730
      %v785 = vunpack.c.l.b16 %v731
      %v786 = vunpack.c.l.b16 %v732
      %v787 = vunpack.c.l.b16 %v733
      %v788 = vunpack.c.l.b16 %v734
      %v789 = vunpack.c.l.b16 %v735
      %v790 = vunpack.c.l.b16 %v736
      %v791 = vunpack.c.l.b16 %v737
      %v792 = vunpack.c.l.b16 %v738
      %v793 = vpack.c.b16 %v778, %v777
      %v794 = vpack.c.b16 %v780, %v779
      %v795 = vpack.c.b16 %v782, %v781
      %v796 = vpack.c.b16 %v784, %v783
      %v797 = vpack.c.b16 %v786, %v785
      %v798 = vpack.c.b16 %v788, %v787
      %v799 = vpack.c.b16 %v790, %v789
      %v800 = vpack.c.b16 %v792, %v791
      %809 = vmatprep.subr.bf16.mxu0 0
      %810 = vmatpush1.bf16.msra.mxu0 %v800
      %811 = vmatprep.subr.bf16.mxu0 0
      %812 = vmatpush1.bf16.msra.mxu0 %v799
      %813 = vmatprep.subr.bf16.mxu0 0
      %814 = vmatpush1.bf16.msra.mxu0 %v798
      %815 = vmatprep.subr.bf16.mxu0 0
      %816 = vmatpush1.bf16.msra.mxu0 %v797
      %817 = vmatprep.subr.bf16.mxu0 0
      %818 = vmatpush1.bf16.msra.mxu0 %v796
      %819 = vmatprep.subr.bf16.mxu0 0
      %820 = vmatpush1.bf16.msra.mxu0 %v795
      %821 = vmatprep.subr.bf16.mxu0 0
      %822 = vmatpush1.bf16.msra.mxu0 %v794
      %823 = vmatprep.subr.bf16.mxu0 0
      %824 = vmatpush1.bf16.msra.mxu0 %v793
      %825 = vmatprep.subr.bf16.mxu0 0
      %826 = vmatpush2.bf16.msra.mxu0 0
      %827 = vmatprep.subr.bf16.mxu0 0
      %828 = vmatpush2.bf16.msra.mxu0 0
      %829 = vmatprep.subr.bf16.mxu0 0
      %830 = vmatpush2.bf16.msra.mxu0 0
      %831 = vmatprep.subr.bf16.mxu0 0
      %832 = vmatpush2.bf16.msra.mxu0 0
      %833 = vmatprep.subr.bf16.mxu0 0
      %834 = vmatpush2.bf16.msra.mxu0 0
      %835 = vmatprep.subr.bf16.mxu0 0
      %836 = vmatpush2.bf16.msra.mxu0 0
      %837 = vmatprep.subr.bf16.mxu0 0
      %838 = vmatpush2.bf16.msra.mxu0 0
      %839 = vmatprep.subr.bf16.mxu0 0
      %840 = vmatpush2.bf16.msra.mxu0 0
      %841 = vmatprep.mubr.bf16.mxu0 0
      %842 = vmatmul.mubr.bf16.gmra.mxu0 %v759
      %v843 = vpop.f32.mrf.mxu0
      %v844 = vadd.f32 0.0, %v843
      %v845 = vpop.f32.mrf.mxu0
      %v846 = vpop.f32.mrf.mxu0
      %v847 = vadd.f32 0.0, %v846
      %v848 = vpop.f32.mrf.mxu0
      %849 = vdwg.mxu0
      %v850 = vadd.f32 %v715, %v844
      %v851 = vadd.f32 %v716, %v847
      %v852 = vld [vmem:[%s717] sm:$0x7]
      %v853 = vld [vmem:[%s717 + $0x4] sm:$0x7]
      %v854 = vld [vmem:[%s717 + $0x8] sm:$0x7]
      %v855 = vld [vmem:[%s717 + $0xc] sm:$0x7]
      %v861 = vunpack.c.l.s4 1983009808
      %v862 = vunpack.c.0.s8 %v861
      %v863 = vlaneseq
      %v864 = vshrl.u32 %v863, 7
      %v865 = vsub.s32 %v862, %v864
      %v866 = vrot.slane %v852, %v865
      %v867 = vcombine.high %v866, %v866
      %v869 = vunpack.c.l.s4 1983009808
      %v870 = vunpack.c.0.s8 %v869
      %v871 = vlaneseq
      %v872 = vshrl.u32 %v871, 7
      %v873 = vsub.s32 %v870, %v872
      %v874 = vrot.slane %v853, %v873
      %v875 = vcombine.high %v874, %v874
      %v877 = vunpack.c.l.s4 1983009808
      %v878 = vunpack.c.0.s8 %v877
      %v879 = vlaneseq
      %v880 = vshrl.u32 %v879, 7
      %v881 = vsub.s32 %v878, %v880
      %v882 = vrot.slane %v854, %v881
      %v883 = vcombine.high %v882, %v882
      %v885 = vunpack.c.l.s4 1983009808
      %v886 = vunpack.c.0.s8 %v885
      %v887 = vlaneseq
      %v888 = vshrl.u32 %v887, 7
      %v889 = vsub.s32 %v886, %v888
      %v890 = vrot.slane %v855, %v889
      %v891 = vcombine.high %v890, %v890
      %v893 = vshrl.u32 %v866, 16
      %v895 = vrot.slane %v893, 6
      %v896 = vshll.u32 %v866, 16
      %v898 = vrot.slane %v896, 7
      %v899 = vor.u32 %v895, %v898
      %v900 = vrot.slane %v899, 2
      %v902 = vshll.u32 %v867, 16
      %v904 = vrot.slane %v902, 7
      %v905 = vsel %vm236, %v900, %v904
      %v907 = vshrl.u32 %v874, 16
      %v909 = vrot.slane %v907, 6
      %v910 = vshll.u32 %v874, 16
      %v912 = vrot.slane %v910, 7
      %v913 = vor.u32 %v909, %v912
      %v914 = vrot.slane %v913, 2
      %v916 = vshll.u32 %v875, 16
      %v918 = vrot.slane %v916, 7
      %v919 = vsel %vm236, %v914, %v918
      %v921 = vshrl.u32 %v882, 16
      %v923 = vrot.slane %v921, 6
      %v924 = vshll.u32 %v882, 16
      %v926 = vrot.slane %v924, 7
      %v927 = vor.u32 %v923, %v926
      %v928 = vrot.slane %v927, 2
      %v930 = vshll.u32 %v883, 16
      %v932 = vrot.slane %v930, 7
      %v933 = vsel %vm236, %v928, %v932
      %v935 = vshrl.u32 %v890, 16
      %v937 = vrot.slane %v935, 6
      %v938 = vshll.u32 %v890, 16
      %v940 = vrot.slane %v938, 7
      %v941 = vor.u32 %v937, %v940
      %v942 = vrot.slane %v941, 2
      %v944 = vshll.u32 %v891, 16
      %v946 = vrot.slane %v944, 7
      %v947 = vsel %vm236, %v942, %v946
      %s948 = scalar_lea.vmem %s1, 256
      %v949 = vld [vmem:[%s948] sm:$0xf]
      %v950 = vld [vmem:[%s948 + $0x4] sm:$0xf]
      %v951 = vld [vmem:[%s948 + $0x8] sm:$0xf]
      %v952 = vld [vmem:[%s948 + $0xc] sm:$0xf]
      %v953 = vld [vmem:[%s948 + $0x10] sm:$0xf]
      %v954 = vld [vmem:[%s948 + $0x14] sm:$0xf]
      %v955 = vld [vmem:[%s948 + $0x18] sm:$0xf]
      %v956 = vld [vmem:[%s948 + $0x1c] sm:$0xf]
      %v957 = vld [vmem:[%s948 + $0x20] sm:$0xf]
      %v958 = vld [vmem:[%s948 + $0x24] sm:$0xf]
      %v959 = vld [vmem:[%s948 + $0x28] sm:$0xf]
      %v960 = vld [vmem:[%s948 + $0x2c] sm:$0xf]
      %v961 = vld [vmem:[%s948 + $0x30] sm:$0xf]
      %v962 = vld [vmem:[%s948 + $0x34] sm:$0xf]
      %v963 = vld [vmem:[%s948 + $0x38] sm:$0xf]
      %v964 = vld [vmem:[%s948 + $0x3c] sm:$0xf]
      %v965 = vcombine.low %v905, %v919
      %v966 = vcombine.low %v933, %v947
      %v968 = vunpack.c.l.s4 1983009808
      %v969 = vunpack.c.0.s8 %v968
      %v970 = vlaneseq
      %v971 = vshrl.u32 %v970, 7
      %v972 = vsub.s32 %v969, %v971
      %v973 = vrot.slane %v965, %v972
      %v975 = vunpack.c.l.s4 1983009808
      %v976 = vunpack.c.0.s8 %v975
      %v977 = vlaneseq
      %v978 = vshrl.u32 %v977, 7
      %v979 = vsub.s32 %v976, %v978
      %v980 = vrot.slane %v966, %v979
      %v981 = vcombine.low %v973, %v980
      %v999 = vunpack.c.l.b16 %v949
      %v1000 = vunpack.c.l.b16 %v950
      %v1001 = vunpack.c.l.b16 %v951
      %v1002 = vunpack.c.l.b16 %v952
      %v1003 = vunpack.c.l.b16 %v953
      %v1004 = vunpack.c.l.b16 %v954
      %v1005 = vunpack.c.l.b16 %v955
      %v1006 = vunpack.c.l.b16 %v956
      %v1007 = vunpack.c.l.b16 %v957
      %v1008 = vunpack.c.l.b16 %v958
      %v1009 = vunpack.c.l.b16 %v959
      %v1010 = vunpack.c.l.b16 %v960
      %v1011 = vunpack.c.l.b16 %v961
      %v1012 = vunpack.c.l.b16 %v962
      %v1013 = vunpack.c.l.b16 %v963
      %v1014 = vunpack.c.l.b16 %v964
      %v1015 = vpack.c.b16 %v1000, %v999
      %v1016 = vpack.c.b16 %v1002, %v1001
      %v1017 = vpack.c.b16 %v1004, %v1003
      %v1018 = vpack.c.b16 %v1006, %v1005
      %v1019 = vpack.c.b16 %v1008, %v1007
      %v1020 = vpack.c.b16 %v1010, %v1009
      %v1021 = vpack.c.b16 %v1012, %v1011
      %v1022 = vpack.c.b16 %v1014, %v1013
      %1031 = vmatprep.subr.bf16.mxu0 0
      %1032 = vmatpush1.bf16.msra.mxu0 %v1022
      %1033 = vmatprep.subr.bf16.mxu0 0
      %1034 = vmatpush1.bf16.msra.mxu0 %v1021
      %1035 = vmatprep.subr.bf16.mxu0 0
      %1036 = vmatpush1.bf16.msra.mxu0 %v1020
      %1037 = vmatprep.subr.bf16.mxu0 0
      %1038 = vmatpush1.bf16.msra.mxu0 %v1019
      %1039 = vmatprep.subr.bf16.mxu0 0
      %1040 = vmatpush1.bf16.msra.mxu0 %v1018
      %1041 = vmatprep.subr.bf16.mxu0 0
      %1042 = vmatpush1.bf16.msra.mxu0 %v1017
      %1043 = vmatprep.subr.bf16.mxu0 0
      %1044 = vmatpush1.bf16.msra.mxu0 %v1016
      %1045 = vmatprep.subr.bf16.mxu0 0
      %1046 = vmatpush1.bf16.msra.mxu0 %v1015
      %1047 = vmatprep.subr.bf16.mxu0 0
      %1048 = vmatpush2.bf16.msra.mxu0 0
      %1049 = vmatprep.subr.bf16.mxu0 0
      %1050 = vmatpush2.bf16.msra.mxu0 0
      %1051 = vmatprep.subr.bf16.mxu0 0
      %1052 = vmatpush2.bf16.msra.mxu0 0
      %1053 = vmatprep.subr.bf16.mxu0 0
      %1054 = vmatpush2.bf16.msra.mxu0 0
      %1055 = vmatprep.subr.bf16.mxu0 0
      %1056 = vmatpush2.bf16.msra.mxu0 0
      %1057 = vmatprep.subr.bf16.mxu0 0
      %1058 = vmatpush2.bf16.msra.mxu0 0
      %1059 = vmatprep.subr.bf16.mxu0 0
      %1060 = vmatpush2.bf16.msra.mxu0 0
      %1061 = vmatprep.subr.bf16.mxu0 0
      %1062 = vmatpush2.bf16.msra.mxu0 0
      %1063 = vmatprep.mubr.bf16.mxu0 0
      %1064 = vmatmul.mubr.bf16.gmra.mxu0 %v981
      %v1065 = vpop.f32.mrf.mxu0
      %v1066 = vadd.f32 0.0, %v1065
      %v1067 = vpop.f32.mrf.mxu0
      %v1068 = vpop.f32.mrf.mxu0
      %v1069 = vadd.f32 0.0, %v1068
      %v1070 = vpop.f32.mrf.mxu0
      %1071 = vdwg.mxu0
      %v1072 = vadd.f32 %v850, %v1066
      %v1073 = vadd.f32 %v851, %v1069
      %v1074 = vld [vmem:[%s717] sm:$0x6]
      %v1075 = vld [vmem:[%s717 + $0x4] sm:$0x6]
      %v1076 = vld [vmem:[%s717 + $0x8] sm:$0x6]
      %v1077 = vld [vmem:[%s717 + $0xc] sm:$0x6]
      %v1083 = vunpack.c.l.s4 1983009808
      %v1084 = vunpack.c.0.s8 %v1083
      %v1085 = vlaneseq
      %v1086 = vshrl.u32 %v1085, 7
      %v1087 = vsub.s32 %v1084, %v1086
      %v1088 = vrot.slane %v1074, %v1087
      %v1089 = vcombine.high %v1088, %v1088
      %v1091 = vunpack.c.l.s4 1983009808
      %v1092 = vunpack.c.0.s8 %v1091
      %v1093 = vlaneseq
      %v1094 = vshrl.u32 %v1093, 7
      %v1095 = vsub.s32 %v1092, %v1094
      %v1096 = vrot.slane %v1075, %v1095
      %v1097 = vcombine.high %v1096, %v1096
      %v1099 = vunpack.c.l.s4 1983009808
      %v1100 = vunpack.c.0.s8 %v1099
      %v1101 = vlaneseq
      %v1102 = vshrl.u32 %v1101, 7
      %v1103 = vsub.s32 %v1100, %v1102
      %v1104 = vrot.slane %v1076, %v1103
      %v1105 = vcombine.high %v1104, %v1104
      %v1107 = vunpack.c.l.s4 1983009808
      %v1108 = vunpack.c.0.s8 %v1107
      %v1109 = vlaneseq
      %v1110 = vshrl.u32 %v1109, 7
      %v1111 = vsub.s32 %v1108, %v1110
      %v1112 = vrot.slane %v1077, %v1111
      %v1113 = vcombine.high %v1112, %v1112
      %v1114 = vrot.slane %v1088, 7
      %v1115 = vrot.slane %v1114, 2
      %v1116 = vrot.slane %v1089, 7
      %v1117 = vsel %vm574, %v1115, %v1116
      %v1118 = vrot.slane %v1096, 7
      %v1119 = vrot.slane %v1118, 2
      %v1120 = vrot.slane %v1097, 7
      %v1121 = vsel %vm574, %v1119, %v1120
      %v1122 = vrot.slane %v1104, 7
      %v1123 = vrot.slane %v1122, 2
      %v1124 = vrot.slane %v1105, 7
      %v1125 = vsel %vm574, %v1123, %v1124
      %v1126 = vrot.slane %v1112, 7
      %v1127 = vrot.slane %v1126, 2
      %v1128 = vrot.slane %v1113, 7
      %v1129 = vsel %vm574, %v1127, %v1128
      %s1130 = scalar_lea.vmem %s1, 320
      %v1131 = vld [vmem:[%s1130] sm:$0xf]
      %v1132 = vld [vmem:[%s1130 + $0x4] sm:$0xf]
      %v1133 = vld [vmem:[%s1130 + $0x8] sm:$0xf]
      %v1134 = vld [vmem:[%s1130 + $0xc] sm:$0xf]
      %v1135 = vld [vmem:[%s1130 + $0x10] sm:$0xf]
      %v1136 = vld [vmem:[%s1130 + $0x14] sm:$0xf]
      %v1137 = vld [vmem:[%s1130 + $0x18] sm:$0xf]
      %v1138 = vld [vmem:[%s1130 + $0x1c] sm:$0xf]
      %v1139 = vld [vmem:[%s1130 + $0x20] sm:$0xf]
      %v1140 = vld [vmem:[%s1130 + $0x24] sm:$0xf]
      %v1141 = vld [vmem:[%s1130 + $0x28] sm:$0xf]
      %v1142 = vld [vmem:[%s1130 + $0x2c] sm:$0xf]
      %v1143 = vld [vmem:[%s1130 + $0x30] sm:$0xf]
      %v1144 = vld [vmem:[%s1130 + $0x34] sm:$0xf]
      %v1145 = vld [vmem:[%s1130 + $0x38] sm:$0xf]
      %v1146 = vld [vmem:[%s1130 + $0x3c] sm:$0xf]
      %v1147 = vcombine.low %v1117, %v1121
      %v1148 = vcombine.low %v1125, %v1129
      %v1150 = vunpack.c.l.s4 1983009808
      %v1151 = vunpack.c.0.s8 %v1150
      %v1152 = vlaneseq
      %v1153 = vshrl.u32 %v1152, 7
      %v1154 = vsub.s32 %v1151, %v1153
      %v1155 = vrot.slane %v1147, %v1154
      %v1157 = vunpack.c.l.s4 1983009808
      %v1158 = vunpack.c.0.s8 %v1157
      %v1159 = vlaneseq
      %v1160 = vshrl.u32 %v1159, 7
      %v1161 = vsub.s32 %v1158, %v1160
      %v1162 = vrot.slane %v1148, %v1161
      %v1163 = vcombine.low %v1155, %v1162
      %v1181 = vunpack.c.l.b16 %v1131
      %v1182 = vunpack.c.l.b16 %v1132
      %v1183 = vunpack.c.l.b16 %v1133
      %v1184 = vunpack.c.l.b16 %v1134
      %v1185 = vunpack.c.l.b16 %v1135
      %v1186 = vunpack.c.l.b16 %v1136
      %v1187 = vunpack.c.l.b16 %v1137
      %v1188 = vunpack.c.l.b16 %v1138
      %v1189 = vunpack.c.l.b16 %v1139
      %v1190 = vunpack.c.l.b16 %v1140
      %v1191 = vunpack.c.l.b16 %v1141
      %v1192 = vunpack.c.l.b16 %v1142
      %v1193 = vunpack.c.l.b16 %v1143
      %v1194 = vunpack.c.l.b16 %v1144
      %v1195 = vunpack.c.l.b16 %v1145
      %v1196 = vunpack.c.l.b16 %v1146
      %v1197 = vpack.c.b16 %v1182, %v1181
      %v1198 = vpack.c.b16 %v1184, %v1183
      %v1199 = vpack.c.b16 %v1186, %v1185
      %v1200 = vpack.c.b16 %v1188, %v1187
      %v1201 = vpack.c.b16 %v1190, %v1189
      %v1202 = vpack.c.b16 %v1192, %v1191
      %v1203 = vpack.c.b16 %v1194, %v1193
      %v1204 = vpack.c.b16 %v1196, %v1195
      %1213 = vmatprep.subr.bf16.mxu0 0
      %1214 = vmatpush1.bf16.msra.mxu0 %v1204
      %1215 = vmatprep.subr.bf16.mxu0 0
      %1216 = vmatpush1.bf16.msra.mxu0 %v1203
      %1217 = vmatprep.subr.bf16.mxu0 0
      %1218 = vmatpush1.bf16.msra.mxu0 %v1202
      %1219 = vmatprep.subr.bf16.mxu0 0
      %1220 = vmatpush1.bf16.msra.mxu0 %v1201
      %1221 = vmatprep.subr.bf16.mxu0 0
      %1222 = vmatpush1.bf16.msra.mxu0 %v1200
      %1223 = vmatprep.subr.bf16.mxu0 0
      %1224 = vmatpush1.bf16.msra.mxu0 %v1199
      %1225 = vmatprep.subr.bf16.mxu0 0
      %1226 = vmatpush1.bf16.msra.mxu0 %v1198
      %1227 = vmatprep.subr.bf16.mxu0 0
      %1228 = vmatpush1.bf16.msra.mxu0 %v1197
      %1229 = vmatprep.subr.bf16.mxu0 0
      %1230 = vmatpush2.bf16.msra.mxu0 0
      %1231 = vmatprep.subr.bf16.mxu0 0
      %1232 = vmatpush2.bf16.msra.mxu0 0
      %1233 = vmatprep.subr.bf16.mxu0 0
      %1234 = vmatpush2.bf16.msra.mxu0 0
      %1235 = vmatprep.subr.bf16.mxu0 0
      %1236 = vmatpush2.bf16.msra.mxu0 0
      %1237 = vmatprep.subr.bf16.mxu0 0
      %1238 = vmatpush2.bf16.msra.mxu0 0
      %1239 = vmatprep.subr.bf16.mxu0 0
      %1240 = vmatpush2.bf16.msra.mxu0 0
      %1241 = vmatprep.subr.bf16.mxu0 0
      %1242 = vmatpush2.bf16.msra.mxu0 0
      %1243 = vmatprep.subr.bf16.mxu0 0
      %1244 = vmatpush2.bf16.msra.mxu0 0
      %1245 = vmatprep.mubr.bf16.mxu0 0
      %1246 = vmatmul.mubr.bf16.gmra.mxu0 %v1163
      %v1247 = vpop.f32.mrf.mxu0
      %v1248 = vadd.f32 0.0, %v1247
      %v1249 = vpop.f32.mrf.mxu0
      %v1250 = vpop.f32.mrf.mxu0
      %v1251 = vadd.f32 0.0, %v1250
      %v1252 = vpop.f32.mrf.mxu0
      %1253 = vdwg.mxu0
      %v1254 = vadd.f32 %v1072, %v1248
      %v1255 = vadd.f32 %v1073, %v1251
      %s1256 = scalar_lea.vmem %s164, 8
      %v1257 = vld [vmem:[%s1256] sm:$0x3]
      %v1258 = vld [vmem:[%s1256 + $0x4] sm:$0x3]
      %v1259 = vld [vmem:[%s1256 + $0x8] sm:$0x3]
      %v1260 = vld [vmem:[%s1256 + $0xc] sm:$0x3]
      %s1261 = scalar_lea.vmem %s1, 384
      %v1262 = vld [vmem:[%s1261] sm:$0xf]
      %v1263 = vld [vmem:[%s1261 + $0x4] sm:$0xf]
      %v1264 = vld [vmem:[%s1261 + $0x8] sm:$0xf]
      %v1265 = vld [vmem:[%s1261 + $0xc] sm:$0xf]
      %v1266 = vld [vmem:[%s1261 + $0x10] sm:$0xf]
      %v1267 = vld [vmem:[%s1261 + $0x14] sm:$0xf]
      %v1268 = vld [vmem:[%s1261 + $0x18] sm:$0xf]
      %v1269 = vld [vmem:[%s1261 + $0x1c] sm:$0xf]
      %v1270 = vld [vmem:[%s1261 + $0x20] sm:$0xf]
      %v1271 = vld [vmem:[%s1261 + $0x24] sm:$0xf]
      %v1272 = vld [vmem:[%s1261 + $0x28] sm:$0xf]
      %v1273 = vld [vmem:[%s1261 + $0x2c] sm:$0xf]
      %v1274 = vld [vmem:[%s1261 + $0x30] sm:$0xf]
      %v1275 = vld [vmem:[%s1261 + $0x34] sm:$0xf]
      %v1276 = vld [vmem:[%s1261 + $0x38] sm:$0xf]
      %v1277 = vld [vmem:[%s1261 + $0x3c] sm:$0xf]
      %v1282 = vcombine.low %v1257, %v1258
      %v1283 = vcombine.low %v1259, %v1260
      %v1285 = vunpack.c.l.s4 1983009808
      %v1286 = vunpack.c.0.s8 %v1285
      %v1287 = vlaneseq
      %v1288 = vshrl.u32 %v1287, 7
      %v1289 = vsub.s32 %v1286, %v1288
      %v1290 = vrot.slane %v1282, %v1289
      %v1292 = vunpack.c.l.s4 1983009808
      %v1293 = vunpack.c.0.s8 %v1292
      %v1294 = vlaneseq
      %v1295 = vshrl.u32 %v1294, 7
      %v1296 = vsub.s32 %v1293, %v1295
      %v1297 = vrot.slane %v1283, %v1296
      %v1298 = vcombine.low %v1290, %v1297
      %v1316 = vunpack.c.l.b16 %v1262
      %v1317 = vunpack.c.l.b16 %v1263
      %v1318 = vunpack.c.l.b16 %v1264
      %v1319 = vunpack.c.l.b16 %v1265
      %v1320 = vunpack.c.l.b16 %v1266
      %v1321 = vunpack.c.l.b16 %v1267
      %v1322 = vunpack.c.l.b16 %v1268
      %v1323 = vunpack.c.l.b16 %v1269
      %v1324 = vunpack.c.l.b16 %v1270
      %v1325 = vunpack.c.l.b16 %v1271
      %v1326 = vunpack.c.l.b16 %v1272
      %v1327 = vunpack.c.l.b16 %v1273
      %v1328 = vunpack.c.l.b16 %v1274
      %v1329 = vunpack.c.l.b16 %v1275
      %v1330 = vunpack.c.l.b16 %v1276
      %v1331 = vunpack.c.l.b16 %v1277
      %v1332 = vpack.c.b16 %v1317, %v1316
      %v1333 = vpack.c.b16 %v1319, %v1318
      %v1334 = vpack.c.b16 %v1321, %v1320
      %v1335 = vpack.c.b16 %v1323, %v1322
      %v1336 = vpack.c.b16 %v1325, %v1324
      %v1337 = vpack.c.b16 %v1327, %v1326
      %v1338 = vpack.c.b16 %v1329, %v1328
      %v1339 = vpack.c.b16 %v1331, %v1330
      %1348 = vmatprep.subr.bf16.mxu0 0
      %1349 = vmatpush1.bf16.msra.mxu0 %v1339
      %1350 = vmatprep.subr.bf16.mxu0 0
      %1351 = vmatpush1.bf16.msra.mxu0 %v1338
      %1352 = vmatprep.subr.bf16.mxu0 0
      %1353 = vmatpush1.bf16.msra.mxu0 %v1337
      %1354 = vmatprep.subr.bf16.mxu0 0
      %1355 = vmatpush1.bf16.msra.mxu0 %v1336
      %1356 = vmatprep.subr.bf16.mxu0 0
      %1357 = vmatpush1.bf16.msra.mxu0 %v1335
      %1358 = vmatprep.subr.bf16.mxu0 0
      %1359 = vmatpush1.bf16.msra.mxu0 %v1334
      %1360 = vmatprep.subr.bf16.mxu0 0
      %1361 = vmatpush1.bf16.msra.mxu0 %v1333
      %1362 = vmatprep.subr.bf16.mxu0 0
      %1363 = vmatpush1.bf16.msra.mxu0 %v1332
      %1364 = vmatprep.subr.bf16.mxu0 0
      %1365 = vmatpush2.bf16.msra.mxu0 0
      %1366 = vmatprep.subr.bf16.mxu0 0
      %1367 = vmatpush2.bf16.msra.mxu0 0
      %1368 = vmatprep.subr.bf16.mxu0 0
      %1369 = vmatpush2.bf16.msra.mxu0 0
      %1370 = vmatprep.subr.bf16.mxu0 0
      %1371 = vmatpush2.bf16.msra.mxu0 0
      %1372 = vmatprep.subr.bf16.mxu0 0
      %1373 = vmatpush2.bf16.msra.mxu0 0
      %1374 = vmatprep.subr.bf16.mxu0 0
      %1375 = vmatpush2.bf16.msra.mxu0 0
      %1376 = vmatprep.subr.bf16.mxu0 0
      %1377 = vmatpush2.bf16.msra.mxu0 0
      %1378 = vmatprep.subr.bf16.mxu0 0
      %1379 = vmatpush2.bf16.msra.mxu0 0
      %1380 = vmatprep.mubr.bf16.mxu0 0
      %1381 = vmatmul.mubr.bf16.gmra.mxu0 %v1298
      %v1382 = vpop.f32.mrf.mxu0
      %v1383 = vadd.f32 0.0, %v1382
      %v1384 = vpop.f32.mrf.mxu0
      %v1385 = vpop.f32.mrf.mxu0
      %v1386 = vadd.f32 0.0, %v1385
      %v1387 = vpop.f32.mrf.mxu0
      %1388 = vdwg.mxu0
      %v1389 = vadd.f32 %v1254, %v1383
      %v1390 = vadd.f32 %v1255, %v1386
      %v1391 = vld [vmem:[%s1256] sm:$0x7]
      %v1392 = vld [vmem:[%s1256 + $0x4] sm:$0x7]
      %v1393 = vld [vmem:[%s1256 + $0x8] sm:$0x7]
      %v1394 = vld [vmem:[%s1256 + $0xc] sm:$0x7]
      %v1400 = vunpack.c.l.s4 1983009808
      %v1401 = vunpack.c.0.s8 %v1400
      %v1402 = vlaneseq
      %v1403 = vshrl.u32 %v1402, 7
      %v1404 = vsub.s32 %v1401, %v1403
      %v1405 = vrot.slane %v1391, %v1404
      %v1406 = vcombine.high %v1405, %v1405
      %v1408 = vunpack.c.l.s4 1983009808
      %v1409 = vunpack.c.0.s8 %v1408
      %v1410 = vlaneseq
      %v1411 = vshrl.u32 %v1410, 7
      %v1412 = vsub.s32 %v1409, %v1411
      %v1413 = vrot.slane %v1392, %v1412
      %v1414 = vcombine.high %v1413, %v1413
      %v1416 = vunpack.c.l.s4 1983009808
      %v1417 = vunpack.c.0.s8 %v1416
      %v1418 = vlaneseq
      %v1419 = vshrl.u32 %v1418, 7
      %v1420 = vsub.s32 %v1417, %v1419
      %v1421 = vrot.slane %v1393, %v1420
      %v1422 = vcombine.high %v1421, %v1421
      %v1424 = vunpack.c.l.s4 1983009808
      %v1425 = vunpack.c.0.s8 %v1424
      %v1426 = vlaneseq
      %v1427 = vshrl.u32 %v1426, 7
      %v1428 = vsub.s32 %v1425, %v1427
      %v1429 = vrot.slane %v1394, %v1428
      %v1430 = vcombine.high %v1429, %v1429
      %v1432 = vshrl.u32 %v1405, 16
      %v1434 = vrot.slane %v1432, 6
      %v1435 = vshll.u32 %v1405, 16
      %v1437 = vrot.slane %v1435, 7
      %v1438 = vor.u32 %v1434, %v1437
      %v1439 = vrot.slane %v1438, 2
      %v1441 = vshll.u32 %v1406, 16
      %v1443 = vrot.slane %v1441, 7
      %v1444 = vsel %vm236, %v1439, %v1443
      %v1446 = vshrl.u32 %v1413, 16
      %v1448 = vrot.slane %v1446, 6
      %v1449 = vshll.u32 %v1413, 16
      %v1451 = vrot.slane %v1449, 7
      %v1452 = vor.u32 %v1448, %v1451
      %v1453 = vrot.slane %v1452, 2
      %v1455 = vshll.u32 %v1414, 16
      %v1457 = vrot.slane %v1455, 7
      %v1458 = vsel %vm236, %v1453, %v1457
      %v1460 = vshrl.u32 %v1421, 16
      %v1462 = vrot.slane %v1460, 6
      %v1463 = vshll.u32 %v1421, 16
      %v1465 = vrot.slane %v1463, 7
      %v1466 = vor.u32 %v1462, %v1465
      %v1467 = vrot.slane %v1466, 2
      %v1469 = vshll.u32 %v1422, 16
      %v1471 = vrot.slane %v1469, 7
      %v1472 = vsel %vm236, %v1467, %v1471
      %v1474 = vshrl.u32 %v1429, 16
      %v1476 = vrot.slane %v1474, 6
      %v1477 = vshll.u32 %v1429, 16
      %v1479 = vrot.slane %v1477, 7
      %v1480 = vor.u32 %v1476, %v1479
      %v1481 = vrot.slane %v1480, 2
      %v1483 = vshll.u32 %v1430, 16
      %v1485 = vrot.slane %v1483, 7
      %v1486 = vsel %vm236, %v1481, %v1485
      %s1487 = scalar_lea.vmem %s1, 448
      %v1488 = vld [vmem:[%s1487] sm:$0xf]
      %v1489 = vld [vmem:[%s1487 + $0x4] sm:$0xf]
      %v1490 = vld [vmem:[%s1487 + $0x8] sm:$0xf]
      %v1491 = vld [vmem:[%s1487 + $0xc] sm:$0xf]
      %v1492 = vld [vmem:[%s1487 + $0x10] sm:$0xf]
      %v1493 = vld [vmem:[%s1487 + $0x14] sm:$0xf]
      %v1494 = vld [vmem:[%s1487 + $0x18] sm:$0xf]
      %v1495 = vld [vmem:[%s1487 + $0x1c] sm:$0xf]
      %v1496 = vld [vmem:[%s1487 + $0x20] sm:$0xf]
      %v1497 = vld [vmem:[%s1487 + $0x24] sm:$0xf]
      %v1498 = vld [vmem:[%s1487 + $0x28] sm:$0xf]
      %v1499 = vld [vmem:[%s1487 + $0x2c] sm:$0xf]
      %v1500 = vld [vmem:[%s1487 + $0x30] sm:$0xf]
      %v1501 = vld [vmem:[%s1487 + $0x34] sm:$0xf]
      %v1502 = vld [vmem:[%s1487 + $0x38] sm:$0xf]
      %v1503 = vld [vmem:[%s1487 + $0x3c] sm:$0xf]
      %v1504 = vcombine.low %v1444, %v1458
      %v1505 = vcombine.low %v1472, %v1486
      %v1507 = vunpack.c.l.s4 1983009808
      %v1508 = vunpack.c.0.s8 %v1507
      %v1509 = vlaneseq
      %v1510 = vshrl.u32 %v1509, 7
      %v1511 = vsub.s32 %v1508, %v1510
      %v1512 = vrot.slane %v1504, %v1511
      %v1514 = vunpack.c.l.s4 1983009808
      %v1515 = vunpack.c.0.s8 %v1514
      %v1516 = vlaneseq
      %v1517 = vshrl.u32 %v1516, 7
      %v1518 = vsub.s32 %v1515, %v1517
      %v1519 = vrot.slane %v1505, %v1518
      %v1520 = vcombine.low %v1512, %v1519
      %v1538 = vunpack.c.l.b16 %v1488
      %v1539 = vunpack.c.l.b16 %v1489
      %v1540 = vunpack.c.l.b16 %v1490
      %v1541 = vunpack.c.l.b16 %v1491
      %v1542 = vunpack.c.l.b16 %v1492
      %v1543 = vunpack.c.l.b16 %v1493
      %v1544 = vunpack.c.l.b16 %v1494
      %v1545 = vunpack.c.l.b16 %v1495
      %v1546 = vunpack.c.l.b16 %v1496
      %v1547 = vunpack.c.l.b16 %v1497
      %v1548 = vunpack.c.l.b16 %v1498
      %v1549 = vunpack.c.l.b16 %v1499
      %v1550 = vunpack.c.l.b16 %v1500
      %v1551 = vunpack.c.l.b16 %v1501
      %v1552 = vunpack.c.l.b16 %v1502
      %v1553 = vunpack.c.l.b16 %v1503
      %v1554 = vpack.c.b16 %v1539, %v1538
      %v1555 = vpack.c.b16 %v1541, %v1540
      %v1556 = vpack.c.b16 %v1543, %v1542
      %v1557 = vpack.c.b16 %v1545, %v1544
      %v1558 = vpack.c.b16 %v1547, %v1546
      %v1559 = vpack.c.b16 %v1549, %v1548
      %v1560 = vpack.c.b16 %v1551, %v1550
      %v1561 = vpack.c.b16 %v1553, %v1552
      %1570 = vmatprep.subr.bf16.mxu0 0
      %1571 = vmatpush1.bf16.msra.mxu0 %v1561
      %1572 = vmatprep.subr.bf16.mxu0 0
      %1573 = vmatpush1.bf16.msra.mxu0 %v1560
      %1574 = vmatprep.subr.bf16.mxu0 0
      %1575 = vmatpush1.bf16.msra.mxu0 %v1559
      %1576 = vmatprep.subr.bf16.mxu0 0
      %1577 = vmatpush1.bf16.msra.mxu0 %v1558
      %1578 = vmatprep.subr.bf16.mxu0 0
      %1579 = vmatpush1.bf16.msra.mxu0 %v1557
      %1580 = vmatprep.subr.bf16.mxu0 0
      %1581 = vmatpush1.bf16.msra.mxu0 %v1556
      %1582 = vmatprep.subr.bf16.mxu0 0
      %1583 = vmatpush1.bf16.msra.mxu0 %v1555
      %1584 = vmatprep.subr.bf16.mxu0 0
      %1585 = vmatpush1.bf16.msra.mxu0 %v1554
      %1586 = vmatprep.subr.bf16.mxu0 0
      %1587 = vmatpush2.bf16.msra.mxu0 0
      %1588 = vmatprep.subr.bf16.mxu0 0
      %1589 = vmatpush2.bf16.msra.mxu0 0
      %1590 = vmatprep.subr.bf16.mxu0 0
      %1591 = vmatpush2.bf16.msra.mxu0 0
      %1592 = vmatprep.subr.bf16.mxu0 0
      %1593 = vmatpush2.bf16.msra.mxu0 0
      %1594 = vmatprep.subr.bf16.mxu0 0
      %1595 = vmatpush2.bf16.msra.mxu0 0
      %1596 = vmatprep.subr.bf16.mxu0 0
      %1597 = vmatpush2.bf16.msra.mxu0 0
      %1598 = vmatprep.subr.bf16.mxu0 0
      %1599 = vmatpush2.bf16.msra.mxu0 0
      %1600 = vmatprep.subr.bf16.mxu0 0
      %1601 = vmatpush2.bf16.msra.mxu0 0
      %1602 = vmatprep.mubr.bf16.mxu0 0
      %1603 = vmatmul.mubr.bf16.gmra.mxu0 %v1520
      %v1604 = vpop.f32.mrf.mxu0
      %v1605 = vadd.f32 0.0, %v1604
      %v1606 = vpop.f32.mrf.mxu0
      %v1607 = vpop.f32.mrf.mxu0
      %v1608 = vadd.f32 0.0, %v1607
      %v1609 = vpop.f32.mrf.mxu0
      %1610 = vdwg.mxu0
      %v1611 = vadd.f32 %v1389, %v1605
      %v1612 = vadd.f32 %v1390, %v1608
      %v1613 = vld [vmem:[%s1256] sm:$0x6]
      %v1614 = vld [vmem:[%s1256 + $0x4] sm:$0x6]
      %v1615 = vld [vmem:[%s1256 + $0x8] sm:$0x6]
      %v1616 = vld [vmem:[%s1256 + $0xc] sm:$0x6]
      %v1622 = vunpack.c.l.s4 1983009808
      %v1623 = vunpack.c.0.s8 %v1622
      %v1624 = vlaneseq
      %v1625 = vshrl.u32 %v1624, 7
      %v1626 = vsub.s32 %v1623, %v1625
      %v1627 = vrot.slane %v1613, %v1626
      %v1628 = vcombine.high %v1627, %v1627
      %v1630 = vunpack.c.l.s4 1983009808
      %v1631 = vunpack.c.0.s8 %v1630
      %v1632 = vlaneseq
      %v1633 = vshrl.u32 %v1632, 7
      %v1634 = vsub.s32 %v1631, %v1633
      %v1635 = vrot.slane %v1614, %v1634
      %v1636 = vcombine.high %v1635, %v1635
      %v1638 = vunpack.c.l.s4 1983009808
      %v1639 = vunpack.c.0.s8 %v1638
      %v1640 = vlaneseq
      %v1641 = vshrl.u32 %v1640, 7
      %v1642 = vsub.s32 %v1639, %v1641
      %v1643 = vrot.slane %v1615, %v1642
      %v1644 = vcombine.high %v1643, %v1643
      %v1646 = vunpack.c.l.s4 1983009808
      %v1647 = vunpack.c.0.s8 %v1646
      %v1648 = vlaneseq
      %v1649 = vshrl.u32 %v1648, 7
      %v1650 = vsub.s32 %v1647, %v1649
      %v1651 = vrot.slane %v1616, %v1650
      %v1652 = vcombine.high %v1651, %v1651
      %v1653 = vrot.slane %v1627, 7
      %v1654 = vrot.slane %v1653, 2
      %v1655 = vrot.slane %v1628, 7
      %v1656 = vsel %vm574, %v1654, %v1655
      %v1657 = vrot.slane %v1635, 7
      %v1658 = vrot.slane %v1657, 2
      %v1659 = vrot.slane %v1636, 7
      %v1660 = vsel %vm574, %v1658, %v1659
      %v1661 = vrot.slane %v1643, 7
      %v1662 = vrot.slane %v1661, 2
      %v1663 = vrot.slane %v1644, 7
      %v1664 = vsel %vm574, %v1662, %v1663
      %v1665 = vrot.slane %v1651, 7
      %v1666 = vrot.slane %v1665, 2
      %v1667 = vrot.slane %v1652, 7
      %v1668 = vsel %vm574, %v1666, %v1667
      %s1669 = scalar_lea.vmem %s1, 512
      %v1670 = vld [vmem:[%s1669] sm:$0xf]
      %v1671 = vld [vmem:[%s1669 + $0x4] sm:$0xf]
      %v1672 = vld [vmem:[%s1669 + $0x8] sm:$0xf]
      %v1673 = vld [vmem:[%s1669 + $0xc] sm:$0xf]
      %v1674 = vld [vmem:[%s1669 + $0x10] sm:$0xf]
      %v1675 = vld [vmem:[%s1669 + $0x14] sm:$0xf]
      %v1676 = vld [vmem:[%s1669 + $0x18] sm:$0xf]
      %v1677 = vld [vmem:[%s1669 + $0x1c] sm:$0xf]
      %v1678 = vld [vmem:[%s1669 + $0x20] sm:$0xf]
      %v1679 = vld [vmem:[%s1669 + $0x24] sm:$0xf]
      %v1680 = vld [vmem:[%s1669 + $0x28] sm:$0xf]
      %v1681 = vld [vmem:[%s1669 + $0x2c] sm:$0xf]
      %v1682 = vld [vmem:[%s1669 + $0x30] sm:$0xf]
      %v1683 = vld [vmem:[%s1669 + $0x34] sm:$0xf]
      %v1684 = vld [vmem:[%s1669 + $0x38] sm:$0xf]
      %v1685 = vld [vmem:[%s1669 + $0x3c] sm:$0xf]
      %v1686 = vcombine.low %v1656, %v1660
      %v1687 = vcombine.low %v1664, %v1668
      %v1689 = vunpack.c.l.s4 1983009808
      %v1690 = vunpack.c.0.s8 %v1689
      %v1691 = vlaneseq
      %v1692 = vshrl.u32 %v1691, 7
      %v1693 = vsub.s32 %v1690, %v1692
      %v1694 = vrot.slane %v1686, %v1693
      %v1696 = vunpack.c.l.s4 1983009808
      %v1697 = vunpack.c.0.s8 %v1696
      %v1698 = vlaneseq
      %v1699 = vshrl.u32 %v1698, 7
      %v1700 = vsub.s32 %v1697, %v1699
      %v1701 = vrot.slane %v1687, %v1700
      %v1702 = vcombine.low %v1694, %v1701
      %v1720 = vunpack.c.l.b16 %v1670
      %v1721 = vunpack.c.l.b16 %v1671
      %v1722 = vunpack.c.l.b16 %v1672
      %v1723 = vunpack.c.l.b16 %v1673
      %v1724 = vunpack.c.l.b16 %v1674
      %v1725 = vunpack.c.l.b16 %v1675
      %v1726 = vunpack.c.l.b16 %v1676
      %v1727 = vunpack.c.l.b16 %v1677
      %v1728 = vunpack.c.l.b16 %v1678
      %v1729 = vunpack.c.l.b16 %v1679
      %v1730 = vunpack.c.l.b16 %v1680
      %v1731 = vunpack.c.l.b16 %v1681
      %v1732 = vunpack.c.l.b16 %v1682
      %v1733 = vunpack.c.l.b16 %v1683
      %v1734 = vunpack.c.l.b16 %v1684
      %v1735 = vunpack.c.l.b16 %v1685
      %v1736 = vpack.c.b16 %v1721, %v1720
      %v1737 = vpack.c.b16 %v1723, %v1722
      %v1738 = vpack.c.b16 %v1725, %v1724
      %v1739 = vpack.c.b16 %v1727, %v1726
      %v1740 = vpack.c.b16 %v1729, %v1728
      %v1741 = vpack.c.b16 %v1731, %v1730
      %v1742 = vpack.c.b16 %v1733, %v1732
      %v1743 = vpack.c.b16 %v1735, %v1734
      %1752 = vmatprep.subr.bf16.mxu0 0
      %1753 = vmatpush1.bf16.msra.mxu0 %v1743
      %1754 = vmatprep.subr.bf16.mxu0 0
      %1755 = vmatpush1.bf16.msra.mxu0 %v1742
      %1756 = vmatprep.subr.bf16.mxu0 0
      %1757 = vmatpush1.bf16.msra.mxu0 %v1741
      %1758 = vmatprep.subr.bf16.mxu0 0
      %1759 = vmatpush1.bf16.msra.mxu0 %v1740
      %1760 = vmatprep.subr.bf16.mxu0 0
      %1761 = vmatpush1.bf16.msra.mxu0 %v1739
      %1762 = vmatprep.subr.bf16.mxu0 0
      %1763 = vmatpush1.bf16.msra.mxu0 %v1738
      %1764 = vmatprep.subr.bf16.mxu0 0
      %1765 = vmatpush1.bf16.msra.mxu0 %v1737
      %1766 = vmatprep.subr.bf16.mxu0 0
      %1767 = vmatpush1.bf16.msra.mxu0 %v1736
      %1768 = vmatprep.subr.bf16.mxu0 0
      %1769 = vmatpush2.bf16.msra.mxu0 0
      %1770 = vmatprep.subr.bf16.mxu0 0
      %1771 = vmatpush2.bf16.msra.mxu0 0
      %1772 = vmatprep.subr.bf16.mxu0 0
      %1773 = vmatpush2.bf16.msra.mxu0 0
      %1774 = vmatprep.subr.bf16.mxu0 0
      %1775 = vmatpush2.bf16.msra.mxu0 0
      %1776 = vmatprep.subr.bf16.mxu0 0
      %1777 = vmatpush2.bf16.msra.mxu0 0
      %1778 = vmatprep.subr.bf16.mxu0 0
      %1779 = vmatpush2.bf16.msra.mxu0 0
      %1780 = vmatprep.subr.bf16.mxu0 0
      %1781 = vmatpush2.bf16.msra.mxu0 0
      %1782 = vmatprep.subr.bf16.mxu0 0
      %1783 = vmatpush2.bf16.msra.mxu0 0
      %1784 = vmatprep.mubr.bf16.mxu0 0
      %1785 = vmatmul.mubr.bf16.gmra.mxu0 %v1702
      %v1786 = vpop.f32.mrf.mxu0
      %v1787 = vadd.f32 0.0, %v1786
      %v1788 = vpop.f32.mrf.mxu0
      %v1789 = vpop.f32.mrf.mxu0
      %v1790 = vadd.f32 0.0, %v1789
      %v1791 = vpop.f32.mrf.mxu0
      %1792 = vdwg.mxu0
      %v1793 = vadd.f32 %v1611, %v1787
      %v1794 = vadd.f32 %v1612, %v1790
      %v1795 = vld [vmem:[%s2] sm:$0x1]
      %v1797 = vlaneseq
      %v1798 = vshrl.u32 %v1797, 7
      %v1799 = vsub.s32 0, %v1798
      %v1800 = vrot.slane %v1795, %v1799
      %v1802 = vadd.f32 %v1793, %v1800
      %v1803 = vadd.f32 %v1794, %v1800
      %v1804 = vmax.f32 %v1802, 0.0
      %v1805 = vmax.f32 %v1803, 0.0
      %v1808 = vcombine.high %v1804, %v1804
      %v1810 = vunpack.c.l.s4 1983009808
      %v1811 = vunpack.c.0.s8 %v1810
      %v1812 = vlaneseq
      %v1813 = vshrl.u32 %v1812, 7
      %v1814 = vsub.s32 %v1811, %v1813
      %v1815 = vrot.slane %v1804, %v1814
      %v1817 = vunpack.c.l.s4 1983009808
      %v1818 = vunpack.c.0.s8 %v1817
      %v1819 = vlaneseq
      %v1820 = vshrl.u32 %v1819, 7
      %v1821 = vsub.s32 %v1818, %v1820
      %v1822 = vrot.slane %v1808, %v1821
      %v1823 = vcombine.high %v1815, %v1815
      %v1824 = vcombine.high %v1822, %v1822
      %v1825 = vcombine.high %v1805, %v1805
      %v1827 = vunpack.c.l.s4 1983009808
      %v1828 = vunpack.c.0.s8 %v1827
      %v1829 = vlaneseq
      %v1830 = vshrl.u32 %v1829, 7
      %v1831 = vsub.s32 %v1828, %v1830
      %v1832 = vrot.slane %v1805, %v1831
      %v1834 = vunpack.c.l.s4 1983009808
      %v1835 = vunpack.c.0.s8 %v1834
      %v1836 = vlaneseq
      %v1837 = vshrl.u32 %v1836, 7
      %v1838 = vsub.s32 %v1835, %v1837
      %v1839 = vrot.slane %v1825, %v1838
      %v1840 = vcombine.high %v1832, %v1832
      %v1841 = vcombine.high %v1839, %v1839
      %v1850 = vrot.slane %v1815, 7
      %v1851 = vrot.slane %v1850, 2
      %v1852 = vrot.slane %v1823, 7
      %v1853 = vrot.slane %v1852, 2
      %v1854 = vrot.slane %v1822, 7
      %v1855 = vrot.slane %v1854, 2
      %v1856 = vrot.slane %v1824, 7
      %v1857 = vrot.slane %v1856, 2
      %v1858 = vrot.slane %v1832, 7
      %v1859 = vrot.slane %v1858, 2
      %v1860 = vrot.slane %v1840, 7
      %v1861 = vrot.slane %v1860, 2
      %v1862 = vrot.slane %v1839, 7
      %v1863 = vrot.slane %v1862, 2
      %v1864 = vrot.slane %v1841, 7
      %v1865 = vrot.slane %v1864, 2
      %v1874 = vmax.f32 %v1815, %v1851
      %v1875 = vmax.f32 %v1823, %v1853
      %v1876 = vmax.f32 %v1822, %v1855
      %v1877 = vmax.f32 %v1824, %v1857
      %v1878 = vmax.f32 %v1832, %v1859
      %v1879 = vmax.f32 %v1840, %v1861
      %v1880 = vmax.f32 %v1839, %v1863
      %v1881 = vmax.f32 %v1841, %v1865
      %v1882 = vmax.f32 %v1874, %v1876
      %v1883 = vmax.f32 %v1875, %v1877
      %v1884 = vmax.f32 %v1878, %v1880
      %v1885 = vmax.f32 %v1879, %v1881
      %v1886 = vpack.c.bf16 %v1882, %v1882
      %v1887 = vpack.c.bf16 %v1883, %v1883
      %v1888 = vpack.c.bf16 %v1884, %v1884
      %v1889 = vpack.c.bf16 %v1885, %v1885
      %v1895 = vunpack.c.l.s4 1966171168
      %v1896 = vunpack.c.0.s8 %v1895
      %v1897 = vlaneseq
      %v1898 = vshrl.u32 %v1897, 7
      %v1899 = vsub.s32 %v1896, %v1898
      %v1900 = vrot.slane %v1886, %v1899
      %v1902 = vunpack.c.l.s4 1966171168
      %v1903 = vunpack.c.0.s8 %v1902
      %v1904 = vlaneseq
      %v1905 = vshrl.u32 %v1904, 7
      %v1906 = vsub.s32 %v1903, %v1905
      %v1907 = vrot.slane %v1900, %v1906
      %v1909 = vunpack.c.l.s4 1966171168
      %v1910 = vunpack.c.0.s8 %v1909
      %v1911 = vlaneseq
      %v1912 = vshrl.u32 %v1911, 7
      %v1913 = vsub.s32 %v1910, %v1912
      %v1914 = vrot.slane %v1887, %v1913
      %v1916 = vunpack.c.l.s4 1966171168
      %v1917 = vunpack.c.0.s8 %v1916
      %v1918 = vlaneseq
      %v1919 = vshrl.u32 %v1918, 7
      %v1920 = vsub.s32 %v1917, %v1919
      %v1921 = vrot.slane %v1914, %v1920
      %v1923 = vunpack.c.l.s4 1966171168
      %v1924 = vunpack.c.0.s8 %v1923
      %v1925 = vlaneseq
      %v1926 = vshrl.u32 %v1925, 7
      %v1927 = vsub.s32 %v1924, %v1926
      %v1928 = vrot.slane %v1888, %v1927
      %v1930 = vunpack.c.l.s4 1966171168
      %v1931 = vunpack.c.0.s8 %v1930
      %v1932 = vlaneseq
      %v1933 = vshrl.u32 %v1932, 7
      %v1934 = vsub.s32 %v1931, %v1933
      %v1935 = vrot.slane %v1928, %v1934
      %v1937 = vunpack.c.l.s4 1966171168
      %v1938 = vunpack.c.0.s8 %v1937
      %v1939 = vlaneseq
      %v1940 = vshrl.u32 %v1939, 7
      %v1941 = vsub.s32 %v1938, %v1940
      %v1942 = vrot.slane %v1889, %v1941
      %v1944 = vunpack.c.l.s4 1966171168
      %v1945 = vunpack.c.0.s8 %v1944
      %v1946 = vlaneseq
      %v1947 = vshrl.u32 %v1946, 7
      %v1948 = vsub.s32 %v1945, %v1947
      %v1949 = vrot.slane %v1942, %v1948
      %v1951 = vunpack.c.l.s4 1935823168
      %v1952 = vunpack.c.0.s8 %v1951
      %v1953 = vlaneseq
      %v1954 = vshrl.u32 %v1953, 7
      %v1955 = vsub.s32 %v1952, %v1954
      %v1956 = vrot.slane %v1907, %v1955
      %v1958 = vunpack.c.l.s4 1935823168
      %v1959 = vunpack.c.0.s8 %v1958
      %v1960 = vlaneseq
      %v1961 = vshrl.u32 %v1960, 7
      %v1962 = vsub.s32 %v1959, %v1961
      %v1963 = vrot.slane %v1956, %v1962
      %v1965 = vunpack.c.l.s4 1935823168
      %v1966 = vunpack.c.0.s8 %v1965
      %v1967 = vlaneseq
      %v1968 = vshrl.u32 %v1967, 7
      %v1969 = vsub.s32 %v1966, %v1968
      %v1970 = vrot.slane %v1921, %v1969
      %v1972 = vunpack.c.l.s4 1935823168
      %v1973 = vunpack.c.0.s8 %v1972
      %v1974 = vlaneseq
      %v1975 = vshrl.u32 %v1974, 7
      %v1976 = vsub.s32 %v1973, %v1975
      %v1977 = vrot.slane %v1970, %v1976
      %v1979 = vunpack.c.l.s4 1935823168
      %v1980 = vunpack.c.0.s8 %v1979
      %v1981 = vlaneseq
      %v1982 = vshrl.u32 %v1981, 7
      %v1983 = vsub.s32 %v1980, %v1982
      %v1984 = vrot.slane %v1935, %v1983
      %v1986 = vunpack.c.l.s4 1935823168
      %v1987 = vunpack.c.0.s8 %v1986
      %v1988 = vlaneseq
      %v1989 = vshrl.u32 %v1988, 7
      %v1990 = vsub.s32 %v1987, %v1989
      %v1991 = vrot.slane %v1984, %v1990
      %v1993 = vunpack.c.l.s4 1935823168
      %v1994 = vunpack.c.0.s8 %v1993
      %v1995 = vlaneseq
      %v1996 = vshrl.u32 %v1995, 7
      %v1997 = vsub.s32 %v1994, %v1996
      %v1998 = vrot.slane %v1949, %v1997
      %v2000 = vunpack.c.l.s4 1935823168
      %v2001 = vunpack.c.0.s8 %v2000
      %v2002 = vlaneseq
      %v2003 = vshrl.u32 %v2002, 7
      %v2004 = vsub.s32 %v2001, %v2003
      %v2005 = vrot.slane %v1998, %v2004
      %v2006 = vunpack.c.l.b16 %v1963
      %v2007 = vunpack.c.l.b16 %v1977
      %v2008 = vunpack.c.l.b16 %v1991
      %v2009 = vunpack.c.l.b16 %v2005
      %v2010 = vrot.slane %v2007, 7
      %vm2011 = vcmask 1041409
      %v2012 = vsel %vm2011, %v2010, %v2006
      %v2013 = vrot.slane %v2009, 7
      %v2014 = vsel %vm2011, %v2013, %v2008
      %v2015 = vpack.c.b16 %v2012, %v2012
      %v2016 = vpack.c.b16 %v2014, %v2014
      %v2018 = vunpack.c.l.s4 1966171168
      %v2019 = vunpack.c.0.s8 %v2018
      %v2020 = vlaneseq
      %v2021 = vshrl.u32 %v2020, 7
      %v2022 = vsub.s32 %v2019, %v2021
      %v2023 = vrot.slane %v2015, %v2022
      %v2025 = vunpack.c.l.s4 1966171168
      %v2026 = vunpack.c.0.s8 %v2025
      %v2027 = vlaneseq
      %v2028 = vshrl.u32 %v2027, 7
      %v2029 = vsub.s32 %v2026, %v2028
      %v2030 = vrot.slane %v2023, %v2029
      %v2032 = vunpack.c.l.s4 1966171168
      %v2033 = vunpack.c.0.s8 %v2032
      %v2034 = vlaneseq
      %v2035 = vshrl.u32 %v2034, 7
      %v2036 = vsub.s32 %v2033, %v2035
      %v2037 = vrot.slane %v2016, %v2036
      %v2039 = vunpack.c.l.s4 1966171168
      %v2040 = vunpack.c.0.s8 %v2039
      %v2041 = vlaneseq
      %v2042 = vshrl.u32 %v2041, 7
      %v2043 = vsub.s32 %v2040, %v2042
      %v2044 = vrot.slane %v2037, %v2043
      %2047 = vst [vmem:[%s168] sm:$0x1] %v2030
      %2048 = vst [vmem:[%s168 + $0x1] sm:$0x1] %v2044
      %p2049 = scmp.lt.s32.totalorder %s14, 1
      %s2050 = scalar_select %p2049, %s14, 1
      %s2051 = smul.addr %s2050, 2
      %s2052 = scalar_lea.vmem %s3, %s2051
      // Predicated region
      $region33: #{vgg_forward.7} parent=31 // pred_check
        %p2053 = pneg %p100
      $region34: #{vgg_forward.7} parent=31 // pred_check_branch
        %2055 = sbr.rel (%p2053) target = $region36
      $region35: #{vgg_forward.7} parent=31 // pred_region
        _
      $region36: #{vgg_forward.7} parent=31 // pred_fallthru
        _
    $region32: #{vgg_forward.7} parent=5 // pred_fallthru
      _
    %p2056 = scmp.le.s32.totalorder 2, %s9
    // Predicated region
    $region37: #{vgg_forward.7} parent=5 // pred_check
      %p2057 = pneg %p2056
    $region38: #{vgg_forward.7} parent=5 // pred_check_branch
      %2059 = sbr.rel (%p2057) target = $region40
    $region39: #{vgg_forward.7} parent=5 // pred_region
      %s2060 = ssub.s32 %s9, 2
      // Predicated region
      $region41: #{vgg_forward.7} parent=39 // pred_check
        %p2061 = pneg %p106
      $region42: #{vgg_forward.7} parent=39 // pred_check_branch
        %2063 = sbr.rel (%p2061) target = $region44
      $region43: #{vgg_forward.7} parent=39 // pred_region
        %p2064 = scmp.lt.s32.totalorder %s15, 1
        %s2065 = scalar_select %p2064, %s15, 1
        %s2066 = smul.addr %s2065, 2
        %s2067 = scalar_lea.vmem %s3, %s2066
      $region44: #{vgg_forward.7} parent=39 // pred_fallthru
        _
    $region40: #{vgg_forward.7} parent=5 // pred_fallthru
      _
  $region6: #{vgg_forward.7} parent=0 // loop_footer
    %s13 = sadd.s32 1, %s9
  $region7: #{vgg_forward.7} parent=0 // loop_footer_branch
    %8 = sbr.rel target = $region3
  $region8: #{vgg_forward.7} parent=0 // loop_exit
    _

// kernel: vgg_forward.6
$region0: #{vgg_forward.6}
  #allocation0 [shape = 'u32[]', space=smem, size = 0x4, offset = 0x4, fixed_abs, tag = 'smem constant byte address 0x4 - core index']
  #allocation1 [shape = 'u32[144,128]{1,0:T(1,128)}', space=vmem, size = 0x12000, scoped, tag = 'internal scratch']
  %s0 = inlined_call_operand.vmem [shape: bf16[2,10,10,128], index: 0, kind: input, shape index: {}]
  %s1 = inlined_call_operand.vmem [shape: bf16[9,128,128], index: 1, kind: input, shape index: {}]
  %s2 = inlined_call_operand.vmem [shape: f32[1,128], index: 2, kind: input, shape index: {}]
  %s3 = inlined_call_operand.vmem [shape: bf16[2,4,4,128], index: 3, kind: output, shape index: {}]
  %s4 = sld [smem:[#allocation0]]
  $region45: #{vgg_forward.6} parent=0
    _
  %s6 = ssub.s32 1, %s4
  %s7 = scalar_select 0, %s6, %s4
  loop: start=0, step=1, limit=4
  $region2: #{vgg_forward.6} parent=0 // loop_pre_header
    _
  $region3: #{vgg_forward.6} parent=0 // loop_header
    %s9 = sphi 0, %s13
    %p10 = scmp.ge.s32.totalorder %s9, 4
    %s19 = sphi 0, %s21
    %s22 = sphi 0, %s19
    %s23 = sphi 0, %s22
    %s39 = sphi 0, %s23
    %s43 = sphi 0, %s43
    %s45 = sphi 0, %s43
    %s46 = sphi 0, %s45
    %s60 = sphi 0, %s46
    %s64 = sphi 0, %s64
    %s66 = sphi 0, %s64
    %s67 = sphi 0, %s66
    %s81 = sphi 0, %s67
    %s87 = sphi 0, %s89
    %s90 = sphi 0, %s87
    %s91 = sphi 0, %s90
    %s107 = sphi 0, %s91
  $region4: #{vgg_forward.6} parent=0 // loop_header_branch
    %12 = sbr.rel (%p10) target = $region8
  $region5: #{vgg_forward.6} parent=0 // loop_body
    %s14 = ssub.s32 %s9, 1
    %s15 = ssub.s32 %s9, 2
    %s16 = sadd.s32 %s9, 1
    %s17 = ssub.s32 %s9, %s16
    %p18 = scmp.eq.s32.totalorder %s17, 0
    %s20 = sadd.s32 %s19, 1
    %s21 = scalar_select %p18, %s19, %s20
    %p24 = pneg %p18
    %p25 = scmp.eq.s32.totalorder %s9, 1
    %p26 = por %p24, %p25
    %p27 = scmp.ne.s32.totalorder %s19, %s22
    %p28 = scmp.eq.s32.totalorder %s9, 0
    %p29 = por %p27, %p28
    %p30 = scmp.ne.s32.totalorder %s19, %s22
    %p31 = scmp.eq.s32.totalorder %s14, 1
    %p32 = por %p30, %p31
    %p33 = scmp.ne.s32.totalorder %s22, %s23
    %p34 = scmp.eq.s32.totalorder %s14, 0
    %p35 = por %p33, %p34
    %p36 = scmp.ne.s32.totalorder %s22, %s23
    %p37 = scmp.eq.s32.totalorder %s15, 1
    %p38 = por %p36, %p37
    %p40 = scmp.ne.s32.totalorder %s23, %s39
    %p41 = scmp.eq.s32.totalorder %s15, 0
    %p42 = por %p40, %p41
    %s44 = sadd.s32 %s43, 1
    %p47 = scmp.eq.s32.totalorder %s9, 1
    %p48 = scmp.ne.s32.totalorder %s43, %s45
    %p49 = scmp.eq.s32.totalorder %s9, 0
    %p50 = por %p48, %p49
    %p51 = scmp.ne.s32.totalorder %s43, %s45
    %p52 = scmp.eq.s32.totalorder %s14, 1
    %p53 = por %p51, %p52
    %p54 = scmp.ne.s32.totalorder %s45, %s46
    %p55 = scmp.eq.s32.totalorder %s14, 0
    %p56 = por %p54, %p55
    %p57 = scmp.ne.s32.totalorder %s45, %s46
    %p58 = scmp.eq.s32.totalorder %s15, 1
    %p59 = por %p57, %p58
    %p61 = scmp.ne.s32.totalorder %s46, %s60
    %p62 = scmp.eq.s32.totalorder %s15, 0
    %p63 = por %p61, %p62
    %s65 = sadd.s32 %s64, 1
    %p68 = scmp.eq.s32.totalorder %s9, 1
    %p69 = scmp.ne.s32.totalorder %s64, %s66
    %p70 = scmp.eq.s32.totalorder %s9, 0
    %p71 = por %p69, %p70
    %p72 = scmp.ne.s32.totalorder %s64, %s66
    %p73 = scmp.eq.s32.totalorder %s14, 1
    %p74 = por %p72, %p73
    %p75 = scmp.ne.s32.totalorder %s66, %s67
    %p76 = scmp.eq.s32.totalorder %s14, 0
    %p77 = por %p75, %p76
    %p78 = scmp.ne.s32.totalorder %s66, %s67
    %p79 = scmp.eq.s32.totalorder %s15, 1
    %p80 = por %p78, %p79
    %p82 = scmp.ne.s32.totalorder %s67, %s81
    %p83 = scmp.eq.s32.totalorder %s15, 0
    %p84 = por %p82, %p83
    %s85 = ssub.s32 %s9, %s16
    %p86 = scmp.eq.s32.totalorder %s85, 0
    %s88 = sadd.s32 %s87, 1
    %s89 = scalar_select %p86, %s87, %s88
    %p92 = pneg %p86
    %p93 = scmp.eq.s32.totalorder %s9, 1
    %p94 = por %p92, %p93
    %p95 = scmp.ne.s32.totalorder %s87, %s90
    %p96 = scmp.eq.s32.totalorder %s9, 0
    %p97 = por %p95, %p96
    %p98 = scmp.ne.s32.totalorder %s87, %s90
    %p99 = scmp.eq.s32.totalorder %s14, 1
    %p100 = por %p98, %p99
    %p101 = scmp.ne.s32.totalorder %s90, %s91
    %p102 = scmp.eq.s32.totalorder %s14, 0
    %p103 = por %p101, %p102
    %p104 = scmp.ne.s32.totalorder %s90, %s91
    %p105 = scmp.eq.s32.totalorder %s15, 1
    %p106 = por %p104, %p105
    %p108 = scmp.ne.s32.totalorder %s91, %s107
    %p109 = scmp.eq.s32.totalorder %s15, 0
    %p110 = por %p108, %p109
    %p111 = scmp.le.s32.totalorder 1, %s9
    %p112 = scmp.lt.s32.totalorder %s9, 3
    %p113 = pnand %p111, %p112
    %p114 = pneg %p113
    // Predicated region
    $region9: #{vgg_forward.6} parent=5 // pred_check
      _
    $region10: #{vgg_forward.6} parent=5 // pred_check_branch
      %116 = sbr.rel (%p113) target = $region12
    $region11: #{vgg_forward.6} parent=5 // pred_region
      %s117 = ssub.s32 %s9, 1
      // Predicated region
      $region13: #{vgg_forward.6} parent=11 // pred_check
        %p118 = pneg %p56
      $region14: #{vgg_forward.6} parent=11 // pred_check_branch
        %120 = sbr.rel (%p118) target = $region16
      $region15: #{vgg_forward.6} parent=11 // pred_region
        _
      $region16: #{vgg_forward.6} parent=11 // pred_fallthru
        _
      // Predicated region
      $region17: #{vgg_forward.6} parent=11 // pred_check
        %p121 = pneg %p77
      $region18: #{vgg_forward.6} parent=11 // pred_check_branch
        %123 = sbr.rel (%p121) target = $region20
      $region19: #{vgg_forward.6} parent=11 // pred_region
        _
      $region20: #{vgg_forward.6} parent=11 // pred_fallthru
        _
    $region12: #{vgg_forward.6} parent=5 // pred_fallthru
      _
    %p124 = scmp.lt.s32.totalorder %s9, 2
    // Predicated region
    $region21: #{vgg_forward.6} parent=5 // pred_check
      %p125 = pneg %p124
    $region22: #{vgg_forward.6} parent=5 // pred_check_branch
      %127 = sbr.rel (%p125) target = $region24
    $region23: #{vgg_forward.6} parent=5 // pred_region
      // Predicated region
      $region25: #{vgg_forward.6} parent=23 // pred_check
        %p128 = pneg %p29
      $region26: #{vgg_forward.6} parent=23 // pred_check_branch
        %130 = sbr.rel (%p128) target = $region28
      $region27: #{vgg_forward.6} parent=23 // pred_region
        %p131 = scmp.lt.s32.totalorder %s9, 1
        %s132 = scalar_select %p131, %s9, 1
        %s133 = smul.addr %s132, 20
        %s134 = smul.addr %s133, 4
        %s135 = scalar_lea.vmem %s0, %s134
      $region28: #{vgg_forward.6} parent=23 // pred_fallthru
        _
    $region24: #{vgg_forward.6} parent=5 // pred_fallthru
      _
    %p136 = scmp.le.s32.totalorder 1, %s9
    %p137 = scmp.lt.s32.totalorder %s9, 3
    %p138 = pnand %p136, %p137
    %p139 = pneg %p138
    // Predicated region
    $region29: #{vgg_forward.6} parent=5 // pred_check
      _
    $region30: #{vgg_forward.6} parent=5 // pred_check_branch
      %141 = sbr.rel (%p138) target = $region32
    $region31: #{vgg_forward.6} parent=5 // pred_region
      %s142 = ssub.s32 %s9, 1
      %p143 = scmp.lt.s32.totalorder %s14, 1
      %s144 = scalar_select %p143, %s14, 1
      %s145 = smul.addr %s144, 20
      %s146 = smul.addr %s145, 4
      %s147 = scalar_lea.vmem %s0, %s146
      %p148 = pneg %p35
      %p149 = pneg %p32
      %p150 = pneg %p56
      %p151 = pneg %p53
      %p152 = pneg %p77
      %p153 = pneg %p74
      %p154 = pneg %p103
      %p155 = pneg %p100
      %p156 = scmp.lt.s32.totalorder %s14, 1
      %s157 = scalar_select %p156, %s14, 1
      %s158 = smul.addr %s157, 4
      %s159 = smul.addr %s158, 2
      %s160 = scalar_lea.vmem %s3, %s159
      %p161 = scmp.lt.s32.totalorder %s14, 1
      %s162 = scalar_select %p161, %s14, 1
      %s163 = smul.addr %s162, 20
      %s164 = smul.addr %s163, 4
      %s165 = scalar_lea.vmem %s0, %s164
      %p166 = scmp.lt.s32.totalorder %s14, 1
      %s167 = scalar_select %p166, %s14, 1
      %s168 = smul.addr %s167, 4
      %s169 = smul.addr %s168, 2
      %s170 = scalar_lea.vmem %s3, %s169
      %v172 = vld [vmem:[%s165] sm:$0xf]
      %v173 = vld [vmem:[%s165 + $0x8] sm:$0xf]
      %v174 = vld [vmem:[%s165 + $0x10] sm:$0xf]
      %v175 = vld [vmem:[%s165 + $0x18] sm:$0xf]
      %v176 = vld [vmem:[%s165 + $0x20] sm:$0xf]
      %v177 = vld [vmem:[%s165 + $0x28] sm:$0xf]
      %v178 = vld [vmem:[%s165 + $0x30] sm:$0xf]
      %v179 = vld [vmem:[%s165 + $0x38] sm:$0xf]
      %v180 = vld [vmem:[%s1] sm:$0xf]
      %v181 = vld [vmem:[%s1 + $0x4] sm:$0xf]
      %v182 = vld [vmem:[%s1 + $0x8] sm:$0xf]
      %v183 = vld [vmem:[%s1 + $0xc] sm:$0xf]
      %v184 = vld [vmem:[%s1 + $0x10] sm:$0xf]
      %v185 = vld [vmem:[%s1 + $0x14] sm:$0xf]
      %v186 = vld [vmem:[%s1 + $0x18] sm:$0xf]
      %v187 = vld [vmem:[%s1 + $0x1c] sm:$0xf]
      %v188 = vld [vmem:[%s1 + $0x20] sm:$0xf]
      %v189 = vld [vmem:[%s1 + $0x24] sm:$0xf]
      %v190 = vld [vmem:[%s1 + $0x28] sm:$0xf]
      %v191 = vld [vmem:[%s1 + $0x2c] sm:$0xf]
      %v192 = vld [vmem:[%s1 + $0x30] sm:$0xf]
      %v193 = vld [vmem:[%s1 + $0x34] sm:$0xf]
      %v194 = vld [vmem:[%s1 + $0x38] sm:$0xf]
      %v195 = vld [vmem:[%s1 + $0x3c] sm:$0xf]
      %v196 = vld [vmem:[%s165 + $0x4] sm:$0x1]
      %v197 = vld [vmem:[%s165 + $0xc] sm:$0x1]
      %v198 = vld [vmem:[%s165 + $0x14] sm:$0x1]
      %v199 = vld [vmem:[%s165 + $0x1c] sm:$0x1]
      %v200 = vld [vmem:[%s165 + $0x24] sm:$0x1]
      %v201 = vld [vmem:[%s165 + $0x2c] sm:$0x1]
      %v202 = vld [vmem:[%s165 + $0x34] sm:$0x1]
      %v203 = vld [vmem:[%s165 + $0x3c] sm:$0x1]
      %vm204 = vsmask.f32 3328
      %vm205 = vsmask.f32 7440
      %vm206 = vmor %vm204, %vm205
      %v208 = vshrl.u32 %v172, 16
      %v210 = vrot.slane %v208, 4
      %v211 = vshll.u32 %v172, 16
      %v213 = vrot.slane %v211, 5
      %v214 = vor.u32 %v210, %v213
      %v215 = vrot.slane %v214, 4
      %v217 = vshll.u32 %v196, 16
      %v219 = vrot.slane %v217, 5
      %v220 = vsel %vm206, %v215, %v219
      %v222 = vshrl.u32 %v173, 16
      %v224 = vrot.slane %v222, 4
      %v225 = vshll.u32 %v173, 16
      %v227 = vrot.slane %v225, 5
      %v228 = vor.u32 %v224, %v227
      %v229 = vrot.slane %v228, 4
      %v231 = vshll.u32 %v197, 16
      %v233 = vrot.slane %v231, 5
      %v234 = vsel %vm206, %v229, %v233
      %v236 = vshrl.u32 %v174, 16
      %v238 = vrot.slane %v236, 4
      %v239 = vshll.u32 %v174, 16
      %v241 = vrot.slane %v239, 5
      %v242 = vor.u32 %v238, %v241
      %v243 = vrot.slane %v242, 4
      %v245 = vshll.u32 %v198, 16
      %v247 = vrot.slane %v245, 5
      %v248 = vsel %vm206, %v243, %v247
      %v250 = vshrl.u32 %v175, 16
      %v252 = vrot.slane %v250, 4
      %v253 = vshll.u32 %v175, 16
      %v255 = vrot.slane %v253, 5
      %v256 = vor.u32 %v252, %v255
      %v257 = vrot.slane %v256, 4
      %v259 = vshll.u32 %v199, 16
      %v261 = vrot.slane %v259, 5
      %v262 = vsel %vm206, %v257, %v261
      %v264 = vshrl.u32 %v176, 16
      %v266 = vrot.slane %v264, 4
      %v267 = vshll.u32 %v176, 16
      %v269 = vrot.slane %v267, 5
      %v270 = vor.u32 %v266, %v269
      %v271 = vrot.slane %v270, 4
      %v273 = vshll.u32 %v200, 16
      %v275 = vrot.slane %v273, 5
      %v276 = vsel %vm206, %v271, %v275
      %v278 = vshrl.u32 %v177, 16
      %v280 = vrot.slane %v278, 4
      %v281 = vshll.u32 %v177, 16
      %v283 = vrot.slane %v281, 5
      %v284 = vor.u32 %v280, %v283
      %v285 = vrot.slane %v284, 4
      %v287 = vshll.u32 %v201, 16
      %v289 = vrot.slane %v287, 5
      %v290 = vsel %vm206, %v285, %v289
      %v292 = vshrl.u32 %v178, 16
      %v294 = vrot.slane %v292, 4
      %v295 = vshll.u32 %v178, 16
      %v297 = vrot.slane %v295, 5
      %v298 = vor.u32 %v294, %v297
      %v299 = vrot.slane %v298, 4
      %v301 = vshll.u32 %v202, 16
      %v303 = vrot.slane %v301, 5
      %v304 = vsel %vm206, %v299, %v303
      %v306 = vshrl.u32 %v179, 16
      %v308 = vrot.slane %v306, 4
      %v309 = vshll.u32 %v179, 16
      %v311 = vrot.slane %v309, 5
      %v312 = vor.u32 %v308, %v311
      %v313 = vrot.slane %v312, 4
      %v315 = vshll.u32 %v203, 16
      %v317 = vrot.slane %v315, 5
      %v318 = vsel %vm206, %v313, %v317
      %s319 = scalar_lea.vmem %s1, 64
      %v320 = vld [vmem:[%s319] sm:$0xf]
      %v321 = vld [vmem:[%s319 + $0x4] sm:$0xf]
      %v322 = vld [vmem:[%s319 + $0x8] sm:$0xf]
      %v323 = vld [vmem:[%s319 + $0xc] sm:$0xf]
      %v324 = vld [vmem:[%s319 + $0x10] sm:$0xf]
      %v325 = vld [vmem:[%s319 + $0x14] sm:$0xf]
      %v326 = vld [vmem:[%s319 + $0x18] sm:$0xf]
      %v327 = vld [vmem:[%s319 + $0x1c] sm:$0xf]
      %v328 = vld [vmem:[%s319 + $0x20] sm:$0xf]
      %v329 = vld [vmem:[%s319 + $0x24] sm:$0xf]
      %v330 = vld [vmem:[%s319 + $0x28] sm:$0xf]
      %v331 = vld [vmem:[%s319 + $0x2c] sm:$0xf]
      %v332 = vld [vmem:[%s319 + $0x30] sm:$0xf]
      %v333 = vld [vmem:[%s319 + $0x34] sm:$0xf]
      %v334 = vld [vmem:[%s319 + $0x38] sm:$0xf]
      %v335 = vld [vmem:[%s319 + $0x3c] sm:$0xf]
      %v336 = vunpack.c.l.b16 %v220
      %v337 = vunpack.c.l.b16 %v234
      %v338 = vunpack.c.l.b16 %v248
      %v339 = vunpack.c.l.b16 %v262
      %v340 = vunpack.c.l.b16 %v276
      %v341 = vunpack.c.l.b16 %v290
      %v342 = vunpack.c.l.b16 %v304
      %v343 = vunpack.c.l.b16 %v318
      %v344 = vpack.c.b16 %v337, %v336
      %v345 = vpack.c.b16 %v339, %v338
      %v346 = vpack.c.b16 %v341, %v340
      %v347 = vpack.c.b16 %v343, %v342
      %v368 = vunpack.c.l.b16 %v320
      %v369 = vunpack.c.l.b16 %v321
      %v370 = vunpack.c.l.b16 %v322
      %v371 = vunpack.c.l.b16 %v323
      %v372 = vunpack.c.l.b16 %v324
      %v373 = vunpack.c.l.b16 %v325
      %v374 = vunpack.c.l.b16 %v326
      %v375 = vunpack.c.l.b16 %v327
      %v376 = vunpack.c.l.b16 %v328
      %v377 = vunpack.c.l.b16 %v329
      %v378 = vunpack.c.l.b16 %v330
      %v379 = vunpack.c.l.b16 %v331
      %v380 = vunpack.c.l.b16 %v332
      %v381 = vunpack.c.l.b16 %v333
      %v382 = vunpack.c.l.b16 %v334
      %v383 = vunpack.c.l.b16 %v335
      %v384 = vpack.c.b16 %v369, %v368
      %v385 = vpack.c.b16 %v371, %v370
      %v386 = vpack.c.b16 %v373, %v372
      %v387 = vpack.c.b16 %v375, %v374
      %v388 = vpack.c.b16 %v377, %v376
      %v389 = vpack.c.b16 %v379, %v378
      %v390 = vpack.c.b16 %v381, %v380
      %v391 = vpack.c.b16 %v383, %v382
      %400 = vmatprep.subr.bf16.mxu0 0
      %401 = vmatpush1.bf16.msra.mxu0 %v391
      %402 = vmatprep.subr.bf16.mxu0 0
      %403 = vmatpush1.bf16.msra.mxu0 %v390
      %404 = vmatprep.subr.bf16.mxu0 0
      %405 = vmatpush1.bf16.msra.mxu0 %v389
      %406 = vmatprep.subr.bf16.mxu0 0
      %407 = vmatpush1.bf16.msra.mxu0 %v388
      %408 = vmatprep.subr.bf16.mxu0 0
      %409 = vmatpush1.bf16.msra.mxu0 %v387
      %410 = vmatprep.subr.bf16.mxu0 0
      %411 = vmatpush1.bf16.msra.mxu0 %v386
      %412 = vmatprep.subr.bf16.mxu0 0
      %413 = vmatpush1.bf16.msra.mxu0 %v385
      %414 = vmatprep.subr.bf16.mxu0 0
      %415 = vmatpush1.bf16.msra.mxu0 %v384
      %416 = vmatprep.subr.bf16.mxu0 0
      %417 = vmatpush2.bf16.msra.mxu0 0
      %418 = vmatprep.subr.bf16.mxu0 0
      %419 = vmatpush2.bf16.msra.mxu0 0
      %420 = vmatprep.subr.bf16.mxu0 0
      %421 = vmatpush2.bf16.msra.mxu0 0
      %422 = vmatprep.subr.bf16.mxu0 0
      %423 = vmatpush2.bf16.msra.mxu0 0
      %424 = vmatprep.subr.bf16.mxu0 0
      %425 = vmatpush2.bf16.msra.mxu0 0
      %426 = vmatprep.subr.bf16.mxu0 0
      %427 = vmatpush2.bf16.msra.mxu0 0
      %428 = vmatprep.subr.bf16.mxu0 0
      %429 = vmatpush2.bf16.msra.mxu0 0
      %430 = vmatprep.subr.bf16.mxu0 0
      %431 = vmatpush2.bf16.msra.mxu0 0
      %432 = vmatprep.mubr.bf16.mxu0 0
      %433 = vmatmul.mubr.bf16.gmra.mxu0 %v344
      %v434 = vpop.f32.mrf.mxu0
      %v435 = vadd.f32 0.0, %v434
      %v436 = vpop.f32.mrf.mxu0
      %v437 = vpop.f32.mrf.mxu0
      %v438 = vadd.f32 0.0, %v437
      %v439 = vpop.f32.mrf.mxu0
      %440 = vmatprep.mubr.bf16.mxu0 0
      %441 = vmatmul.mubr.bf16.gmra.mxu0 %v345
      %v442 = vpop.f32.mrf.mxu0
      %v443 = vadd.f32 0.0, %v442
      %v444 = vpop.f32.mrf.mxu0
      %v445 = vpop.f32.mrf.mxu0
      %v446 = vadd.f32 0.0, %v445
      %v447 = vpop.f32.mrf.mxu0
      %448 = vmatprep.mubr.bf16.mxu0 0
      %449 = vmatmul.mubr.bf16.gmra.mxu0 %v346
      %v450 = vpop.f32.mrf.mxu0
      %v451 = vadd.f32 0.0, %v450
      %v452 = vpop.f32.mrf.mxu0
      %v453 = vpop.f32.mrf.mxu0
      %v454 = vadd.f32 0.0, %v453
      %v455 = vpop.f32.mrf.mxu0
      %456 = vmatprep.mubr.bf16.mxu0 0
      %457 = vmatmul.mubr.bf16.gmra.mxu0 %v347
      %v458 = vpop.f32.mrf.mxu0
      %v459 = vadd.f32 0.0, %v458
      %v460 = vpop.f32.mrf.mxu0
      %v461 = vpop.f32.mrf.mxu0
      %v462 = vadd.f32 0.0, %v461
      %v463 = vpop.f32.mrf.mxu0
      %464 = vdwg.mxu0
      %v473 = vunpack.c.l.b16 %v172
      %v474 = vunpack.c.l.b16 %v173
      %v475 = vunpack.c.l.b16 %v174
      %v476 = vunpack.c.l.b16 %v175
      %v477 = vunpack.c.l.b16 %v176
      %v478 = vunpack.c.l.b16 %v177
      %v479 = vunpack.c.l.b16 %v178
      %v480 = vunpack.c.l.b16 %v179
      %v481 = vpack.c.b16 %v474, %v473
      %v482 = vpack.c.b16 %v476, %v475
      %v483 = vpack.c.b16 %v478, %v477
      %v484 = vpack.c.b16 %v480, %v479
      %v505 = vunpack.c.l.b16 %v180
      %v506 = vunpack.c.l.b16 %v181
      %v507 = vunpack.c.l.b16 %v182
      %v508 = vunpack.c.l.b16 %v183
      %v509 = vunpack.c.l.b16 %v184
      %v510 = vunpack.c.l.b16 %v185
      %v511 = vunpack.c.l.b16 %v186
      %v512 = vunpack.c.l.b16 %v187
      %v513 = vunpack.c.l.b16 %v188
      %v514 = vunpack.c.l.b16 %v189
      %v515 = vunpack.c.l.b16 %v190
      %v516 = vunpack.c.l.b16 %v191
      %v517 = vunpack.c.l.b16 %v192
      %v518 = vunpack.c.l.b16 %v193
      %v519 = vunpack.c.l.b16 %v194
      %v520 = vunpack.c.l.b16 %v195
      %v521 = vpack.c.b16 %v506, %v505
      %v522 = vpack.c.b16 %v508, %v507
      %v523 = vpack.c.b16 %v510, %v509
      %v524 = vpack.c.b16 %v512, %v511
      %v525 = vpack.c.b16 %v514, %v513
      %v526 = vpack.c.b16 %v516, %v515
      %v527 = vpack.c.b16 %v518, %v517
      %v528 = vpack.c.b16 %v520, %v519
      %537 = vmatprep.subr.bf16.mxu0 0
      %538 = vmatpush1.bf16.msra.mxu0 %v528
      %539 = vmatprep.subr.bf16.mxu0 0
      %540 = vmatpush1.bf16.msra.mxu0 %v527
      %541 = vmatprep.subr.bf16.mxu0 0
      %542 = vmatpush1.bf16.msra.mxu0 %v526
      %543 = vmatprep.subr.bf16.mxu0 0
      %544 = vmatpush1.bf16.msra.mxu0 %v525
      %545 = vmatprep.subr.bf16.mxu0 0
      %546 = vmatpush1.bf16.msra.mxu0 %v524
      %547 = vmatprep.subr.bf16.mxu0 0
      %548 = vmatpush1.bf16.msra.mxu0 %v523
      %549 = vmatprep.subr.bf16.mxu0 0
      %550 = vmatpush1.bf16.msra.mxu0 %v522
      %551 = vmatprep.subr.bf16.mxu0 0
      %552 = vmatpush1.bf16.msra.mxu0 %v521
      %553 = vmatprep.subr.bf16.mxu0 0
      %554 = vmatpush2.bf16.msra.mxu0 0
      %555 = vmatprep.subr.bf16.mxu0 0
      %556 = vmatpush2.bf16.msra.mxu0 0
      %557 = vmatprep.subr.bf16.mxu0 0
      %558 = vmatpush2.bf16.msra.mxu0 0
      %559 = vmatprep.subr.bf16.mxu0 0
      %560 = vmatpush2.bf16.msra.mxu0 0
      %561 = vmatprep.subr.bf16.mxu0 0
      %562 = vmatpush2.bf16.msra.mxu0 0
      %563 = vmatprep.subr.bf16.mxu0 0
      %564 = vmatpush2.bf16.msra.mxu0 0
      %565 = vmatprep.subr.bf16.mxu0 0
      %566 = vmatpush2.bf16.msra.mxu0 0
      %567 = vmatprep.subr.bf16.mxu0 0
      %568 = vmatpush2.bf16.msra.mxu0 0
      %569 = vmatprep.mubr.bf16.mxu0 0
      %570 = vmatmul.mubr.bf16.gmra.mxu0 %v481
      %v571 = vpop.f32.mrf.mxu0
      %v572 = vadd.f32 %v435, %v571
      %v573 = vpop.f32.mrf.mxu0
      %v574 = vpop.f32.mrf.mxu0
      %v575 = vadd.f32 %v438, %v574
      %v576 = vpop.f32.mrf.mxu0
      %577 = vmatprep.mubr.bf16.mxu0 0
      %578 = vmatmul.mubr.bf16.gmra.mxu0 %v482
      %v579 = vpop.f32.mrf.mxu0
      %v580 = vadd.f32 %v443, %v579
      %v581 = vpop.f32.mrf.mxu0
      %v582 = vpop.f32.mrf.mxu0
      %v583 = vadd.f32 %v446, %v582
      %v584 = vpop.f32.mrf.mxu0
      %585 = vmatprep.mubr.bf16.mxu0 0
      %586 = vmatmul.mubr.bf16.gmra.mxu0 %v483
      %v587 = vpop.f32.mrf.mxu0
      %v588 = vadd.f32 %v451, %v587
      %v589 = vpop.f32.mrf.mxu0
      %v590 = vpop.f32.mrf.mxu0
      %v591 = vadd.f32 %v454, %v590
      %v592 = vpop.f32.mrf.mxu0
      %593 = vmatprep.mubr.bf16.mxu0 0
      %594 = vmatmul.mubr.bf16.gmra.mxu0 %v484
      %v595 = vpop.f32.mrf.mxu0
      %v596 = vadd.f32 %v459, %v595
      %v597 = vpop.f32.mrf.mxu0
      %v598 = vpop.f32.mrf.mxu0
      %v599 = vadd.f32 %v462, %v598
      %v600 = vpop.f32.mrf.mxu0
      %601 = vdwg.mxu0
      %v602 = vld [vmem:[%s165] sm:$0xe]
      %v603 = vld [vmem:[%s165 + $0x8] sm:$0xe]
      %v604 = vld [vmem:[%s165 + $0x10] sm:$0xe]
      %v605 = vld [vmem:[%s165 + $0x18] sm:$0xe]
      %v606 = vld [vmem:[%s165 + $0x20] sm:$0xe]
      %v607 = vld [vmem:[%s165 + $0x28] sm:$0xe]
      %v608 = vld [vmem:[%s165 + $0x30] sm:$0xe]
      %v609 = vld [vmem:[%s165 + $0x38] sm:$0xe]
      %vm626 = vcmask 1042432
      %vm627 = vcmask 1046532
      %vm628 = vmor %vm626, %vm627
      %v629 = vrot.slane %v602, 5
      %v630 = vrot.slane %v629, 4
      %v631 = vrot.slane %v196, 5
      %v632 = vsel %vm628, %v630, %v631
      %v633 = vrot.slane %v603, 5
      %v634 = vrot.slane %v633, 4
      %v635 = vrot.slane %v197, 5
      %v636 = vsel %vm628, %v634, %v635
      %v637 = vrot.slane %v604, 5
      %v638 = vrot.slane %v637, 4
      %v639 = vrot.slane %v198, 5
      %v640 = vsel %vm628, %v638, %v639
      %v641 = vrot.slane %v605, 5
      %v642 = vrot.slane %v641, 4
      %v643 = vrot.slane %v199, 5
      %v644 = vsel %vm628, %v642, %v643
      %v645 = vrot.slane %v606, 5
      %v646 = vrot.slane %v645, 4
      %v647 = vrot.slane %v200, 5
      %v648 = vsel %vm628, %v646, %v647
      %v649 = vrot.slane %v607, 5
      %v650 = vrot.slane %v649, 4
      %v651 = vrot.slane %v201, 5
      %v652 = vsel %vm628, %v650, %v651
      %v653 = vrot.slane %v608, 5
      %v654 = vrot.slane %v653, 4
      %v655 = vrot.slane %v202, 5
      %v656 = vsel %vm628, %v654, %v655
      %v657 = vrot.slane %v609, 5
      %v658 = vrot.slane %v657, 4
      %v659 = vrot.slane %v203, 5
      %v660 = vsel %vm628, %v658, %v659
      %s661 = scalar_lea.vmem %s1, 128
      %v662 = vld [vmem:[%s661] sm:$0xf]
      %v663 = vld [vmem:[%s661 + $0x4] sm:$0xf]
      %v664 = vld [vmem:[%s661 + $0x8] sm:$0xf]
      %v665 = vld [vmem:[%s661 + $0xc] sm:$0xf]
      %v666 = vld [vmem:[%s661 + $0x10] sm:$0xf]
      %v667 = vld [vmem:[%s661 + $0x14] sm:$0xf]
      %v668 = vld [vmem:[%s661 + $0x18] sm:$0xf]
      %v669 = vld [vmem:[%s661 + $0x1c] sm:$0xf]
      %v670 = vld [vmem:[%s661 + $0x20] sm:$0xf]
      %v671 = vld [vmem:[%s661 + $0x24] sm:$0xf]
      %v672 = vld [vmem:[%s661 + $0x28] sm:$0xf]
      %v673 = vld [vmem:[%s661 + $0x2c] sm:$0xf]
      %v674 = vld [vmem:[%s661 + $0x30] sm:$0xf]
      %v675 = vld [vmem:[%s661 + $0x34] sm:$0xf]
      %v676 = vld [vmem:[%s661 + $0x38] sm:$0xf]
      %v677 = vld [vmem:[%s661 + $0x3c] sm:$0xf]
      %v678 = vunpack.c.l.b16 %v632
      %v679 = vunpack.c.l.b16 %v636
      %v680 = vunpack.c.l.b16 %v640
      %v681 = vunpack.c.l.b16 %v644
      %v682 = vunpack.c.l.b16 %v648
      %v683 = vunpack.c.l.b16 %v652
      %v684 = vunpack.c.l.b16 %v656
      %v685 = vunpack.c.l.b16 %v660
      %v686 = vpack.c.b16 %v679, %v678
      %v687 = vpack.c.b16 %v681, %v680
      %v688 = vpack.c.b16 %v683, %v682
      %v689 = vpack.c.b16 %v685, %v684
      %v710 = vunpack.c.l.b16 %v662
      %v711 = vunpack.c.l.b16 %v663
      %v712 = vunpack.c.l.b16 %v664
      %v713 = vunpack.c.l.b16 %v665
      %v714 = vunpack.c.l.b16 %v666
      %v715 = vunpack.c.l.b16 %v667
      %v716 = vunpack.c.l.b16 %v668
      %v717 = vunpack.c.l.b16 %v669
      %v718 = vunpack.c.l.b16 %v670
      %v719 = vunpack.c.l.b16 %v671
      %v720 = vunpack.c.l.b16 %v672
      %v721 = vunpack.c.l.b16 %v673
      %v722 = vunpack.c.l.b16 %v674
      %v723 = vunpack.c.l.b16 %v675
      %v724 = vunpack.c.l.b16 %v676
      %v725 = vunpack.c.l.b16 %v677
      %v726 = vpack.c.b16 %v711, %v710
      %v727 = vpack.c.b16 %v713, %v712
      %v728 = vpack.c.b16 %v715, %v714
      %v729 = vpack.c.b16 %v717, %v716
      %v730 = vpack.c.b16 %v719, %v718
      %v731 = vpack.c.b16 %v721, %v720
      %v732 = vpack.c.b16 %v723, %v722
      %v733 = vpack.c.b16 %v725, %v724
      %742 = vmatprep.subr.bf16.mxu0 0
      %743 = vmatpush1.bf16.msra.mxu0 %v733
      %744 = vmatprep.subr.bf16.mxu0 0
      %745 = vmatpush1.bf16.msra.mxu0 %v732
      %746 = vmatprep.subr.bf16.mxu0 0
      %747 = vmatpush1.bf16.msra.mxu0 %v731
      %748 = vmatprep.subr.bf16.mxu0 0
      %749 = vmatpush1.bf16.msra.mxu0 %v730
      %750 = vmatprep.subr.bf16.mxu0 0
      %751 = vmatpush1.bf16.msra.mxu0 %v729
      %752 = vmatprep.subr.bf16.mxu0 0
      %753 = vmatpush1.bf16.msra.mxu0 %v728
      %754 = vmatprep.subr.bf16.mxu0 0
      %755 = vmatpush1.bf16.msra.mxu0 %v727
      %756 = vmatprep.subr.bf16.mxu0 0
      %757 = vmatpush1.bf16.msra.mxu0 %v726
      %758 = vmatprep.subr.bf16.mxu0 0
      %759 = vmatpush2.bf16.msra.mxu0 0
      %760 = vmatprep.subr.bf16.mxu0 0
      %761 = vmatpush2.bf16.msra.mxu0 0
      %762 = vmatprep.subr.bf16.mxu0 0
      %763 = vmatpush2.bf16.msra.mxu0 0
      %764 = vmatprep.subr.bf16.mxu0 0
      %765 = vmatpush2.bf16.msra.mxu0 0
      %766 = vmatprep.subr.bf16.mxu0 0
      %767 = vmatpush2.bf16.msra.mxu0 0
      %768 = vmatprep.subr.bf16.mxu0 0
      %769 = vmatpush2.bf16.msra.mxu0 0
      %770 = vmatprep.subr.bf16.mxu0 0
      %771 = vmatpush2.bf16.msra.mxu0 0
      %772 = vmatprep.subr.bf16.mxu0 0
      %773 = vmatpush2.bf16.msra.mxu0 0
      %774 = vmatprep.mubr.bf16.mxu0 0
      %775 = vmatmul.mubr.bf16.gmra.mxu0 %v686
      %v776 = vpop.f32.mrf.mxu0
      %v777 = vadd.f32 0.0, %v776
      %v778 = vpop.f32.mrf.mxu0
      %v779 = vpop.f32.mrf.mxu0
      %v780 = vadd.f32 0.0, %v779
      %v781 = vpop.f32.mrf.mxu0
      %782 = vmatprep.mubr.bf16.mxu0 0
      %783 = vmatmul.mubr.bf16.gmra.mxu0 %v687
      %v784 = vpop.f32.mrf.mxu0
      %v785 = vadd.f32 0.0, %v784
      %v786 = vpop.f32.mrf.mxu0
      %v787 = vpop.f32.mrf.mxu0
      %v788 = vadd.f32 0.0, %v787
      %v789 = vpop.f32.mrf.mxu0
      %790 = vmatprep.mubr.bf16.mxu0 0
      %791 = vmatmul.mubr.bf16.gmra.mxu0 %v688
      %v792 = vpop.f32.mrf.mxu0
      %v793 = vadd.f32 0.0, %v792
      %v794 = vpop.f32.mrf.mxu0
      %v795 = vpop.f32.mrf.mxu0
      %v796 = vadd.f32 0.0, %v795
      %v797 = vpop.f32.mrf.mxu0
      %798 = vmatprep.mubr.bf16.mxu0 0
      %799 = vmatmul.mubr.bf16.gmra.mxu0 %v689
      %v800 = vpop.f32.mrf.mxu0
      %v801 = vadd.f32 0.0, %v800
      %v802 = vpop.f32.mrf.mxu0
      %v803 = vpop.f32.mrf.mxu0
      %v804 = vadd.f32 0.0, %v803
      %v805 = vpop.f32.mrf.mxu0
      %806 = vdwg.mxu0
      %v807 = vadd.f32 %v572, %v777
      %v808 = vadd.f32 %v575, %v780
      %v809 = vadd.f32 %v580, %v785
      %v810 = vadd.f32 %v583, %v788
      %v811 = vadd.f32 %v588, %v793
      %v812 = vadd.f32 %v591, %v796
      %v813 = vadd.f32 %v596, %v801
      %v814 = vadd.f32 %v599, %v804
      %s815 = scalar_lea.vmem %s165, 8
      %v816 = vld [vmem:[%s815] sm:$0xf]
      %v817 = vld [vmem:[%s815 + $0x8] sm:$0xf]
      %v818 = vld [vmem:[%s815 + $0x10] sm:$0xf]
      %v819 = vld [vmem:[%s815 + $0x18] sm:$0xf]
      %v820 = vld [vmem:[%s815 + $0x20] sm:$0xf]
      %v821 = vld [vmem:[%s815 + $0x28] sm:$0xf]
      %v822 = vld [vmem:[%s815 + $0x30] sm:$0xf]
      %v823 = vld [vmem:[%s815 + $0x38] sm:$0xf]
      %s824 = scalar_lea.vmem %s1, 192
      %v825 = vld [vmem:[%s824] sm:$0xf]
      %v826 = vld [vmem:[%s824 + $0x4] sm:$0xf]
      %v827 = vld [vmem:[%s824 + $0x8] sm:$0xf]
      %v828 = vld [vmem:[%s824 + $0xc] sm:$0xf]
      %v829 = vld [vmem:[%s824 + $0x10] sm:$0xf]
      %v830 = vld [vmem:[%s824 + $0x14] sm:$0xf]
      %v831 = vld [vmem:[%s824 + $0x18] sm:$0xf]
      %v832 = vld [vmem:[%s824 + $0x1c] sm:$0xf]
      %v833 = vld [vmem:[%s824 + $0x20] sm:$0xf]
      %v834 = vld [vmem:[%s824 + $0x24] sm:$0xf]
      %v835 = vld [vmem:[%s824 + $0x28] sm:$0xf]
      %v836 = vld [vmem:[%s824 + $0x2c] sm:$0xf]
      %v837 = vld [vmem:[%s824 + $0x30] sm:$0xf]
      %v838 = vld [vmem:[%s824 + $0x34] sm:$0xf]
      %v839 = vld [vmem:[%s824 + $0x38] sm:$0xf]
      %v840 = vld [vmem:[%s824 + $0x3c] sm:$0xf]
      %v849 = vunpack.c.l.b16 %v816
      %v850 = vunpack.c.l.b16 %v817
      %v851 = vunpack.c.l.b16 %v818
      %v852 = vunpack.c.l.b16 %v819
      %v853 = vunpack.c.l.b16 %v820
      %v854 = vunpack.c.l.b16 %v821
      %v855 = vunpack.c.l.b16 %v822
      %v856 = vunpack.c.l.b16 %v823
      %v857 = vpack.c.b16 %v850, %v849
      %v858 = vpack.c.b16 %v852, %v851
      %v859 = vpack.c.b16 %v854, %v853
      %v860 = vpack.c.b16 %v856, %v855
      %v881 = vunpack.c.l.b16 %v825
      %v882 = vunpack.c.l.b16 %v826
      %v883 = vunpack.c.l.b16 %v827
      %v884 = vunpack.c.l.b16 %v828
      %v885 = vunpack.c.l.b16 %v829
      %v886 = vunpack.c.l.b16 %v830
      %v887 = vunpack.c.l.b16 %v831
      %v888 = vunpack.c.l.b16 %v832
      %v889 = vunpack.c.l.b16 %v833
      %v890 = vunpack.c.l.b16 %v834
      %v891 = vunpack.c.l.b16 %v835
      %v892 = vunpack.c.l.b16 %v836
      %v893 = vunpack.c.l.b16 %v837
      %v894 = vunpack.c.l.b16 %v838
      %v895 = vunpack.c.l.b16 %v839
      %v896 = vunpack.c.l.b16 %v840
      %v897 = vpack.c.b16 %v882, %v881
      %v898 = vpack.c.b16 %v884, %v883
      %v899 = vpack.c.b16 %v886, %v885
      %v900 = vpack.c.b16 %v888, %v887
      %v901 = vpack.c.b16 %v890, %v889
      %v902 = vpack.c.b16 %v892, %v891
      %v903 = vpack.c.b16 %v894, %v893
      %v904 = vpack.c.b16 %v896, %v895
      %913 = vmatprep.subr.bf16.mxu0 0
      %914 = vmatpush1.bf16.msra.mxu0 %v904
      %915 = vmatprep.subr.bf16.mxu0 0
      %916 = vmatpush1.bf16.msra.mxu0 %v903
      %917 = vmatprep.subr.bf16.mxu0 0
      %918 = vmatpush1.bf16.msra.mxu0 %v902
      %919 = vmatprep.subr.bf16.mxu0 0
      %920 = vmatpush1.bf16.msra.mxu0 %v901
      %921 = vmatprep.subr.bf16.mxu0 0
      %922 = vmatpush1.bf16.msra.mxu0 %v900
      %923 = vmatprep.subr.bf16.mxu0 0
      %924 = vmatpush1.bf16.msra.mxu0 %v899
      %925 = vmatprep.subr.bf16.mxu0 0
      %926 = vmatpush1.bf16.msra.mxu0 %v898
      %927 = vmatprep.subr.bf16.mxu0 0
      %928 = vmatpush1.bf16.msra.mxu0 %v897
      %929 = vmatprep.subr.bf16.mxu0 0
      %930 = vmatpush2.bf16.msra.mxu0 0
      %931 = vmatprep.subr.bf16.mxu0 0
      %932 = vmatpush2.bf16.msra.mxu0 0
      %933 = vmatprep.subr.bf16.mxu0 0
      %934 = vmatpush2.bf16.msra.mxu0 0
      %935 = vmatprep.subr.bf16.mxu0 0
      %936 = vmatpush2.bf16.msra.mxu0 0
      %937 = vmatprep.subr.bf16.mxu0 0
      %938 = vmatpush2.bf16.msra.mxu0 0
      %939 = vmatprep.subr.bf16.mxu0 0
      %940 = vmatpush2.bf16.msra.mxu0 0
      %941 = vmatprep.subr.bf16.mxu0 0
      %942 = vmatpush2.bf16.msra.mxu0 0
      %943 = vmatprep.subr.bf16.mxu0 0
      %944 = vmatpush2.bf16.msra.mxu0 0
      %945 = vmatprep.mubr.bf16.mxu0 0
      %946 = vmatmul.mubr.bf16.gmra.mxu0 %v857
      %v947 = vpop.f32.mrf.mxu0
      %v948 = vadd.f32 0.0, %v947
      %v949 = vpop.f32.mrf.mxu0
      %v950 = vpop.f32.mrf.mxu0
      %v951 = vadd.f32 0.0, %v950
      %v952 = vpop.f32.mrf.mxu0
      %953 = vmatprep.mubr.bf16.mxu0 0
      %954 = vmatmul.mubr.bf16.gmra.mxu0 %v858
      %v955 = vpop.f32.mrf.mxu0
      %v956 = vadd.f32 0.0, %v955
      %v957 = vpop.f32.mrf.mxu0
      %v958 = vpop.f32.mrf.mxu0
      %v959 = vadd.f32 0.0, %v958
      %v960 = vpop.f32.mrf.mxu0
      %961 = vmatprep.mubr.bf16.mxu0 0
      %962 = vmatmul.mubr.bf16.gmra.mxu0 %v859
      %v963 = vpop.f32.mrf.mxu0
      %v964 = vadd.f32 0.0, %v963
      %v965 = vpop.f32.mrf.mxu0
      %v966 = vpop.f32.mrf.mxu0
      %v967 = vadd.f32 0.0, %v966
      %v968 = vpop.f32.mrf.mxu0
      %969 = vmatprep.mubr.bf16.mxu0 0
      %970 = vmatmul.mubr.bf16.gmra.mxu0 %v860
      %v971 = vpop.f32.mrf.mxu0
      %v972 = vadd.f32 0.0, %v971
      %v973 = vpop.f32.mrf.mxu0
      %v974 = vpop.f32.mrf.mxu0
      %v975 = vadd.f32 0.0, %v974
      %v976 = vpop.f32.mrf.mxu0
      %977 = vdwg.mxu0
      %v978 = vadd.f32 %v807, %v948
      %v979 = vadd.f32 %v808, %v951
      %v980 = vadd.f32 %v809, %v956
      %v981 = vadd.f32 %v810, %v959
      %v982 = vadd.f32 %v811, %v964
      %v983 = vadd.f32 %v812, %v967
      %v984 = vadd.f32 %v813, %v972
      %v985 = vadd.f32 %v814, %v975
      %v986 = vld [vmem:[%s815] sm:$0xf]
      %v987 = vld [vmem:[%s815 + $0x4] sm:$0x1]
      %v988 = vld [vmem:[%s815 + $0x8] sm:$0xf]
      %v989 = vld [vmem:[%s815 + $0xc] sm:$0x1]
      %v990 = vld [vmem:[%s815 + $0x10] sm:$0xf]
      %v991 = vld [vmem:[%s815 + $0x14] sm:$0x1]
      %v992 = vld [vmem:[%s815 + $0x18] sm:$0xf]
      %v993 = vld [vmem:[%s815 + $0x1c] sm:$0x1]
      %v994 = vld [vmem:[%s815 + $0x20] sm:$0xf]
      %v995 = vld [vmem:[%s815 + $0x24] sm:$0x1]
      %v996 = vld [vmem:[%s815 + $0x28] sm:$0xf]
      %v997 = vld [vmem:[%s815 + $0x2c] sm:$0x1]
      %v998 = vld [vmem:[%s815 + $0x30] sm:$0xf]
      %v999 = vld [vmem:[%s815 + $0x34] sm:$0x1]
      %v1000 = vld [vmem:[%s815 + $0x38] sm:$0xf]
      %v1001 = vld [vmem:[%s815 + $0x3c] sm:$0x1]
      %v1003 = vshrl.u32 %v986, 16
      %v1005 = vrot.slane %v1003, 4
      %v1006 = vshll.u32 %v986, 16
      %v1008 = vrot.slane %v1006, 5
      %v1009 = vor.u32 %v1005, %v1008
      %v1010 = vrot.slane %v1009, 4
      %v1012 = vshll.u32 %v987, 16
      %v1014 = vrot.slane %v1012, 5
      %v1015 = vsel %vm206, %v1010, %v1014
      %v1017 = vshrl.u32 %v988, 16
      %v1019 = vrot.slane %v1017, 4
      %v1020 = vshll.u32 %v988, 16
      %v1022 = vrot.slane %v1020, 5
      %v1023 = vor.u32 %v1019, %v1022
      %v1024 = vrot.slane %v1023, 4
      %v1026 = vshll.u32 %v989, 16
      %v1028 = vrot.slane %v1026, 5
      %v1029 = vsel %vm206, %v1024, %v1028
      %v1031 = vshrl.u32 %v990, 16
      %v1033 = vrot.slane %v1031, 4
      %v1034 = vshll.u32 %v990, 16
      %v1036 = vrot.slane %v1034, 5
      %v1037 = vor.u32 %v1033, %v1036
      %v1038 = vrot.slane %v1037, 4
      %v1040 = vshll.u32 %v991, 16
      %v1042 = vrot.slane %v1040, 5
      %v1043 = vsel %vm206, %v1038, %v1042
      %v1045 = vshrl.u32 %v992, 16
      %v1047 = vrot.slane %v1045, 4
      %v1048 = vshll.u32 %v992, 16
      %v1050 = vrot.slane %v1048, 5
      %v1051 = vor.u32 %v1047, %v1050
      %v1052 = vrot.slane %v1051, 4
      %v1054 = vshll.u32 %v993, 16
      %v1056 = vrot.slane %v1054, 5
      %v1057 = vsel %vm206, %v1052, %v1056
      %v1059 = vshrl.u32 %v994, 16
      %v1061 = vrot.slane %v1059, 4
      %v1062 = vshll.u32 %v994, 16
      %v1064 = vrot.slane %v1062, 5
      %v1065 = vor.u32 %v1061, %v1064
      %v1066 = vrot.slane %v1065, 4
      %v1068 = vshll.u32 %v995, 16
      %v1070 = vrot.slane %v1068, 5
      %v1071 = vsel %vm206, %v1066, %v1070
      %v1073 = vshrl.u32 %v996, 16
      %v1075 = vrot.slane %v1073, 4
      %v1076 = vshll.u32 %v996, 16
      %v1078 = vrot.slane %v1076, 5
      %v1079 = vor.u32 %v1075, %v1078
      %v1080 = vrot.slane %v1079, 4
      %v1082 = vshll.u32 %v997, 16
      %v1084 = vrot.slane %v1082, 5
      %v1085 = vsel %vm206, %v1080, %v1084
      %v1087 = vshrl.u32 %v998, 16
      %v1089 = vrot.slane %v1087, 4
      %v1090 = vshll.u32 %v998, 16
      %v1092 = vrot.slane %v1090, 5
      %v1093 = vor.u32 %v1089, %v1092
      %v1094 = vrot.slane %v1093, 4
      %v1096 = vshll.u32 %v999, 16
      %v1098 = vrot.slane %v1096, 5
      %v1099 = vsel %vm206, %v1094, %v1098
      %v1101 = vshrl.u32 %v1000, 16
      %v1103 = vrot.slane %v1101, 4
      %v1104 = vshll.u32 %v1000, 16
      %v1106 = vrot.slane %v1104, 5
      %v1107 = vor.u32 %v1103, %v1106
      %v1108 = vrot.slane %v1107, 4
      %v1110 = vshll.u32 %v1001, 16
      %v1112 = vrot.slane %v1110, 5
      %v1113 = vsel %vm206, %v1108, %v1112
      %s1114 = scalar_lea.vmem %s1, 256
      %v1115 = vld [vmem:[%s1114] sm:$0xf]
      %v1116 = vld [vmem:[%s1114 + $0x4] sm:$0xf]
      %v1117 = vld [vmem:[%s1114 + $0x8] sm:$0xf]
      %v1118 = vld [vmem:[%s1114 + $0xc] sm:$0xf]
      %v1119 = vld [vmem:[%s1114 + $0x10] sm:$0xf]
      %v1120 = vld [vmem:[%s1114 + $0x14] sm:$0xf]
      %v1121 = vld [vmem:[%s1114 + $0x18] sm:$0xf]
      %v1122 = vld [vmem:[%s1114 + $0x1c] sm:$0xf]
      %v1123 = vld [vmem:[%s1114 + $0x20] sm:$0xf]
      %v1124 = vld [vmem:[%s1114 + $0x24] sm:$0xf]
      %v1125 = vld [vmem:[%s1114 + $0x28] sm:$0xf]
      %v1126 = vld [vmem:[%s1114 + $0x2c] sm:$0xf]
      %v1127 = vld [vmem:[%s1114 + $0x30] sm:$0xf]
      %v1128 = vld [vmem:[%s1114 + $0x34] sm:$0xf]
      %v1129 = vld [vmem:[%s1114 + $0x38] sm:$0xf]
      %v1130 = vld [vmem:[%s1114 + $0x3c] sm:$0xf]
      %v1131 = vunpack.c.l.b16 %v1015
      %v1132 = vunpack.c.l.b16 %v1029
      %v1133 = vunpack.c.l.b16 %v1043
      %v1134 = vunpack.c.l.b16 %v1057
      %v1135 = vunpack.c.l.b16 %v1071
      %v1136 = vunpack.c.l.b16 %v1085
      %v1137 = vunpack.c.l.b16 %v1099
      %v1138 = vunpack.c.l.b16 %v1113
      %v1139 = vpack.c.b16 %v1132, %v1131
      %v1140 = vpack.c.b16 %v1134, %v1133
      %v1141 = vpack.c.b16 %v1136, %v1135
      %v1142 = vpack.c.b16 %v1138, %v1137
      %v1163 = vunpack.c.l.b16 %v1115
      %v1164 = vunpack.c.l.b16 %v1116
      %v1165 = vunpack.c.l.b16 %v1117
      %v1166 = vunpack.c.l.b16 %v1118
      %v1167 = vunpack.c.l.b16 %v1119
      %v1168 = vunpack.c.l.b16 %v1120
      %v1169 = vunpack.c.l.b16 %v1121
      %v1170 = vunpack.c.l.b16 %v1122
      %v1171 = vunpack.c.l.b16 %v1123
      %v1172 = vunpack.c.l.b16 %v1124
      %v1173 = vunpack.c.l.b16 %v1125
      %v1174 = vunpack.c.l.b16 %v1126
      %v1175 = vunpack.c.l.b16 %v1127
      %v1176 = vunpack.c.l.b16 %v1128
      %v1177 = vunpack.c.l.b16 %v1129
      %v1178 = vunpack.c.l.b16 %v1130
      %v1179 = vpack.c.b16 %v1164, %v1163
      %v1180 = vpack.c.b16 %v1166, %v1165
      %v1181 = vpack.c.b16 %v1168, %v1167
      %v1182 = vpack.c.b16 %v1170, %v1169
      %v1183 = vpack.c.b16 %v1172, %v1171
      %v1184 = vpack.c.b16 %v1174, %v1173
      %v1185 = vpack.c.b16 %v1176, %v1175
      %v1186 = vpack.c.b16 %v1178, %v1177
      %1195 = vmatprep.subr.bf16.mxu0 0
      %1196 = vmatpush1.bf16.msra.mxu0 %v1186
      %1197 = vmatprep.subr.bf16.mxu0 0
      %1198 = vmatpush1.bf16.msra.mxu0 %v1185
      %1199 = vmatprep.subr.bf16.mxu0 0
      %1200 = vmatpush1.bf16.msra.mxu0 %v1184
      %1201 = vmatprep.subr.bf16.mxu0 0
      %1202 = vmatpush1.bf16.msra.mxu0 %v1183
      %1203 = vmatprep.subr.bf16.mxu0 0
      %1204 = vmatpush1.bf16.msra.mxu0 %v1182
      %1205 = vmatprep.subr.bf16.mxu0 0
      %1206 = vmatpush1.bf16.msra.mxu0 %v1181
      %1207 = vmatprep.subr.bf16.mxu0 0
      %1208 = vmatpush1.bf16.msra.mxu0 %v1180
      %1209 = vmatprep.subr.bf16.mxu0 0
      %1210 = vmatpush1.bf16.msra.mxu0 %v1179
      %1211 = vmatprep.subr.bf16.mxu0 0
      %1212 = vmatpush2.bf16.msra.mxu0 0
      %1213 = vmatprep.subr.bf16.mxu0 0
      %1214 = vmatpush2.bf16.msra.mxu0 0
      %1215 = vmatprep.subr.bf16.mxu0 0
      %1216 = vmatpush2.bf16.msra.mxu0 0
      %1217 = vmatprep.subr.bf16.mxu0 0
      %1218 = vmatpush2.bf16.msra.mxu0 0
      %1219 = vmatprep.subr.bf16.mxu0 0
      %1220 = vmatpush2.bf16.msra.mxu0 0
      %1221 = vmatprep.subr.bf16.mxu0 0
      %1222 = vmatpush2.bf16.msra.mxu0 0
      %1223 = vmatprep.subr.bf16.mxu0 0
      %1224 = vmatpush2.bf16.msra.mxu0 0
      %1225 = vmatprep.subr.bf16.mxu0 0
      %1226 = vmatpush2.bf16.msra.mxu0 0
      %1227 = vmatprep.mubr.bf16.mxu0 0
      %1228 = vmatmul.mubr.bf16.gmra.mxu0 %v1139
      %v1229 = vpop.f32.mrf.mxu0
      %v1230 = vadd.f32 0.0, %v1229
      %v1231 = vpop.f32.mrf.mxu0
      %v1232 = vpop.f32.mrf.mxu0
      %v1233 = vadd.f32 0.0, %v1232
      %v1234 = vpop.f32.mrf.mxu0
      %1235 = vmatprep.mubr.bf16.mxu0 0
      %1236 = vmatmul.mubr.bf16.gmra.mxu0 %v1140
      %v1237 = vpop.f32.mrf.mxu0
      %v1238 = vadd.f32 0.0, %v1237
      %v1239 = vpop.f32.mrf.mxu0
      %v1240 = vpop.f32.mrf.mxu0
      %v1241 = vadd.f32 0.0, %v1240
      %v1242 = vpop.f32.mrf.mxu0
      %1243 = vmatprep.mubr.bf16.mxu0 0
      %1244 = vmatmul.mubr.bf16.gmra.mxu0 %v1141
      %v1245 = vpop.f32.mrf.mxu0
      %v1246 = vadd.f32 0.0, %v1245
      %v1247 = vpop.f32.mrf.mxu0
      %v1248 = vpop.f32.mrf.mxu0
      %v1249 = vadd.f32 0.0, %v1248
      %v1250 = vpop.f32.mrf.mxu0
      %1251 = vmatprep.mubr.bf16.mxu0 0
      %1252 = vmatmul.mubr.bf16.gmra.mxu0 %v1142
      %v1253 = vpop.f32.mrf.mxu0
      %v1254 = vadd.f32 0.0, %v1253
      %v1255 = vpop.f32.mrf.mxu0
      %v1256 = vpop.f32.mrf.mxu0
      %v1257 = vadd.f32 0.0, %v1256
      %v1258 = vpop.f32.mrf.mxu0
      %1259 = vdwg.mxu0
      %v1260 = vadd.f32 %v978, %v1230
      %v1261 = vadd.f32 %v979, %v1233
      %v1262 = vadd.f32 %v980, %v1238
      %v1263 = vadd.f32 %v981, %v1241
      %v1264 = vadd.f32 %v982, %v1246
      %v1265 = vadd.f32 %v983, %v1249
      %v1266 = vadd.f32 %v984, %v1254
      %v1267 = vadd.f32 %v985, %v1257
      %v1268 = vld [vmem:[%s815] sm:$0xe]
      %v1269 = vld [vmem:[%s815 + $0x8] sm:$0xe]
      %v1270 = vld [vmem:[%s815 + $0x10] sm:$0xe]
      %v1271 = vld [vmem:[%s815 + $0x18] sm:$0xe]
      %v1272 = vld [vmem:[%s815 + $0x20] sm:$0xe]
      %v1273 = vld [vmem:[%s815 + $0x28] sm:$0xe]
      %v1274 = vld [vmem:[%s815 + $0x30] sm:$0xe]
      %v1275 = vld [vmem:[%s815 + $0x38] sm:$0xe]
      %v1292 = vrot.slane %v1268, 5
      %v1293 = vrot.slane %v1292, 4
      %v1294 = vrot.slane %v987, 5
      %v1295 = vsel %vm628, %v1293, %v1294
      %v1296 = vrot.slane %v1269, 5
      %v1297 = vrot.slane %v1296, 4
      %v1298 = vrot.slane %v989, 5
      %v1299 = vsel %vm628, %v1297, %v1298
      %v1300 = vrot.slane %v1270, 5
      %v1301 = vrot.slane %v1300, 4
      %v1302 = vrot.slane %v991, 5
      %v1303 = vsel %vm628, %v1301, %v1302
      %v1304 = vrot.slane %v1271, 5
      %v1305 = vrot.slane %v1304, 4
      %v1306 = vrot.slane %v993, 5
      %v1307 = vsel %vm628, %v1305, %v1306
      %v1308 = vrot.slane %v1272, 5
      %v1309 = vrot.slane %v1308, 4
      %v1310 = vrot.slane %v995, 5
      %v1311 = vsel %vm628, %v1309, %v1310
      %v1312 = vrot.slane %v1273, 5
      %v1313 = vrot.slane %v1312, 4
      %v1314 = vrot.slane %v997, 5
      %v1315 = vsel %vm628, %v1313, %v1314
      %v1316 = vrot.slane %v1274, 5
      %v1317 = vrot.slane %v1316, 4
      %v1318 = vrot.slane %v999, 5
      %v1319 = vsel %vm628, %v1317, %v1318
      %v1320 = vrot.slane %v1275, 5
      %v1321 = vrot.slane %v1320, 4
      %v1322 = vrot.slane %v1001, 5
      %v1323 = vsel %vm628, %v1321, %v1322
      %s1324 = scalar_lea.vmem %s1, 320
      %v1325 = vld [vmem:[%s1324] sm:$0xf]
      %v1326 = vld [vmem:[%s1324 + $0x4] sm:$0xf]
      %v1327 = vld [vmem:[%s1324 + $0x8] sm:$0xf]
      %v1328 = vld [vmem:[%s1324 + $0xc] sm:$0xf]
      %v1329 = vld [vmem:[%s1324 + $0x10] sm:$0xf]
      %v1330 = vld [vmem:[%s1324 + $0x14] sm:$0xf]
      %v1331 = vld [vmem:[%s1324 + $0x18] sm:$0xf]
      %v1332 = vld [vmem:[%s1324 + $0x1c] sm:$0xf]
      %v1333 = vld [vmem:[%s1324 + $0x20] sm:$0xf]
      %v1334 = vld [vmem:[%s1324 + $0x24] sm:$0xf]
      %v1335 = vld [vmem:[%s1324 + $0x28] sm:$0xf]
      %v1336 = vld [vmem:[%s1324 + $0x2c] sm:$0xf]
      %v1337 = vld [vmem:[%s1324 + $0x30] sm:$0xf]
      %v1338 = vld [vmem:[%s1324 + $0x34] sm:$0xf]
      %v1339 = vld [vmem:[%s1324 + $0x38] sm:$0xf]
      %v1340 = vld [vmem:[%s1324 + $0x3c] sm:$0xf]
      %v1341 = vunpack.c.l.b16 %v1295
      %v1342 = vunpack.c.l.b16 %v1299
      %v1343 = vunpack.c.l.b16 %v1303
      %v1344 = vunpack.c.l.b16 %v1307
      %v1345 = vunpack.c.l.b16 %v1311
      %v1346 = vunpack.c.l.b16 %v1315
      %v1347 = vunpack.c.l.b16 %v1319
      %v1348 = vunpack.c.l.b16 %v1323
      %v1349 = vpack.c.b16 %v1342, %v1341
      %v1350 = vpack.c.b16 %v1344, %v1343
      %v1351 = vpack.c.b16 %v1346, %v1345
      %v1352 = vpack.c.b16 %v1348, %v1347
      %v1373 = vunpack.c.l.b16 %v1325
      %v1374 = vunpack.c.l.b16 %v1326
      %v1375 = vunpack.c.l.b16 %v1327
      %v1376 = vunpack.c.l.b16 %v1328
      %v1377 = vunpack.c.l.b16 %v1329
      %v1378 = vunpack.c.l.b16 %v1330
      %v1379 = vunpack.c.l.b16 %v1331
      %v1380 = vunpack.c.l.b16 %v1332
      %v1381 = vunpack.c.l.b16 %v1333
      %v1382 = vunpack.c.l.b16 %v1334
      %v1383 = vunpack.c.l.b16 %v1335
      %v1384 = vunpack.c.l.b16 %v1336
      %v1385 = vunpack.c.l.b16 %v1337
      %v1386 = vunpack.c.l.b16 %v1338
      %v1387 = vunpack.c.l.b16 %v1339
      %v1388 = vunpack.c.l.b16 %v1340
      %v1389 = vpack.c.b16 %v1374, %v1373
      %v1390 = vpack.c.b16 %v1376, %v1375
      %v1391 = vpack.c.b16 %v1378, %v1377
      %v1392 = vpack.c.b16 %v1380, %v1379
      %v1393 = vpack.c.b16 %v1382, %v1381
      %v1394 = vpack.c.b16 %v1384, %v1383
      %v1395 = vpack.c.b16 %v1386, %v1385
      %v1396 = vpack.c.b16 %v1388, %v1387
      %1405 = vmatprep.subr.bf16.mxu0 0
      %1406 = vmatpush1.bf16.msra.mxu0 %v1396
      %1407 = vmatprep.subr.bf16.mxu0 0
      %1408 = vmatpush1.bf16.msra.mxu0 %v1395
      %1409 = vmatprep.subr.bf16.mxu0 0
      %1410 = vmatpush1.bf16.msra.mxu0 %v1394
      %1411 = vmatprep.subr.bf16.mxu0 0
      %1412 = vmatpush1.bf16.msra.mxu0 %v1393
      %1413 = vmatprep.subr.bf16.mxu0 0
      %1414 = vmatpush1.bf16.msra.mxu0 %v1392
      %1415 = vmatprep.subr.bf16.mxu0 0
      %1416 = vmatpush1.bf16.msra.mxu0 %v1391
      %1417 = vmatprep.subr.bf16.mxu0 0
      %1418 = vmatpush1.bf16.msra.mxu0 %v1390
      %1419 = vmatprep.subr.bf16.mxu0 0
      %1420 = vmatpush1.bf16.msra.mxu0 %v1389
      %1421 = vmatprep.subr.bf16.mxu0 0
      %1422 = vmatpush2.bf16.msra.mxu0 0
      %1423 = vmatprep.subr.bf16.mxu0 0
      %1424 = vmatpush2.bf16.msra.mxu0 0
      %1425 = vmatprep.subr.bf16.mxu0 0
      %1426 = vmatpush2.bf16.msra.mxu0 0
      %1427 = vmatprep.subr.bf16.mxu0 0
      %1428 = vmatpush2.bf16.msra.mxu0 0
      %1429 = vmatprep.subr.bf16.mxu0 0
      %1430 = vmatpush2.bf16.msra.mxu0 0
      %1431 = vmatprep.subr.bf16.mxu0 0
      %1432 = vmatpush2.bf16.msra.mxu0 0
      %1433 = vmatprep.subr.bf16.mxu0 0
      %1434 = vmatpush2.bf16.msra.mxu0 0
      %1435 = vmatprep.subr.bf16.mxu0 0
      %1436 = vmatpush2.bf16.msra.mxu0 0
      %1437 = vmatprep.mubr.bf16.mxu0 0
      %1438 = vmatmul.mubr.bf16.gmra.mxu0 %v1349
      %v1439 = vpop.f32.mrf.mxu0
      %v1440 = vadd.f32 0.0, %v1439
      %v1441 = vpop.f32.mrf.mxu0
      %v1442 = vpop.f32.mrf.mxu0
      %v1443 = vadd.f32 0.0, %v1442
      %v1444 = vpop.f32.mrf.mxu0
      %1445 = vmatprep.mubr.bf16.mxu0 0
      %1446 = vmatmul.mubr.bf16.gmra.mxu0 %v1350
      %v1447 = vpop.f32.mrf.mxu0
      %v1448 = vadd.f32 0.0, %v1447
      %v1449 = vpop.f32.mrf.mxu0
      %v1450 = vpop.f32.mrf.mxu0
      %v1451 = vadd.f32 0.0, %v1450
      %v1452 = vpop.f32.mrf.mxu0
      %1453 = vmatprep.mubr.bf16.mxu0 0
      %1454 = vmatmul.mubr.bf16.gmra.mxu0 %v1351
      %v1455 = vpop.f32.mrf.mxu0
      %v1456 = vadd.f32 0.0, %v1455
      %v1457 = vpop.f32.mrf.mxu0
      %v1458 = vpop.f32.mrf.mxu0
      %v1459 = vadd.f32 0.0, %v1458
      %v1460 = vpop.f32.mrf.mxu0
      %1461 = vmatprep.mubr.bf16.mxu0 0
      %1462 = vmatmul.mubr.bf16.gmra.mxu0 %v1352
      %v1463 = vpop.f32.mrf.mxu0
      %v1464 = vadd.f32 0.0, %v1463
      %v1465 = vpop.f32.mrf.mxu0
      %v1466 = vpop.f32.mrf.mxu0
      %v1467 = vadd.f32 0.0, %v1466
      %v1468 = vpop.f32.mrf.mxu0
      %1469 = vdwg.mxu0
      %v1470 = vadd.f32 %v1260, %v1440
      %v1471 = vadd.f32 %v1261, %v1443
      %v1472 = vadd.f32 %v1262, %v1448
      %v1473 = vadd.f32 %v1263, %v1451
      %v1474 = vadd.f32 %v1264, %v1456
      %v1475 = vadd.f32 %v1265, %v1459
      %v1476 = vadd.f32 %v1266, %v1464
      %v1477 = vadd.f32 %v1267, %v1467
      %s1478 = scalar_lea.vmem %s165, 16
      %v1479 = vld [vmem:[%s1478] sm:$0xf]
      %v1480 = vld [vmem:[%s1478 + $0x8] sm:$0xf]
      %v1481 = vld [vmem:[%s1478 + $0x10] sm:$0xf]
      %v1482 = vld [vmem:[%s1478 + $0x18] sm:$0xf]
      %v1483 = vld [vmem:[%s1478 + $0x20] sm:$0xf]
      %v1484 = vld [vmem:[%s1478 + $0x28] sm:$0xf]
      %v1485 = vld [vmem:[%s1478 + $0x30] sm:$0xf]
      %v1486 = vld [vmem:[%s1478 + $0x38] sm:$0xf]
      %s1487 = scalar_lea.vmem %s1, 384
      %v1488 = vld [vmem:[%s1487] sm:$0xf]
      %v1489 = vld [vmem:[%s1487 + $0x4] sm:$0xf]
      %v1490 = vld [vmem:[%s1487 + $0x8] sm:$0xf]
      %v1491 = vld [vmem:[%s1487 + $0xc] sm:$0xf]
      %v1492 = vld [vmem:[%s1487 + $0x10] sm:$0xf]
      %v1493 = vld [vmem:[%s1487 + $0x14] sm:$0xf]
      %v1494 = vld [vmem:[%s1487 + $0x18] sm:$0xf]
      %v1495 = vld [vmem:[%s1487 + $0x1c] sm:$0xf]
      %v1496 = vld [vmem:[%s1487 + $0x20] sm:$0xf]
      %v1497 = vld [vmem:[%s1487 + $0x24] sm:$0xf]
      %v1498 = vld [vmem:[%s1487 + $0x28] sm:$0xf]
      %v1499 = vld [vmem:[%s1487 + $0x2c] sm:$0xf]
      %v1500 = vld [vmem:[%s1487 + $0x30] sm:$0xf]
      %v1501 = vld [vmem:[%s1487 + $0x34] sm:$0xf]
      %v1502 = vld [vmem:[%s1487 + $0x38] sm:$0xf]
      %v1503 = vld [vmem:[%s1487 + $0x3c] sm:$0xf]
      %v1512 = vunpack.c.l.b16 %v1479
      %v1513 = vunpack.c.l.b16 %v1480
      %v1514 = vunpack.c.l.b16 %v1481
      %v1515 = vunpack.c.l.b16 %v1482
      %v1516 = vunpack.c.l.b16 %v1483
      %v1517 = vunpack.c.l.b16 %v1484
      %v1518 = vunpack.c.l.b16 %v1485
      %v1519 = vunpack.c.l.b16 %v1486
      %v1520 = vpack.c.b16 %v1513, %v1512
      %v1521 = vpack.c.b16 %v1515, %v1514
      %v1522 = vpack.c.b16 %v1517, %v1516
      %v1523 = vpack.c.b16 %v1519, %v1518
      %v1544 = vunpack.c.l.b16 %v1488
      %v1545 = vunpack.c.l.b16 %v1489
      %v1546 = vunpack.c.l.b16 %v1490
      %v1547 = vunpack.c.l.b16 %v1491
      %v1548 = vunpack.c.l.b16 %v1492
      %v1549 = vunpack.c.l.b16 %v1493
      %v1550 = vunpack.c.l.b16 %v1494
      %v1551 = vunpack.c.l.b16 %v1495
      %v1552 = vunpack.c.l.b16 %v1496
      %v1553 = vunpack.c.l.b16 %v1497
      %v1554 = vunpack.c.l.b16 %v1498
      %v1555 = vunpack.c.l.b16 %v1499
      %v1556 = vunpack.c.l.b16 %v1500
      %v1557 = vunpack.c.l.b16 %v1501
      %v1558 = vunpack.c.l.b16 %v1502
      %v1559 = vunpack.c.l.b16 %v1503
      %v1560 = vpack.c.b16 %v1545, %v1544
      %v1561 = vpack.c.b16 %v1547, %v1546
      %v1562 = vpack.c.b16 %v1549, %v1548
      %v1563 = vpack.c.b16 %v1551, %v1550
      %v1564 = vpack.c.b16 %v1553, %v1552
      %v1565 = vpack.c.b16 %v1555, %v1554
      %v1566 = vpack.c.b16 %v1557, %v1556
      %v1567 = vpack.c.b16 %v1559, %v1558
      %1576 = vmatprep.subr.bf16.mxu0 0
      %1577 = vmatpush1.bf16.msra.mxu0 %v1567
      %1578 = vmatprep.subr.bf16.mxu0 0
      %1579 = vmatpush1.bf16.msra.mxu0 %v1566
      %1580 = vmatprep.subr.bf16.mxu0 0
      %1581 = vmatpush1.bf16.msra.mxu0 %v1565
      %1582 = vmatprep.subr.bf16.mxu0 0
      %1583 = vmatpush1.bf16.msra.mxu0 %v1564
      %1584 = vmatprep.subr.bf16.mxu0 0
      %1585 = vmatpush1.bf16.msra.mxu0 %v1563
      %1586 = vmatprep.subr.bf16.mxu0 0
      %1587 = vmatpush1.bf16.msra.mxu0 %v1562
      %1588 = vmatprep.subr.bf16.mxu0 0
      %1589 = vmatpush1.bf16.msra.mxu0 %v1561
      %1590 = vmatprep.subr.bf16.mxu0 0
      %1591 = vmatpush1.bf16.msra.mxu0 %v1560
      %1592 = vmatprep.subr.bf16.mxu0 0
      %1593 = vmatpush2.bf16.msra.mxu0 0
      %1594 = vmatprep.subr.bf16.mxu0 0
      %1595 = vmatpush2.bf16.msra.mxu0 0
      %1596 = vmatprep.subr.bf16.mxu0 0
      %1597 = vmatpush2.bf16.msra.mxu0 0
      %1598 = vmatprep.subr.bf16.mxu0 0
      %1599 = vmatpush2.bf16.msra.mxu0 0
      %1600 = vmatprep.subr.bf16.mxu0 0
      %1601 = vmatpush2.bf16.msra.mxu0 0
      %1602 = vmatprep.subr.bf16.mxu0 0
      %1603 = vmatpush2.bf16.msra.mxu0 0
      %1604 = vmatprep.subr.bf16.mxu0 0
      %1605 = vmatpush2.bf16.msra.mxu0 0
      %1606 = vmatprep.subr.bf16.mxu0 0
      %1607 = vmatpush2.bf16.msra.mxu0 0
      %1608 = vmatprep.mubr.bf16.mxu0 0
      %1609 = vmatmul.mubr.bf16.gmra.mxu0 %v1520
      %v1610 = vpop.f32.mrf.mxu0
      %v1611 = vadd.f32 0.0, %v1610
      %v1612 = vpop.f32.mrf.mxu0
      %v1613 = vpop.f32.mrf.mxu0
      %v1614 = vadd.f32 0.0, %v1613
      %v1615 = vpop.f32.mrf.mxu0
      %1616 = vmatprep.mubr.bf16.mxu0 0
      %1617 = vmatmul.mubr.bf16.gmra.mxu0 %v1521
      %v1618 = vpop.f32.mrf.mxu0
      %v1619 = vadd.f32 0.0, %v1618
      %v1620 = vpop.f32.mrf.mxu0
      %v1621 = vpop.f32.mrf.mxu0
      %v1622 = vadd.f32 0.0, %v1621
      %v1623 = vpop.f32.mrf.mxu0
      %1624 = vmatprep.mubr.bf16.mxu0 0
      %1625 = vmatmul.mubr.bf16.gmra.mxu0 %v1522
      %v1626 = vpop.f32.mrf.mxu0
      %v1627 = vadd.f32 0.0, %v1626
      %v1628 = vpop.f32.mrf.mxu0
      %v1629 = vpop.f32.mrf.mxu0
      %v1630 = vadd.f32 0.0, %v1629
      %v1631 = vpop.f32.mrf.mxu0
      %1632 = vmatprep.mubr.bf16.mxu0 0
      %1633 = vmatmul.mubr.bf16.gmra.mxu0 %v1523
      %v1634 = vpop.f32.mrf.mxu0
      %v1635 = vadd.f32 0.0, %v1634
      %v1636 = vpop.f32.mrf.mxu0
      %v1637 = vpop.f32.mrf.mxu0
      %v1638 = vadd.f32 0.0, %v1637
      %v1639 = vpop.f32.mrf.mxu0
      %1640 = vdwg.mxu0
      %v1641 = vadd.f32 %v1470, %v1611
      %v1642 = vadd.f32 %v1471, %v1614
      %v1643 = vadd.f32 %v1472, %v1619
      %v1644 = vadd.f32 %v1473, %v1622
      %v1645 = vadd.f32 %v1474, %v1627
      %v1646 = vadd.f32 %v1475, %v1630
      %v1647 = vadd.f32 %v1476, %v1635
      %v1648 = vadd.f32 %v1477, %v1638
      %v1649 = vld [vmem:[%s1478] sm:$0xf]
      %v1650 = vld [vmem:[%s1478 + $0x4] sm:$0x1]
      %v1651 = vld [vmem:[%s1478 + $0x8] sm:$0xf]
      %v1652 = vld [vmem:[%s1478 + $0xc] sm:$0x1]
      %v1653 = vld [vmem:[%s1478 + $0x10] sm:$0xf]
      %v1654 = vld [vmem:[%s1478 + $0x14] sm:$0x1]
      %v1655 = vld [vmem:[%s1478 + $0x18] sm:$0xf]
      %v1656 = vld [vmem:[%s1478 + $0x1c] sm:$0x1]
      %v1657 = vld [vmem:[%s1478 + $0x20] sm:$0xf]
      %v1658 = vld [vmem:[%s1478 + $0x24] sm:$0x1]
      %v1659 = vld [vmem:[%s1478 + $0x28] sm:$0xf]
      %v1660 = vld [vmem:[%s1478 + $0x2c] sm:$0x1]
      %v1661 = vld [vmem:[%s1478 + $0x30] sm:$0xf]
      %v1662 = vld [vmem:[%s1478 + $0x34] sm:$0x1]
      %v1663 = vld [vmem:[%s1478 + $0x38] sm:$0xf]
      %v1664 = vld [vmem:[%s1478 + $0x3c] sm:$0x1]
      %v1666 = vshrl.u32 %v1649, 16
      %v1668 = vrot.slane %v1666, 4
      %v1669 = vshll.u32 %v1649, 16
      %v1671 = vrot.slane %v1669, 5
      %v1672 = vor.u32 %v1668, %v1671
      %v1673 = vrot.slane %v1672, 4
      %v1675 = vshll.u32 %v1650, 16
      %v1677 = vrot.slane %v1675, 5
      %v1678 = vsel %vm206, %v1673, %v1677
      %v1680 = vshrl.u32 %v1651, 16
      %v1682 = vrot.slane %v1680, 4
      %v1683 = vshll.u32 %v1651, 16
      %v1685 = vrot.slane %v1683, 5
      %v1686 = vor.u32 %v1682, %v1685
      %v1687 = vrot.slane %v1686, 4
      %v1689 = vshll.u32 %v1652, 16
      %v1691 = vrot.slane %v1689, 5
      %v1692 = vsel %vm206, %v1687, %v1691
      %v1694 = vshrl.u32 %v1653, 16
      %v1696 = vrot.slane %v1694, 4
      %v1697 = vshll.u32 %v1653, 16
      %v1699 = vrot.slane %v1697, 5
      %v1700 = vor.u32 %v1696, %v1699
      %v1701 = vrot.slane %v1700, 4
      %v1703 = vshll.u32 %v1654, 16
      %v1705 = vrot.slane %v1703, 5
      %v1706 = vsel %vm206, %v1701, %v1705
      %v1708 = vshrl.u32 %v1655, 16
      %v1710 = vrot.slane %v1708, 4
      %v1711 = vshll.u32 %v1655, 16
      %v1713 = vrot.slane %v1711, 5
      %v1714 = vor.u32 %v1710, %v1713
      %v1715 = vrot.slane %v1714, 4
      %v1717 = vshll.u32 %v1656, 16
      %v1719 = vrot.slane %v1717, 5
      %v1720 = vsel %vm206, %v1715, %v1719
      %v1722 = vshrl.u32 %v1657, 16
      %v1724 = vrot.slane %v1722, 4
      %v1725 = vshll.u32 %v1657, 16
      %v1727 = vrot.slane %v1725, 5
      %v1728 = vor.u32 %v1724, %v1727
      %v1729 = vrot.slane %v1728, 4
      %v1731 = vshll.u32 %v1658, 16
      %v1733 = vrot.slane %v1731, 5
      %v1734 = vsel %vm206, %v1729, %v1733
      %v1736 = vshrl.u32 %v1659, 16
      %v1738 = vrot.slane %v1736, 4
      %v1739 = vshll.u32 %v1659, 16
      %v1741 = vrot.slane %v1739, 5
      %v1742 = vor.u32 %v1738, %v1741
      %v1743 = vrot.slane %v1742, 4
      %v1745 = vshll.u32 %v1660, 16
      %v1747 = vrot.slane %v1745, 5
      %v1748 = vsel %vm206, %v1743, %v1747
      %v1750 = vshrl.u32 %v1661, 16
      %v1752 = vrot.slane %v1750, 4
      %v1753 = vshll.u32 %v1661, 16
      %v1755 = vrot.slane %v1753, 5
      %v1756 = vor.u32 %v1752, %v1755
      %v1757 = vrot.slane %v1756, 4
      %v1759 = vshll.u32 %v1662, 16
      %v1761 = vrot.slane %v1759, 5
      %v1762 = vsel %vm206, %v1757, %v1761
      %v1764 = vshrl.u32 %v1663, 16
      %v1766 = vrot.slane %v1764, 4
      %v1767 = vshll.u32 %v1663, 16
      %v1769 = vrot.slane %v1767, 5
      %v1770 = vor.u32 %v1766, %v1769
      %v1771 = vrot.slane %v1770, 4
      %v1773 = vshll.u32 %v1664, 16
      %v1775 = vrot.slane %v1773, 5
      %v1776 = vsel %vm206, %v1771, %v1775
      %s1777 = scalar_lea.vmem %s1, 448
      %v1778 = vld [vmem:[%s1777] sm:$0xf]
      %v1779 = vld [vmem:[%s1777 + $0x4] sm:$0xf]
      %v1780 = vld [vmem:[%s1777 + $0x8] sm:$0xf]
      %v1781 = vld [vmem:[%s1777 + $0xc] sm:$0xf]
      %v1782 = vld [vmem:[%s1777 + $0x10] sm:$0xf]
      %v1783 = vld [vmem:[%s1777 + $0x14] sm:$0xf]
      %v1784 = vld [vmem:[%s1777 + $0x18] sm:$0xf]
      %v1785 = vld [vmem:[%s1777 + $0x1c] sm:$0xf]
      %v1786 = vld [vmem:[%s1777 + $0x20] sm:$0xf]
      %v1787 = vld [vmem:[%s1777 + $0x24] sm:$0xf]
      %v1788 = vld [vmem:[%s1777 + $0x28] sm:$0xf]
      %v1789 = vld [vmem:[%s1777 + $0x2c] sm:$0xf]
      %v1790 = vld [vmem:[%s1777 + $0x30] sm:$0xf]
      %v1791 = vld [vmem:[%s1777 + $0x34] sm:$0xf]
      %v1792 = vld [vmem:[%s1777 + $0x38] sm:$0xf]
      %v1793 = vld [vmem:[%s1777 + $0x3c] sm:$0xf]
      %v1794 = vunpack.c.l.b16 %v1678
      %v1795 = vunpack.c.l.b16 %v1692
      %v1796 = vunpack.c.l.b16 %v1706
      %v1797 = vunpack.c.l.b16 %v1720
      %v1798 = vunpack.c.l.b16 %v1734
      %v1799 = vunpack.c.l.b16 %v1748
      %v1800 = vunpack.c.l.b16 %v1762
      %v1801 = vunpack.c.l.b16 %v1776
      %v1802 = vpack.c.b16 %v1795, %v1794
      %v1803 = vpack.c.b16 %v1797, %v1796
      %v1804 = vpack.c.b16 %v1799, %v1798
      %v1805 = vpack.c.b16 %v1801, %v1800
      %v1826 = vunpack.c.l.b16 %v1778
      %v1827 = vunpack.c.l.b16 %v1779
      %v1828 = vunpack.c.l.b16 %v1780
      %v1829 = vunpack.c.l.b16 %v1781
      %v1830 = vunpack.c.l.b16 %v1782
      %v1831 = vunpack.c.l.b16 %v1783
      %v1832 = vunpack.c.l.b16 %v1784
      %v1833 = vunpack.c.l.b16 %v1785
      %v1834 = vunpack.c.l.b16 %v1786
      %v1835 = vunpack.c.l.b16 %v1787
      %v1836 = vunpack.c.l.b16 %v1788
      %v1837 = vunpack.c.l.b16 %v1789
      %v1838 = vunpack.c.l.b16 %v1790
      %v1839 = vunpack.c.l.b16 %v1791
      %v1840 = vunpack.c.l.b16 %v1792
      %v1841 = vunpack.c.l.b16 %v1793
      %v1842 = vpack.c.b16 %v1827, %v1826
      %v1843 = vpack.c.b16 %v1829, %v1828
      %v1844 = vpack.c.b16 %v1831, %v1830
      %v1845 = vpack.c.b16 %v1833, %v1832
      %v1846 = vpack.c.b16 %v1835, %v1834
      %v1847 = vpack.c.b16 %v1837, %v1836
      %v1848 = vpack.c.b16 %v1839, %v1838
      %v1849 = vpack.c.b16 %v1841, %v1840
      %1858 = vmatprep.subr.bf16.mxu0 0
      %1859 = vmatpush1.bf16.msra.mxu0 %v1849
      %1860 = vmatprep.subr.bf16.mxu0 0
      %1861 = vmatpush1.bf16.msra.mxu0 %v1848
      %1862 = vmatprep.subr.bf16.mxu0 0
      %1863 = vmatpush1.bf16.msra.mxu0 %v1847
      %1864 = vmatprep.subr.bf16.mxu0 0
      %1865 = vmatpush1.bf16.msra.mxu0 %v1846
      %1866 = vmatprep.subr.bf16.mxu0 0
      %1867 = vmatpush1.bf16.msra.mxu0 %v1845
      %1868 = vmatprep.subr.bf16.mxu0 0
      %1869 = vmatpush1.bf16.msra.mxu0 %v1844
      %1870 = vmatprep.subr.bf16.mxu0 0
      %1871 = vmatpush1.bf16.msra.mxu0 %v1843
      %1872 = vmatprep.subr.bf16.mxu0 0
      %1873 = vmatpush1.bf16.msra.mxu0 %v1842
      %1874 = vmatprep.subr.bf16.mxu0 0
      %1875 = vmatpush2.bf16.msra.mxu0 0
      %1876 = vmatprep.subr.bf16.mxu0 0
      %1877 = vmatpush2.bf16.msra.mxu0 0
      %1878 = vmatprep.subr.bf16.mxu0 0
      %1879 = vmatpush2.bf16.msra.mxu0 0
      %1880 = vmatprep.subr.bf16.mxu0 0
      %1881 = vmatpush2.bf16.msra.mxu0 0
      %1882 = vmatprep.subr.bf16.mxu0 0
      %1883 = vmatpush2.bf16.msra.mxu0 0
      %1884 = vmatprep.subr.bf16.mxu0 0
      %1885 = vmatpush2.bf16.msra.mxu0 0
      %1886 = vmatprep.subr.bf16.mxu0 0
      %1887 = vmatpush2.bf16.msra.mxu0 0
      %1888 = vmatprep.subr.bf16.mxu0 0
      %1889 = vmatpush2.bf16.msra.mxu0 0
      %1890 = vmatprep.mubr.bf16.mxu0 0
      %1891 = vmatmul.mubr.bf16.gmra.mxu0 %v1802
      %v1892 = vpop.f32.mrf.mxu0
      %v1893 = vadd.f32 0.0, %v1892
      %v1894 = vpop.f32.mrf.mxu0
      %v1895 = vpop.f32.mrf.mxu0
      %v1896 = vadd.f32 0.0, %v1895
      %v1897 = vpop.f32.mrf.mxu0
      %1898 = vmatprep.mubr.bf16.mxu0 0
      %1899 = vmatmul.mubr.bf16.gmra.mxu0 %v1803
      %v1900 = vpop.f32.mrf.mxu0
      %v1901 = vadd.f32 0.0, %v1900
      %v1902 = vpop.f32.mrf.mxu0
      %v1903 = vpop.f32.mrf.mxu0
      %v1904 = vadd.f32 0.0, %v1903
      %v1905 = vpop.f32.mrf.mxu0
      %1906 = vmatprep.mubr.bf16.mxu0 0
      %1907 = vmatmul.mubr.bf16.gmra.mxu0 %v1804
      %v1908 = vpop.f32.mrf.mxu0
      %v1909 = vadd.f32 0.0, %v1908
      %v1910 = vpop.f32.mrf.mxu0
      %v1911 = vpop.f32.mrf.mxu0
      %v1912 = vadd.f32 0.0, %v1911
      %v1913 = vpop.f32.mrf.mxu0
      %1914 = vmatprep.mubr.bf16.mxu0 0
      %1915 = vmatmul.mubr.bf16.gmra.mxu0 %v1805
      %v1916 = vpop.f32.mrf.mxu0
      %v1917 = vadd.f32 0.0, %v1916
      %v1918 = vpop.f32.mrf.mxu0
      %v1919 = vpop.f32.mrf.mxu0
      %v1920 = vadd.f32 0.0, %v1919
      %v1921 = vpop.f32.mrf.mxu0
      %1922 = vdwg.mxu0
      %v1923 = vadd.f32 %v1641, %v1893
      %v1924 = vadd.f32 %v1642, %v1896
      %v1925 = vadd.f32 %v1643, %v1901
      %v1926 = vadd.f32 %v1644, %v1904
      %v1927 = vadd.f32 %v1645, %v1909
      %v1928 = vadd.f32 %v1646, %v1912
      %v1929 = vadd.f32 %v1647, %v1917
      %v1930 = vadd.f32 %v1648, %v1920
      %v1931 = vld [vmem:[%s1478] sm:$0xe]
      %v1932 = vld [vmem:[%s1478 + $0x8] sm:$0xe]
      %v1933 = vld [vmem:[%s1478 + $0x10] sm:$0xe]
      %v1934 = vld [vmem:[%s1478 + $0x18] sm:$0xe]
      %v1935 = vld [vmem:[%s1478 + $0x20] sm:$0xe]
      %v1936 = vld [vmem:[%s1478 + $0x28] sm:$0xe]
      %v1937 = vld [vmem:[%s1478 + $0x30] sm:$0xe]
      %v1938 = vld [vmem:[%s1478 + $0x38] sm:$0xe]
      %v1955 = vrot.slane %v1931, 5
      %v1956 = vrot.slane %v1955, 4
      %v1957 = vrot.slane %v1650, 5
      %v1958 = vsel %vm628, %v1956, %v1957
      %v1959 = vrot.slane %v1932, 5
      %v1960 = vrot.slane %v1959, 4
      %v1961 = vrot.slane %v1652, 5
      %v1962 = vsel %vm628, %v1960, %v1961
      %v1963 = vrot.slane %v1933, 5
      %v1964 = vrot.slane %v1963, 4
      %v1965 = vrot.slane %v1654, 5
      %v1966 = vsel %vm628, %v1964, %v1965
      %v1967 = vrot.slane %v1934, 5
      %v1968 = vrot.slane %v1967, 4
      %v1969 = vrot.slane %v1656, 5
      %v1970 = vsel %vm628, %v1968, %v1969
      %v1971 = vrot.slane %v1935, 5
      %v1972 = vrot.slane %v1971, 4
      %v1973 = vrot.slane %v1658, 5
      %v1974 = vsel %vm628, %v1972, %v1973
      %v1975 = vrot.slane %v1936, 5
      %v1976 = vrot.slane %v1975, 4
      %v1977 = vrot.slane %v1660, 5
      %v1978 = vsel %vm628, %v1976, %v1977
      %v1979 = vrot.slane %v1937, 5
      %v1980 = vrot.slane %v1979, 4
      %v1981 = vrot.slane %v1662, 5
      %v1982 = vsel %vm628, %v1980, %v1981
      %v1983 = vrot.slane %v1938, 5
      %v1984 = vrot.slane %v1983, 4
      %v1985 = vrot.slane %v1664, 5
      %v1986 = vsel %vm628, %v1984, %v1985
      %s1987 = scalar_lea.vmem %s1, 512
      %v1988 = vld [vmem:[%s1987] sm:$0xf]
      %v1989 = vld [vmem:[%s1987 + $0x4] sm:$0xf]
      %v1990 = vld [vmem:[%s1987 + $0x8] sm:$0xf]
      %v1991 = vld [vmem:[%s1987 + $0xc] sm:$0xf]
      %v1992 = vld [vmem:[%s1987 + $0x10] sm:$0xf]
      %v1993 = vld [vmem:[%s1987 + $0x14] sm:$0xf]
      %v1994 = vld [vmem:[%s1987 + $0x18] sm:$0xf]
      %v1995 = vld [vmem:[%s1987 + $0x1c] sm:$0xf]
      %v1996 = vld [vmem:[%s1987 + $0x20] sm:$0xf]
      %v1997 = vld [vmem:[%s1987 + $0x24] sm:$0xf]
      %v1998 = vld [vmem:[%s1987 + $0x28] sm:$0xf]
      %v1999 = vld [vmem:[%s1987 + $0x2c] sm:$0xf]
      %v2000 = vld [vmem:[%s1987 + $0x30] sm:$0xf]
      %v2001 = vld [vmem:[%s1987 + $0x34] sm:$0xf]
      %v2002 = vld [vmem:[%s1987 + $0x38] sm:$0xf]
      %v2003 = vld [vmem:[%s1987 + $0x3c] sm:$0xf]
      %v2004 = vunpack.c.l.b16 %v1958
      %v2005 = vunpack.c.l.b16 %v1962
      %v2006 = vunpack.c.l.b16 %v1966
      %v2007 = vunpack.c.l.b16 %v1970
      %v2008 = vunpack.c.l.b16 %v1974
      %v2009 = vunpack.c.l.b16 %v1978
      %v2010 = vunpack.c.l.b16 %v1982
      %v2011 = vunpack.c.l.b16 %v1986
      %v2012 = vpack.c.b16 %v2005, %v2004
      %v2013 = vpack.c.b16 %v2007, %v2006
      %v2014 = vpack.c.b16 %v2009, %v2008
      %v2015 = vpack.c.b16 %v2011, %v2010
      %v2036 = vunpack.c.l.b16 %v1988
      %v2037 = vunpack.c.l.b16 %v1989
      %v2038 = vunpack.c.l.b16 %v1990
      %v2039 = vunpack.c.l.b16 %v1991
      %v2040 = vunpack.c.l.b16 %v1992
      %v2041 = vunpack.c.l.b16 %v1993
      %v2042 = vunpack.c.l.b16 %v1994
      %v2043 = vunpack.c.l.b16 %v1995
      %v2044 = vunpack.c.l.b16 %v1996
      %v2045 = vunpack.c.l.b16 %v1997
      %v2046 = vunpack.c.l.b16 %v1998
      %v2047 = vunpack.c.l.b16 %v1999
      %v2048 = vunpack.c.l.b16 %v2000
      %v2049 = vunpack.c.l.b16 %v2001
      %v2050 = vunpack.c.l.b16 %v2002
      %v2051 = vunpack.c.l.b16 %v2003
      %v2052 = vpack.c.b16 %v2037, %v2036
      %v2053 = vpack.c.b16 %v2039, %v2038
      %v2054 = vpack.c.b16 %v2041, %v2040
      %v2055 = vpack.c.b16 %v2043, %v2042
      %v2056 = vpack.c.b16 %v2045, %v2044
      %v2057 = vpack.c.b16 %v2047, %v2046
      %v2058 = vpack.c.b16 %v2049, %v2048
      %v2059 = vpack.c.b16 %v2051, %v2050
      %2068 = vmatprep.subr.bf16.mxu0 0
      %2069 = vmatpush1.bf16.msra.mxu0 %v2059
      %2070 = vmatprep.subr.bf16.mxu0 0
      %2071 = vmatpush1.bf16.msra.mxu0 %v2058
      %2072 = vmatprep.subr.bf16.mxu0 0
      %2073 = vmatpush1.bf16.msra.mxu0 %v2057
      %2074 = vmatprep.subr.bf16.mxu0 0
      %2075 = vmatpush1.bf16.msra.mxu0 %v2056
      %2076 = vmatprep.subr.bf16.mxu0 0
      %2077 = vmatpush1.bf16.msra.mxu0 %v2055
      %2078 = vmatprep.subr.bf16.mxu0 0
      %2079 = vmatpush1.bf16.msra.mxu0 %v2054
      %2080 = vmatprep.subr.bf16.mxu0 0
      %2081 = vmatpush1.bf16.msra.mxu0 %v2053
      %2082 = vmatprep.subr.bf16.mxu0 0
      %2083 = vmatpush1.bf16.msra.mxu0 %v2052
      %2084 = vmatprep.subr.bf16.mxu0 0
      %2085 = vmatpush2.bf16.msra.mxu0 0
      %2086 = vmatprep.subr.bf16.mxu0 0
      %2087 = vmatpush2.bf16.msra.mxu0 0
      %2088 = vmatprep.subr.bf16.mxu0 0
      %2089 = vmatpush2.bf16.msra.mxu0 0
      %2090 = vmatprep.subr.bf16.mxu0 0
      %2091 = vmatpush2.bf16.msra.mxu0 0
      %2092 = vmatprep.subr.bf16.mxu0 0
      %2093 = vmatpush2.bf16.msra.mxu0 0
      %2094 = vmatprep.subr.bf16.mxu0 0
      %2095 = vmatpush2.bf16.msra.mxu0 0
      %2096 = vmatprep.subr.bf16.mxu0 0
      %2097 = vmatpush2.bf16.msra.mxu0 0
      %2098 = vmatprep.subr.bf16.mxu0 0
      %2099 = vmatpush2.bf16.msra.mxu0 0
      %2100 = vmatprep.mubr.bf16.mxu0 0
      %2101 = vmatmul.mubr.bf16.gmra.mxu0 %v2012
      %v2102 = vpop.f32.mrf.mxu0
      %v2103 = vadd.f32 0.0, %v2102
      %v2104 = vpop.f32.mrf.mxu0
      %v2105 = vpop.f32.mrf.mxu0
      %v2106 = vadd.f32 0.0, %v2105
      %v2107 = vpop.f32.mrf.mxu0
      %2108 = vmatprep.mubr.bf16.mxu0 0
      %2109 = vmatmul.mubr.bf16.gmra.mxu0 %v2013
      %v2110 = vpop.f32.mrf.mxu0
      %v2111 = vadd.f32 0.0, %v2110
      %v2112 = vpop.f32.mrf.mxu0
      %v2113 = vpop.f32.mrf.mxu0
      %v2114 = vadd.f32 0.0, %v2113
      %v2115 = vpop.f32.mrf.mxu0
      %2116 = vmatprep.mubr.bf16.mxu0 0
      %2117 = vmatmul.mubr.bf16.gmra.mxu0 %v2014
      %v2118 = vpop.f32.mrf.mxu0
      %v2119 = vadd.f32 0.0, %v2118
      %v2120 = vpop.f32.mrf.mxu0
      %v2121 = vpop.f32.mrf.mxu0
      %v2122 = vadd.f32 0.0, %v2121
      %v2123 = vpop.f32.mrf.mxu0
      %2124 = vmatprep.mubr.bf16.mxu0 0
      %2125 = vmatmul.mubr.bf16.gmra.mxu0 %v2015
      %v2126 = vpop.f32.mrf.mxu0
      %v2127 = vadd.f32 0.0, %v2126
      %v2128 = vpop.f32.mrf.mxu0
      %v2129 = vpop.f32.mrf.mxu0
      %v2130 = vadd.f32 0.0, %v2129
      %v2131 = vpop.f32.mrf.mxu0
      %2132 = vdwg.mxu0
      %v2133 = vadd.f32 %v1923, %v2103
      %v2134 = vadd.f32 %v1924, %v2106
      %v2135 = vadd.f32 %v1925, %v2111
      %v2136 = vadd.f32 %v1926, %v2114
      %v2137 = vadd.f32 %v1927, %v2119
      %v2138 = vadd.f32 %v1928, %v2122
      %v2139 = vadd.f32 %v1929, %v2127
      %v2140 = vadd.f32 %v1930, %v2130
      %v2141 = vld [vmem:[%s2] sm:$0x1]
      %v2143 = vlaneseq
      %v2144 = vshrl.u32 %v2143, 7
      %v2145 = vsub.s32 0, %v2144
      %v2146 = vrot.slane %v2141, %v2145
      %v2148 = vadd.f32 %v2133, %v2146
      %v2149 = vadd.f32 %v2134, %v2146
      %v2150 = vadd.f32 %v2135, %v2146
      %v2151 = vadd.f32 %v2136, %v2146
      %v2152 = vadd.f32 %v2137, %v2146
      %v2153 = vadd.f32 %v2138, %v2146
      %v2154 = vadd.f32 %v2139, %v2146
      %v2155 = vadd.f32 %v2140, %v2146
      %v2156 = vmax.f32 %v2148, 0.0
      %v2157 = vmax.f32 %v2149, 0.0
      %v2158 = vmax.f32 %v2150, 0.0
      %v2159 = vmax.f32 %v2151, 0.0
      %v2160 = vmax.f32 %v2152, 0.0
      %v2161 = vmax.f32 %v2153, 0.0
      %v2162 = vmax.f32 %v2154, 0.0
      %v2163 = vmax.f32 %v2155, 0.0
      %v2172 = vcombine.high %v2156, %v2156
      %v2174 = vunpack.c.l.s4 1983009808
      %v2175 = vunpack.c.0.s8 %v2174
      %v2176 = vlaneseq
      %v2177 = vshrl.u32 %v2176, 7
      %v2178 = vsub.s32 %v2175, %v2177
      %v2179 = vrot.slane %v2156, %v2178
      %v2181 = vunpack.c.l.s4 1983009808
      %v2182 = vunpack.c.0.s8 %v2181
      %v2183 = vlaneseq
      %v2184 = vshrl.u32 %v2183, 7
      %v2185 = vsub.s32 %v2182, %v2184
      %v2186 = vrot.slane %v2172, %v2185
      %v2187 = vcombine.high %v2179, %v2179
      %v2188 = vcombine.high %v2186, %v2186
      %v2189 = vcombine.high %v2157, %v2157
      %v2191 = vunpack.c.l.s4 1983009808
      %v2192 = vunpack.c.0.s8 %v2191
      %v2193 = vlaneseq
      %v2194 = vshrl.u32 %v2193, 7
      %v2195 = vsub.s32 %v2192, %v2194
      %v2196 = vrot.slane %v2157, %v2195
      %v2198 = vunpack.c.l.s4 1983009808
      %v2199 = vunpack.c.0.s8 %v2198
      %v2200 = vlaneseq
      %v2201 = vshrl.u32 %v2200, 7
      %v2202 = vsub.s32 %v2199, %v2201
      %v2203 = vrot.slane %v2189, %v2202
      %v2204 = vcombine.high %v2196, %v2196
      %v2205 = vcombine.high %v2203, %v2203
      %v2206 = vcombine.high %v2158, %v2158
      %v2208 = vunpack.c.l.s4 1983009808
      %v2209 = vunpack.c.0.s8 %v2208
      %v2210 = vlaneseq
      %v2211 = vshrl.u32 %v2210, 7
      %v2212 = vsub.s32 %v2209, %v2211
      %v2213 = vrot.slane %v2158, %v2212
      %v2215 = vunpack.c.l.s4 1983009808
      %v2216 = vunpack.c.0.s8 %v2215
      %v2217 = vlaneseq
      %v2218 = vshrl.u32 %v2217, 7
      %v2219 = vsub.s32 %v2216, %v2218
      %v2220 = vrot.slane %v2206, %v2219
      %v2221 = vcombine.high %v2213, %v2213
      %v2222 = vcombine.high %v2220, %v2220
      %v2223 = vcombine.high %v2159, %v2159
      %v2225 = vunpack.c.l.s4 1983009808
      %v2226 = vunpack.c.0.s8 %v2225
      %v2227 = vlaneseq
      %v2228 = vshrl.u32 %v2227, 7
      %v2229 = vsub.s32 %v2226, %v2228
      %v2230 = vrot.slane %v2159, %v2229
      %v2232 = vunpack.c.l.s4 1983009808
      %v2233 = vunpack.c.0.s8 %v2232
      %v2234 = vlaneseq
      %v2235 = vshrl.u32 %v2234, 7
      %v2236 = vsub.s32 %v2233, %v2235
      %v2237 = vrot.slane %v2223, %v2236
      %v2238 = vcombine.high %v2230, %v2230
      %v2239 = vcombine.high %v2237, %v2237
      %v2240 = vcombine.high %v2160, %v2160
      %v2242 = vunpack.c.l.s4 1983009808
      %v2243 = vunpack.c.0.s8 %v2242
      %v2244 = vlaneseq
      %v2245 = vshrl.u32 %v2244, 7
      %v2246 = vsub.s32 %v2243, %v2245
      %v2247 = vrot.slane %v2160, %v2246
      %v2249 = vunpack.c.l.s4 1983009808
      %v2250 = vunpack.c.0.s8 %v2249
      %v2251 = vlaneseq
      %v2252 = vshrl.u32 %v2251, 7
      %v2253 = vsub.s32 %v2250, %v2252
      %v2254 = vrot.slane %v2240, %v2253
      %v2255 = vcombine.high %v2247, %v2247
      %v2256 = vcombine.high %v2254, %v2254
      %v2257 = vcombine.high %v2161, %v2161
      %v2259 = vunpack.c.l.s4 1983009808
      %v2260 = vunpack.c.0.s8 %v2259
      %v2261 = vlaneseq
      %v2262 = vshrl.u32 %v2261, 7
      %v2263 = vsub.s32 %v2260, %v2262
      %v2264 = vrot.slane %v2161, %v2263
      %v2266 = vunpack.c.l.s4 1983009808
      %v2267 = vunpack.c.0.s8 %v2266
      %v2268 = vlaneseq
      %v2269 = vshrl.u32 %v2268, 7
      %v2270 = vsub.s32 %v2267, %v2269
      %v2271 = vrot.slane %v2257, %v2270
      %v2272 = vcombine.high %v2264, %v2264
      %v2273 = vcombine.high %v2271, %v2271
      %v2274 = vcombine.high %v2162, %v2162
      %v2276 = vunpack.c.l.s4 1983009808
      %v2277 = vunpack.c.0.s8 %v2276
      %v2278 = vlaneseq
      %v2279 = vshrl.u32 %v2278, 7
      %v2280 = vsub.s32 %v2277, %v2279
      %v2281 = vrot.slane %v2162, %v2280
      %v2283 = vunpack.c.l.s4 1983009808
      %v2284 = vunpack.c.0.s8 %v2283
      %v2285 = vlaneseq
      %v2286 = vshrl.u32 %v2285, 7
      %v2287 = vsub.s32 %v2284, %v2286
      %v2288 = vrot.slane %v2274, %v2287
      %v2289 = vcombine.high %v2281, %v2281
      %v2290 = vcombine.high %v2288, %v2288
      %v2291 = vcombine.high %v2163, %v2163
      %v2293 = vunpack.c.l.s4 1983009808
      %v2294 = vunpack.c.0.s8 %v2293
      %v2295 = vlaneseq
      %v2296 = vshrl.u32 %v2295, 7
      %v2297 = vsub.s32 %v2294, %v2296
      %v2298 = vrot.slane %v2163, %v2297
      %v2300 = vunpack.c.l.s4 1983009808
      %v2301 = vunpack.c.0.s8 %v2300
      %v2302 = vlaneseq
      %v2303 = vshrl.u32 %v2302, 7
      %v2304 = vsub.s32 %v2301, %v2303
      %v2305 = vrot.slane %v2291, %v2304
      %v2306 = vcombine.high %v2298, %v2298
      %v2307 = vcombine.high %v2305, %v2305
      %v2340 = vrot.slane %v2179, 7
      %v2341 = vrot.slane %v2340, 2
      %v2342 = vrot.slane %v2187, 7
      %v2343 = vrot.slane %v2342, 2
      %v2344 = vrot.slane %v2186, 7
      %v2345 = vrot.slane %v2344, 2
      %v2346 = vrot.slane %v2188, 7
      %v2347 = vrot.slane %v2346, 2
      %v2348 = vrot.slane %v2196, 7
      %v2349 = vrot.slane %v2348, 2
      %v2350 = vrot.slane %v2204, 7
      %v2351 = vrot.slane %v2350, 2
      %v2352 = vrot.slane %v2203, 7
      %v2353 = vrot.slane %v2352, 2
      %v2354 = vrot.slane %v2205, 7
      %v2355 = vrot.slane %v2354, 2
      %v2356 = vrot.slane %v2213, 7
      %v2357 = vrot.slane %v2356, 2
      %v2358 = vrot.slane %v2221, 7
      %v2359 = vrot.slane %v2358, 2
      %v2360 = vrot.slane %v2220, 7
      %v2361 = vrot.slane %v2360, 2
      %v2362 = vrot.slane %v2222, 7
      %v2363 = vrot.slane %v2362, 2
      %v2364 = vrot.slane %v2230, 7
      %v2365 = vrot.slane %v2364, 2
      %v2366 = vrot.slane %v2238, 7
      %v2367 = vrot.slane %v2366, 2
      %v2368 = vrot.slane %v2237, 7
      %v2369 = vrot.slane %v2368, 2
      %v2370 = vrot.slane %v2239, 7
      %v2371 = vrot.slane %v2370, 2
      %v2372 = vrot.slane %v2247, 7
      %v2373 = vrot.slane %v2372, 2
      %v2374 = vrot.slane %v2255, 7
      %v2375 = vrot.slane %v2374, 2
      %v2376 = vrot.slane %v2254, 7
      %v2377 = vrot.slane %v2376, 2
      %v2378 = vrot.slane %v2256, 7
      %v2379 = vrot.slane %v2378, 2
      %v2380 = vrot.slane %v2264, 7
      %v2381 = vrot.slane %v2380, 2
      %v2382 = vrot.slane %v2272, 7
      %v2383 = vrot.slane %v2382, 2
      %v2384 = vrot.slane %v2271, 7
      %v2385 = vrot.slane %v2384, 2
      %v2386 = vrot.slane %v2273, 7
      %v2387 = vrot.slane %v2386, 2
      %v2388 = vrot.slane %v2281, 7
      %v2389 = vrot.slane %v2388, 2
      %v2390 = vrot.slane %v2289, 7
      %v2391 = vrot.slane %v2390, 2
      %v2392 = vrot.slane %v2288, 7
      %v2393 = vrot.slane %v2392, 2
      %v2394 = vrot.slane %v2290, 7
      %v2395 = vrot.slane %v2394, 2
      %v2396 = vrot.slane %v2298, 7
      %v2397 = vrot.slane %v2396, 2
      %v2398 = vrot.slane %v2306, 7
      %v2399 = vrot.slane %v2398, 2
      %v2400 = vrot.slane %v2305, 7
      %v2401 = vrot.slane %v2400, 2
      %v2402 = vrot.slane %v2307, 7
      %v2403 = vrot.slane %v2402, 2
      %v2436 = vmax.f32 %v2179, %v2341
      %v2437 = vmax.f32 %v2187, %v2343
      %v2438 = vmax.f32 %v2186, %v2345
      %v2439 = vmax.f32 %v2188, %v2347
      %v2440 = vmax.f32 %v2196, %v2349
      %v2441 = vmax.f32 %v2204, %v2351
      %v2442 = vmax.f32 %v2203, %v2353
      %v2443 = vmax.f32 %v2205, %v2355
      %v2444 = vmax.f32 %v2213, %v2357
      %v2445 = vmax.f32 %v2221, %v2359
      %v2446 = vmax.f32 %v2220, %v2361
      %v2447 = vmax.f32 %v2222, %v2363
      %v2448 = vmax.f32 %v2230, %v2365
      %v2449 = vmax.f32 %v2238, %v2367
      %v2450 = vmax.f32 %v2237, %v2369
      %v2451 = vmax.f32 %v2239, %v2371
      %v2452 = vmax.f32 %v2247, %v2373
      %v2453 = vmax.f32 %v2255, %v2375
      %v2454 = vmax.f32 %v2254, %v2377
      %v2455 = vmax.f32 %v2256, %v2379
      %v2456 = vmax.f32 %v2264, %v2381
      %v2457 = vmax.f32 %v2272, %v2383
      %v2458 = vmax.f32 %v2271, %v2385
      %v2459 = vmax.f32 %v2273, %v2387
      %v2460 = vmax.f32 %v2281, %v2389
      %v2461 = vmax.f32 %v2289, %v2391
      %v2462 = vmax.f32 %v2288, %v2393
      %v2463 = vmax.f32 %v2290, %v2395
      %v2464 = vmax.f32 %v2298, %v2397
      %v2465 = vmax.f32 %v2306, %v2399
      %v2466 = vmax.f32 %v2305, %v2401
      %v2467 = vmax.f32 %v2307, %v2403
      %v2468 = vmax.f32 %v2436, %v2440
      %v2469 = vmax.f32 %v2437, %v2441
      %v2470 = vmax.f32 %v2438, %v2442
      %v2471 = vmax.f32 %v2439, %v2443
      %v2472 = vmax.f32 %v2444, %v2448
      %v2473 = vmax.f32 %v2445, %v2449
      %v2474 = vmax.f32 %v2446, %v2450
      %v2475 = vmax.f32 %v2447, %v2451
      %v2476 = vmax.f32 %v2452, %v2456
      %v2477 = vmax.f32 %v2453, %v2457
      %v2478 = vmax.f32 %v2454, %v2458
      %v2479 = vmax.f32 %v2455, %v2459
      %v2480 = vmax.f32 %v2460, %v2464
      %v2481 = vmax.f32 %v2461, %v2465
      %v2482 = vmax.f32 %v2462, %v2466
      %v2483 = vmax.f32 %v2463, %v2467
      %v2484 = vpack.c.bf16 %v2468, %v2468
      %v2485 = vpack.c.bf16 %v2469, %v2469
      %v2486 = vpack.c.bf16 %v2470, %v2470
      %v2487 = vpack.c.bf16 %v2471, %v2471
      %v2488 = vpack.c.bf16 %v2472, %v2472
      %v2489 = vpack.c.bf16 %v2473, %v2473
      %v2490 = vpack.c.bf16 %v2474, %v2474
      %v2491 = vpack.c.bf16 %v2475, %v2475
      %v2492 = vpack.c.bf16 %v2476, %v2476
      %v2493 = vpack.c.bf16 %v2477, %v2477
      %v2494 = vpack.c.bf16 %v2478, %v2478
      %v2495 = vpack.c.bf16 %v2479, %v2479
      %v2496 = vpack.c.bf16 %v2480, %v2480
      %v2497 = vpack.c.bf16 %v2481, %v2481
      %v2498 = vpack.c.bf16 %v2482, %v2482
      %v2499 = vpack.c.bf16 %v2483, %v2483
      %v2517 = vunpack.c.l.s4 1983009808
      %v2518 = vunpack.c.0.s8 %v2517
      %v2519 = vlaneseq
      %v2520 = vshrl.u32 %v2519, 7
      %v2521 = vsub.s32 %v2518, %v2520
      %v2522 = vrot.slane %v2484, %v2521
      %v2524 = vunpack.c.l.s4 1983009808
      %v2525 = vunpack.c.0.s8 %v2524
      %v2526 = vlaneseq
      %v2527 = vshrl.u32 %v2526, 7
      %v2528 = vsub.s32 %v2525, %v2527
      %v2529 = vrot.slane %v2485, %v2528
      %v2531 = vunpack.c.l.s4 1983009808
      %v2532 = vunpack.c.0.s8 %v2531
      %v2533 = vlaneseq
      %v2534 = vshrl.u32 %v2533, 7
      %v2535 = vsub.s32 %v2532, %v2534
      %v2536 = vrot.slane %v2486, %v2535
      %v2538 = vunpack.c.l.s4 1983009808
      %v2539 = vunpack.c.0.s8 %v2538
      %v2540 = vlaneseq
      %v2541 = vshrl.u32 %v2540, 7
      %v2542 = vsub.s32 %v2539, %v2541
      %v2543 = vrot.slane %v2487, %v2542
      %v2545 = vunpack.c.l.s4 1983009808
      %v2546 = vunpack.c.0.s8 %v2545
      %v2547 = vlaneseq
      %v2548 = vshrl.u32 %v2547, 7
      %v2549 = vsub.s32 %v2546, %v2548
      %v2550 = vrot.slane %v2488, %v2549
      %v2552 = vunpack.c.l.s4 1983009808
      %v2553 = vunpack.c.0.s8 %v2552
      %v2554 = vlaneseq
      %v2555 = vshrl.u32 %v2554, 7
      %v2556 = vsub.s32 %v2553, %v2555
      %v2557 = vrot.slane %v2489, %v2556
      %v2559 = vunpack.c.l.s4 1983009808
      %v2560 = vunpack.c.0.s8 %v2559
      %v2561 = vlaneseq
      %v2562 = vshrl.u32 %v2561, 7
      %v2563 = vsub.s32 %v2560, %v2562
      %v2564 = vrot.slane %v2490, %v2563
      %v2566 = vunpack.c.l.s4 1983009808
      %v2567 = vunpack.c.0.s8 %v2566
      %v2568 = vlaneseq
      %v2569 = vshrl.u32 %v2568, 7
      %v2570 = vsub.s32 %v2567, %v2569
      %v2571 = vrot.slane %v2491, %v2570
      %v2573 = vunpack.c.l.s4 1983009808
      %v2574 = vunpack.c.0.s8 %v2573
      %v2575 = vlaneseq
      %v2576 = vshrl.u32 %v2575, 7
      %v2577 = vsub.s32 %v2574, %v2576
      %v2578 = vrot.slane %v2492, %v2577
      %v2580 = vunpack.c.l.s4 1983009808
      %v2581 = vunpack.c.0.s8 %v2580
      %v2582 = vlaneseq
      %v2583 = vshrl.u32 %v2582, 7
      %v2584 = vsub.s32 %v2581, %v2583
      %v2585 = vrot.slane %v2493, %v2584
      %v2587 = vunpack.c.l.s4 1983009808
      %v2588 = vunpack.c.0.s8 %v2587
      %v2589 = vlaneseq
      %v2590 = vshrl.u32 %v2589, 7
      %v2591 = vsub.s32 %v2588, %v2590
      %v2592 = vrot.slane %v2494, %v2591
      %v2594 = vunpack.c.l.s4 1983009808
      %v2595 = vunpack.c.0.s8 %v2594
      %v2596 = vlaneseq
      %v2597 = vshrl.u32 %v2596, 7
      %v2598 = vsub.s32 %v2595, %v2597
      %v2599 = vrot.slane %v2495, %v2598
      %v2601 = vunpack.c.l.s4 1983009808
      %v2602 = vunpack.c.0.s8 %v2601
      %v2603 = vlaneseq
      %v2604 = vshrl.u32 %v2603, 7
      %v2605 = vsub.s32 %v2602, %v2604
      %v2606 = vrot.slane %v2496, %v2605
      %v2608 = vunpack.c.l.s4 1983009808
      %v2609 = vunpack.c.0.s8 %v2608
      %v2610 = vlaneseq
      %v2611 = vshrl.u32 %v2610, 7
      %v2612 = vsub.s32 %v2609, %v2611
      %v2613 = vrot.slane %v2497, %v2612
      %v2615 = vunpack.c.l.s4 1983009808
      %v2616 = vunpack.c.0.s8 %v2615
      %v2617 = vlaneseq
      %v2618 = vshrl.u32 %v2617, 7
      %v2619 = vsub.s32 %v2616, %v2618
      %v2620 = vrot.slane %v2498, %v2619
      %v2622 = vunpack.c.l.s4 1983009808
      %v2623 = vunpack.c.0.s8 %v2622
      %v2624 = vlaneseq
      %v2625 = vshrl.u32 %v2624, 7
      %v2626 = vsub.s32 %v2623, %v2625
      %v2627 = vrot.slane %v2499, %v2626
      %v2629 = vunpack.c.l.s4 1983009808
      %v2630 = vunpack.c.0.s8 %v2629
      %v2631 = vlaneseq
      %v2632 = vshrl.u32 %v2631, 7
      %v2633 = vsub.s32 %v2630, %v2632
      %v2634 = vrot.slane %v2522, %v2633
      %v2636 = vunpack.c.l.s4 1983009808
      %v2637 = vunpack.c.0.s8 %v2636
      %v2638 = vlaneseq
      %v2639 = vshrl.u32 %v2638, 7
      %v2640 = vsub.s32 %v2637, %v2639
      %v2641 = vrot.slane %v2529, %v2640
      %v2643 = vunpack.c.l.s4 1983009808
      %v2644 = vunpack.c.0.s8 %v2643
      %v2645 = vlaneseq
      %v2646 = vshrl.u32 %v2645, 7
      %v2647 = vsub.s32 %v2644, %v2646
      %v2648 = vrot.slane %v2536, %v2647
      %v2650 = vunpack.c.l.s4 1983009808
      %v2651 = vunpack.c.0.s8 %v2650
      %v2652 = vlaneseq
      %v2653 = vshrl.u32 %v2652, 7
      %v2654 = vsub.s32 %v2651, %v2653
      %v2655 = vrot.slane %v2543, %v2654
      %v2657 = vunpack.c.l.s4 1983009808
      %v2658 = vunpack.c.0.s8 %v2657
      %v2659 = vlaneseq
      %v2660 = vshrl.u32 %v2659, 7
      %v2661 = vsub.s32 %v2658, %v2660
      %v2662 = vrot.slane %v2550, %v2661
      %v2664 = vunpack.c.l.s4 1983009808
      %v2665 = vunpack.c.0.s8 %v2664
      %v2666 = vlaneseq
      %v2667 = vshrl.u32 %v2666, 7
      %v2668 = vsub.s32 %v2665, %v2667
      %v2669 = vrot.slane %v2557, %v2668
      %v2671 = vunpack.c.l.s4 1983009808
      %v2672 = vunpack.c.0.s8 %v2671
      %v2673 = vlaneseq
      %v2674 = vshrl.u32 %v2673, 7
      %v2675 = vsub.s32 %v2672, %v2674
      %v2676 = vrot.slane %v2564, %v2675
      %v2678 = vunpack.c.l.s4 1983009808
      %v2679 = vunpack.c.0.s8 %v2678
      %v2680 = vlaneseq
      %v2681 = vshrl.u32 %v2680, 7
      %v2682 = vsub.s32 %v2679, %v2681
      %v2683 = vrot.slane %v2571, %v2682
      %v2685 = vunpack.c.l.s4 1983009808
      %v2686 = vunpack.c.0.s8 %v2685
      %v2687 = vlaneseq
      %v2688 = vshrl.u32 %v2687, 7
      %v2689 = vsub.s32 %v2686, %v2688
      %v2690 = vrot.slane %v2578, %v2689
      %v2692 = vunpack.c.l.s4 1983009808
      %v2693 = vunpack.c.0.s8 %v2692
      %v2694 = vlaneseq
      %v2695 = vshrl.u32 %v2694, 7
      %v2696 = vsub.s32 %v2693, %v2695
      %v2697 = vrot.slane %v2585, %v2696
      %v2699 = vunpack.c.l.s4 1983009808
      %v2700 = vunpack.c.0.s8 %v2699
      %v2701 = vlaneseq
      %v2702 = vshrl.u32 %v2701, 7
      %v2703 = vsub.s32 %v2700, %v2702
      %v2704 = vrot.slane %v2592, %v2703
      %v2706 = vunpack.c.l.s4 1983009808
      %v2707 = vunpack.c.0.s8 %v2706
      %v2708 = vlaneseq
      %v2709 = vshrl.u32 %v2708, 7
      %v2710 = vsub.s32 %v2707, %v2709
      %v2711 = vrot.slane %v2599, %v2710
      %v2713 = vunpack.c.l.s4 1983009808
      %v2714 = vunpack.c.0.s8 %v2713
      %v2715 = vlaneseq
      %v2716 = vshrl.u32 %v2715, 7
      %v2717 = vsub.s32 %v2714, %v2716
      %v2718 = vrot.slane %v2606, %v2717
      %v2720 = vunpack.c.l.s4 1983009808
      %v2721 = vunpack.c.0.s8 %v2720
      %v2722 = vlaneseq
      %v2723 = vshrl.u32 %v2722, 7
      %v2724 = vsub.s32 %v2721, %v2723
      %v2725 = vrot.slane %v2613, %v2724
      %v2727 = vunpack.c.l.s4 1983009808
      %v2728 = vunpack.c.0.s8 %v2727
      %v2729 = vlaneseq
      %v2730 = vshrl.u32 %v2729, 7
      %v2731 = vsub.s32 %v2728, %v2730
      %v2732 = vrot.slane %v2620, %v2731
      %v2734 = vunpack.c.l.s4 1983009808
      %v2735 = vunpack.c.0.s8 %v2734
      %v2736 = vlaneseq
      %v2737 = vshrl.u32 %v2736, 7
      %v2738 = vsub.s32 %v2735, %v2737
      %v2739 = vrot.slane %v2627, %v2738
      %v2740 = vunpack.c.l.b16 %v2634
      %v2741 = vunpack.c.l.b16 %v2641
      %v2742 = vunpack.c.l.b16 %v2648
      %v2743 = vunpack.c.l.b16 %v2655
      %v2744 = vunpack.c.l.b16 %v2662
      %v2745 = vunpack.c.l.b16 %v2669
      %v2746 = vunpack.c.l.b16 %v2676
      %v2747 = vunpack.c.l.b16 %v2683
      %v2748 = vunpack.c.l.b16 %v2690
      %v2749 = vunpack.c.l.b16 %v2697
      %v2750 = vunpack.c.l.b16 %v2704
      %v2751 = vunpack.c.l.b16 %v2711
      %v2752 = vunpack.c.l.b16 %v2718
      %v2753 = vunpack.c.l.b16 %v2725
      %v2754 = vunpack.c.l.b16 %v2732
      %v2755 = vunpack.c.l.b16 %v2739
      %v2756 = vrot.slane %v2741, 7
      %vm2757 = vcmask 1041409
      %v2758 = vsel %vm2757, %v2756, %v2740
      %v2759 = vrot.slane %v2742, 6
      %vm2760 = vcmask 1042434
      %v2761 = vsel %vm2760, %v2759, %v2758
      %v2762 = vrot.slane %v2743, 5
      %vm2763 = vcmask 1043459
      %v2764 = vsel %vm2763, %v2762, %v2761
      %v2765 = vrot.slane %v2745, 7
      %v2766 = vsel %vm2757, %v2765, %v2744
      %v2767 = vrot.slane %v2746, 6
      %v2768 = vsel %vm2760, %v2767, %v2766
      %v2769 = vrot.slane %v2747, 5
      %v2770 = vsel %vm2763, %v2769, %v2768
      %v2771 = vrot.slane %v2749, 7
      %v2772 = vsel %vm2757, %v2771, %v2748
      %v2773 = vrot.slane %v2750, 6
      %v2774 = vsel %vm2760, %v2773, %v2772
      %v2775 = vrot.slane %v2751, 5
      %v2776 = vsel %vm2763, %v2775, %v2774
      %v2777 = vrot.slane %v2753, 7
      %v2778 = vsel %vm2757, %v2777, %v2752
      %v2779 = vrot.slane %v2754, 6
      %v2780 = vsel %vm2760, %v2779, %v2778
      %v2781 = vrot.slane %v2755, 5
      %v2782 = vsel %vm2763, %v2781, %v2780
      %v2783 = vpack.c.b16 %v2764, %v2764
      %v2784 = vpack.c.b16 %v2770, %v2770
      %v2785 = vpack.c.b16 %v2776, %v2776
      %v2786 = vpack.c.b16 %v2782, %v2782
      %v2788 = vunpack.c.l.s4 1983009808
      %v2789 = vunpack.c.0.s8 %v2788
      %v2790 = vlaneseq
      %v2791 = vshrl.u32 %v2790, 7
      %v2792 = vsub.s32 %v2789, %v2791
      %v2793 = vrot.slane %v2783, %v2792
      %v2795 = vunpack.c.l.s4 1983009808
      %v2796 = vunpack.c.0.s8 %v2795
      %v2797 = vlaneseq
      %v2798 = vshrl.u32 %v2797, 7
      %v2799 = vsub.s32 %v2796, %v2798
      %v2800 = vrot.slane %v2784, %v2799
      %v2802 = vunpack.c.l.s4 1983009808
      %v2803 = vunpack.c.0.s8 %v2802
      %v2804 = vlaneseq
      %v2805 = vshrl.u32 %v2804, 7
      %v2806 = vsub.s32 %v2803, %v2805
      %v2807 = vrot.slane %v2785, %v2806
      %v2809 = vunpack.c.l.s4 1983009808
      %v2810 = vunpack.c.0.s8 %v2809
      %v2811 = vlaneseq
      %v2812 = vshrl.u32 %v2811, 7
      %v2813 = vsub.s32 %v2810, %v2812
      %v2814 = vrot.slane %v2786, %v2813
      %2819 = vst [vmem:[%s170] sm:$0x3] %v2793
      %2820 = vst [vmem:[%s170 + $0x2] sm:$0x3] %v2800
      %2821 = vst [vmem:[%s170 + $0x4] sm:$0x3] %v2807
      %2822 = vst [vmem:[%s170 + $0x6] sm:$0x3] %v2814
      %p2823 = scmp.lt.s32.totalorder %s14, 1
      %s2824 = scalar_select %p2823, %s14, 1
      %s2825 = smul.addr %s2824, 4
      %s2826 = smul.addr %s2825, 2
      %s2827 = scalar_lea.vmem %s3, %s2826
      // Predicated region
      $region33: #{vgg_forward.6} parent=31 // pred_check
        %p2828 = pneg %p100
      $region34: #{vgg_forward.6} parent=31 // pred_check_branch
        %2830 = sbr.rel (%p2828) target = $region36
      $region35: #{vgg_forward.6} parent=31 // pred_region
        _
      $region36: #{vgg_forward.6} parent=31 // pred_fallthru
        _
    $region32: #{vgg_forward.6} parent=5 // pred_fallthru
      _
    %p2831 = scmp.le.s32.totalorder 2, %s9
    // Predicated region
    $region37: #{vgg_forward.6} parent=5 // pred_check
      %p2832 = pneg %p2831
    $region38: #{vgg_forward.6} parent=5 // pred_check_branch
      %2834 = sbr.rel (%p2832) target = $region40
    $region39: #{vgg_forward.6} parent=5 // pred_region
      %s2835 = ssub.s32 %s9, 2
      // Predicated region
      $region41: #{vgg_forward.6} parent=39 // pred_check
        %p2836 = pneg %p106
      $region42: #{vgg_forward.6} parent=39 // pred_check_branch
        %2838 = sbr.rel (%p2836) target = $region44
      $region43: #{vgg_forward.6} parent=39 // pred_region
        %p2839 = scmp.lt.s32.totalorder %s15, 1
        %s2840 = scalar_select %p2839, %s15, 1
        %s2841 = smul.addr %s2840, 4
        %s2842 = smul.addr %s2841, 2
        %s2843 = scalar_lea.vmem %s3, %s2842
      $region44: #{vgg_forward.6} parent=39 // pred_fallthru
        _
    $region40: #{vgg_forward.6} parent=5 // pred_fallthru
      _
  $region6: #{vgg_forward.6} parent=0 // loop_footer
    %s13 = sadd.s32 1, %s9
  $region7: #{vgg_forward.6} parent=0 // loop_footer_branch
    %8 = sbr.rel target = $region3
  $region8: #{vgg_forward.6} parent=0 // loop_exit
    _

// kernel: vgg_forward.5
$region0: #{vgg_forward.5}
  #allocation0 [shape = 'u32[]', space=smem, size = 0x4, offset = 0x4, fixed_abs, tag = 'smem constant byte address 0x4 - core index']
  #allocation1 [shape = 'u32[144,128]{1,0:T(1,128)}', space=vmem, size = 0x12000, scoped, tag = 'internal scratch']
  %s0 = inlined_call_operand.vmem [shape: f32[2,18,18,3], index: 0, kind: input, shape index: {}]
  %s1 = inlined_call_operand.vmem [shape: bf16[9,3,128], index: 1, kind: input, shape index: {}]
  %s2 = inlined_call_operand.vmem [shape: f32[1,128], index: 2, kind: input, shape index: {}]
  %s3 = inlined_call_operand.vmem [shape: bf16[2,8,8,128], index: 3, kind: output, shape index: {}]
  %s4 = sld [smem:[#allocation0]]
  $region45: #{vgg_forward.5} parent=0
    _
  %s6 = ssub.s32 1, %s4
  %s7 = scalar_select 0, %s6, %s4
  loop: start=0, step=1, limit=4
  $region2: #{vgg_forward.5} parent=0 // loop_pre_header
    _
  $region3: #{vgg_forward.5} parent=0 // loop_header
    %s9 = sphi 0, %s13
    %p10 = scmp.ge.s32.totalorder %s9, 4
    %s19 = sphi 0, %s21
    %s22 = sphi 0, %s19
    %s23 = sphi 0, %s22
    %s39 = sphi 0, %s23
    %s43 = sphi 0, %s43
    %s45 = sphi 0, %s43
    %s46 = sphi 0, %s45
    %s60 = sphi 0, %s46
    %s64 = sphi 0, %s64
    %s66 = sphi 0, %s64
    %s67 = sphi 0, %s66
    %s81 = sphi 0, %s67
    %s87 = sphi 0, %s89
    %s90 = sphi 0, %s87
    %s91 = sphi 0, %s90
    %s107 = sphi 0, %s91
  $region4: #{vgg_forward.5} parent=0 // loop_header_branch
    %12 = sbr.rel (%p10) target = $region8
  $region5: #{vgg_forward.5} parent=0 // loop_body
    %s14 = ssub.s32 %s9, 1
    %s15 = ssub.s32 %s9, 2
    %s16 = sadd.s32 %s9, 1
    %s17 = ssub.s32 %s9, %s16
    %p18 = scmp.eq.s32.totalorder %s17, 0
    %s20 = sadd.s32 %s19, 1
    %s21 = scalar_select %p18, %s19, %s20
    %p24 = pneg %p18
    %p25 = scmp.eq.s32.totalorder %s9, 1
    %p26 = por %p24, %p25
    %p27 = scmp.ne.s32.totalorder %s19, %s22
    %p28 = scmp.eq.s32.totalorder %s9, 0
    %p29 = por %p27, %p28
    %p30 = scmp.ne.s32.totalorder %s19, %s22
    %p31 = scmp.eq.s32.totalorder %s14, 1
    %p32 = por %p30, %p31
    %p33 = scmp.ne.s32.totalorder %s22, %s23
    %p34 = scmp.eq.s32.totalorder %s14, 0
    %p35 = por %p33, %p34
    %p36 = scmp.ne.s32.totalorder %s22, %s23
    %p37 = scmp.eq.s32.totalorder %s15, 1
    %p38 = por %p36, %p37
    %p40 = scmp.ne.s32.totalorder %s23, %s39
    %p41 = scmp.eq.s32.totalorder %s15, 0
    %p42 = por %p40, %p41
    %s44 = sadd.s32 %s43, 1
    %p47 = scmp.eq.s32.totalorder %s9, 1
    %p48 = scmp.ne.s32.totalorder %s43, %s45
    %p49 = scmp.eq.s32.totalorder %s9, 0
    %p50 = por %p48, %p49
    %p51 = scmp.ne.s32.totalorder %s43, %s45
    %p52 = scmp.eq.s32.totalorder %s14, 1
    %p53 = por %p51, %p52
    %p54 = scmp.ne.s32.totalorder %s45, %s46
    %p55 = scmp.eq.s32.totalorder %s14, 0
    %p56 = por %p54, %p55
    %p57 = scmp.ne.s32.totalorder %s45, %s46
    %p58 = scmp.eq.s32.totalorder %s15, 1
    %p59 = por %p57, %p58
    %p61 = scmp.ne.s32.totalorder %s46, %s60
    %p62 = scmp.eq.s32.totalorder %s15, 0
    %p63 = por %p61, %p62
    %s65 = sadd.s32 %s64, 1
    %p68 = scmp.eq.s32.totalorder %s9, 1
    %p69 = scmp.ne.s32.totalorder %s64, %s66
    %p70 = scmp.eq.s32.totalorder %s9, 0
    %p71 = por %p69, %p70
    %p72 = scmp.ne.s32.totalorder %s64, %s66
    %p73 = scmp.eq.s32.totalorder %s14, 1
    %p74 = por %p72, %p73
    %p75 = scmp.ne.s32.totalorder %s66, %s67
    %p76 = scmp.eq.s32.totalorder %s14, 0
    %p77 = por %p75, %p76
    %p78 = scmp.ne.s32.totalorder %s66, %s67
    %p79 = scmp.eq.s32.totalorder %s15, 1
    %p80 = por %p78, %p79
    %p82 = scmp.ne.s32.totalorder %s67, %s81
    %p83 = scmp.eq.s32.totalorder %s15, 0
    %p84 = por %p82, %p83
    %s85 = ssub.s32 %s9, %s16
    %p86 = scmp.eq.s32.totalorder %s85, 0
    %s88 = sadd.s32 %s87, 1
    %s89 = scalar_select %p86, %s87, %s88
    %p92 = pneg %p86
    %p93 = scmp.eq.s32.totalorder %s9, 1
    %p94 = por %p92, %p93
    %p95 = scmp.ne.s32.totalorder %s87, %s90
    %p96 = scmp.eq.s32.totalorder %s9, 0
    %p97 = por %p95, %p96
    %p98 = scmp.ne.s32.totalorder %s87, %s90
    %p99 = scmp.eq.s32.totalorder %s14, 1
    %p100 = por %p98, %p99
    %p101 = scmp.ne.s32.totalorder %s90, %s91
    %p102 = scmp.eq.s32.totalorder %s14, 0
    %p103 = por %p101, %p102
    %p104 = scmp.ne.s32.totalorder %s90, %s91
    %p105 = scmp.eq.s32.totalorder %s15, 1
    %p106 = por %p104, %p105
    %p108 = scmp.ne.s32.totalorder %s91, %s107
    %p109 = scmp.eq.s32.totalorder %s15, 0
    %p110 = por %p108, %p109
    %p111 = scmp.le.s32.totalorder 1, %s9
    %p112 = scmp.lt.s32.totalorder %s9, 3
    %p113 = pnand %p111, %p112
    %p114 = pneg %p113
    // Predicated region
    $region9: #{vgg_forward.5} parent=5 // pred_check
      _
    $region10: #{vgg_forward.5} parent=5 // pred_check_branch
      %116 = sbr.rel (%p113) target = $region12
    $region11: #{vgg_forward.5} parent=5 // pred_region
      %s117 = ssub.s32 %s9, 1
      // Predicated region
      $region13: #{vgg_forward.5} parent=11 // pred_check
        %p118 = pneg %p56
      $region14: #{vgg_forward.5} parent=11 // pred_check_branch
        %120 = sbr.rel (%p118) target = $region16
      $region15: #{vgg_forward.5} parent=11 // pred_region
        _
      $region16: #{vgg_forward.5} parent=11 // pred_fallthru
        _
      // Predicated region
      $region17: #{vgg_forward.5} parent=11 // pred_check
        %p121 = pneg %p77
      $region18: #{vgg_forward.5} parent=11 // pred_check_branch
        %123 = sbr.rel (%p121) target = $region20
      $region19: #{vgg_forward.5} parent=11 // pred_region
        _
      $region20: #{vgg_forward.5} parent=11 // pred_fallthru
        _
    $region12: #{vgg_forward.5} parent=5 // pred_fallthru
      _
    %p124 = scmp.lt.s32.totalorder %s9, 2
    // Predicated region
    $region21: #{vgg_forward.5} parent=5 // pred_check
      %p125 = pneg %p124
    $region22: #{vgg_forward.5} parent=5 // pred_check_branch
      %127 = sbr.rel (%p125) target = $region24
    $region23: #{vgg_forward.5} parent=5 // pred_region
      // Predicated region
      $region25: #{vgg_forward.5} parent=23 // pred_check
        %p128 = pneg %p29
      $region26: #{vgg_forward.5} parent=23 // pred_check_branch
        %130 = sbr.rel (%p128) target = $region28
      $region27: #{vgg_forward.5} parent=23 // pred_region
        %p131 = scmp.lt.s32.totalorder %s9, 1
        %s132 = scalar_select %p131, %s9, 1
        %s133 = smul.addr %s132, 54
        %s134 = smul.addr %s133, 8
        %s135 = scalar_lea.vmem %s0, %s134
      $region28: #{vgg_forward.5} parent=23 // pred_fallthru
        _
    $region24: #{vgg_forward.5} parent=5 // pred_fallthru
      _
    %p136 = scmp.le.s32.totalorder 1, %s9
    %p137 = scmp.lt.s32.totalorder %s9, 3
    %p138 = pnand %p136, %p137
    %p139 = pneg %p138
    // Predicated region
    $region29: #{vgg_forward.5} parent=5 // pred_check
      _
    $region30: #{vgg_forward.5} parent=5 // pred_check_branch
      %141 = sbr.rel (%p138) target = $region32
    $region31: #{vgg_forward.5} parent=5 // pred_region
      %s142 = ssub.s32 %s9, 1
      %p143 = scmp.lt.s32.totalorder %s14, 1
      %s144 = scalar_select %p143, %s14, 1
      %s145 = smul.addr %s144, 54
      %s146 = smul.addr %s145, 8
      %s147 = scalar_lea.vmem %s0, %s146
      %p148 = pneg %p35
      %p149 = pneg %p32
      %p150 = pneg %p56
      %p151 = pneg %p53
      %p152 = pneg %p77
      %p153 = pneg %p74
      %p154 = pneg %p103
      %p155 = pneg %p100
      %p156 = scmp.lt.s32.totalorder %s14, 1
      %s157 = scalar_select %p156, %s14, 1
      %s158 = smul.addr %s157, 8
      %s159 = smul.addr %s158, 4
      %s160 = scalar_lea.vmem %s3, %s159
      %p161 = scmp.lt.s32.totalorder %s14, 1
      %s162 = scalar_select %p161, %s14, 1
      %s163 = smul.addr %s162, 54
      %s164 = smul.addr %s163, 8
      %s165 = scalar_lea.vmem %s0, %s164
      %p166 = scmp.lt.s32.totalorder %s14, 1
      %s167 = scalar_select %p166, %s14, 1
      %s168 = smul.addr %s167, 8
      %s169 = smul.addr %s168, 4
      %s170 = scalar_lea.vmem %s3, %s169
      %v172 = vld [vmem:[%s165] sm:$0xff]
      %v173 = vld [vmem:[%s165 + $0x8] sm:$0xff]
      %v174 = vld [vmem:[%s165 + $0x18] sm:$0xff]
      %v175 = vld [vmem:[%s165 + $0x20] sm:$0xff]
      %v176 = vld [vmem:[%s165 + $0x30] sm:$0xff]
      %v177 = vld [vmem:[%s165 + $0x38] sm:$0xff]
      %v178 = vld [vmem:[%s165 + $0x48] sm:$0xff]
      %v179 = vld [vmem:[%s165 + $0x50] sm:$0xff]
      %v180 = vld [vmem:[%s165 + $0x60] sm:$0xff]
      %v181 = vld [vmem:[%s165 + $0x68] sm:$0xff]
      %v182 = vld [vmem:[%s165 + $0x78] sm:$0xff]
      %v183 = vld [vmem:[%s165 + $0x80] sm:$0xff]
      %v184 = vld [vmem:[%s165 + $0x90] sm:$0xff]
      %v185 = vld [vmem:[%s165 + $0x98] sm:$0xff]
      %v186 = vld [vmem:[%s165 + $0xa8] sm:$0xff]
      %v187 = vld [vmem:[%s165 + $0xb0] sm:$0xff]
      %v188 = vld [vmem:[%s165 + $0xc0] sm:$0xff]
      %v189 = vld [vmem:[%s165 + $0xc8] sm:$0xff]
      %v190 = vld [vmem:[%s165 + $0xd8] sm:$0xff]
      %v191 = vld [vmem:[%s165 + $0xe0] sm:$0xff]
      %v192 = vld [vmem:[%s165 + $0xf0] sm:$0xff]
      %v193 = vld [vmem:[%s165 + $0xf8] sm:$0xff]
      %v194 = vld [vmem:[%s165 + $0x108] sm:$0xff]
      %v195 = vld [vmem:[%s165 + $0x110] sm:$0xff]
      %v196 = vld [vmem:[%s165 + $0x120] sm:$0xff]
      %v197 = vld [vmem:[%s165 + $0x128] sm:$0xff]
      %v198 = vld [vmem:[%s165 + $0x138] sm:$0xff]
      %v199 = vld [vmem:[%s165 + $0x140] sm:$0xff]
      %v200 = vld [vmem:[%s165 + $0x150] sm:$0xff]
      %v201 = vld [vmem:[%s165 + $0x158] sm:$0xff]
      %v202 = vld [vmem:[%s165 + $0x168] sm:$0xff]
      %v203 = vld [vmem:[%s165 + $0x170] sm:$0xff]
      %v204 = vpack.c.bf16 %v173, %v172
      %v205 = vpack.c.bf16 %v175, %v174
      %v206 = vpack.c.bf16 %v177, %v176
      %v207 = vpack.c.bf16 %v179, %v178
      %v208 = vpack.c.bf16 %v181, %v180
      %v209 = vpack.c.bf16 %v183, %v182
      %v210 = vpack.c.bf16 %v185, %v184
      %v211 = vpack.c.bf16 %v187, %v186
      %v212 = vpack.c.bf16 %v189, %v188
      %v213 = vpack.c.bf16 %v191, %v190
      %v214 = vpack.c.bf16 %v193, %v192
      %v215 = vpack.c.bf16 %v195, %v194
      %v216 = vpack.c.bf16 %v197, %v196
      %v217 = vpack.c.bf16 %v199, %v198
      %v218 = vpack.c.bf16 %v201, %v200
      %v219 = vpack.c.bf16 %v203, %v202
      %v220 = vld [vmem:[%s1] sm:$0x3]
      %v221 = vld [vmem:[%s165 + $0x1] sm:$0xff]
      %v222 = vld [vmem:[%s165 + $0x9] sm:$0xff]
      %v223 = vld [vmem:[%s165 + $0x19] sm:$0xff]
      %v224 = vld [vmem:[%s165 + $0x21] sm:$0xff]
      %v225 = vld [vmem:[%s165 + $0x31] sm:$0xff]
      %v226 = vld [vmem:[%s165 + $0x39] sm:$0xff]
      %v227 = vld [vmem:[%s165 + $0x49] sm:$0xff]
      %v228 = vld [vmem:[%s165 + $0x51] sm:$0xff]
      %v229 = vld [vmem:[%s165 + $0x61] sm:$0xff]
      %v230 = vld [vmem:[%s165 + $0x69] sm:$0xff]
      %v231 = vld [vmem:[%s165 + $0x79] sm:$0xff]
      %v232 = vld [vmem:[%s165 + $0x81] sm:$0xff]
      %v233 = vld [vmem:[%s165 + $0x91] sm:$0xff]
      %v234 = vld [vmem:[%s165 + $0x99] sm:$0xff]
      %v235 = vld [vmem:[%s165 + $0xa9] sm:$0xff]
      %v236 = vld [vmem:[%s165 + $0xb1] sm:$0xff]
      %v237 = vld [vmem:[%s165 + $0xc1] sm:$0xff]
      %v238 = vld [vmem:[%s165 + $0xc9] sm:$0xff]
      %v239 = vld [vmem:[%s165 + $0xd9] sm:$0xff]
      %v240 = vld [vmem:[%s165 + $0xe1] sm:$0xff]
      %v241 = vld [vmem:[%s165 + $0xf1] sm:$0xff]
      %v242 = vld [vmem:[%s165 + $0xf9] sm:$0xff]
      %v243 = vld [vmem:[%s165 + $0x109] sm:$0xff]
      %v244 = vld [vmem:[%s165 + $0x111] sm:$0xff]
      %v245 = vld [vmem:[%s165 + $0x121] sm:$0xff]
      %v246 = vld [vmem:[%s165 + $0x129] sm:$0xff]
      %v247 = vld [vmem:[%s165 + $0x139] sm:$0xff]
      %v248 = vld [vmem:[%s165 + $0x141] sm:$0xff]
      %v249 = vld [vmem:[%s165 + $0x151] sm:$0xff]
      %v250 = vld [vmem:[%s165 + $0x159] sm:$0xff]
      %v251 = vld [vmem:[%s165 + $0x169] sm:$0xff]
      %v252 = vld [vmem:[%s165 + $0x171] sm:$0xff]
      %v253 = vpack.c.bf16 %v222, %v221
      %v254 = vpack.c.bf16 %v224, %v223
      %v255 = vpack.c.bf16 %v226, %v225
      %v256 = vpack.c.bf16 %v228, %v227
      %v257 = vpack.c.bf16 %v230, %v229
      %v258 = vpack.c.bf16 %v232, %v231
      %v259 = vpack.c.bf16 %v234, %v233
      %v260 = vpack.c.bf16 %v236, %v235
      %v261 = vpack.c.bf16 %v238, %v237
      %v262 = vpack.c.bf16 %v240, %v239
      %v263 = vpack.c.bf16 %v242, %v241
      %v264 = vpack.c.bf16 %v244, %v243
      %v265 = vpack.c.bf16 %v246, %v245
      %v266 = vpack.c.bf16 %v248, %v247
      %v267 = vpack.c.bf16 %v250, %v249
      %v268 = vpack.c.bf16 %v252, %v251
      %s269 = scalar_lea.vmem %s1, 2
      %v270 = vld [vmem:[%s269] sm:$0x3]
      %vm271 = vcmask 23552
      %v273 = vsel %vm271, %v253, 0
      %v276 = vsel %vm271, %v254, 0
      %v279 = vsel %vm271, %v255, 0
      %v282 = vsel %vm271, %v256, 0
      %v285 = vsel %vm271, %v257, 0
      %v288 = vsel %vm271, %v258, 0
      %v291 = vsel %vm271, %v259, 0
      %v294 = vsel %vm271, %v260, 0
      %v297 = vsel %vm271, %v261, 0
      %v300 = vsel %vm271, %v262, 0
      %v303 = vsel %vm271, %v263, 0
      %v306 = vsel %vm271, %v264, 0
      %v309 = vsel %vm271, %v265, 0
      %v312 = vsel %vm271, %v266, 0
      %v315 = vsel %vm271, %v267, 0
      %v318 = vsel %vm271, %v268, 0
      %vm320 = vcmask 1040384
      %vm321 = vcmask 1041408
      %v322 = vsel %vm320, 4294967295, 65535
      %v323 = vsel %vm321, %v322, 0
      %v325 = vand.u32 %v270, %v323
      %327 = vmatprep.subr.bf16.mxu0 0
      %328 = vmatpush1.bf16.msra.mxu0 0
      %329 = vmatprep.subr.bf16.mxu0 0
      %330 = vmatpush1.bf16.msra.mxu0 0
      %331 = vmatprep.subr.bf16.mxu0 0
      %332 = vmatpush1.bf16.msra.mxu0 0
      %333 = vmatprep.subr.bf16.mxu0 0
      %334 = vmatpush1.bf16.msra.mxu0 0
      %335 = vmatprep.subr.bf16.mxu0 0
      %336 = vmatpush1.bf16.msra.mxu0 0
      %337 = vmatprep.subr.bf16.mxu0 0
      %338 = vmatpush1.bf16.msra.mxu0 0
      %339 = vmatprep.subr.bf16.mxu0 0
      %340 = vmatpush1.bf16.msra.mxu0 0
      %341 = vmatprep.subr.bf16.mxu0 0
      %342 = vmatpush1.bf16.msra.mxu0 %v325
      %343 = vmatprep.subr.bf16.mxu0 0
      %344 = vmatpush2.bf16.msra.mxu0 0
      %345 = vmatprep.subr.bf16.mxu0 0
      %346 = vmatpush2.bf16.msra.mxu0 0
      %347 = vmatprep.subr.bf16.mxu0 0
      %348 = vmatpush2.bf16.msra.mxu0 0
      %349 = vmatprep.subr.bf16.mxu0 0
      %350 = vmatpush2.bf16.msra.mxu0 0
      %351 = vmatprep.subr.bf16.mxu0 0
      %352 = vmatpush2.bf16.msra.mxu0 0
      %353 = vmatprep.subr.bf16.mxu0 0
      %354 = vmatpush2.bf16.msra.mxu0 0
      %355 = vmatprep.subr.bf16.mxu0 0
      %356 = vmatpush2.bf16.msra.mxu0 0
      %357 = vmatprep.subr.bf16.mxu0 0
      %358 = vmatpush2.bf16.msra.mxu0 0
      %359 = vmatprep.mubr.bf16.mxu0 0
      %360 = vmatmul.mubr.bf16.gmra.mxu0 %v273
      %v361 = vpop.f32.mrf.mxu0
      %v362 = vadd.f32 0.0, %v361
      %v363 = vpop.f32.mrf.mxu0
      %v364 = vpop.f32.mrf.mxu0
      %v365 = vadd.f32 0.0, %v364
      %v366 = vpop.f32.mrf.mxu0
      %367 = vmatprep.mubr.bf16.mxu0 0
      %368 = vmatmul.mubr.bf16.gmra.mxu0 %v276
      %v369 = vpop.f32.mrf.mxu0
      %v370 = vadd.f32 0.0, %v369
      %v371 = vpop.f32.mrf.mxu0
      %v372 = vpop.f32.mrf.mxu0
      %v373 = vadd.f32 0.0, %v372
      %v374 = vpop.f32.mrf.mxu0
      %375 = vmatprep.mubr.bf16.mxu0 0
      %376 = vmatmul.mubr.bf16.gmra.mxu0 %v279
      %v377 = vpop.f32.mrf.mxu0
      %v378 = vadd.f32 0.0, %v377
      %v379 = vpop.f32.mrf.mxu0
      %v380 = vpop.f32.mrf.mxu0
      %v381 = vadd.f32 0.0, %v380
      %v382 = vpop.f32.mrf.mxu0
      %383 = vmatprep.mubr.bf16.mxu0 0
      %384 = vmatmul.mubr.bf16.gmra.mxu0 %v282
      %v385 = vpop.f32.mrf.mxu0
      %v386 = vadd.f32 0.0, %v385
      %v387 = vpop.f32.mrf.mxu0
      %v388 = vpop.f32.mrf.mxu0
      %v389 = vadd.f32 0.0, %v388
      %v390 = vpop.f32.mrf.mxu0
      %391 = vmatprep.mubr.bf16.mxu0 0
      %392 = vmatmul.mubr.bf16.gmra.mxu0 %v285
      %v393 = vpop.f32.mrf.mxu0
      %v394 = vadd.f32 0.0, %v393
      %v395 = vpop.f32.mrf.mxu0
      %v396 = vpop.f32.mrf.mxu0
      %v397 = vadd.f32 0.0, %v396
      %v398 = vpop.f32.mrf.mxu0
      %399 = vmatprep.mubr.bf16.mxu0 0
      %400 = vmatmul.mubr.bf16.gmra.mxu0 %v288
      %v401 = vpop.f32.mrf.mxu0
      %v402 = vadd.f32 0.0, %v401
      %v403 = vpop.f32.mrf.mxu0
      %v404 = vpop.f32.mrf.mxu0
      %v405 = vadd.f32 0.0, %v404
      %v406 = vpop.f32.mrf.mxu0
      %407 = vmatprep.mubr.bf16.mxu0 0
      %408 = vmatmul.mubr.bf16.gmra.mxu0 %v291
      %v409 = vpop.f32.mrf.mxu0
      %v410 = vadd.f32 0.0, %v409
      %v411 = vpop.f32.mrf.mxu0
      %v412 = vpop.f32.mrf.mxu0
      %v413 = vadd.f32 0.0, %v412
      %v414 = vpop.f32.mrf.mxu0
      %415 = vmatprep.mubr.bf16.mxu0 0
      %416 = vmatmul.mubr.bf16.gmra.mxu0 %v294
      %v417 = vpop.f32.mrf.mxu0
      %v418 = vadd.f32 0.0, %v417
      %v419 = vpop.f32.mrf.mxu0
      %v420 = vpop.f32.mrf.mxu0
      %v421 = vadd.f32 0.0, %v420
      %v422 = vpop.f32.mrf.mxu0
      %423 = vmatprep.mubr.bf16.mxu0 0
      %424 = vmatmul.mubr.bf16.gmra.mxu0 %v297
      %v425 = vpop.f32.mrf.mxu0
      %v426 = vadd.f32 0.0, %v425
      %v427 = vpop.f32.mrf.mxu0
      %v428 = vpop.f32.mrf.mxu0
      %v429 = vadd.f32 0.0, %v428
      %v430 = vpop.f32.mrf.mxu0
      %431 = vmatprep.mubr.bf16.mxu0 0
      %432 = vmatmul.mubr.bf16.gmra.mxu0 %v300
      %v433 = vpop.f32.mrf.mxu0
      %v434 = vadd.f32 0.0, %v433
      %v435 = vpop.f32.mrf.mxu0
      %v436 = vpop.f32.mrf.mxu0
      %v437 = vadd.f32 0.0, %v436
      %v438 = vpop.f32.mrf.mxu0
      %439 = vmatprep.mubr.bf16.mxu0 0
      %440 = vmatmul.mubr.bf16.gmra.mxu0 %v303
      %v441 = vpop.f32.mrf.mxu0
      %v442 = vadd.f32 0.0, %v441
      %v443 = vpop.f32.mrf.mxu0
      %v444 = vpop.f32.mrf.mxu0
      %v445 = vadd.f32 0.0, %v444
      %v446 = vpop.f32.mrf.mxu0
      %447 = vmatprep.mubr.bf16.mxu0 0
      %448 = vmatmul.mubr.bf16.gmra.mxu0 %v306
      %v449 = vpop.f32.mrf.mxu0
      %v450 = vadd.f32 0.0, %v449
      %v451 = vpop.f32.mrf.mxu0
      %v452 = vpop.f32.mrf.mxu0
      %v453 = vadd.f32 0.0, %v452
      %v454 = vpop.f32.mrf.mxu0
      %455 = vmatprep.mubr.bf16.mxu0 0
      %456 = vmatmul.mubr.bf16.gmra.mxu0 %v309
      %v457 = vpop.f32.mrf.mxu0
      %v458 = vadd.f32 0.0, %v457
      %v459 = vpop.f32.mrf.mxu0
      %v460 = vpop.f32.mrf.mxu0
      %v461 = vadd.f32 0.0, %v460
      %v462 = vpop.f32.mrf.mxu0
      %463 = vmatprep.mubr.bf16.mxu0 0
      %464 = vmatmul.mubr.bf16.gmra.mxu0 %v312
      %v465 = vpop.f32.mrf.mxu0
      %v466 = vadd.f32 0.0, %v465
      %v467 = vpop.f32.mrf.mxu0
      %v468 = vpop.f32.mrf.mxu0
      %v469 = vadd.f32 0.0, %v468
      %v470 = vpop.f32.mrf.mxu0
      %471 = vmatprep.mubr.bf16.mxu0 0
      %472 = vmatmul.mubr.bf16.gmra.mxu0 %v315
      %v473 = vpop.f32.mrf.mxu0
      %v474 = vadd.f32 0.0, %v473
      %v475 = vpop.f32.mrf.mxu0
      %v476 = vpop.f32.mrf.mxu0
      %v477 = vadd.f32 0.0, %v476
      %v478 = vpop.f32.mrf.mxu0
      %479 = vmatprep.mubr.bf16.mxu0 0
      %480 = vmatmul.mubr.bf16.gmra.mxu0 %v318
      %v481 = vpop.f32.mrf.mxu0
      %v482 = vadd.f32 0.0, %v481
      %v483 = vpop.f32.mrf.mxu0
      %v484 = vpop.f32.mrf.mxu0
      %v485 = vadd.f32 0.0, %v484
      %v486 = vpop.f32.mrf.mxu0
      %487 = vdwg.mxu0
      %v489 = vsel %vm271, %v204, 0
      %v492 = vsel %vm271, %v205, 0
      %v495 = vsel %vm271, %v206, 0
      %v498 = vsel %vm271, %v207, 0
      %v501 = vsel %vm271, %v208, 0
      %v504 = vsel %vm271, %v209, 0
      %v507 = vsel %vm271, %v210, 0
      %v510 = vsel %vm271, %v211, 0
      %v513 = vsel %vm271, %v212, 0
      %v516 = vsel %vm271, %v213, 0
      %v519 = vsel %vm271, %v214, 0
      %v522 = vsel %vm271, %v215, 0
      %v525 = vsel %vm271, %v216, 0
      %v528 = vsel %vm271, %v217, 0
      %v531 = vsel %vm271, %v218, 0
      %v534 = vsel %vm271, %v219, 0
      %v537 = vand.u32 %v220, %v323
      %539 = vmatprep.subr.bf16.mxu0 0
      %540 = vmatpush1.bf16.msra.mxu0 0
      %541 = vmatprep.subr.bf16.mxu0 0
      %542 = vmatpush1.bf16.msra.mxu0 0
      %543 = vmatprep.subr.bf16.mxu0 0
      %544 = vmatpush1.bf16.msra.mxu0 0
      %545 = vmatprep.subr.bf16.mxu0 0
      %546 = vmatpush1.bf16.msra.mxu0 0
      %547 = vmatprep.subr.bf16.mxu0 0
      %548 = vmatpush1.bf16.msra.mxu0 0
      %549 = vmatprep.subr.bf16.mxu0 0
      %550 = vmatpush1.bf16.msra.mxu0 0
      %551 = vmatprep.subr.bf16.mxu0 0
      %552 = vmatpush1.bf16.msra.mxu0 0
      %553 = vmatprep.subr.bf16.mxu0 0
      %554 = vmatpush1.bf16.msra.mxu0 %v537
      %555 = vmatprep.subr.bf16.mxu0 0
      %556 = vmatpush2.bf16.msra.mxu0 0
      %557 = vmatprep.subr.bf16.mxu0 0
      %558 = vmatpush2.bf16.msra.mxu0 0
      %559 = vmatprep.subr.bf16.mxu0 0
      %560 = vmatpush2.bf16.msra.mxu0 0
      %561 = vmatprep.subr.bf16.mxu0 0
      %562 = vmatpush2.bf16.msra.mxu0 0
      %563 = vmatprep.subr.bf16.mxu0 0
      %564 = vmatpush2.bf16.msra.mxu0 0
      %565 = vmatprep.subr.bf16.mxu0 0
      %566 = vmatpush2.bf16.msra.mxu0 0
      %567 = vmatprep.subr.bf16.mxu0 0
      %568 = vmatpush2.bf16.msra.mxu0 0
      %569 = vmatprep.subr.bf16.mxu0 0
      %570 = vmatpush2.bf16.msra.mxu0 0
      %571 = vmatprep.mubr.bf16.mxu0 0
      %572 = vmatmul.mubr.bf16.gmra.mxu0 %v489
      %v573 = vpop.f32.mrf.mxu0
      %v574 = vadd.f32 %v362, %v573
      %v575 = vpop.f32.mrf.mxu0
      %v576 = vpop.f32.mrf.mxu0
      %v577 = vadd.f32 %v365, %v576
      %v578 = vpop.f32.mrf.mxu0
      %579 = vmatprep.mubr.bf16.mxu0 0
      %580 = vmatmul.mubr.bf16.gmra.mxu0 %v492
      %v581 = vpop.f32.mrf.mxu0
      %v582 = vadd.f32 %v370, %v581
      %v583 = vpop.f32.mrf.mxu0
      %v584 = vpop.f32.mrf.mxu0
      %v585 = vadd.f32 %v373, %v584
      %v586 = vpop.f32.mrf.mxu0
      %587 = vmatprep.mubr.bf16.mxu0 0
      %588 = vmatmul.mubr.bf16.gmra.mxu0 %v495
      %v589 = vpop.f32.mrf.mxu0
      %v590 = vadd.f32 %v378, %v589
      %v591 = vpop.f32.mrf.mxu0
      %v592 = vpop.f32.mrf.mxu0
      %v593 = vadd.f32 %v381, %v592
      %v594 = vpop.f32.mrf.mxu0
      %595 = vmatprep.mubr.bf16.mxu0 0
      %596 = vmatmul.mubr.bf16.gmra.mxu0 %v498
      %v597 = vpop.f32.mrf.mxu0
      %v598 = vadd.f32 %v386, %v597
      %v599 = vpop.f32.mrf.mxu0
      %v600 = vpop.f32.mrf.mxu0
      %v601 = vadd.f32 %v389, %v600
      %v602 = vpop.f32.mrf.mxu0
      %603 = vmatprep.mubr.bf16.mxu0 0
      %604 = vmatmul.mubr.bf16.gmra.mxu0 %v501
      %v605 = vpop.f32.mrf.mxu0
      %v606 = vadd.f32 %v394, %v605
      %v607 = vpop.f32.mrf.mxu0
      %v608 = vpop.f32.mrf.mxu0
      %v609 = vadd.f32 %v397, %v608
      %v610 = vpop.f32.mrf.mxu0
      %611 = vmatprep.mubr.bf16.mxu0 0
      %612 = vmatmul.mubr.bf16.gmra.mxu0 %v504
      %v613 = vpop.f32.mrf.mxu0
      %v614 = vadd.f32 %v402, %v613
      %v615 = vpop.f32.mrf.mxu0
      %v616 = vpop.f32.mrf.mxu0
      %v617 = vadd.f32 %v405, %v616
      %v618 = vpop.f32.mrf.mxu0
      %619 = vmatprep.mubr.bf16.mxu0 0
      %620 = vmatmul.mubr.bf16.gmra.mxu0 %v507
      %v621 = vpop.f32.mrf.mxu0
      %v622 = vadd.f32 %v410, %v621
      %v623 = vpop.f32.mrf.mxu0
      %v624 = vpop.f32.mrf.mxu0
      %v625 = vadd.f32 %v413, %v624
      %v626 = vpop.f32.mrf.mxu0
      %627 = vmatprep.mubr.bf16.mxu0 0
      %628 = vmatmul.mubr.bf16.gmra.mxu0 %v510
      %v629 = vpop.f32.mrf.mxu0
      %v630 = vadd.f32 %v418, %v629
      %v631 = vpop.f32.mrf.mxu0
      %v632 = vpop.f32.mrf.mxu0
      %v633 = vadd.f32 %v421, %v632
      %v634 = vpop.f32.mrf.mxu0
      %635 = vmatprep.mubr.bf16.mxu0 0
      %636 = vmatmul.mubr.bf16.gmra.mxu0 %v513
      %v637 = vpop.f32.mrf.mxu0
      %v638 = vadd.f32 %v426, %v637
      %v639 = vpop.f32.mrf.mxu0
      %v640 = vpop.f32.mrf.mxu0
      %v641 = vadd.f32 %v429, %v640
      %v642 = vpop.f32.mrf.mxu0
      %643 = vmatprep.mubr.bf16.mxu0 0
      %644 = vmatmul.mubr.bf16.gmra.mxu0 %v516
      %v645 = vpop.f32.mrf.mxu0
      %v646 = vadd.f32 %v434, %v645
      %v647 = vpop.f32.mrf.mxu0
      %v648 = vpop.f32.mrf.mxu0
      %v649 = vadd.f32 %v437, %v648
      %v650 = vpop.f32.mrf.mxu0
      %651 = vmatprep.mubr.bf16.mxu0 0
      %652 = vmatmul.mubr.bf16.gmra.mxu0 %v519
      %v653 = vpop.f32.mrf.mxu0
      %v654 = vadd.f32 %v442, %v653
      %v655 = vpop.f32.mrf.mxu0
      %v656 = vpop.f32.mrf.mxu0
      %v657 = vadd.f32 %v445, %v656
      %v658 = vpop.f32.mrf.mxu0
      %659 = vmatprep.mubr.bf16.mxu0 0
      %660 = vmatmul.mubr.bf16.gmra.mxu0 %v522
      %v661 = vpop.f32.mrf.mxu0
      %v662 = vadd.f32 %v450, %v661
      %v663 = vpop.f32.mrf.mxu0
      %v664 = vpop.f32.mrf.mxu0
      %v665 = vadd.f32 %v453, %v664
      %v666 = vpop.f32.mrf.mxu0
      %667 = vmatprep.mubr.bf16.mxu0 0
      %668 = vmatmul.mubr.bf16.gmra.mxu0 %v525
      %v669 = vpop.f32.mrf.mxu0
      %v670 = vadd.f32 %v458, %v669
      %v671 = vpop.f32.mrf.mxu0
      %v672 = vpop.f32.mrf.mxu0
      %v673 = vadd.f32 %v461, %v672
      %v674 = vpop.f32.mrf.mxu0
      %675 = vmatprep.mubr.bf16.mxu0 0
      %676 = vmatmul.mubr.bf16.gmra.mxu0 %v528
      %v677 = vpop.f32.mrf.mxu0
      %v678 = vadd.f32 %v466, %v677
      %v679 = vpop.f32.mrf.mxu0
      %v680 = vpop.f32.mrf.mxu0
      %v681 = vadd.f32 %v469, %v680
      %v682 = vpop.f32.mrf.mxu0
      %683 = vmatprep.mubr.bf16.mxu0 0
      %684 = vmatmul.mubr.bf16.gmra.mxu0 %v531
      %v685 = vpop.f32.mrf.mxu0
      %v686 = vadd.f32 %v474, %v685
      %v687 = vpop.f32.mrf.mxu0
      %v688 = vpop.f32.mrf.mxu0
      %v689 = vadd.f32 %v477, %v688
      %v690 = vpop.f32.mrf.mxu0
      %691 = vmatprep.mubr.bf16.mxu0 0
      %692 = vmatmul.mubr.bf16.gmra.mxu0 %v534
      %v693 = vpop.f32.mrf.mxu0
      %v694 = vadd.f32 %v482, %v693
      %v695 = vpop.f32.mrf.mxu0
      %v696 = vpop.f32.mrf.mxu0
      %v697 = vadd.f32 %v485, %v696
      %v698 = vpop.f32.mrf.mxu0
      %699 = vdwg.mxu0
      %v700 = vld [vmem:[%s165 + $0x2] sm:$0xff]
      %v701 = vld [vmem:[%s165 + $0xa] sm:$0xff]
      %v702 = vld [vmem:[%s165 + $0x1a] sm:$0xff]
      %v703 = vld [vmem:[%s165 + $0x22] sm:$0xff]
      %v704 = vld [vmem:[%s165 + $0x32] sm:$0xff]
      %v705 = vld [vmem:[%s165 + $0x3a] sm:$0xff]
      %v706 = vld [vmem:[%s165 + $0x4a] sm:$0xff]
      %v707 = vld [vmem:[%s165 + $0x52] sm:$0xff]
      %v708 = vld [vmem:[%s165 + $0x62] sm:$0xff]
      %v709 = vld [vmem:[%s165 + $0x6a] sm:$0xff]
      %v710 = vld [vmem:[%s165 + $0x7a] sm:$0xff]
      %v711 = vld [vmem:[%s165 + $0x82] sm:$0xff]
      %v712 = vld [vmem:[%s165 + $0x92] sm:$0xff]
      %v713 = vld [vmem:[%s165 + $0x9a] sm:$0xff]
      %v714 = vld [vmem:[%s165 + $0xaa] sm:$0xff]
      %v715 = vld [vmem:[%s165 + $0xb2] sm:$0xff]
      %v716 = vld [vmem:[%s165 + $0xc2] sm:$0xff]
      %v717 = vld [vmem:[%s165 + $0xca] sm:$0xff]
      %v718 = vld [vmem:[%s165 + $0xda] sm:$0xff]
      %v719 = vld [vmem:[%s165 + $0xe2] sm:$0xff]
      %v720 = vld [vmem:[%s165 + $0xf2] sm:$0xff]
      %v721 = vld [vmem:[%s165 + $0xfa] sm:$0xff]
      %v722 = vld [vmem:[%s165 + $0x10a] sm:$0xff]
      %v723 = vld [vmem:[%s165 + $0x112] sm:$0xff]
      %v724 = vld [vmem:[%s165 + $0x122] sm:$0xff]
      %v725 = vld [vmem:[%s165 + $0x12a] sm:$0xff]
      %v726 = vld [vmem:[%s165 + $0x13a] sm:$0xff]
      %v727 = vld [vmem:[%s165 + $0x142] sm:$0xff]
      %v728 = vld [vmem:[%s165 + $0x152] sm:$0xff]
      %v729 = vld [vmem:[%s165 + $0x15a] sm:$0xff]
      %v730 = vld [vmem:[%s165 + $0x16a] sm:$0xff]
      %v731 = vld [vmem:[%s165 + $0x172] sm:$0xff]
      %v732 = vpack.c.bf16 %v701, %v700
      %v733 = vpack.c.bf16 %v703, %v702
      %v734 = vpack.c.bf16 %v705, %v704
      %v735 = vpack.c.bf16 %v707, %v706
      %v736 = vpack.c.bf16 %v709, %v708
      %v737 = vpack.c.bf16 %v711, %v710
      %v738 = vpack.c.bf16 %v713, %v712
      %v739 = vpack.c.bf16 %v715, %v714
      %v740 = vpack.c.bf16 %v717, %v716
      %v741 = vpack.c.bf16 %v719, %v718
      %v742 = vpack.c.bf16 %v721, %v720
      %v743 = vpack.c.bf16 %v723, %v722
      %v744 = vpack.c.bf16 %v725, %v724
      %v745 = vpack.c.bf16 %v727, %v726
      %v746 = vpack.c.bf16 %v729, %v728
      %v747 = vpack.c.bf16 %v731, %v730
      %s748 = scalar_lea.vmem %s1, 4
      %v749 = vld [vmem:[%s748] sm:$0x3]
      %v751 = vsel %vm271, %v732, 0
      %v754 = vsel %vm271, %v733, 0
      %v757 = vsel %vm271, %v734, 0
      %v760 = vsel %vm271, %v735, 0
      %v763 = vsel %vm271, %v736, 0
      %v766 = vsel %vm271, %v737, 0
      %v769 = vsel %vm271, %v738, 0
      %v772 = vsel %vm271, %v739, 0
      %v775 = vsel %vm271, %v740, 0
      %v778 = vsel %vm271, %v741, 0
      %v781 = vsel %vm271, %v742, 0
      %v784 = vsel %vm271, %v743, 0
      %v787 = vsel %vm271, %v744, 0
      %v790 = vsel %vm271, %v745, 0
      %v793 = vsel %vm271, %v746, 0
      %v796 = vsel %vm271, %v747, 0
      %v799 = vand.u32 %v749, %v323
      %801 = vmatprep.subr.bf16.mxu0 0
      %802 = vmatpush1.bf16.msra.mxu0 0
      %803 = vmatprep.subr.bf16.mxu0 0
      %804 = vmatpush1.bf16.msra.mxu0 0
      %805 = vmatprep.subr.bf16.mxu0 0
      %806 = vmatpush1.bf16.msra.mxu0 0
      %807 = vmatprep.subr.bf16.mxu0 0
      %808 = vmatpush1.bf16.msra.mxu0 0
      %809 = vmatprep.subr.bf16.mxu0 0
      %810 = vmatpush1.bf16.msra.mxu0 0
      %811 = vmatprep.subr.bf16.mxu0 0
      %812 = vmatpush1.bf16.msra.mxu0 0
      %813 = vmatprep.subr.bf16.mxu0 0
      %814 = vmatpush1.bf16.msra.mxu0 0
      %815 = vmatprep.subr.bf16.mxu0 0
      %816 = vmatpush1.bf16.msra.mxu0 %v799
      %817 = vmatprep.subr.bf16.mxu0 0
      %818 = vmatpush2.bf16.msra.mxu0 0
      %819 = vmatprep.subr.bf16.mxu0 0
      %820 = vmatpush2.bf16.msra.mxu0 0
      %821 = vmatprep.subr.bf16.mxu0 0
      %822 = vmatpush2.bf16.msra.mxu0 0
      %823 = vmatprep.subr.bf16.mxu0 0
      %824 = vmatpush2.bf16.msra.mxu0 0
      %825 = vmatprep.subr.bf16.mxu0 0
      %826 = vmatpush2.bf16.msra.mxu0 0
      %827 = vmatprep.subr.bf16.mxu0 0
      %828 = vmatpush2.bf16.msra.mxu0 0
      %829 = vmatprep.subr.bf16.mxu0 0
      %830 = vmatpush2.bf16.msra.mxu0 0
      %831 = vmatprep.subr.bf16.mxu0 0
      %832 = vmatpush2.bf16.msra.mxu0 0
      %833 = vmatprep.mubr.bf16.mxu0 0
      %834 = vmatmul.mubr.bf16.gmra.mxu0 %v751
      %v835 = vpop.f32.mrf.mxu0
      %v836 = vadd.f32 0.0, %v835
      %v837 = vpop.f32.mrf.mxu0
      %v838 = vpop.f32.mrf.mxu0
      %v839 = vadd.f32 0.0, %v838
      %v840 = vpop.f32.mrf.mxu0
      %841 = vmatprep.mubr.bf16.mxu0 0
      %842 = vmatmul.mubr.bf16.gmra.mxu0 %v754
      %v843 = vpop.f32.mrf.mxu0
      %v844 = vadd.f32 0.0, %v843
      %v845 = vpop.f32.mrf.mxu0
      %v846 = vpop.f32.mrf.mxu0
      %v847 = vadd.f32 0.0, %v846
      %v848 = vpop.f32.mrf.mxu0
      %849 = vmatprep.mubr.bf16.mxu0 0
      %850 = vmatmul.mubr.bf16.gmra.mxu0 %v757
      %v851 = vpop.f32.mrf.mxu0
      %v852 = vadd.f32 0.0, %v851
      %v853 = vpop.f32.mrf.mxu0
      %v854 = vpop.f32.mrf.mxu0
      %v855 = vadd.f32 0.0, %v854
      %v856 = vpop.f32.mrf.mxu0
      %857 = vmatprep.mubr.bf16.mxu0 0
      %858 = vmatmul.mubr.bf16.gmra.mxu0 %v760
      %v859 = vpop.f32.mrf.mxu0
      %v860 = vadd.f32 0.0, %v859
      %v861 = vpop.f32.mrf.mxu0
      %v862 = vpop.f32.mrf.mxu0
      %v863 = vadd.f32 0.0, %v862
      %v864 = vpop.f32.mrf.mxu0
      %865 = vmatprep.mubr.bf16.mxu0 0
      %866 = vmatmul.mubr.bf16.gmra.mxu0 %v763
      %v867 = vpop.f32.mrf.mxu0
      %v868 = vadd.f32 0.0, %v867
      %v869 = vpop.f32.mrf.mxu0
      %v870 = vpop.f32.mrf.mxu0
      %v871 = vadd.f32 0.0, %v870
      %v872 = vpop.f32.mrf.mxu0
      %873 = vmatprep.mubr.bf16.mxu0 0
      %874 = vmatmul.mubr.bf16.gmra.mxu0 %v766
      %v875 = vpop.f32.mrf.mxu0
      %v876 = vadd.f32 0.0, %v875
      %v877 = vpop.f32.mrf.mxu0
      %v878 = vpop.f32.mrf.mxu0
      %v879 = vadd.f32 0.0, %v878
      %v880 = vpop.f32.mrf.mxu0
      %881 = vmatprep.mubr.bf16.mxu0 0
      %882 = vmatmul.mubr.bf16.gmra.mxu0 %v769
      %v883 = vpop.f32.mrf.mxu0
      %v884 = vadd.f32 0.0, %v883
      %v885 = vpop.f32.mrf.mxu0
      %v886 = vpop.f32.mrf.mxu0
      %v887 = vadd.f32 0.0, %v886
      %v888 = vpop.f32.mrf.mxu0
      %889 = vmatprep.mubr.bf16.mxu0 0
      %890 = vmatmul.mubr.bf16.gmra.mxu0 %v772
      %v891 = vpop.f32.mrf.mxu0
      %v892 = vadd.f32 0.0, %v891
      %v893 = vpop.f32.mrf.mxu0
      %v894 = vpop.f32.mrf.mxu0
      %v895 = vadd.f32 0.0, %v894
      %v896 = vpop.f32.mrf.mxu0
      %897 = vmatprep.mubr.bf16.mxu0 0
      %898 = vmatmul.mubr.bf16.gmra.mxu0 %v775
      %v899 = vpop.f32.mrf.mxu0
      %v900 = vadd.f32 0.0, %v899
      %v901 = vpop.f32.mrf.mxu0
      %v902 = vpop.f32.mrf.mxu0
      %v903 = vadd.f32 0.0, %v902
      %v904 = vpop.f32.mrf.mxu0
      %905 = vmatprep.mubr.bf16.mxu0 0
      %906 = vmatmul.mubr.bf16.gmra.mxu0 %v778
      %v907 = vpop.f32.mrf.mxu0
      %v908 = vadd.f32 0.0, %v907
      %v909 = vpop.f32.mrf.mxu0
      %v910 = vpop.f32.mrf.mxu0
      %v911 = vadd.f32 0.0, %v910
      %v912 = vpop.f32.mrf.mxu0
      %913 = vmatprep.mubr.bf16.mxu0 0
      %914 = vmatmul.mubr.bf16.gmra.mxu0 %v781
      %v915 = vpop.f32.mrf.mxu0
      %v916 = vadd.f32 0.0, %v915
      %v917 = vpop.f32.mrf.mxu0
      %v918 = vpop.f32.mrf.mxu0
      %v919 = vadd.f32 0.0, %v918
      %v920 = vpop.f32.mrf.mxu0
      %921 = vmatprep.mubr.bf16.mxu0 0
      %922 = vmatmul.mubr.bf16.gmra.mxu0 %v784
      %v923 = vpop.f32.mrf.mxu0
      %v924 = vadd.f32 0.0, %v923
      %v925 = vpop.f32.mrf.mxu0
      %v926 = vpop.f32.mrf.mxu0
      %v927 = vadd.f32 0.0, %v926
      %v928 = vpop.f32.mrf.mxu0
      %929 = vmatprep.mubr.bf16.mxu0 0
      %930 = vmatmul.mubr.bf16.gmra.mxu0 %v787
      %v931 = vpop.f32.mrf.mxu0
      %v932 = vadd.f32 0.0, %v931
      %v933 = vpop.f32.mrf.mxu0
      %v934 = vpop.f32.mrf.mxu0
      %v935 = vadd.f32 0.0, %v934
      %v936 = vpop.f32.mrf.mxu0
      %937 = vmatprep.mubr.bf16.mxu0 0
      %938 = vmatmul.mubr.bf16.gmra.mxu0 %v790
      %v939 = vpop.f32.mrf.mxu0
      %v940 = vadd.f32 0.0, %v939
      %v941 = vpop.f32.mrf.mxu0
      %v942 = vpop.f32.mrf.mxu0
      %v943 = vadd.f32 0.0, %v942
      %v944 = vpop.f32.mrf.mxu0
      %945 = vmatprep.mubr.bf16.mxu0 0
      %946 = vmatmul.mubr.bf16.gmra.mxu0 %v793
      %v947 = vpop.f32.mrf.mxu0
      %v948 = vadd.f32 0.0, %v947
      %v949 = vpop.f32.mrf.mxu0
      %v950 = vpop.f32.mrf.mxu0
      %v951 = vadd.f32 0.0, %v950
      %v952 = vpop.f32.mrf.mxu0
      %953 = vmatprep.mubr.bf16.mxu0 0
      %954 = vmatmul.mubr.bf16.gmra.mxu0 %v796
      %v955 = vpop.f32.mrf.mxu0
      %v956 = vadd.f32 0.0, %v955
      %v957 = vpop.f32.mrf.mxu0
      %v958 = vpop.f32.mrf.mxu0
      %v959 = vadd.f32 0.0, %v958
      %v960 = vpop.f32.mrf.mxu0
      %961 = vdwg.mxu0
      %v962 = vadd.f32 %v574, %v836
      %v963 = vadd.f32 %v577, %v839
      %v964 = vadd.f32 %v582, %v844
      %v965 = vadd.f32 %v585, %v847
      %v966 = vadd.f32 %v590, %v852
      %v967 = vadd.f32 %v593, %v855
      %v968 = vadd.f32 %v598, %v860
      %v969 = vadd.f32 %v601, %v863
      %v970 = vadd.f32 %v606, %v868
      %v971 = vadd.f32 %v609, %v871
      %v972 = vadd.f32 %v614, %v876
      %v973 = vadd.f32 %v617, %v879
      %v974 = vadd.f32 %v622, %v884
      %v975 = vadd.f32 %v625, %v887
      %v976 = vadd.f32 %v630, %v892
      %v977 = vadd.f32 %v633, %v895
      %v978 = vadd.f32 %v638, %v900
      %v979 = vadd.f32 %v641, %v903
      %v980 = vadd.f32 %v646, %v908
      %v981 = vadd.f32 %v649, %v911
      %v982 = vadd.f32 %v654, %v916
      %v983 = vadd.f32 %v657, %v919
      %v984 = vadd.f32 %v662, %v924
      %v985 = vadd.f32 %v665, %v927
      %v986 = vadd.f32 %v670, %v932
      %v987 = vadd.f32 %v673, %v935
      %v988 = vadd.f32 %v678, %v940
      %v989 = vadd.f32 %v681, %v943
      %v990 = vadd.f32 %v686, %v948
      %v991 = vadd.f32 %v689, %v951
      %v992 = vadd.f32 %v694, %v956
      %v993 = vadd.f32 %v697, %v959
      %s994 = scalar_lea.vmem %s165, 24
      %v995 = vld [vmem:[%s994] sm:$0xff]
      %v996 = vld [vmem:[%s994 + $0x8] sm:$0xff]
      %v997 = vld [vmem:[%s994 + $0x18] sm:$0xff]
      %v998 = vld [vmem:[%s994 + $0x20] sm:$0xff]
      %v999 = vld [vmem:[%s994 + $0x30] sm:$0xff]
      %v1000 = vld [vmem:[%s994 + $0x38] sm:$0xff]
      %v1001 = vld [vmem:[%s994 + $0x48] sm:$0xff]
      %v1002 = vld [vmem:[%s994 + $0x50] sm:$0xff]
      %v1003 = vld [vmem:[%s994 + $0x60] sm:$0xff]
      %v1004 = vld [vmem:[%s994 + $0x68] sm:$0xff]
      %v1005 = vld [vmem:[%s994 + $0x78] sm:$0xff]
      %v1006 = vld [vmem:[%s994 + $0x80] sm:$0xff]
      %v1007 = vld [vmem:[%s994 + $0x90] sm:$0xff]
      %v1008 = vld [vmem:[%s994 + $0x98] sm:$0xff]
      %v1009 = vld [vmem:[%s994 + $0xa8] sm:$0xff]
      %v1010 = vld [vmem:[%s994 + $0xb0] sm:$0xff]
      %v1011 = vld [vmem:[%s994 + $0xc0] sm:$0xff]
      %v1012 = vld [vmem:[%s994 + $0xc8] sm:$0xff]
      %v1013 = vld [vmem:[%s994 + $0xd8] sm:$0xff]
      %v1014 = vld [vmem:[%s994 + $0xe0] sm:$0xff]
      %v1015 = vld [vmem:[%s994 + $0xf0] sm:$0xff]
      %v1016 = vld [vmem:[%s994 + $0xf8] sm:$0xff]
      %v1017 = vld [vmem:[%s994 + $0x108] sm:$0xff]
      %v1018 = vld [vmem:[%s994 + $0x110] sm:$0xff]
      %v1019 = vld [vmem:[%s994 + $0x120] sm:$0xff]
      %v1020 = vld [vmem:[%s994 + $0x128] sm:$0xff]
      %v1021 = vld [vmem:[%s994 + $0x138] sm:$0xff]
      %v1022 = vld [vmem:[%s994 + $0x140] sm:$0xff]
      %v1023 = vld [vmem:[%s994 + $0x150] sm:$0xff]
      %v1024 = vld [vmem:[%s994 + $0x158] sm:$0xff]
      %v1025 = vld [vmem:[%s994 + $0x168] sm:$0xff]
      %v1026 = vld [vmem:[%s994 + $0x170] sm:$0xff]
      %v1027 = vpack.c.bf16 %v996, %v995
      %v1028 = vpack.c.bf16 %v998, %v997
      %v1029 = vpack.c.bf16 %v1000, %v999
      %v1030 = vpack.c.bf16 %v1002, %v1001
      %v1031 = vpack.c.bf16 %v1004, %v1003
      %v1032 = vpack.c.bf16 %v1006, %v1005
      %v1033 = vpack.c.bf16 %v1008, %v1007
      %v1034 = vpack.c.bf16 %v1010, %v1009
      %v1035 = vpack.c.bf16 %v1012, %v1011
      %v1036 = vpack.c.bf16 %v1014, %v1013
      %v1037 = vpack.c.bf16 %v1016, %v1015
      %v1038 = vpack.c.bf16 %v1018, %v1017
      %v1039 = vpack.c.bf16 %v1020, %v1019
      %v1040 = vpack.c.bf16 %v1022, %v1021
      %v1041 = vpack.c.bf16 %v1024, %v1023
      %v1042 = vpack.c.bf16 %v1026, %v1025
      %s1043 = scalar_lea.vmem %s1, 6
      %v1044 = vld [vmem:[%s1043] sm:$0x3]
      %v1046 = vsel %vm271, %v1027, 0
      %v1049 = vsel %vm271, %v1028, 0
      %v1052 = vsel %vm271, %v1029, 0
      %v1055 = vsel %vm271, %v1030, 0
      %v1058 = vsel %vm271, %v1031, 0
      %v1061 = vsel %vm271, %v1032, 0
      %v1064 = vsel %vm271, %v1033, 0
      %v1067 = vsel %vm271, %v1034, 0
      %v1070 = vsel %vm271, %v1035, 0
      %v1073 = vsel %vm271, %v1036, 0
      %v1076 = vsel %vm271, %v1037, 0
      %v1079 = vsel %vm271, %v1038, 0
      %v1082 = vsel %vm271, %v1039, 0
      %v1085 = vsel %vm271, %v1040, 0
      %v1088 = vsel %vm271, %v1041, 0
      %v1091 = vsel %vm271, %v1042, 0
      %v1094 = vand.u32 %v1044, %v323
      %1096 = vmatprep.subr.bf16.mxu0 0
      %1097 = vmatpush1.bf16.msra.mxu0 0
      %1098 = vmatprep.subr.bf16.mxu0 0
      %1099 = vmatpush1.bf16.msra.mxu0 0
      %1100 = vmatprep.subr.bf16.mxu0 0
      %1101 = vmatpush1.bf16.msra.mxu0 0
      %1102 = vmatprep.subr.bf16.mxu0 0
      %1103 = vmatpush1.bf16.msra.mxu0 0
      %1104 = vmatprep.subr.bf16.mxu0 0
      %1105 = vmatpush1.bf16.msra.mxu0 0
      %1106 = vmatprep.subr.bf16.mxu0 0
      %1107 = vmatpush1.bf16.msra.mxu0 0
      %1108 = vmatprep.subr.bf16.mxu0 0
      %1109 = vmatpush1.bf16.msra.mxu0 0
      %1110 = vmatprep.subr.bf16.mxu0 0
      %1111 = vmatpush1.bf16.msra.mxu0 %v1094
      %1112 = vmatprep.subr.bf16.mxu0 0
      %1113 = vmatpush2.bf16.msra.mxu0 0
      %1114 = vmatprep.subr.bf16.mxu0 0
      %1115 = vmatpush2.bf16.msra.mxu0 0
      %1116 = vmatprep.subr.bf16.mxu0 0
      %1117 = vmatpush2.bf16.msra.mxu0 0
      %1118 = vmatprep.subr.bf16.mxu0 0
      %1119 = vmatpush2.bf16.msra.mxu0 0
      %1120 = vmatprep.subr.bf16.mxu0 0
      %1121 = vmatpush2.bf16.msra.mxu0 0
      %1122 = vmatprep.subr.bf16.mxu0 0
      %1123 = vmatpush2.bf16.msra.mxu0 0
      %1124 = vmatprep.subr.bf16.mxu0 0
      %1125 = vmatpush2.bf16.msra.mxu0 0
      %1126 = vmatprep.subr.bf16.mxu0 0
      %1127 = vmatpush2.bf16.msra.mxu0 0
      %1128 = vmatprep.mubr.bf16.mxu0 0
      %1129 = vmatmul.mubr.bf16.gmra.mxu0 %v1046
      %v1130 = vpop.f32.mrf.mxu0
      %v1131 = vadd.f32 0.0, %v1130
      %v1132 = vpop.f32.mrf.mxu0
      %v1133 = vpop.f32.mrf.mxu0
      %v1134 = vadd.f32 0.0, %v1133
      %v1135 = vpop.f32.mrf.mxu0
      %1136 = vmatprep.mubr.bf16.mxu0 0
      %1137 = vmatmul.mubr.bf16.gmra.mxu0 %v1049
      %v1138 = vpop.f32.mrf.mxu0
      %v1139 = vadd.f32 0.0, %v1138
      %v1140 = vpop.f32.mrf.mxu0
      %v1141 = vpop.f32.mrf.mxu0
      %v1142 = vadd.f32 0.0, %v1141
      %v1143 = vpop.f32.mrf.mxu0
      %1144 = vmatprep.mubr.bf16.mxu0 0
      %1145 = vmatmul.mubr.bf16.gmra.mxu0 %v1052
      %v1146 = vpop.f32.mrf.mxu0
      %v1147 = vadd.f32 0.0, %v1146
      %v1148 = vpop.f32.mrf.mxu0
      %v1149 = vpop.f32.mrf.mxu0
      %v1150 = vadd.f32 0.0, %v1149
      %v1151 = vpop.f32.mrf.mxu0
      %1152 = vmatprep.mubr.bf16.mxu0 0
      %1153 = vmatmul.mubr.bf16.gmra.mxu0 %v1055
      %v1154 = vpop.f32.mrf.mxu0
      %v1155 = vadd.f32 0.0, %v1154
      %v1156 = vpop.f32.mrf.mxu0
      %v1157 = vpop.f32.mrf.mxu0
      %v1158 = vadd.f32 0.0, %v1157
      %v1159 = vpop.f32.mrf.mxu0
      %1160 = vmatprep.mubr.bf16.mxu0 0
      %1161 = vmatmul.mubr.bf16.gmra.mxu0 %v1058
      %v1162 = vpop.f32.mrf.mxu0
      %v1163 = vadd.f32 0.0, %v1162
      %v1164 = vpop.f32.mrf.mxu0
      %v1165 = vpop.f32.mrf.mxu0
      %v1166 = vadd.f32 0.0, %v1165
      %v1167 = vpop.f32.mrf.mxu0
      %1168 = vmatprep.mubr.bf16.mxu0 0
      %1169 = vmatmul.mubr.bf16.gmra.mxu0 %v1061
      %v1170 = vpop.f32.mrf.mxu0
      %v1171 = vadd.f32 0.0, %v1170
      %v1172 = vpop.f32.mrf.mxu0
      %v1173 = vpop.f32.mrf.mxu0
      %v1174 = vadd.f32 0.0, %v1173
      %v1175 = vpop.f32.mrf.mxu0
      %1176 = vmatprep.mubr.bf16.mxu0 0
      %1177 = vmatmul.mubr.bf16.gmra.mxu0 %v1064
      %v1178 = vpop.f32.mrf.mxu0
      %v1179 = vadd.f32 0.0, %v1178
      %v1180 = vpop.f32.mrf.mxu0
      %v1181 = vpop.f32.mrf.mxu0
      %v1182 = vadd.f32 0.0, %v1181
      %v1183 = vpop.f32.mrf.mxu0
      %1184 = vmatprep.mubr.bf16.mxu0 0
      %1185 = vmatmul.mubr.bf16.gmra.mxu0 %v1067
      %v1186 = vpop.f32.mrf.mxu0
      %v1187 = vadd.f32 0.0, %v1186
      %v1188 = vpop.f32.mrf.mxu0
      %v1189 = vpop.f32.mrf.mxu0
      %v1190 = vadd.f32 0.0, %v1189
      %v1191 = vpop.f32.mrf.mxu0
      %1192 = vmatprep.mubr.bf16.mxu0 0
      %1193 = vmatmul.mubr.bf16.gmra.mxu0 %v1070
      %v1194 = vpop.f32.mrf.mxu0
      %v1195 = vadd.f32 0.0, %v1194
      %v1196 = vpop.f32.mrf.mxu0
      %v1197 = vpop.f32.mrf.mxu0
      %v1198 = vadd.f32 0.0, %v1197
      %v1199 = vpop.f32.mrf.mxu0
      %1200 = vmatprep.mubr.bf16.mxu0 0
      %1201 = vmatmul.mubr.bf16.gmra.mxu0 %v1073
      %v1202 = vpop.f32.mrf.mxu0
      %v1203 = vadd.f32 0.0, %v1202
      %v1204 = vpop.f32.mrf.mxu0
      %v1205 = vpop.f32.mrf.mxu0
      %v1206 = vadd.f32 0.0, %v1205
      %v1207 = vpop.f32.mrf.mxu0
      %1208 = vmatprep.mubr.bf16.mxu0 0
      %1209 = vmatmul.mubr.bf16.gmra.mxu0 %v1076
      %v1210 = vpop.f32.mrf.mxu0
      %v1211 = vadd.f32 0.0, %v1210
      %v1212 = vpop.f32.mrf.mxu0
      %v1213 = vpop.f32.mrf.mxu0
      %v1214 = vadd.f32 0.0, %v1213
      %v1215 = vpop.f32.mrf.mxu0
      %1216 = vmatprep.mubr.bf16.mxu0 0
      %1217 = vmatmul.mubr.bf16.gmra.mxu0 %v1079
      %v1218 = vpop.f32.mrf.mxu0
      %v1219 = vadd.f32 0.0, %v1218
      %v1220 = vpop.f32.mrf.mxu0
      %v1221 = vpop.f32.mrf.mxu0
      %v1222 = vadd.f32 0.0, %v1221
      %v1223 = vpop.f32.mrf.mxu0
      %1224 = vmatprep.mubr.bf16.mxu0 0
      %1225 = vmatmul.mubr.bf16.gmra.mxu0 %v1082
      %v1226 = vpop.f32.mrf.mxu0
      %v1227 = vadd.f32 0.0, %v1226
      %v1228 = vpop.f32.mrf.mxu0
      %v1229 = vpop.f32.mrf.mxu0
      %v1230 = vadd.f32 0.0, %v1229
      %v1231 = vpop.f32.mrf.mxu0
      %1232 = vmatprep.mubr.bf16.mxu0 0
      %1233 = vmatmul.mubr.bf16.gmra.mxu0 %v1085
      %v1234 = vpop.f32.mrf.mxu0
      %v1235 = vadd.f32 0.0, %v1234
      %v1236 = vpop.f32.mrf.mxu0
      %v1237 = vpop.f32.mrf.mxu0
      %v1238 = vadd.f32 0.0, %v1237
      %v1239 = vpop.f32.mrf.mxu0
      %1240 = vmatprep.mubr.bf16.mxu0 0
      %1241 = vmatmul.mubr.bf16.gmra.mxu0 %v1088
      %v1242 = vpop.f32.mrf.mxu0
      %v1243 = vadd.f32 0.0, %v1242
      %v1244 = vpop.f32.mrf.mxu0
      %v1245 = vpop.f32.mrf.mxu0
      %v1246 = vadd.f32 0.0, %v1245
      %v1247 = vpop.f32.mrf.mxu0
      %1248 = vmatprep.mubr.bf16.mxu0 0
      %1249 = vmatmul.mubr.bf16.gmra.mxu0 %v1091
      %v1250 = vpop.f32.mrf.mxu0
      %v1251 = vadd.f32 0.0, %v1250
      %v1252 = vpop.f32.mrf.mxu0
      %v1253 = vpop.f32.mrf.mxu0
      %v1254 = vadd.f32 0.0, %v1253
      %v1255 = vpop.f32.mrf.mxu0
      %1256 = vdwg.mxu0
      %v1257 = vadd.f32 %v962, %v1131
      %v1258 = vadd.f32 %v963, %v1134
      %v1259 = vadd.f32 %v964, %v1139
      %v1260 = vadd.f32 %v965, %v1142
      %v1261 = vadd.f32 %v966, %v1147
      %v1262 = vadd.f32 %v967, %v1150
      %v1263 = vadd.f32 %v968, %v1155
      %v1264 = vadd.f32 %v969, %v1158
      %v1265 = vadd.f32 %v970, %v1163
      %v1266 = vadd.f32 %v971, %v1166
      %v1267 = vadd.f32 %v972, %v1171
      %v1268 = vadd.f32 %v973, %v1174
      %v1269 = vadd.f32 %v974, %v1179
      %v1270 = vadd.f32 %v975, %v1182
      %v1271 = vadd.f32 %v976, %v1187
      %v1272 = vadd.f32 %v977, %v1190
      %v1273 = vadd.f32 %v978, %v1195
      %v1274 = vadd.f32 %v979, %v1198
      %v1275 = vadd.f32 %v980, %v1203
      %v1276 = vadd.f32 %v981, %v1206
      %v1277 = vadd.f32 %v982, %v1211
      %v1278 = vadd.f32 %v983, %v1214
      %v1279 = vadd.f32 %v984, %v1219
      %v1280 = vadd.f32 %v985, %v1222
      %v1281 = vadd.f32 %v986, %v1227
      %v1282 = vadd.f32 %v987, %v1230
      %v1283 = vadd.f32 %v988, %v1235
      %v1284 = vadd.f32 %v989, %v1238
      %v1285 = vadd.f32 %v990, %v1243
      %v1286 = vadd.f32 %v991, %v1246
      %v1287 = vadd.f32 %v992, %v1251
      %v1288 = vadd.f32 %v993, %v1254
      %v1289 = vld [vmem:[%s994 + $0x1] sm:$0xff]
      %v1290 = vld [vmem:[%s994 + $0x9] sm:$0xff]
      %v1291 = vld [vmem:[%s994 + $0x19] sm:$0xff]
      %v1292 = vld [vmem:[%s994 + $0x21] sm:$0xff]
      %v1293 = vld [vmem:[%s994 + $0x31] sm:$0xff]
      %v1294 = vld [vmem:[%s994 + $0x39] sm:$0xff]
      %v1295 = vld [vmem:[%s994 + $0x49] sm:$0xff]
      %v1296 = vld [vmem:[%s994 + $0x51] sm:$0xff]
      %v1297 = vld [vmem:[%s994 + $0x61] sm:$0xff]
      %v1298 = vld [vmem:[%s994 + $0x69] sm:$0xff]
      %v1299 = vld [vmem:[%s994 + $0x79] sm:$0xff]
      %v1300 = vld [vmem:[%s994 + $0x81] sm:$0xff]
      %v1301 = vld [vmem:[%s994 + $0x91] sm:$0xff]
      %v1302 = vld [vmem:[%s994 + $0x99] sm:$0xff]
      %v1303 = vld [vmem:[%s994 + $0xa9] sm:$0xff]
      %v1304 = vld [vmem:[%s994 + $0xb1] sm:$0xff]
      %v1305 = vld [vmem:[%s994 + $0xc1] sm:$0xff]
      %v1306 = vld [vmem:[%s994 + $0xc9] sm:$0xff]
      %v1307 = vld [vmem:[%s994 + $0xd9] sm:$0xff]
      %v1308 = vld [vmem:[%s994 + $0xe1] sm:$0xff]
      %v1309 = vld [vmem:[%s994 + $0xf1] sm:$0xff]
      %v1310 = vld [vmem:[%s994 + $0xf9] sm:$0xff]
      %v1311 = vld [vmem:[%s994 + $0x109] sm:$0xff]
      %v1312 = vld [vmem:[%s994 + $0x111] sm:$0xff]
      %v1313 = vld [vmem:[%s994 + $0x121] sm:$0xff]
      %v1314 = vld [vmem:[%s994 + $0x129] sm:$0xff]
      %v1315 = vld [vmem:[%s994 + $0x139] sm:$0xff]
      %v1316 = vld [vmem:[%s994 + $0x141] sm:$0xff]
      %v1317 = vld [vmem:[%s994 + $0x151] sm:$0xff]
      %v1318 = vld [vmem:[%s994 + $0x159] sm:$0xff]
      %v1319 = vld [vmem:[%s994 + $0x169] sm:$0xff]
      %v1320 = vld [vmem:[%s994 + $0x171] sm:$0xff]
      %v1321 = vpack.c.bf16 %v1290, %v1289
      %v1322 = vpack.c.bf16 %v1292, %v1291
      %v1323 = vpack.c.bf16 %v1294, %v1293
      %v1324 = vpack.c.bf16 %v1296, %v1295
      %v1325 = vpack.c.bf16 %v1298, %v1297
      %v1326 = vpack.c.bf16 %v1300, %v1299
      %v1327 = vpack.c.bf16 %v1302, %v1301
      %v1328 = vpack.c.bf16 %v1304, %v1303
      %v1329 = vpack.c.bf16 %v1306, %v1305
      %v1330 = vpack.c.bf16 %v1308, %v1307
      %v1331 = vpack.c.bf16 %v1310, %v1309
      %v1332 = vpack.c.bf16 %v1312, %v1311
      %v1333 = vpack.c.bf16 %v1314, %v1313
      %v1334 = vpack.c.bf16 %v1316, %v1315
      %v1335 = vpack.c.bf16 %v1318, %v1317
      %v1336 = vpack.c.bf16 %v1320, %v1319
      %s1337 = scalar_lea.vmem %s1, 8
      %v1338 = vld [vmem:[%s1337] sm:$0x3]
      %v1340 = vsel %vm271, %v1321, 0
      %v1343 = vsel %vm271, %v1322, 0
      %v1346 = vsel %vm271, %v1323, 0
      %v1349 = vsel %vm271, %v1324, 0
      %v1352 = vsel %vm271, %v1325, 0
      %v1355 = vsel %vm271, %v1326, 0
      %v1358 = vsel %vm271, %v1327, 0
      %v1361 = vsel %vm271, %v1328, 0
      %v1364 = vsel %vm271, %v1329, 0
      %v1367 = vsel %vm271, %v1330, 0
      %v1370 = vsel %vm271, %v1331, 0
      %v1373 = vsel %vm271, %v1332, 0
      %v1376 = vsel %vm271, %v1333, 0
      %v1379 = vsel %vm271, %v1334, 0
      %v1382 = vsel %vm271, %v1335, 0
      %v1385 = vsel %vm271, %v1336, 0
      %v1388 = vand.u32 %v1338, %v323
      %1390 = vmatprep.subr.bf16.mxu0 0
      %1391 = vmatpush1.bf16.msra.mxu0 0
      %1392 = vmatprep.subr.bf16.mxu0 0
      %1393 = vmatpush1.bf16.msra.mxu0 0
      %1394 = vmatprep.subr.bf16.mxu0 0
      %1395 = vmatpush1.bf16.msra.mxu0 0
      %1396 = vmatprep.subr.bf16.mxu0 0
      %1397 = vmatpush1.bf16.msra.mxu0 0
      %1398 = vmatprep.subr.bf16.mxu0 0
      %1399 = vmatpush1.bf16.msra.mxu0 0
      %1400 = vmatprep.subr.bf16.mxu0 0
      %1401 = vmatpush1.bf16.msra.mxu0 0
      %1402 = vmatprep.subr.bf16.mxu0 0
      %1403 = vmatpush1.bf16.msra.mxu0 0
      %1404 = vmatprep.subr.bf16.mxu0 0
      %1405 = vmatpush1.bf16.msra.mxu0 %v1388
      %1406 = vmatprep.subr.bf16.mxu0 0
      %1407 = vmatpush2.bf16.msra.mxu0 0
      %1408 = vmatprep.subr.bf16.mxu0 0
      %1409 = vmatpush2.bf16.msra.mxu0 0
      %1410 = vmatprep.subr.bf16.mxu0 0
      %1411 = vmatpush2.bf16.msra.mxu0 0
      %1412 = vmatprep.subr.bf16.mxu0 0
      %1413 = vmatpush2.bf16.msra.mxu0 0
      %1414 = vmatprep.subr.bf16.mxu0 0
      %1415 = vmatpush2.bf16.msra.mxu0 0
      %1416 = vmatprep.subr.bf16.mxu0 0
      %1417 = vmatpush2.bf16.msra.mxu0 0
      %1418 = vmatprep.subr.bf16.mxu0 0
      %1419 = vmatpush2.bf16.msra.mxu0 0
      %1420 = vmatprep.subr.bf16.mxu0 0
      %1421 = vmatpush2.bf16.msra.mxu0 0
      %1422 = vmatprep.mubr.bf16.mxu0 0
      %1423 = vmatmul.mubr.bf16.gmra.mxu0 %v1340
      %v1424 = vpop.f32.mrf.mxu0
      %v1425 = vadd.f32 0.0, %v1424
      %v1426 = vpop.f32.mrf.mxu0
      %v1427 = vpop.f32.mrf.mxu0
      %v1428 = vadd.f32 0.0, %v1427
      %v1429 = vpop.f32.mrf.mxu0
      %1430 = vmatprep.mubr.bf16.mxu0 0
      %1431 = vmatmul.mubr.bf16.gmra.mxu0 %v1343
      %v1432 = vpop.f32.mrf.mxu0
      %v1433 = vadd.f32 0.0, %v1432
      %v1434 = vpop.f32.mrf.mxu0
      %v1435 = vpop.f32.mrf.mxu0
      %v1436 = vadd.f32 0.0, %v1435
      %v1437 = vpop.f32.mrf.mxu0
      %1438 = vmatprep.mubr.bf16.mxu0 0
      %1439 = vmatmul.mubr.bf16.gmra.mxu0 %v1346
      %v1440 = vpop.f32.mrf.mxu0
      %v1441 = vadd.f32 0.0, %v1440
      %v1442 = vpop.f32.mrf.mxu0
      %v1443 = vpop.f32.mrf.mxu0
      %v1444 = vadd.f32 0.0, %v1443
      %v1445 = vpop.f32.mrf.mxu0
      %1446 = vmatprep.mubr.bf16.mxu0 0
      %1447 = vmatmul.mubr.bf16.gmra.mxu0 %v1349
      %v1448 = vpop.f32.mrf.mxu0
      %v1449 = vadd.f32 0.0, %v1448
      %v1450 = vpop.f32.mrf.mxu0
      %v1451 = vpop.f32.mrf.mxu0
      %v1452 = vadd.f32 0.0, %v1451
      %v1453 = vpop.f32.mrf.mxu0
      %1454 = vmatprep.mubr.bf16.mxu0 0
      %1455 = vmatmul.mubr.bf16.gmra.mxu0 %v1352
      %v1456 = vpop.f32.mrf.mxu0
      %v1457 = vadd.f32 0.0, %v1456
      %v1458 = vpop.f32.mrf.mxu0
      %v1459 = vpop.f32.mrf.mxu0
      %v1460 = vadd.f32 0.0, %v1459
      %v1461 = vpop.f32.mrf.mxu0
      %1462 = vmatprep.mubr.bf16.mxu0 0
      %1463 = vmatmul.mubr.bf16.gmra.mxu0 %v1355
      %v1464 = vpop.f32.mrf.mxu0
      %v1465 = vadd.f32 0.0, %v1464
      %v1466 = vpop.f32.mrf.mxu0
      %v1467 = vpop.f32.mrf.mxu0
      %v1468 = vadd.f32 0.0, %v1467
      %v1469 = vpop.f32.mrf.mxu0
      %1470 = vmatprep.mubr.bf16.mxu0 0
      %1471 = vmatmul.mubr.bf16.gmra.mxu0 %v1358
      %v1472 = vpop.f32.mrf.mxu0
      %v1473 = vadd.f32 0.0, %v1472
      %v1474 = vpop.f32.mrf.mxu0
      %v1475 = vpop.f32.mrf.mxu0
      %v1476 = vadd.f32 0.0, %v1475
      %v1477 = vpop.f32.mrf.mxu0
      %1478 = vmatprep.mubr.bf16.mxu0 0
      %1479 = vmatmul.mubr.bf16.gmra.mxu0 %v1361
      %v1480 = vpop.f32.mrf.mxu0
      %v1481 = vadd.f32 0.0, %v1480
      %v1482 = vpop.f32.mrf.mxu0
      %v1483 = vpop.f32.mrf.mxu0
      %v1484 = vadd.f32 0.0, %v1483
      %v1485 = vpop.f32.mrf.mxu0
      %1486 = vmatprep.mubr.bf16.mxu0 0
      %1487 = vmatmul.mubr.bf16.gmra.mxu0 %v1364
      %v1488 = vpop.f32.mrf.mxu0
      %v1489 = vadd.f32 0.0, %v1488
      %v1490 = vpop.f32.mrf.mxu0
      %v1491 = vpop.f32.mrf.mxu0
      %v1492 = vadd.f32 0.0, %v1491
      %v1493 = vpop.f32.mrf.mxu0
      %1494 = vmatprep.mubr.bf16.mxu0 0
      %1495 = vmatmul.mubr.bf16.gmra.mxu0 %v1367
      %v1496 = vpop.f32.mrf.mxu0
      %v1497 = vadd.f32 0.0, %v1496
      %v1498 = vpop.f32.mrf.mxu0
      %v1499 = vpop.f32.mrf.mxu0
      %v1500 = vadd.f32 0.0, %v1499
      %v1501 = vpop.f32.mrf.mxu0
      %1502 = vmatprep.mubr.bf16.mxu0 0
      %1503 = vmatmul.mubr.bf16.gmra.mxu0 %v1370
      %v1504 = vpop.f32.mrf.mxu0
      %v1505 = vadd.f32 0.0, %v1504
      %v1506 = vpop.f32.mrf.mxu0
      %v1507 = vpop.f32.mrf.mxu0
      %v1508 = vadd.f32 0.0, %v1507
      %v1509 = vpop.f32.mrf.mxu0
      %1510 = vmatprep.mubr.bf16.mxu0 0
      %1511 = vmatmul.mubr.bf16.gmra.mxu0 %v1373
      %v1512 = vpop.f32.mrf.mxu0
      %v1513 = vadd.f32 0.0, %v1512
      %v1514 = vpop.f32.mrf.mxu0
      %v1515 = vpop.f32.mrf.mxu0
      %v1516 = vadd.f32 0.0, %v1515
      %v1517 = vpop.f32.mrf.mxu0
      %1518 = vmatprep.mubr.bf16.mxu0 0
      %1519 = vmatmul.mubr.bf16.gmra.mxu0 %v1376
      %v1520 = vpop.f32.mrf.mxu0
      %v1521 = vadd.f32 0.0, %v1520
      %v1522 = vpop.f32.mrf.mxu0
      %v1523 = vpop.f32.mrf.mxu0
      %v1524 = vadd.f32 0.0, %v1523
      %v1525 = vpop.f32.mrf.mxu0
      %1526 = vmatprep.mubr.bf16.mxu0 0
      %1527 = vmatmul.mubr.bf16.gmra.mxu0 %v1379
      %v1528 = vpop.f32.mrf.mxu0
      %v1529 = vadd.f32 0.0, %v1528
      %v1530 = vpop.f32.mrf.mxu0
      %v1531 = vpop.f32.mrf.mxu0
      %v1532 = vadd.f32 0.0, %v1531
      %v1533 = vpop.f32.mrf.mxu0
      %1534 = vmatprep.mubr.bf16.mxu0 0
      %1535 = vmatmul.mubr.bf16.gmra.mxu0 %v1382
      %v1536 = vpop.f32.mrf.mxu0
      %v1537 = vadd.f32 0.0, %v1536
      %v1538 = vpop.f32.mrf.mxu0
      %v1539 = vpop.f32.mrf.mxu0
      %v1540 = vadd.f32 0.0, %v1539
      %v1541 = vpop.f32.mrf.mxu0
      %1542 = vmatprep.mubr.bf16.mxu0 0
      %1543 = vmatmul.mubr.bf16.gmra.mxu0 %v1385
      %v1544 = vpop.f32.mrf.mxu0
      %v1545 = vadd.f32 0.0, %v1544
      %v1546 = vpop.f32.mrf.mxu0
      %v1547 = vpop.f32.mrf.mxu0
      %v1548 = vadd.f32 0.0, %v1547
      %v1549 = vpop.f32.mrf.mxu0
      %1550 = vdwg.mxu0
      %v1551 = vadd.f32 %v1257, %v1425
      %v1552 = vadd.f32 %v1258, %v1428
      %v1553 = vadd.f32 %v1259, %v1433
      %v1554 = vadd.f32 %v1260, %v1436
      %v1555 = vadd.f32 %v1261, %v1441
      %v1556 = vadd.f32 %v1262, %v1444
      %v1557 = vadd.f32 %v1263, %v1449
      %v1558 = vadd.f32 %v1264, %v1452
      %v1559 = vadd.f32 %v1265, %v1457
      %v1560 = vadd.f32 %v1266, %v1460
      %v1561 = vadd.f32 %v1267, %v1465
      %v1562 = vadd.f32 %v1268, %v1468
      %v1563 = vadd.f32 %v1269, %v1473
      %v1564 = vadd.f32 %v1270, %v1476
      %v1565 = vadd.f32 %v1271, %v1481
      %v1566 = vadd.f32 %v1272, %v1484
      %v1567 = vadd.f32 %v1273, %v1489
      %v1568 = vadd.f32 %v1274, %v1492
      %v1569 = vadd.f32 %v1275, %v1497
      %v1570 = vadd.f32 %v1276, %v1500
      %v1571 = vadd.f32 %v1277, %v1505
      %v1572 = vadd.f32 %v1278, %v1508
      %v1573 = vadd.f32 %v1279, %v1513
      %v1574 = vadd.f32 %v1280, %v1516
      %v1575 = vadd.f32 %v1281, %v1521
      %v1576 = vadd.f32 %v1282, %v1524
      %v1577 = vadd.f32 %v1283, %v1529
      %v1578 = vadd.f32 %v1284, %v1532
      %v1579 = vadd.f32 %v1285, %v1537
      %v1580 = vadd.f32 %v1286, %v1540
      %v1581 = vadd.f32 %v1287, %v1545
      %v1582 = vadd.f32 %v1288, %v1548
      %v1583 = vld [vmem:[%s994 + $0x2] sm:$0xff]
      %v1584 = vld [vmem:[%s994 + $0xa] sm:$0xff]
      %v1585 = vld [vmem:[%s994 + $0x1a] sm:$0xff]
      %v1586 = vld [vmem:[%s994 + $0x22] sm:$0xff]
      %v1587 = vld [vmem:[%s994 + $0x32] sm:$0xff]
      %v1588 = vld [vmem:[%s994 + $0x3a] sm:$0xff]
      %v1589 = vld [vmem:[%s994 + $0x4a] sm:$0xff]
      %v1590 = vld [vmem:[%s994 + $0x52] sm:$0xff]
      %v1591 = vld [vmem:[%s994 + $0x62] sm:$0xff]
      %v1592 = vld [vmem:[%s994 + $0x6a] sm:$0xff]
      %v1593 = vld [vmem:[%s994 + $0x7a] sm:$0xff]
      %v1594 = vld [vmem:[%s994 + $0x82] sm:$0xff]
      %v1595 = vld [vmem:[%s994 + $0x92] sm:$0xff]
      %v1596 = vld [vmem:[%s994 + $0x9a] sm:$0xff]
      %v1597 = vld [vmem:[%s994 + $0xaa] sm:$0xff]
      %v1598 = vld [vmem:[%s994 + $0xb2] sm:$0xff]
      %v1599 = vld [vmem:[%s994 + $0xc2] sm:$0xff]
      %v1600 = vld [vmem:[%s994 + $0xca] sm:$0xff]
      %v1601 = vld [vmem:[%s994 + $0xda] sm:$0xff]
      %v1602 = vld [vmem:[%s994 + $0xe2] sm:$0xff]
      %v1603 = vld [vmem:[%s994 + $0xf2] sm:$0xff]
      %v1604 = vld [vmem:[%s994 + $0xfa] sm:$0xff]
      %v1605 = vld [vmem:[%s994 + $0x10a] sm:$0xff]
      %v1606 = vld [vmem:[%s994 + $0x112] sm:$0xff]
      %v1607 = vld [vmem:[%s994 + $0x122] sm:$0xff]
      %v1608 = vld [vmem:[%s994 + $0x12a] sm:$0xff]
      %v1609 = vld [vmem:[%s994 + $0x13a] sm:$0xff]
      %v1610 = vld [vmem:[%s994 + $0x142] sm:$0xff]
      %v1611 = vld [vmem:[%s994 + $0x152] sm:$0xff]
      %v1612 = vld [vmem:[%s994 + $0x15a] sm:$0xff]
      %v1613 = vld [vmem:[%s994 + $0x16a] sm:$0xff]
      %v1614 = vld [vmem:[%s994 + $0x172] sm:$0xff]
      %v1615 = vpack.c.bf16 %v1584, %v1583
      %v1616 = vpack.c.bf16 %v1586, %v1585
      %v1617 = vpack.c.bf16 %v1588, %v1587
      %v1618 = vpack.c.bf16 %v1590, %v1589
      %v1619 = vpack.c.bf16 %v1592, %v1591
      %v1620 = vpack.c.bf16 %v1594, %v1593
      %v1621 = vpack.c.bf16 %v1596, %v1595
      %v1622 = vpack.c.bf16 %v1598, %v1597
      %v1623 = vpack.c.bf16 %v1600, %v1599
      %v1624 = vpack.c.bf16 %v1602, %v1601
      %v1625 = vpack.c.bf16 %v1604, %v1603
      %v1626 = vpack.c.bf16 %v1606, %v1605
      %v1627 = vpack.c.bf16 %v1608, %v1607
      %v1628 = vpack.c.bf16 %v1610, %v1609
      %v1629 = vpack.c.bf16 %v1612, %v1611
      %v1630 = vpack.c.bf16 %v1614, %v1613
      %s1631 = scalar_lea.vmem %s1, 10
      %v1632 = vld [vmem:[%s1631] sm:$0x3]
      %v1634 = vsel %vm271, %v1615, 0
      %v1637 = vsel %vm271, %v1616, 0
      %v1640 = vsel %vm271, %v1617, 0
      %v1643 = vsel %vm271, %v1618, 0
      %v1646 = vsel %vm271, %v1619, 0
      %v1649 = vsel %vm271, %v1620, 0
      %v1652 = vsel %vm271, %v1621, 0
      %v1655 = vsel %vm271, %v1622, 0
      %v1658 = vsel %vm271, %v1623, 0
      %v1661 = vsel %vm271, %v1624, 0
      %v1664 = vsel %vm271, %v1625, 0
      %v1667 = vsel %vm271, %v1626, 0
      %v1670 = vsel %vm271, %v1627, 0
      %v1673 = vsel %vm271, %v1628, 0
      %v1676 = vsel %vm271, %v1629, 0
      %v1679 = vsel %vm271, %v1630, 0
      %v1682 = vand.u32 %v1632, %v323
      %1684 = vmatprep.subr.bf16.mxu0 0
      %1685 = vmatpush1.bf16.msra.mxu0 0
      %1686 = vmatprep.subr.bf16.mxu0 0
      %1687 = vmatpush1.bf16.msra.mxu0 0
      %1688 = vmatprep.subr.bf16.mxu0 0
      %1689 = vmatpush1.bf16.msra.mxu0 0
      %1690 = vmatprep.subr.bf16.mxu0 0
      %1691 = vmatpush1.bf16.msra.mxu0 0
      %1692 = vmatprep.subr.bf16.mxu0 0
      %1693 = vmatpush1.bf16.msra.mxu0 0
      %1694 = vmatprep.subr.bf16.mxu0 0
      %1695 = vmatpush1.bf16.msra.mxu0 0
      %1696 = vmatprep.subr.bf16.mxu0 0
      %1697 = vmatpush1.bf16.msra.mxu0 0
      %1698 = vmatprep.subr.bf16.mxu0 0
      %1699 = vmatpush1.bf16.msra.mxu0 %v1682
      %1700 = vmatprep.subr.bf16.mxu0 0
      %1701 = vmatpush2.bf16.msra.mxu0 0
      %1702 = vmatprep.subr.bf16.mxu0 0
      %1703 = vmatpush2.bf16.msra.mxu0 0
      %1704 = vmatprep.subr.bf16.mxu0 0
      %1705 = vmatpush2.bf16.msra.mxu0 0
      %1706 = vmatprep.subr.bf16.mxu0 0
      %1707 = vmatpush2.bf16.msra.mxu0 0
      %1708 = vmatprep.subr.bf16.mxu0 0
      %1709 = vmatpush2.bf16.msra.mxu0 0
      %1710 = vmatprep.subr.bf16.mxu0 0
      %1711 = vmatpush2.bf16.msra.mxu0 0
      %1712 = vmatprep.subr.bf16.mxu0 0
      %1713 = vmatpush2.bf16.msra.mxu0 0
      %1714 = vmatprep.subr.bf16.mxu0 0
      %1715 = vmatpush2.bf16.msra.mxu0 0
      %1716 = vmatprep.mubr.bf16.mxu0 0
      %1717 = vmatmul.mubr.bf16.gmra.mxu0 %v1634
      %v1718 = vpop.f32.mrf.mxu0
      %v1719 = vadd.f32 0.0, %v1718
      %v1720 = vpop.f32.mrf.mxu0
      %v1721 = vpop.f32.mrf.mxu0
      %v1722 = vadd.f32 0.0, %v1721
      %v1723 = vpop.f32.mrf.mxu0
      %1724 = vmatprep.mubr.bf16.mxu0 0
      %1725 = vmatmul.mubr.bf16.gmra.mxu0 %v1637
      %v1726 = vpop.f32.mrf.mxu0
      %v1727 = vadd.f32 0.0, %v1726
      %v1728 = vpop.f32.mrf.mxu0
      %v1729 = vpop.f32.mrf.mxu0
      %v1730 = vadd.f32 0.0, %v1729
      %v1731 = vpop.f32.mrf.mxu0
      %1732 = vmatprep.mubr.bf16.mxu0 0
      %1733 = vmatmul.mubr.bf16.gmra.mxu0 %v1640
      %v1734 = vpop.f32.mrf.mxu0
      %v1735 = vadd.f32 0.0, %v1734
      %v1736 = vpop.f32.mrf.mxu0
      %v1737 = vpop.f32.mrf.mxu0
      %v1738 = vadd.f32 0.0, %v1737
      %v1739 = vpop.f32.mrf.mxu0
      %1740 = vmatprep.mubr.bf16.mxu0 0
      %1741 = vmatmul.mubr.bf16.gmra.mxu0 %v1643
      %v1742 = vpop.f32.mrf.mxu0
      %v1743 = vadd.f32 0.0, %v1742
      %v1744 = vpop.f32.mrf.mxu0
      %v1745 = vpop.f32.mrf.mxu0
      %v1746 = vadd.f32 0.0, %v1745
      %v1747 = vpop.f32.mrf.mxu0
      %1748 = vmatprep.mubr.bf16.mxu0 0
      %1749 = vmatmul.mubr.bf16.gmra.mxu0 %v1646
      %v1750 = vpop.f32.mrf.mxu0
      %v1751 = vadd.f32 0.0, %v1750
      %v1752 = vpop.f32.mrf.mxu0
      %v1753 = vpop.f32.mrf.mxu0
      %v1754 = vadd.f32 0.0, %v1753
      %v1755 = vpop.f32.mrf.mxu0
      %1756 = vmatprep.mubr.bf16.mxu0 0
      %1757 = vmatmul.mubr.bf16.gmra.mxu0 %v1649
      %v1758 = vpop.f32.mrf.mxu0
      %v1759 = vadd.f32 0.0, %v1758
      %v1760 = vpop.f32.mrf.mxu0
      %v1761 = vpop.f32.mrf.mxu0
      %v1762 = vadd.f32 0.0, %v1761
      %v1763 = vpop.f32.mrf.mxu0
      %1764 = vmatprep.mubr.bf16.mxu0 0
      %1765 = vmatmul.mubr.bf16.gmra.mxu0 %v1652
      %v1766 = vpop.f32.mrf.mxu0
      %v1767 = vadd.f32 0.0, %v1766
      %v1768 = vpop.f32.mrf.mxu0
      %v1769 = vpop.f32.mrf.mxu0
      %v1770 = vadd.f32 0.0, %v1769
      %v1771 = vpop.f32.mrf.mxu0
      %1772 = vmatprep.mubr.bf16.mxu0 0
      %1773 = vmatmul.mubr.bf16.gmra.mxu0 %v1655
      %v1774 = vpop.f32.mrf.mxu0
      %v1775 = vadd.f32 0.0, %v1774
      %v1776 = vpop.f32.mrf.mxu0
      %v1777 = vpop.f32.mrf.mxu0
      %v1778 = vadd.f32 0.0, %v1777
      %v1779 = vpop.f32.mrf.mxu0
      %1780 = vmatprep.mubr.bf16.mxu0 0
      %1781 = vmatmul.mubr.bf16.gmra.mxu0 %v1658
      %v1782 = vpop.f32.mrf.mxu0
      %v1783 = vadd.f32 0.0, %v1782
      %v1784 = vpop.f32.mrf.mxu0
      %v1785 = vpop.f32.mrf.mxu0
      %v1786 = vadd.f32 0.0, %v1785
      %v1787 = vpop.f32.mrf.mxu0
      %1788 = vmatprep.mubr.bf16.mxu0 0
      %1789 = vmatmul.mubr.bf16.gmra.mxu0 %v1661
      %v1790 = vpop.f32.mrf.mxu0
      %v1791 = vadd.f32 0.0, %v1790
      %v1792 = vpop.f32.mrf.mxu0
      %v1793 = vpop.f32.mrf.mxu0
      %v1794 = vadd.f32 0.0, %v1793
      %v1795 = vpop.f32.mrf.mxu0
      %1796 = vmatprep.mubr.bf16.mxu0 0
      %1797 = vmatmul.mubr.bf16.gmra.mxu0 %v1664
      %v1798 = vpop.f32.mrf.mxu0
      %v1799 = vadd.f32 0.0, %v1798
      %v1800 = vpop.f32.mrf.mxu0
      %v1801 = vpop.f32.mrf.mxu0
      %v1802 = vadd.f32 0.0, %v1801
      %v1803 = vpop.f32.mrf.mxu0
      %1804 = vmatprep.mubr.bf16.mxu0 0
      %1805 = vmatmul.mubr.bf16.gmra.mxu0 %v1667
      %v1806 = vpop.f32.mrf.mxu0
      %v1807 = vadd.f32 0.0, %v1806
      %v1808 = vpop.f32.mrf.mxu0
      %v1809 = vpop.f32.mrf.mxu0
      %v1810 = vadd.f32 0.0, %v1809
      %v1811 = vpop.f32.mrf.mxu0
      %1812 = vmatprep.mubr.bf16.mxu0 0
      %1813 = vmatmul.mubr.bf16.gmra.mxu0 %v1670
      %v1814 = vpop.f32.mrf.mxu0
      %v1815 = vadd.f32 0.0, %v1814
      %v1816 = vpop.f32.mrf.mxu0
      %v1817 = vpop.f32.mrf.mxu0
      %v1818 = vadd.f32 0.0, %v1817
      %v1819 = vpop.f32.mrf.mxu0
      %1820 = vmatprep.mubr.bf16.mxu0 0
      %1821 = vmatmul.mubr.bf16.gmra.mxu0 %v1673
      %v1822 = vpop.f32.mrf.mxu0
      %v1823 = vadd.f32 0.0, %v1822
      %v1824 = vpop.f32.mrf.mxu0
      %v1825 = vpop.f32.mrf.mxu0
      %v1826 = vadd.f32 0.0, %v1825
      %v1827 = vpop.f32.mrf.mxu0
      %1828 = vmatprep.mubr.bf16.mxu0 0
      %1829 = vmatmul.mubr.bf16.gmra.mxu0 %v1676
      %v1830 = vpop.f32.mrf.mxu0
      %v1831 = vadd.f32 0.0, %v1830
      %v1832 = vpop.f32.mrf.mxu0
      %v1833 = vpop.f32.mrf.mxu0
      %v1834 = vadd.f32 0.0, %v1833
      %v1835 = vpop.f32.mrf.mxu0
      %1836 = vmatprep.mubr.bf16.mxu0 0
      %1837 = vmatmul.mubr.bf16.gmra.mxu0 %v1679
      %v1838 = vpop.f32.mrf.mxu0
      %v1839 = vadd.f32 0.0, %v1838
      %v1840 = vpop.f32.mrf.mxu0
      %v1841 = vpop.f32.mrf.mxu0
      %v1842 = vadd.f32 0.0, %v1841
      %v1843 = vpop.f32.mrf.mxu0
      %1844 = vdwg.mxu0
      %v1845 = vadd.f32 %v1551, %v1719
      %v1846 = vadd.f32 %v1552, %v1722
      %v1847 = vadd.f32 %v1553, %v1727
      %v1848 = vadd.f32 %v1554, %v1730
      %v1849 = vadd.f32 %v1555, %v1735
      %v1850 = vadd.f32 %v1556, %v1738
      %v1851 = vadd.f32 %v1557, %v1743
      %v1852 = vadd.f32 %v1558, %v1746
      %v1853 = vadd.f32 %v1559, %v1751
      %v1854 = vadd.f32 %v1560, %v1754
      %v1855 = vadd.f32 %v1561, %v1759
      %v1856 = vadd.f32 %v1562, %v1762
      %v1857 = vadd.f32 %v1563, %v1767
      %v1858 = vadd.f32 %v1564, %v1770
      %v1859 = vadd.f32 %v1565, %v1775
      %v1860 = vadd.f32 %v1566, %v1778
      %v1861 = vadd.f32 %v1567, %v1783
      %v1862 = vadd.f32 %v1568, %v1786
      %v1863 = vadd.f32 %v1569, %v1791
      %v1864 = vadd.f32 %v1570, %v1794
      %v1865 = vadd.f32 %v1571, %v1799
      %v1866 = vadd.f32 %v1572, %v1802
      %v1867 = vadd.f32 %v1573, %v1807
      %v1868 = vadd.f32 %v1574, %v1810
      %v1869 = vadd.f32 %v1575, %v1815
      %v1870 = vadd.f32 %v1576, %v1818
      %v1871 = vadd.f32 %v1577, %v1823
      %v1872 = vadd.f32 %v1578, %v1826
      %v1873 = vadd.f32 %v1579, %v1831
      %v1874 = vadd.f32 %v1580, %v1834
      %v1875 = vadd.f32 %v1581, %v1839
      %v1876 = vadd.f32 %v1582, %v1842
      %s1877 = scalar_lea.vmem %s165, 48
      %v1878 = vld [vmem:[%s1877] sm:$0xff]
      %v1879 = vld [vmem:[%s1877 + $0x8] sm:$0xff]
      %v1880 = vld [vmem:[%s1877 + $0x18] sm:$0xff]
      %v1881 = vld [vmem:[%s1877 + $0x20] sm:$0xff]
      %v1882 = vld [vmem:[%s1877 + $0x30] sm:$0xff]
      %v1883 = vld [vmem:[%s1877 + $0x38] sm:$0xff]
      %v1884 = vld [vmem:[%s1877 + $0x48] sm:$0xff]
      %v1885 = vld [vmem:[%s1877 + $0x50] sm:$0xff]
      %v1886 = vld [vmem:[%s1877 + $0x60] sm:$0xff]
      %v1887 = vld [vmem:[%s1877 + $0x68] sm:$0xff]
      %v1888 = vld [vmem:[%s1877 + $0x78] sm:$0xff]
      %v1889 = vld [vmem:[%s1877 + $0x80] sm:$0xff]
      %v1890 = vld [vmem:[%s1877 + $0x90] sm:$0xff]
      %v1891 = vld [vmem:[%s1877 + $0x98] sm:$0xff]
      %v1892 = vld [vmem:[%s1877 + $0xa8] sm:$0xff]
      %v1893 = vld [vmem:[%s1877 + $0xb0] sm:$0xff]
      %v1894 = vld [vmem:[%s1877 + $0xc0] sm:$0xff]
      %v1895 = vld [vmem:[%s1877 + $0xc8] sm:$0xff]
      %v1896 = vld [vmem:[%s1877 + $0xd8] sm:$0xff]
      %v1897 = vld [vmem:[%s1877 + $0xe0] sm:$0xff]
      %v1898 = vld [vmem:[%s1877 + $0xf0] sm:$0xff]
      %v1899 = vld [vmem:[%s1877 + $0xf8] sm:$0xff]
      %v1900 = vld [vmem:[%s1877 + $0x108] sm:$0xff]
      %v1901 = vld [vmem:[%s1877 + $0x110] sm:$0xff]
      %v1902 = vld [vmem:[%s1877 + $0x120] sm:$0xff]
      %v1903 = vld [vmem:[%s1877 + $0x128] sm:$0xff]
      %v1904 = vld [vmem:[%s1877 + $0x138] sm:$0xff]
      %v1905 = vld [vmem:[%s1877 + $0x140] sm:$0xff]
      %v1906 = vld [vmem:[%s1877 + $0x150] sm:$0xff]
      %v1907 = vld [vmem:[%s1877 + $0x158] sm:$0xff]
      %v1908 = vld [vmem:[%s1877 + $0x168] sm:$0xff]
      %v1909 = vld [vmem:[%s1877 + $0x170] sm:$0xff]
      %v1910 = vpack.c.bf16 %v1879, %v1878
      %v1911 = vpack.c.bf16 %v1881, %v1880
      %v1912 = vpack.c.bf16 %v1883, %v1882
      %v1913 = vpack.c.bf16 %v1885, %v1884
      %v1914 = vpack.c.bf16 %v1887, %v1886
      %v1915 = vpack.c.bf16 %v1889, %v1888
      %v1916 = vpack.c.bf16 %v1891, %v1890
      %v1917 = vpack.c.bf16 %v1893, %v1892
      %v1918 = vpack.c.bf16 %v1895, %v1894
      %v1919 = vpack.c.bf16 %v1897, %v1896
      %v1920 = vpack.c.bf16 %v1899, %v1898
      %v1921 = vpack.c.bf16 %v1901, %v1900
      %v1922 = vpack.c.bf16 %v1903, %v1902
      %v1923 = vpack.c.bf16 %v1905, %v1904
      %v1924 = vpack.c.bf16 %v1907, %v1906
      %v1925 = vpack.c.bf16 %v1909, %v1908
      %s1926 = scalar_lea.vmem %s1, 12
      %v1927 = vld [vmem:[%s1926] sm:$0x3]
      %v1929 = vsel %vm271, %v1910, 0
      %v1932 = vsel %vm271, %v1911, 0
      %v1935 = vsel %vm271, %v1912, 0
      %v1938 = vsel %vm271, %v1913, 0
      %v1941 = vsel %vm271, %v1914, 0
      %v1944 = vsel %vm271, %v1915, 0
      %v1947 = vsel %vm271, %v1916, 0
      %v1950 = vsel %vm271, %v1917, 0
      %v1953 = vsel %vm271, %v1918, 0
      %v1956 = vsel %vm271, %v1919, 0
      %v1959 = vsel %vm271, %v1920, 0
      %v1962 = vsel %vm271, %v1921, 0
      %v1965 = vsel %vm271, %v1922, 0
      %v1968 = vsel %vm271, %v1923, 0
      %v1971 = vsel %vm271, %v1924, 0
      %v1974 = vsel %vm271, %v1925, 0
      %v1977 = vand.u32 %v1927, %v323
      %1979 = vmatprep.subr.bf16.mxu0 0
      %1980 = vmatpush1.bf16.msra.mxu0 0
      %1981 = vmatprep.subr.bf16.mxu0 0
      %1982 = vmatpush1.bf16.msra.mxu0 0
      %1983 = vmatprep.subr.bf16.mxu0 0
      %1984 = vmatpush1.bf16.msra.mxu0 0
      %1985 = vmatprep.subr.bf16.mxu0 0
      %1986 = vmatpush1.bf16.msra.mxu0 0
      %1987 = vmatprep.subr.bf16.mxu0 0
      %1988 = vmatpush1.bf16.msra.mxu0 0
      %1989 = vmatprep.subr.bf16.mxu0 0
      %1990 = vmatpush1.bf16.msra.mxu0 0
      %1991 = vmatprep.subr.bf16.mxu0 0
      %1992 = vmatpush1.bf16.msra.mxu0 0
      %1993 = vmatprep.subr.bf16.mxu0 0
      %1994 = vmatpush1.bf16.msra.mxu0 %v1977
      %1995 = vmatprep.subr.bf16.mxu0 0
      %1996 = vmatpush2.bf16.msra.mxu0 0
      %1997 = vmatprep.subr.bf16.mxu0 0
      %1998 = vmatpush2.bf16.msra.mxu0 0
      %1999 = vmatprep.subr.bf16.mxu0 0
      %2000 = vmatpush2.bf16.msra.mxu0 0
      %2001 = vmatprep.subr.bf16.mxu0 0
      %2002 = vmatpush2.bf16.msra.mxu0 0
      %2003 = vmatprep.subr.bf16.mxu0 0
      %2004 = vmatpush2.bf16.msra.mxu0 0
      %2005 = vmatprep.subr.bf16.mxu0 0
      %2006 = vmatpush2.bf16.msra.mxu0 0
      %2007 = vmatprep.subr.bf16.mxu0 0
      %2008 = vmatpush2.bf16.msra.mxu0 0
      %2009 = vmatprep.subr.bf16.mxu0 0
      %2010 = vmatpush2.bf16.msra.mxu0 0
      %2011 = vmatprep.mubr.bf16.mxu0 0
      %2012 = vmatmul.mubr.bf16.gmra.mxu0 %v1929
      %v2013 = vpop.f32.mrf.mxu0
      %v2014 = vadd.f32 0.0, %v2013
      %v2015 = vpop.f32.mrf.mxu0
      %v2016 = vpop.f32.mrf.mxu0
      %v2017 = vadd.f32 0.0, %v2016
      %v2018 = vpop.f32.mrf.mxu0
      %2019 = vmatprep.mubr.bf16.mxu0 0
      %2020 = vmatmul.mubr.bf16.gmra.mxu0 %v1932
      %v2021 = vpop.f32.mrf.mxu0
      %v2022 = vadd.f32 0.0, %v2021
      %v2023 = vpop.f32.mrf.mxu0
      %v2024 = vpop.f32.mrf.mxu0
      %v2025 = vadd.f32 0.0, %v2024
      %v2026 = vpop.f32.mrf.mxu0
      %2027 = vmatprep.mubr.bf16.mxu0 0
      %2028 = vmatmul.mubr.bf16.gmra.mxu0 %v1935
      %v2029 = vpop.f32.mrf.mxu0
      %v2030 = vadd.f32 0.0, %v2029
      %v2031 = vpop.f32.mrf.mxu0
      %v2032 = vpop.f32.mrf.mxu0
      %v2033 = vadd.f32 0.0, %v2032
      %v2034 = vpop.f32.mrf.mxu0
      %2035 = vmatprep.mubr.bf16.mxu0 0
      %2036 = vmatmul.mubr.bf16.gmra.mxu0 %v1938
      %v2037 = vpop.f32.mrf.mxu0
      %v2038 = vadd.f32 0.0, %v2037
      %v2039 = vpop.f32.mrf.mxu0
      %v2040 = vpop.f32.mrf.mxu0
      %v2041 = vadd.f32 0.0, %v2040
      %v2042 = vpop.f32.mrf.mxu0
      %2043 = vmatprep.mubr.bf16.mxu0 0
      %2044 = vmatmul.mubr.bf16.gmra.mxu0 %v1941
      %v2045 = vpop.f32.mrf.mxu0
      %v2046 = vadd.f32 0.0, %v2045
      %v2047 = vpop.f32.mrf.mxu0
      %v2048 = vpop.f32.mrf.mxu0
      %v2049 = vadd.f32 0.0, %v2048
      %v2050 = vpop.f32.mrf.mxu0
      %2051 = vmatprep.mubr.bf16.mxu0 0
      %2052 = vmatmul.mubr.bf16.gmra.mxu0 %v1944
      %v2053 = vpop.f32.mrf.mxu0
      %v2054 = vadd.f32 0.0, %v2053
      %v2055 = vpop.f32.mrf.mxu0
      %v2056 = vpop.f32.mrf.mxu0
      %v2057 = vadd.f32 0.0, %v2056
      %v2058 = vpop.f32.mrf.mxu0
      %2059 = vmatprep.mubr.bf16.mxu0 0
      %2060 = vmatmul.mubr.bf16.gmra.mxu0 %v1947
      %v2061 = vpop.f32.mrf.mxu0
      %v2062 = vadd.f32 0.0, %v2061
      %v2063 = vpop.f32.mrf.mxu0
      %v2064 = vpop.f32.mrf.mxu0
      %v2065 = vadd.f32 0.0, %v2064
      %v2066 = vpop.f32.mrf.mxu0
      %2067 = vmatprep.mubr.bf16.mxu0 0
      %2068 = vmatmul.mubr.bf16.gmra.mxu0 %v1950
      %v2069 = vpop.f32.mrf.mxu0
      %v2070 = vadd.f32 0.0, %v2069
      %v2071 = vpop.f32.mrf.mxu0
      %v2072 = vpop.f32.mrf.mxu0
      %v2073 = vadd.f32 0.0, %v2072
      %v2074 = vpop.f32.mrf.mxu0
      %2075 = vmatprep.mubr.bf16.mxu0 0
      %2076 = vmatmul.mubr.bf16.gmra.mxu0 %v1953
      %v2077 = vpop.f32.mrf.mxu0
      %v2078 = vadd.f32 0.0, %v2077
      %v2079 = vpop.f32.mrf.mxu0
      %v2080 = vpop.f32.mrf.mxu0
      %v2081 = vadd.f32 0.0, %v2080
      %v2082 = vpop.f32.mrf.mxu0
      %2083 = vmatprep.mubr.bf16.mxu0 0
      %2084 = vmatmul.mubr.bf16.gmra.mxu0 %v1956
      %v2085 = vpop.f32.mrf.mxu0
      %v2086 = vadd.f32 0.0, %v2085
      %v2087 = vpop.f32.mrf.mxu0
      %v2088 = vpop.f32.mrf.mxu0
      %v2089 = vadd.f32 0.0, %v2088
      %v2090 = vpop.f32.mrf.mxu0
      %2091 = vmatprep.mubr.bf16.mxu0 0
      %2092 = vmatmul.mubr.bf16.gmra.mxu0 %v1959
      %v2093 = vpop.f32.mrf.mxu0
      %v2094 = vadd.f32 0.0, %v2093
      %v2095 = vpop.f32.mrf.mxu0
      %v2096 = vpop.f32.mrf.mxu0
      %v2097 = vadd.f32 0.0, %v2096
      %v2098 = vpop.f32.mrf.mxu0
      %2099 = vmatprep.mubr.bf16.mxu0 0
      %2100 = vmatmul.mubr.bf16.gmra.mxu0 %v1962
      %v2101 = vpop.f32.mrf.mxu0
      %v2102 = vadd.f32 0.0, %v2101
      %v2103 = vpop.f32.mrf.mxu0
      %v2104 = vpop.f32.mrf.mxu0
      %v2105 = vadd.f32 0.0, %v2104
      %v2106 = vpop.f32.mrf.mxu0
      %2107 = vmatprep.mubr.bf16.mxu0 0
      %2108 = vmatmul.mubr.bf16.gmra.mxu0 %v1965
      %v2109 = vpop.f32.mrf.mxu0
      %v2110 = vadd.f32 0.0, %v2109
      %v2111 = vpop.f32.mrf.mxu0
      %v2112 = vpop.f32.mrf.mxu0
      %v2113 = vadd.f32 0.0, %v2112
      %v2114 = vpop.f32.mrf.mxu0
      %2115 = vmatprep.mubr.bf16.mxu0 0
      %2116 = vmatmul.mubr.bf16.gmra.mxu0 %v1968
      %v2117 = vpop.f32.mrf.mxu0
      %v2118 = vadd.f32 0.0, %v2117
      %v2119 = vpop.f32.mrf.mxu0
      %v2120 = vpop.f32.mrf.mxu0
      %v2121 = vadd.f32 0.0, %v2120
      %v2122 = vpop.f32.mrf.mxu0
      %2123 = vmatprep.mubr.bf16.mxu0 0
      %2124 = vmatmul.mubr.bf16.gmra.mxu0 %v1971
      %v2125 = vpop.f32.mrf.mxu0
      %v2126 = vadd.f32 0.0, %v2125
      %v2127 = vpop.f32.mrf.mxu0
      %v2128 = vpop.f32.mrf.mxu0
      %v2129 = vadd.f32 0.0, %v2128
      %v2130 = vpop.f32.mrf.mxu0
      %2131 = vmatprep.mubr.bf16.mxu0 0
      %2132 = vmatmul.mubr.bf16.gmra.mxu0 %v1974
      %v2133 = vpop.f32.mrf.mxu0
      %v2134 = vadd.f32 0.0, %v2133
      %v2135 = vpop.f32.mrf.mxu0
      %v2136 = vpop.f32.mrf.mxu0
      %v2137 = vadd.f32 0.0, %v2136
      %v2138 = vpop.f32.mrf.mxu0
      %2139 = vdwg.mxu0
      %v2140 = vadd.f32 %v1845, %v2014
      %v2141 = vadd.f32 %v1846, %v2017
      %v2142 = vadd.f32 %v1847, %v2022
      %v2143 = vadd.f32 %v1848, %v2025
      %v2144 = vadd.f32 %v1849, %v2030
      %v2145 = vadd.f32 %v1850, %v2033
      %v2146 = vadd.f32 %v1851, %v2038
      %v2147 = vadd.f32 %v1852, %v2041
      %v2148 = vadd.f32 %v1853, %v2046
      %v2149 = vadd.f32 %v1854, %v2049
      %v2150 = vadd.f32 %v1855, %v2054
      %v2151 = vadd.f32 %v1856, %v2057
      %v2152 = vadd.f32 %v1857, %v2062
      %v2153 = vadd.f32 %v1858, %v2065
      %v2154 = vadd.f32 %v1859, %v2070
      %v2155 = vadd.f32 %v1860, %v2073
      %v2156 = vadd.f32 %v1861, %v2078
      %v2157 = vadd.f32 %v1862, %v2081
      %v2158 = vadd.f32 %v1863, %v2086
      %v2159 = vadd.f32 %v1864, %v2089
      %v2160 = vadd.f32 %v1865, %v2094
      %v2161 = vadd.f32 %v1866, %v2097
      %v2162 = vadd.f32 %v1867, %v2102
      %v2163 = vadd.f32 %v1868, %v2105
      %v2164 = vadd.f32 %v1869, %v2110
      %v2165 = vadd.f32 %v1870, %v2113
      %v2166 = vadd.f32 %v1871, %v2118
      %v2167 = vadd.f32 %v1872, %v2121
      %v2168 = vadd.f32 %v1873, %v2126
      %v2169 = vadd.f32 %v1874, %v2129
      %v2170 = vadd.f32 %v1875, %v2134
      %v2171 = vadd.f32 %v1876, %v2137
      %v2172 = vld [vmem:[%s1877 + $0x1] sm:$0xff]
      %v2173 = vld [vmem:[%s1877 + $0x9] sm:$0xff]
      %v2174 = vld [vmem:[%s1877 + $0x19] sm:$0xff]
      %v2175 = vld [vmem:[%s1877 + $0x21] sm:$0xff]
      %v2176 = vld [vmem:[%s1877 + $0x31] sm:$0xff]
      %v2177 = vld [vmem:[%s1877 + $0x39] sm:$0xff]
      %v2178 = vld [vmem:[%s1877 + $0x49] sm:$0xff]
      %v2179 = vld [vmem:[%s1877 + $0x51] sm:$0xff]
      %v2180 = vld [vmem:[%s1877 + $0x61] sm:$0xff]
      %v2181 = vld [vmem:[%s1877 + $0x69] sm:$0xff]
      %v2182 = vld [vmem:[%s1877 + $0x79] sm:$0xff]
      %v2183 = vld [vmem:[%s1877 + $0x81] sm:$0xff]
      %v2184 = vld [vmem:[%s1877 + $0x91] sm:$0xff]
      %v2185 = vld [vmem:[%s1877 + $0x99] sm:$0xff]
      %v2186 = vld [vmem:[%s1877 + $0xa9] sm:$0xff]
      %v2187 = vld [vmem:[%s1877 + $0xb1] sm:$0xff]
      %v2188 = vld [vmem:[%s1877 + $0xc1] sm:$0xff]
      %v2189 = vld [vmem:[%s1877 + $0xc9] sm:$0xff]
      %v2190 = vld [vmem:[%s1877 + $0xd9] sm:$0xff]
      %v2191 = vld [vmem:[%s1877 + $0xe1] sm:$0xff]
      %v2192 = vld [vmem:[%s1877 + $0xf1] sm:$0xff]
      %v2193 = vld [vmem:[%s1877 + $0xf9] sm:$0xff]
      %v2194 = vld [vmem:[%s1877 + $0x109] sm:$0xff]
      %v2195 = vld [vmem:[%s1877 + $0x111] sm:$0xff]
      %v2196 = vld [vmem:[%s1877 + $0x121] sm:$0xff]
      %v2197 = vld [vmem:[%s1877 + $0x129] sm:$0xff]
      %v2198 = vld [vmem:[%s1877 + $0x139] sm:$0xff]
      %v2199 = vld [vmem:[%s1877 + $0x141] sm:$0xff]
      %v2200 = vld [vmem:[%s1877 + $0x151] sm:$0xff]
      %v2201 = vld [vmem:[%s1877 + $0x159] sm:$0xff]
      %v2202 = vld [vmem:[%s1877 + $0x169] sm:$0xff]
      %v2203 = vld [vmem:[%s1877 + $0x171] sm:$0xff]
      %v2204 = vpack.c.bf16 %v2173, %v2172
      %v2205 = vpack.c.bf16 %v2175, %v2174
      %v2206 = vpack.c.bf16 %v2177, %v2176
      %v2207 = vpack.c.bf16 %v2179, %v2178
      %v2208 = vpack.c.bf16 %v2181, %v2180
      %v2209 = vpack.c.bf16 %v2183, %v2182
      %v2210 = vpack.c.bf16 %v2185, %v2184
      %v2211 = vpack.c.bf16 %v2187, %v2186
      %v2212 = vpack.c.bf16 %v2189, %v2188
      %v2213 = vpack.c.bf16 %v2191, %v2190
      %v2214 = vpack.c.bf16 %v2193, %v2192
      %v2215 = vpack.c.bf16 %v2195, %v2194
      %v2216 = vpack.c.bf16 %v2197, %v2196
      %v2217 = vpack.c.bf16 %v2199, %v2198
      %v2218 = vpack.c.bf16 %v2201, %v2200
      %v2219 = vpack.c.bf16 %v2203, %v2202
      %s2220 = scalar_lea.vmem %s1, 14
      %v2221 = vld [vmem:[%s2220] sm:$0x3]
      %v2223 = vsel %vm271, %v2204, 0
      %v2226 = vsel %vm271, %v2205, 0
      %v2229 = vsel %vm271, %v2206, 0
      %v2232 = vsel %vm271, %v2207, 0
      %v2235 = vsel %vm271, %v2208, 0
      %v2238 = vsel %vm271, %v2209, 0
      %v2241 = vsel %vm271, %v2210, 0
      %v2244 = vsel %vm271, %v2211, 0
      %v2247 = vsel %vm271, %v2212, 0
      %v2250 = vsel %vm271, %v2213, 0
      %v2253 = vsel %vm271, %v2214, 0
      %v2256 = vsel %vm271, %v2215, 0
      %v2259 = vsel %vm271, %v2216, 0
      %v2262 = vsel %vm271, %v2217, 0
      %v2265 = vsel %vm271, %v2218, 0
      %v2268 = vsel %vm271, %v2219, 0
      %v2271 = vand.u32 %v2221, %v323
      %2273 = vmatprep.subr.bf16.mxu0 0
      %2274 = vmatpush1.bf16.msra.mxu0 0
      %2275 = vmatprep.subr.bf16.mxu0 0
      %2276 = vmatpush1.bf16.msra.mxu0 0
      %2277 = vmatprep.subr.bf16.mxu0 0
      %2278 = vmatpush1.bf16.msra.mxu0 0
      %2279 = vmatprep.subr.bf16.mxu0 0
      %2280 = vmatpush1.bf16.msra.mxu0 0
      %2281 = vmatprep.subr.bf16.mxu0 0
      %2282 = vmatpush1.bf16.msra.mxu0 0
      %2283 = vmatprep.subr.bf16.mxu0 0
      %2284 = vmatpush1.bf16.msra.mxu0 0
      %2285 = vmatprep.subr.bf16.mxu0 0
      %2286 = vmatpush1.bf16.msra.mxu0 0
      %2287 = vmatprep.subr.bf16.mxu0 0
      %2288 = vmatpush1.bf16.msra.mxu0 %v2271
      %2289 = vmatprep.subr.bf16.mxu0 0
      %2290 = vmatpush2.bf16.msra.mxu0 0
      %2291 = vmatprep.subr.bf16.mxu0 0
      %2292 = vmatpush2.bf16.msra.mxu0 0
      %2293 = vmatprep.subr.bf16.mxu0 0
      %2294 = vmatpush2.bf16.msra.mxu0 0
      %2295 = vmatprep.subr.bf16.mxu0 0
      %2296 = vmatpush2.bf16.msra.mxu0 0
      %2297 = vmatprep.subr.bf16.mxu0 0
      %2298 = vmatpush2.bf16.msra.mxu0 0
      %2299 = vmatprep.subr.bf16.mxu0 0
      %2300 = vmatpush2.bf16.msra.mxu0 0
      %2301 = vmatprep.subr.bf16.mxu0 0
      %2302 = vmatpush2.bf16.msra.mxu0 0
      %2303 = vmatprep.subr.bf16.mxu0 0
      %2304 = vmatpush2.bf16.msra.mxu0 0
      %2305 = vmatprep.mubr.bf16.mxu0 0
      %2306 = vmatmul.mubr.bf16.gmra.mxu0 %v2223
      %v2307 = vpop.f32.mrf.mxu0
      %v2308 = vadd.f32 0.0, %v2307
      %v2309 = vpop.f32.mrf.mxu0
      %v2310 = vpop.f32.mrf.mxu0
      %v2311 = vadd.f32 0.0, %v2310
      %v2312 = vpop.f32.mrf.mxu0
      %2313 = vmatprep.mubr.bf16.mxu0 0
      %2314 = vmatmul.mubr.bf16.gmra.mxu0 %v2226
      %v2315 = vpop.f32.mrf.mxu0
      %v2316 = vadd.f32 0.0, %v2315
      %v2317 = vpop.f32.mrf.mxu0
      %v2318 = vpop.f32.mrf.mxu0
      %v2319 = vadd.f32 0.0, %v2318
      %v2320 = vpop.f32.mrf.mxu0
      %2321 = vmatprep.mubr.bf16.mxu0 0
      %2322 = vmatmul.mubr.bf16.gmra.mxu0 %v2229
      %v2323 = vpop.f32.mrf.mxu0
      %v2324 = vadd.f32 0.0, %v2323
      %v2325 = vpop.f32.mrf.mxu0
      %v2326 = vpop.f32.mrf.mxu0
      %v2327 = vadd.f32 0.0, %v2326
      %v2328 = vpop.f32.mrf.mxu0
      %2329 = vmatprep.mubr.bf16.mxu0 0
      %2330 = vmatmul.mubr.bf16.gmra.mxu0 %v2232
      %v2331 = vpop.f32.mrf.mxu0
      %v2332 = vadd.f32 0.0, %v2331
      %v2333 = vpop.f32.mrf.mxu0
      %v2334 = vpop.f32.mrf.mxu0
      %v2335 = vadd.f32 0.0, %v2334
      %v2336 = vpop.f32.mrf.mxu0
      %2337 = vmatprep.mubr.bf16.mxu0 0
      %2338 = vmatmul.mubr.bf16.gmra.mxu0 %v2235
      %v2339 = vpop.f32.mrf.mxu0
      %v2340 = vadd.f32 0.0, %v2339
      %v2341 = vpop.f32.mrf.mxu0
      %v2342 = vpop.f32.mrf.mxu0
      %v2343 = vadd.f32 0.0, %v2342
      %v2344 = vpop.f32.mrf.mxu0
      %2345 = vmatprep.mubr.bf16.mxu0 0
      %2346 = vmatmul.mubr.bf16.gmra.mxu0 %v2238
      %v2347 = vpop.f32.mrf.mxu0
      %v2348 = vadd.f32 0.0, %v2347
      %v2349 = vpop.f32.mrf.mxu0
      %v2350 = vpop.f32.mrf.mxu0
      %v2351 = vadd.f32 0.0, %v2350
      %v2352 = vpop.f32.mrf.mxu0
      %2353 = vmatprep.mubr.bf16.mxu0 0
      %2354 = vmatmul.mubr.bf16.gmra.mxu0 %v2241
      %v2355 = vpop.f32.mrf.mxu0
      %v2356 = vadd.f32 0.0, %v2355
      %v2357 = vpop.f32.mrf.mxu0
      %v2358 = vpop.f32.mrf.mxu0
      %v2359 = vadd.f32 0.0, %v2358
      %v2360 = vpop.f32.mrf.mxu0
      %2361 = vmatprep.mubr.bf16.mxu0 0
      %2362 = vmatmul.mubr.bf16.gmra.mxu0 %v2244
      %v2363 = vpop.f32.mrf.mxu0
      %v2364 = vadd.f32 0.0, %v2363
      %v2365 = vpop.f32.mrf.mxu0
      %v2366 = vpop.f32.mrf.mxu0
      %v2367 = vadd.f32 0.0, %v2366
      %v2368 = vpop.f32.mrf.mxu0
      %2369 = vmatprep.mubr.bf16.mxu0 0
      %2370 = vmatmul.mubr.bf16.gmra.mxu0 %v2247
      %v2371 = vpop.f32.mrf.mxu0
      %v2372 = vadd.f32 0.0, %v2371
      %v2373 = vpop.f32.mrf.mxu0
      %v2374 = vpop.f32.mrf.mxu0
      %v2375 = vadd.f32 0.0, %v2374
      %v2376 = vpop.f32.mrf.mxu0
      %2377 = vmatprep.mubr.bf16.mxu0 0
      %2378 = vmatmul.mubr.bf16.gmra.mxu0 %v2250
      %v2379 = vpop.f32.mrf.mxu0
      %v2380 = vadd.f32 0.0, %v2379
      %v2381 = vpop.f32.mrf.mxu0
      %v2382 = vpop.f32.mrf.mxu0
      %v2383 = vadd.f32 0.0, %v2382
      %v2384 = vpop.f32.mrf.mxu0
      %2385 = vmatprep.mubr.bf16.mxu0 0
      %2386 = vmatmul.mubr.bf16.gmra.mxu0 %v2253
      %v2387 = vpop.f32.mrf.mxu0
      %v2388 = vadd.f32 0.0, %v2387
      %v2389 = vpop.f32.mrf.mxu0
      %v2390 = vpop.f32.mrf.mxu0
      %v2391 = vadd.f32 0.0, %v2390
      %v2392 = vpop.f32.mrf.mxu0
      %2393 = vmatprep.mubr.bf16.mxu0 0
      %2394 = vmatmul.mubr.bf16.gmra.mxu0 %v2256
      %v2395 = vpop.f32.mrf.mxu0
      %v2396 = vadd.f32 0.0, %v2395
      %v2397 = vpop.f32.mrf.mxu0
      %v2398 = vpop.f32.mrf.mxu0
      %v2399 = vadd.f32 0.0, %v2398
      %v2400 = vpop.f32.mrf.mxu0
      %2401 = vmatprep.mubr.bf16.mxu0 0
      %2402 = vmatmul.mubr.bf16.gmra.mxu0 %v2259
      %v2403 = vpop.f32.mrf.mxu0
      %v2404 = vadd.f32 0.0, %v2403
      %v2405 = vpop.f32.mrf.mxu0
      %v2406 = vpop.f32.mrf.mxu0
      %v2407 = vadd.f32 0.0, %v2406
      %v2408 = vpop.f32.mrf.mxu0
      %2409 = vmatprep.mubr.bf16.mxu0 0
      %2410 = vmatmul.mubr.bf16.gmra.mxu0 %v2262
      %v2411 = vpop.f32.mrf.mxu0
      %v2412 = vadd.f32 0.0, %v2411
      %v2413 = vpop.f32.mrf.mxu0
      %v2414 = vpop.f32.mrf.mxu0
      %v2415 = vadd.f32 0.0, %v2414
      %v2416 = vpop.f32.mrf.mxu0
      %2417 = vmatprep.mubr.bf16.mxu0 0
      %2418 = vmatmul.mubr.bf16.gmra.mxu0 %v2265
      %v2419 = vpop.f32.mrf.mxu0
      %v2420 = vadd.f32 0.0, %v2419
      %v2421 = vpop.f32.mrf.mxu0
      %v2422 = vpop.f32.mrf.mxu0
      %v2423 = vadd.f32 0.0, %v2422
      %v2424 = vpop.f32.mrf.mxu0
      %2425 = vmatprep.mubr.bf16.mxu0 0
      %2426 = vmatmul.mubr.bf16.gmra.mxu0 %v2268
      %v2427 = vpop.f32.mrf.mxu0
      %v2428 = vadd.f32 0.0, %v2427
      %v2429 = vpop.f32.mrf.mxu0
      %v2430 = vpop.f32.mrf.mxu0
      %v2431 = vadd.f32 0.0, %v2430
      %v2432 = vpop.f32.mrf.mxu0
      %2433 = vdwg.mxu0
      %v2434 = vadd.f32 %v2140, %v2308
      %v2435 = vadd.f32 %v2141, %v2311
      %v2436 = vadd.f32 %v2142, %v2316
      %v2437 = vadd.f32 %v2143, %v2319
      %v2438 = vadd.f32 %v2144, %v2324
      %v2439 = vadd.f32 %v2145, %v2327
      %v2440 = vadd.f32 %v2146, %v2332
      %v2441 = vadd.f32 %v2147, %v2335
      %v2442 = vadd.f32 %v2148, %v2340
      %v2443 = vadd.f32 %v2149, %v2343
      %v2444 = vadd.f32 %v2150, %v2348
      %v2445 = vadd.f32 %v2151, %v2351
      %v2446 = vadd.f32 %v2152, %v2356
      %v2447 = vadd.f32 %v2153, %v2359
      %v2448 = vadd.f32 %v2154, %v2364
      %v2449 = vadd.f32 %v2155, %v2367
      %v2450 = vadd.f32 %v2156, %v2372
      %v2451 = vadd.f32 %v2157, %v2375
      %v2452 = vadd.f32 %v2158, %v2380
      %v2453 = vadd.f32 %v2159, %v2383
      %v2454 = vadd.f32 %v2160, %v2388
      %v2455 = vadd.f32 %v2161, %v2391
      %v2456 = vadd.f32 %v2162, %v2396
      %v2457 = vadd.f32 %v2163, %v2399
      %v2458 = vadd.f32 %v2164, %v2404
      %v2459 = vadd.f32 %v2165, %v2407
      %v2460 = vadd.f32 %v2166, %v2412
      %v2461 = vadd.f32 %v2167, %v2415
      %v2462 = vadd.f32 %v2168, %v2420
      %v2463 = vadd.f32 %v2169, %v2423
      %v2464 = vadd.f32 %v2170, %v2428
      %v2465 = vadd.f32 %v2171, %v2431
      %v2466 = vld [vmem:[%s1877 + $0x2] sm:$0xff]
      %v2467 = vld [vmem:[%s1877 + $0xa] sm:$0xff]
      %v2468 = vld [vmem:[%s1877 + $0x1a] sm:$0xff]
      %v2469 = vld [vmem:[%s1877 + $0x22] sm:$0xff]
      %v2470 = vld [vmem:[%s1877 + $0x32] sm:$0xff]
      %v2471 = vld [vmem:[%s1877 + $0x3a] sm:$0xff]
      %v2472 = vld [vmem:[%s1877 + $0x4a] sm:$0xff]
      %v2473 = vld [vmem:[%s1877 + $0x52] sm:$0xff]
      %v2474 = vld [vmem:[%s1877 + $0x62] sm:$0xff]
      %v2475 = vld [vmem:[%s1877 + $0x6a] sm:$0xff]
      %v2476 = vld [vmem:[%s1877 + $0x7a] sm:$0xff]
      %v2477 = vld [vmem:[%s1877 + $0x82] sm:$0xff]
      %v2478 = vld [vmem:[%s1877 + $0x92] sm:$0xff]
      %v2479 = vld [vmem:[%s1877 + $0x9a] sm:$0xff]
      %v2480 = vld [vmem:[%s1877 + $0xaa] sm:$0xff]
      %v2481 = vld [vmem:[%s1877 + $0xb2] sm:$0xff]
      %v2482 = vld [vmem:[%s1877 + $0xc2] sm:$0xff]
      %v2483 = vld [vmem:[%s1877 + $0xca] sm:$0xff]
      %v2484 = vld [vmem:[%s1877 + $0xda] sm:$0xff]
      %v2485 = vld [vmem:[%s1877 + $0xe2] sm:$0xff]
      %v2486 = vld [vmem:[%s1877 + $0xf2] sm:$0xff]
      %v2487 = vld [vmem:[%s1877 + $0xfa] sm:$0xff]
      %v2488 = vld [vmem:[%s1877 + $0x10a] sm:$0xff]
      %v2489 = vld [vmem:[%s1877 + $0x112] sm:$0xff]
      %v2490 = vld [vmem:[%s1877 + $0x122] sm:$0xff]
      %v2491 = vld [vmem:[%s1877 + $0x12a] sm:$0xff]
      %v2492 = vld [vmem:[%s1877 + $0x13a] sm:$0xff]
      %v2493 = vld [vmem:[%s1877 + $0x142] sm:$0xff]
      %v2494 = vld [vmem:[%s1877 + $0x152] sm:$0xff]
      %v2495 = vld [vmem:[%s1877 + $0x15a] sm:$0xff]
      %v2496 = vld [vmem:[%s1877 + $0x16a] sm:$0xff]
      %v2497 = vld [vmem:[%s1877 + $0x172] sm:$0xff]
      %v2498 = vpack.c.bf16 %v2467, %v2466
      %v2499 = vpack.c.bf16 %v2469, %v2468
      %v2500 = vpack.c.bf16 %v2471, %v2470
      %v2501 = vpack.c.bf16 %v2473, %v2472
      %v2502 = vpack.c.bf16 %v2475, %v2474
      %v2503 = vpack.c.bf16 %v2477, %v2476
      %v2504 = vpack.c.bf16 %v2479, %v2478
      %v2505 = vpack.c.bf16 %v2481, %v2480
      %v2506 = vpack.c.bf16 %v2483, %v2482
      %v2507 = vpack.c.bf16 %v2485, %v2484
      %v2508 = vpack.c.bf16 %v2487, %v2486
      %v2509 = vpack.c.bf16 %v2489, %v2488
      %v2510 = vpack.c.bf16 %v2491, %v2490
      %v2511 = vpack.c.bf16 %v2493, %v2492
      %v2512 = vpack.c.bf16 %v2495, %v2494
      %v2513 = vpack.c.bf16 %v2497, %v2496
      %s2514 = scalar_lea.vmem %s1, 16
      %v2515 = vld [vmem:[%s2514] sm:$0x3]
      %v2517 = vsel %vm271, %v2498, 0
      %v2520 = vsel %vm271, %v2499, 0
      %v2523 = vsel %vm271, %v2500, 0
      %v2526 = vsel %vm271, %v2501, 0
      %v2529 = vsel %vm271, %v2502, 0
      %v2532 = vsel %vm271, %v2503, 0
      %v2535 = vsel %vm271, %v2504, 0
      %v2538 = vsel %vm271, %v2505, 0
      %v2541 = vsel %vm271, %v2506, 0
      %v2544 = vsel %vm271, %v2507, 0
      %v2547 = vsel %vm271, %v2508, 0
      %v2550 = vsel %vm271, %v2509, 0
      %v2553 = vsel %vm271, %v2510, 0
      %v2556 = vsel %vm271, %v2511, 0
      %v2559 = vsel %vm271, %v2512, 0
      %v2562 = vsel %vm271, %v2513, 0
      %v2565 = vand.u32 %v2515, %v323
      %2567 = vmatprep.subr.bf16.mxu0 0
      %2568 = vmatpush1.bf16.msra.mxu0 0
      %2569 = vmatprep.subr.bf16.mxu0 0
      %2570 = vmatpush1.bf16.msra.mxu0 0
      %2571 = vmatprep.subr.bf16.mxu0 0
      %2572 = vmatpush1.bf16.msra.mxu0 0
      %2573 = vmatprep.subr.bf16.mxu0 0
      %2574 = vmatpush1.bf16.msra.mxu0 0
      %2575 = vmatprep.subr.bf16.mxu0 0
      %2576 = vmatpush1.bf16.msra.mxu0 0
      %2577 = vmatprep.subr.bf16.mxu0 0
      %2578 = vmatpush1.bf16.msra.mxu0 0
      %2579 = vmatprep.subr.bf16.mxu0 0
      %2580 = vmatpush1.bf16.msra.mxu0 0
      %2581 = vmatprep.subr.bf16.mxu0 0
      %2582 = vmatpush1.bf16.msra.mxu0 %v2565
      %2583 = vmatprep.subr.bf16.mxu0 0
      %2584 = vmatpush2.bf16.msra.mxu0 0
      %2585 = vmatprep.subr.bf16.mxu0 0
      %2586 = vmatpush2.bf16.msra.mxu0 0
      %2587 = vmatprep.subr.bf16.mxu0 0
      %2588 = vmatpush2.bf16.msra.mxu0 0
      %2589 = vmatprep.subr.bf16.mxu0 0
      %2590 = vmatpush2.bf16.msra.mxu0 0
      %2591 = vmatprep.subr.bf16.mxu0 0
      %2592 = vmatpush2.bf16.msra.mxu0 0
      %2593 = vmatprep.subr.bf16.mxu0 0
      %2594 = vmatpush2.bf16.msra.mxu0 0
      %2595 = vmatprep.subr.bf16.mxu0 0
      %2596 = vmatpush2.bf16.msra.mxu0 0
      %2597 = vmatprep.subr.bf16.mxu0 0
      %2598 = vmatpush2.bf16.msra.mxu0 0
      %2599 = vmatprep.mubr.bf16.mxu0 0
      %2600 = vmatmul.mubr.bf16.gmra.mxu0 %v2517
      %v2601 = vpop.f32.mrf.mxu0
      %v2602 = vadd.f32 0.0, %v2601
      %v2603 = vpop.f32.mrf.mxu0
      %v2604 = vpop.f32.mrf.mxu0
      %v2605 = vadd.f32 0.0, %v2604
      %v2606 = vpop.f32.mrf.mxu0
      %2607 = vmatprep.mubr.bf16.mxu0 0
      %2608 = vmatmul.mubr.bf16.gmra.mxu0 %v2520
      %v2609 = vpop.f32.mrf.mxu0
      %v2610 = vadd.f32 0.0, %v2609
      %v2611 = vpop.f32.mrf.mxu0
      %v2612 = vpop.f32.mrf.mxu0
      %v2613 = vadd.f32 0.0, %v2612
      %v2614 = vpop.f32.mrf.mxu0
      %2615 = vmatprep.mubr.bf16.mxu0 0
      %2616 = vmatmul.mubr.bf16.gmra.mxu0 %v2523
      %v2617 = vpop.f32.mrf.mxu0
      %v2618 = vadd.f32 0.0, %v2617
      %v2619 = vpop.f32.mrf.mxu0
      %v2620 = vpop.f32.mrf.mxu0
      %v2621 = vadd.f32 0.0, %v2620
      %v2622 = vpop.f32.mrf.mxu0
      %2623 = vmatprep.mubr.bf16.mxu0 0
      %2624 = vmatmul.mubr.bf16.gmra.mxu0 %v2526
      %v2625 = vpop.f32.mrf.mxu0
      %v2626 = vadd.f32 0.0, %v2625
      %v2627 = vpop.f32.mrf.mxu0
      %v2628 = vpop.f32.mrf.mxu0
      %v2629 = vadd.f32 0.0, %v2628
      %v2630 = vpop.f32.mrf.mxu0
      %2631 = vmatprep.mubr.bf16.mxu0 0
      %2632 = vmatmul.mubr.bf16.gmra.mxu0 %v2529
      %v2633 = vpop.f32.mrf.mxu0
      %v2634 = vadd.f32 0.0, %v2633
      %v2635 = vpop.f32.mrf.mxu0
      %v2636 = vpop.f32.mrf.mxu0
      %v2637 = vadd.f32 0.0, %v2636
      %v2638 = vpop.f32.mrf.mxu0
      %2639 = vmatprep.mubr.bf16.mxu0 0
      %2640 = vmatmul.mubr.bf16.gmra.mxu0 %v2532
      %v2641 = vpop.f32.mrf.mxu0
      %v2642 = vadd.f32 0.0, %v2641
      %v2643 = vpop.f32.mrf.mxu0
      %v2644 = vpop.f32.mrf.mxu0
      %v2645 = vadd.f32 0.0, %v2644
      %v2646 = vpop.f32.mrf.mxu0
      %2647 = vmatprep.mubr.bf16.mxu0 0
      %2648 = vmatmul.mubr.bf16.gmra.mxu0 %v2535
      %v2649 = vpop.f32.mrf.mxu0
      %v2650 = vadd.f32 0.0, %v2649
      %v2651 = vpop.f32.mrf.mxu0
      %v2652 = vpop.f32.mrf.mxu0
      %v2653 = vadd.f32 0.0, %v2652
      %v2654 = vpop.f32.mrf.mxu0
      %2655 = vmatprep.mubr.bf16.mxu0 0
      %2656 = vmatmul.mubr.bf16.gmra.mxu0 %v2538
      %v2657 = vpop.f32.mrf.mxu0
      %v2658 = vadd.f32 0.0, %v2657
      %v2659 = vpop.f32.mrf.mxu0
      %v2660 = vpop.f32.mrf.mxu0
      %v2661 = vadd.f32 0.0, %v2660
      %v2662 = vpop.f32.mrf.mxu0
      %2663 = vmatprep.mubr.bf16.mxu0 0
      %2664 = vmatmul.mubr.bf16.gmra.mxu0 %v2541
      %v2665 = vpop.f32.mrf.mxu0
      %v2666 = vadd.f32 0.0, %v2665
      %v2667 = vpop.f32.mrf.mxu0
      %v2668 = vpop.f32.mrf.mxu0
      %v2669 = vadd.f32 0.0, %v2668
      %v2670 = vpop.f32.mrf.mxu0
      %2671 = vmatprep.mubr.bf16.mxu0 0
      %2672 = vmatmul.mubr.bf16.gmra.mxu0 %v2544
      %v2673 = vpop.f32.mrf.mxu0
      %v2674 = vadd.f32 0.0, %v2673
      %v2675 = vpop.f32.mrf.mxu0
      %v2676 = vpop.f32.mrf.mxu0
      %v2677 = vadd.f32 0.0, %v2676
      %v2678 = vpop.f32.mrf.mxu0
      %2679 = vmatprep.mubr.bf16.mxu0 0
      %2680 = vmatmul.mubr.bf16.gmra.mxu0 %v2547
      %v2681 = vpop.f32.mrf.mxu0
      %v2682 = vadd.f32 0.0, %v2681
      %v2683 = vpop.f32.mrf.mxu0
      %v2684 = vpop.f32.mrf.mxu0
      %v2685 = vadd.f32 0.0, %v2684
      %v2686 = vpop.f32.mrf.mxu0
      %2687 = vmatprep.mubr.bf16.mxu0 0
      %2688 = vmatmul.mubr.bf16.gmra.mxu0 %v2550
      %v2689 = vpop.f32.mrf.mxu0
      %v2690 = vadd.f32 0.0, %v2689
      %v2691 = vpop.f32.mrf.mxu0
      %v2692 = vpop.f32.mrf.mxu0
      %v2693 = vadd.f32 0.0, %v2692
      %v2694 = vpop.f32.mrf.mxu0
      %2695 = vmatprep.mubr.bf16.mxu0 0
      %2696 = vmatmul.mubr.bf16.gmra.mxu0 %v2553
      %v2697 = vpop.f32.mrf.mxu0
      %v2698 = vadd.f32 0.0, %v2697
      %v2699 = vpop.f32.mrf.mxu0
      %v2700 = vpop.f32.mrf.mxu0
      %v2701 = vadd.f32 0.0, %v2700
      %v2702 = vpop.f32.mrf.mxu0
      %2703 = vmatprep.mubr.bf16.mxu0 0
      %2704 = vmatmul.mubr.bf16.gmra.mxu0 %v2556
      %v2705 = vpop.f32.mrf.mxu0
      %v2706 = vadd.f32 0.0, %v2705
      %v2707 = vpop.f32.mrf.mxu0
      %v2708 = vpop.f32.mrf.mxu0
      %v2709 = vadd.f32 0.0, %v2708
      %v2710 = vpop.f32.mrf.mxu0
      %2711 = vmatprep.mubr.bf16.mxu0 0
      %2712 = vmatmul.mubr.bf16.gmra.mxu0 %v2559
      %v2713 = vpop.f32.mrf.mxu0
      %v2714 = vadd.f32 0.0, %v2713
      %v2715 = vpop.f32.mrf.mxu0
      %v2716 = vpop.f32.mrf.mxu0
      %v2717 = vadd.f32 0.0, %v2716
      %v2718 = vpop.f32.mrf.mxu0
      %2719 = vmatprep.mubr.bf16.mxu0 0
      %2720 = vmatmul.mubr.bf16.gmra.mxu0 %v2562
      %v2721 = vpop.f32.mrf.mxu0
      %v2722 = vadd.f32 0.0, %v2721
      %v2723 = vpop.f32.mrf.mxu0
      %v2724 = vpop.f32.mrf.mxu0
      %v2725 = vadd.f32 0.0, %v2724
      %v2726 = vpop.f32.mrf.mxu0
      %2727 = vdwg.mxu0
      %v2728 = vadd.f32 %v2434, %v2602
      %v2729 = vadd.f32 %v2435, %v2605
      %v2730 = vadd.f32 %v2436, %v2610
      %v2731 = vadd.f32 %v2437, %v2613
      %v2732 = vadd.f32 %v2438, %v2618
      %v2733 = vadd.f32 %v2439, %v2621
      %v2734 = vadd.f32 %v2440, %v2626
      %v2735 = vadd.f32 %v2441, %v2629
      %v2736 = vadd.f32 %v2442, %v2634
      %v2737 = vadd.f32 %v2443, %v2637
      %v2738 = vadd.f32 %v2444, %v2642
      %v2739 = vadd.f32 %v2445, %v2645
      %v2740 = vadd.f32 %v2446, %v2650
      %v2741 = vadd.f32 %v2447, %v2653
      %v2742 = vadd.f32 %v2448, %v2658
      %v2743 = vadd.f32 %v2449, %v2661
      %v2744 = vadd.f32 %v2450, %v2666
      %v2745 = vadd.f32 %v2451, %v2669
      %v2746 = vadd.f32 %v2452, %v2674
      %v2747 = vadd.f32 %v2453, %v2677
      %v2748 = vadd.f32 %v2454, %v2682
      %v2749 = vadd.f32 %v2455, %v2685
      %v2750 = vadd.f32 %v2456, %v2690
      %v2751 = vadd.f32 %v2457, %v2693
      %v2752 = vadd.f32 %v2458, %v2698
      %v2753 = vadd.f32 %v2459, %v2701
      %v2754 = vadd.f32 %v2460, %v2706
      %v2755 = vadd.f32 %v2461, %v2709
      %v2756 = vadd.f32 %v2462, %v2714
      %v2757 = vadd.f32 %v2463, %v2717
      %v2758 = vadd.f32 %v2464, %v2722
      %v2759 = vadd.f32 %v2465, %v2725
      %v2760 = vld [vmem:[%s2] sm:$0x1]
      %v2762 = vlaneseq
      %v2763 = vshrl.u32 %v2762, 7
      %v2764 = vsub.s32 0, %v2763
      %v2765 = vrot.slane %v2760, %v2764
      %v2767 = vadd.f32 %v2728, %v2765
      %v2768 = vadd.f32 %v2729, %v2765
      %v2769 = vadd.f32 %v2730, %v2765
      %v2770 = vadd.f32 %v2731, %v2765
      %v2771 = vadd.f32 %v2732, %v2765
      %v2772 = vadd.f32 %v2733, %v2765
      %v2773 = vadd.f32 %v2734, %v2765
      %v2774 = vadd.f32 %v2735, %v2765
      %v2775 = vadd.f32 %v2736, %v2765
      %v2776 = vadd.f32 %v2737, %v2765
      %v2777 = vadd.f32 %v2738, %v2765
      %v2778 = vadd.f32 %v2739, %v2765
      %v2779 = vadd.f32 %v2740, %v2765
      %v2780 = vadd.f32 %v2741, %v2765
      %v2781 = vadd.f32 %v2742, %v2765
      %v2782 = vadd.f32 %v2743, %v2765
      %v2783 = vadd.f32 %v2744, %v2765
      %v2784 = vadd.f32 %v2745, %v2765
      %v2785 = vadd.f32 %v2746, %v2765
      %v2786 = vadd.f32 %v2747, %v2765
      %v2787 = vadd.f32 %v2748, %v2765
      %v2788 = vadd.f32 %v2749, %v2765
      %v2789 = vadd.f32 %v2750, %v2765
      %v2790 = vadd.f32 %v2751, %v2765
      %v2791 = vadd.f32 %v2752, %v2765
      %v2792 = vadd.f32 %v2753, %v2765
      %v2793 = vadd.f32 %v2754, %v2765
      %v2794 = vadd.f32 %v2755, %v2765
      %v2795 = vadd.f32 %v2756, %v2765
      %v2796 = vadd.f32 %v2757, %v2765
      %v2797 = vadd.f32 %v2758, %v2765
      %v2798 = vadd.f32 %v2759, %v2765
      %v2799 = vmax.f32 %v2767, 0.0
      %v2800 = vmax.f32 %v2768, 0.0
      %v2801 = vmax.f32 %v2769, 0.0
      %v2802 = vmax.f32 %v2770, 0.0
      %v2803 = vmax.f32 %v2771, 0.0
      %v2804 = vmax.f32 %v2772, 0.0
      %v2805 = vmax.f32 %v2773, 0.0
      %v2806 = vmax.f32 %v2774, 0.0
      %v2807 = vmax.f32 %v2775, 0.0
      %v2808 = vmax.f32 %v2776, 0.0
      %v2809 = vmax.f32 %v2777, 0.0
      %v2810 = vmax.f32 %v2778, 0.0
      %v2811 = vmax.f32 %v2779, 0.0
      %v2812 = vmax.f32 %v2780, 0.0
      %v2813 = vmax.f32 %v2781, 0.0
      %v2814 = vmax.f32 %v2782, 0.0
      %v2815 = vmax.f32 %v2783, 0.0
      %v2816 = vmax.f32 %v2784, 0.0
      %v2817 = vmax.f32 %v2785, 0.0
      %v2818 = vmax.f32 %v2786, 0.0
      %v2819 = vmax.f32 %v2787, 0.0
      %v2820 = vmax.f32 %v2788, 0.0
      %v2821 = vmax.f32 %v2789, 0.0
      %v2822 = vmax.f32 %v2790, 0.0
      %v2823 = vmax.f32 %v2791, 0.0
      %v2824 = vmax.f32 %v2792, 0.0
      %v2825 = vmax.f32 %v2793, 0.0
      %v2826 = vmax.f32 %v2794, 0.0
      %v2827 = vmax.f32 %v2795, 0.0
      %v2828 = vmax.f32 %v2796, 0.0
      %v2829 = vmax.f32 %v2797, 0.0
      %v2830 = vmax.f32 %v2798, 0.0
      %v2863 = vcombine.high %v2799, %v2799
      %v2865 = vunpack.c.l.s4 1983009808
      %v2866 = vunpack.c.0.s8 %v2865
      %v2867 = vlaneseq
      %v2868 = vshrl.u32 %v2867, 7
      %v2869 = vsub.s32 %v2866, %v2868
      %v2870 = vrot.slane %v2799, %v2869
      %v2872 = vunpack.c.l.s4 1983009808
      %v2873 = vunpack.c.0.s8 %v2872
      %v2874 = vlaneseq
      %v2875 = vshrl.u32 %v2874, 7
      %v2876 = vsub.s32 %v2873, %v2875
      %v2877 = vrot.slane %v2863, %v2876
      %v2878 = vcombine.high %v2870, %v2870
      %v2879 = vcombine.high %v2877, %v2877
      %v2880 = vcombine.high %v2800, %v2800
      %v2882 = vunpack.c.l.s4 1983009808
      %v2883 = vunpack.c.0.s8 %v2882
      %v2884 = vlaneseq
      %v2885 = vshrl.u32 %v2884, 7
      %v2886 = vsub.s32 %v2883, %v2885
      %v2887 = vrot.slane %v2800, %v2886
      %v2889 = vunpack.c.l.s4 1983009808
      %v2890 = vunpack.c.0.s8 %v2889
      %v2891 = vlaneseq
      %v2892 = vshrl.u32 %v2891, 7
      %v2893 = vsub.s32 %v2890, %v2892
      %v2894 = vrot.slane %v2880, %v2893
      %v2895 = vcombine.high %v2887, %v2887
      %v2896 = vcombine.high %v2894, %v2894
      %v2897 = vcombine.high %v2801, %v2801
      %v2899 = vunpack.c.l.s4 1983009808
      %v2900 = vunpack.c.0.s8 %v2899
      %v2901 = vlaneseq
      %v2902 = vshrl.u32 %v2901, 7
      %v2903 = vsub.s32 %v2900, %v2902
      %v2904 = vrot.slane %v2801, %v2903
      %v2906 = vunpack.c.l.s4 1983009808
      %v2907 = vunpack.c.0.s8 %v2906
      %v2908 = vlaneseq
      %v2909 = vshrl.u32 %v2908, 7
      %v2910 = vsub.s32 %v2907, %v2909
      %v2911 = vrot.slane %v2897, %v2910
      %v2912 = vcombine.high %v2904, %v2904
      %v2913 = vcombine.high %v2911, %v2911
      %v2914 = vcombine.high %v2802, %v2802
      %v2916 = vunpack.c.l.s4 1983009808
      %v2917 = vunpack.c.0.s8 %v2916
      %v2918 = vlaneseq
      %v2919 = vshrl.u32 %v2918, 7
      %v2920 = vsub.s32 %v2917, %v2919
      %v2921 = vrot.slane %v2802, %v2920
      %v2923 = vunpack.c.l.s4 1983009808
      %v2924 = vunpack.c.0.s8 %v2923
      %v2925 = vlaneseq
      %v2926 = vshrl.u32 %v2925, 7
      %v2927 = vsub.s32 %v2924, %v2926
      %v2928 = vrot.slane %v2914, %v2927
      %v2929 = vcombine.high %v2921, %v2921
      %v2930 = vcombine.high %v2928, %v2928
      %v2931 = vcombine.high %v2803, %v2803
      %v2933 = vunpack.c.l.s4 1983009808
      %v2934 = vunpack.c.0.s8 %v2933
      %v2935 = vlaneseq
      %v2936 = vshrl.u32 %v2935, 7
      %v2937 = vsub.s32 %v2934, %v2936
      %v2938 = vrot.slane %v2803, %v2937
      %v2940 = vunpack.c.l.s4 1983009808
      %v2941 = vunpack.c.0.s8 %v2940
      %v2942 = vlaneseq
      %v2943 = vshrl.u32 %v2942, 7
      %v2944 = vsub.s32 %v2941, %v2943
      %v2945 = vrot.slane %v2931, %v2944
      %v2946 = vcombine.high %v2938, %v2938
      %v2947 = vcombine.high %v2945, %v2945
      %v2948 = vcombine.high %v2804, %v2804
      %v2950 = vunpack.c.l.s4 1983009808
      %v2951 = vunpack.c.0.s8 %v2950
      %v2952 = vlaneseq
      %v2953 = vshrl.u32 %v2952, 7
      %v2954 = vsub.s32 %v2951, %v2953
      %v2955 = vrot.slane %v2804, %v2954
      %v2957 = vunpack.c.l.s4 1983009808
      %v2958 = vunpack.c.0.s8 %v2957
      %v2959 = vlaneseq
      %v2960 = vshrl.u32 %v2959, 7
      %v2961 = vsub.s32 %v2958, %v2960
      %v2962 = vrot.slane %v2948, %v2961
      %v2963 = vcombine.high %v2955, %v2955
      %v2964 = vcombine.high %v2962, %v2962
      %v2965 = vcombine.high %v2805, %v2805
      %v2967 = vunpack.c.l.s4 1983009808
      %v2968 = vunpack.c.0.s8 %v2967
      %v2969 = vlaneseq
      %v2970 = vshrl.u32 %v2969, 7
      %v2971 = vsub.s32 %v2968, %v2970
      %v2972 = vrot.slane %v2805, %v2971
      %v2974 = vunpack.c.l.s4 1983009808
      %v2975 = vunpack.c.0.s8 %v2974
      %v2976 = vlaneseq
      %v2977 = vshrl.u32 %v2976, 7
      %v2978 = vsub.s32 %v2975, %v2977
      %v2979 = vrot.slane %v2965, %v2978
      %v2980 = vcombine.high %v2972, %v2972
      %v2981 = vcombine.high %v2979, %v2979
      %v2982 = vcombine.high %v2806, %v2806
      %v2984 = vunpack.c.l.s4 1983009808
      %v2985 = vunpack.c.0.s8 %v2984
      %v2986 = vlaneseq
      %v2987 = vshrl.u32 %v2986, 7
      %v2988 = vsub.s32 %v2985, %v2987
      %v2989 = vrot.slane %v2806, %v2988
      %v2991 = vunpack.c.l.s4 1983009808
      %v2992 = vunpack.c.0.s8 %v2991
      %v2993 = vlaneseq
      %v2994 = vshrl.u32 %v2993, 7
      %v2995 = vsub.s32 %v2992, %v2994
      %v2996 = vrot.slane %v2982, %v2995
      %v2997 = vcombine.high %v2989, %v2989
      %v2998 = vcombine.high %v2996, %v2996
      %v2999 = vcombine.high %v2807, %v2807
      %v3001 = vunpack.c.l.s4 1983009808
      %v3002 = vunpack.c.0.s8 %v3001
      %v3003 = vlaneseq
      %v3004 = vshrl.u32 %v3003, 7
      %v3005 = vsub.s32 %v3002, %v3004
      %v3006 = vrot.slane %v2807, %v3005
      %v3008 = vunpack.c.l.s4 1983009808
      %v3009 = vunpack.c.0.s8 %v3008
      %v3010 = vlaneseq
      %v3011 = vshrl.u32 %v3010, 7
      %v3012 = vsub.s32 %v3009, %v3011
      %v3013 = vrot.slane %v2999, %v3012
      %v3014 = vcombine.high %v3006, %v3006
      %v3015 = vcombine.high %v3013, %v3013
      %v3016 = vcombine.high %v2808, %v2808
      %v3018 = vunpack.c.l.s4 1983009808
      %v3019 = vunpack.c.0.s8 %v3018
      %v3020 = vlaneseq
      %v3021 = vshrl.u32 %v3020, 7
      %v3022 = vsub.s32 %v3019, %v3021
      %v3023 = vrot.slane %v2808, %v3022
      %v3025 = vunpack.c.l.s4 1983009808
      %v3026 = vunpack.c.0.s8 %v3025
      %v3027 = vlaneseq
      %v3028 = vshrl.u32 %v3027, 7
      %v3029 = vsub.s32 %v3026, %v3028
      %v3030 = vrot.slane %v3016, %v3029
      %v3031 = vcombine.high %v3023, %v3023
      %v3032 = vcombine.high %v3030, %v3030
      %v3033 = vcombine.high %v2809, %v2809
      %v3035 = vunpack.c.l.s4 1983009808
      %v3036 = vunpack.c.0.s8 %v3035
      %v3037 = vlaneseq
      %v3038 = vshrl.u32 %v3037, 7
      %v3039 = vsub.s32 %v3036, %v3038
      %v3040 = vrot.slane %v2809, %v3039
      %v3042 = vunpack.c.l.s4 1983009808
      %v3043 = vunpack.c.0.s8 %v3042
      %v3044 = vlaneseq
      %v3045 = vshrl.u32 %v3044, 7
      %v3046 = vsub.s32 %v3043, %v3045
      %v3047 = vrot.slane %v3033, %v3046
      %v3048 = vcombine.high %v3040, %v3040
      %v3049 = vcombine.high %v3047, %v3047
      %v3050 = vcombine.high %v2810, %v2810
      %v3052 = vunpack.c.l.s4 1983009808
      %v3053 = vunpack.c.0.s8 %v3052
      %v3054 = vlaneseq
      %v3055 = vshrl.u32 %v3054, 7
      %v3056 = vsub.s32 %v3053, %v3055
      %v3057 = vrot.slane %v2810, %v3056
      %v3059 = vunpack.c.l.s4 1983009808
      %v3060 = vunpack.c.0.s8 %v3059
      %v3061 = vlaneseq
      %v3062 = vshrl.u32 %v3061, 7
      %v3063 = vsub.s32 %v3060, %v3062
      %v3064 = vrot.slane %v3050, %v3063
      %v3065 = vcombine.high %v3057, %v3057
      %v3066 = vcombine.high %v3064, %v3064
      %v3067 = vcombine.high %v2811, %v2811
      %v3069 = vunpack.c.l.s4 1983009808
      %v3070 = vunpack.c.0.s8 %v3069
      %v3071 = vlaneseq
      %v3072 = vshrl.u32 %v3071, 7
      %v3073 = vsub.s32 %v3070, %v3072
      %v3074 = vrot.slane %v2811, %v3073
      %v3076 = vunpack.c.l.s4 1983009808
      %v3077 = vunpack.c.0.s8 %v3076
      %v3078 = vlaneseq
      %v3079 = vshrl.u32 %v3078, 7
      %v3080 = vsub.s32 %v3077, %v3079
      %v3081 = vrot.slane %v3067, %v3080
      %v3082 = vcombine.high %v3074, %v3074
      %v3083 = vcombine.high %v3081, %v3081
      %v3084 = vcombine.high %v2812, %v2812
      %v3086 = vunpack.c.l.s4 1983009808
      %v3087 = vunpack.c.0.s8 %v3086
      %v3088 = vlaneseq
      %v3089 = vshrl.u32 %v3088, 7
      %v3090 = vsub.s32 %v3087, %v3089
      %v3091 = vrot.slane %v2812, %v3090
      %v3093 = vunpack.c.l.s4 1983009808
      %v3094 = vunpack.c.0.s8 %v3093
      %v3095 = vlaneseq
      %v3096 = vshrl.u32 %v3095, 7
      %v3097 = vsub.s32 %v3094, %v3096
      %v3098 = vrot.slane %v3084, %v3097
      %v3099 = vcombine.high %v3091, %v3091
      %v3100 = vcombine.high %v3098, %v3098
      %v3101 = vcombine.high %v2813, %v2813
      %v3103 = vunpack.c.l.s4 1983009808
      %v3104 = vunpack.c.0.s8 %v3103
      %v3105 = vlaneseq
      %v3106 = vshrl.u32 %v3105, 7
      %v3107 = vsub.s32 %v3104, %v3106
      %v3108 = vrot.slane %v2813, %v3107
      %v3110 = vunpack.c.l.s4 1983009808
      %v3111 = vunpack.c.0.s8 %v3110
      %v3112 = vlaneseq
      %v3113 = vshrl.u32 %v3112, 7
      %v3114 = vsub.s32 %v3111, %v3113
      %v3115 = vrot.slane %v3101, %v3114
      %v3116 = vcombine.high %v3108, %v3108
      %v3117 = vcombine.high %v3115, %v3115
      %v3118 = vcombine.high %v2814, %v2814
      %v3120 = vunpack.c.l.s4 1983009808
      %v3121 = vunpack.c.0.s8 %v3120
      %v3122 = vlaneseq
      %v3123 = vshrl.u32 %v3122, 7
      %v3124 = vsub.s32 %v3121, %v3123
      %v3125 = vrot.slane %v2814, %v3124
      %v3127 = vunpack.c.l.s4 1983009808
      %v3128 = vunpack.c.0.s8 %v3127
      %v3129 = vlaneseq
      %v3130 = vshrl.u32 %v3129, 7
      %v3131 = vsub.s32 %v3128, %v3130
      %v3132 = vrot.slane %v3118, %v3131
      %v3133 = vcombine.high %v3125, %v3125
      %v3134 = vcombine.high %v3132, %v3132
      %v3135 = vcombine.high %v2815, %v2815
      %v3137 = vunpack.c.l.s4 1983009808
      %v3138 = vunpack.c.0.s8 %v3137
      %v3139 = vlaneseq
      %v3140 = vshrl.u32 %v3139, 7
      %v3141 = vsub.s32 %v3138, %v3140
      %v3142 = vrot.slane %v2815, %v3141
      %v3144 = vunpack.c.l.s4 1983009808
      %v3145 = vunpack.c.0.s8 %v3144
      %v3146 = vlaneseq
      %v3147 = vshrl.u32 %v3146, 7
      %v3148 = vsub.s32 %v3145, %v3147
      %v3149 = vrot.slane %v3135, %v3148
      %v3150 = vcombine.high %v3142, %v3142
      %v3151 = vcombine.high %v3149, %v3149
      %v3152 = vcombine.high %v2816, %v2816
      %v3154 = vunpack.c.l.s4 1983009808
      %v3155 = vunpack.c.0.s8 %v3154
      %v3156 = vlaneseq
      %v3157 = vshrl.u32 %v3156, 7
      %v3158 = vsub.s32 %v3155, %v3157
      %v3159 = vrot.slane %v2816, %v3158
      %v3161 = vunpack.c.l.s4 1983009808
      %v3162 = vunpack.c.0.s8 %v3161
      %v3163 = vlaneseq
      %v3164 = vshrl.u32 %v3163, 7
      %v3165 = vsub.s32 %v3162, %v3164
      %v3166 = vrot.slane %v3152, %v3165
      %v3167 = vcombine.high %v3159, %v3159
      %v3168 = vcombine.high %v3166, %v3166
      %v3169 = vcombine.high %v2817, %v2817
      %v3171 = vunpack.c.l.s4 1983009808
      %v3172 = vunpack.c.0.s8 %v3171
      %v3173 = vlaneseq
      %v3174 = vshrl.u32 %v3173, 7
      %v3175 = vsub.s32 %v3172, %v3174
      %v3176 = vrot.slane %v2817, %v3175
      %v3178 = vunpack.c.l.s4 1983009808
      %v3179 = vunpack.c.0.s8 %v3178
      %v3180 = vlaneseq
      %v3181 = vshrl.u32 %v3180, 7
      %v3182 = vsub.s32 %v3179, %v3181
      %v3183 = vrot.slane %v3169, %v3182
      %v3184 = vcombine.high %v3176, %v3176
      %v3185 = vcombine.high %v3183, %v3183
      %v3186 = vcombine.high %v2818, %v2818
      %v3188 = vunpack.c.l.s4 1983009808
      %v3189 = vunpack.c.0.s8 %v3188
      %v3190 = vlaneseq
      %v3191 = vshrl.u32 %v3190, 7
      %v3192 = vsub.s32 %v3189, %v3191
      %v3193 = vrot.slane %v2818, %v3192
      %v3195 = vunpack.c.l.s4 1983009808
      %v3196 = vunpack.c.0.s8 %v3195
      %v3197 = vlaneseq
      %v3198 = vshrl.u32 %v3197, 7
      %v3199 = vsub.s32 %v3196, %v3198
      %v3200 = vrot.slane %v3186, %v3199
      %v3201 = vcombine.high %v3193, %v3193
      %v3202 = vcombine.high %v3200, %v3200
      %v3203 = vcombine.high %v2819, %v2819
      %v3205 = vunpack.c.l.s4 1983009808
      %v3206 = vunpack.c.0.s8 %v3205
      %v3207 = vlaneseq
      %v3208 = vshrl.u32 %v3207, 7
      %v3209 = vsub.s32 %v3206, %v3208
      %v3210 = vrot.slane %v2819, %v3209
      %v3212 = vunpack.c.l.s4 1983009808
      %v3213 = vunpack.c.0.s8 %v3212
      %v3214 = vlaneseq
      %v3215 = vshrl.u32 %v3214, 7
      %v3216 = vsub.s32 %v3213, %v3215
      %v3217 = vrot.slane %v3203, %v3216
      %v3218 = vcombine.high %v3210, %v3210
      %v3219 = vcombine.high %v3217, %v3217
      %v3220 = vcombine.high %v2820, %v2820
      %v3222 = vunpack.c.l.s4 1983009808
      %v3223 = vunpack.c.0.s8 %v3222
      %v3224 = vlaneseq
      %v3225 = vshrl.u32 %v3224, 7
      %v3226 = vsub.s32 %v3223, %v3225
      %v3227 = vrot.slane %v2820, %v3226
      %v3229 = vunpack.c.l.s4 1983009808
      %v3230 = vunpack.c.0.s8 %v3229
      %v3231 = vlaneseq
      %v3232 = vshrl.u32 %v3231, 7
      %v3233 = vsub.s32 %v3230, %v3232
      %v3234 = vrot.slane %v3220, %v3233
      %v3235 = vcombine.high %v3227, %v3227
      %v3236 = vcombine.high %v3234, %v3234
      %v3237 = vcombine.high %v2821, %v2821
      %v3239 = vunpack.c.l.s4 1983009808
      %v3240 = vunpack.c.0.s8 %v3239
      %v3241 = vlaneseq
      %v3242 = vshrl.u32 %v3241, 7
      %v3243 = vsub.s32 %v3240, %v3242
      %v3244 = vrot.slane %v2821, %v3243
      %v3246 = vunpack.c.l.s4 1983009808
      %v3247 = vunpack.c.0.s8 %v3246
      %v3248 = vlaneseq
      %v3249 = vshrl.u32 %v3248, 7
      %v3250 = vsub.s32 %v3247, %v3249
      %v3251 = vrot.slane %v3237, %v3250
      %v3252 = vcombine.high %v3244, %v3244
      %v3253 = vcombine.high %v3251, %v3251
      %v3254 = vcombine.high %v2822, %v2822
      %v3256 = vunpack.c.l.s4 1983009808
      %v3257 = vunpack.c.0.s8 %v3256
      %v3258 = vlaneseq
      %v3259 = vshrl.u32 %v3258, 7
      %v3260 = vsub.s32 %v3257, %v3259
      %v3261 = vrot.slane %v2822, %v3260
      %v3263 = vunpack.c.l.s4 1983009808
      %v3264 = vunpack.c.0.s8 %v3263
      %v3265 = vlaneseq
      %v3266 = vshrl.u32 %v3265, 7
      %v3267 = vsub.s32 %v3264, %v3266
      %v3268 = vrot.slane %v3254, %v3267
      %v3269 = vcombine.high %v3261, %v3261
      %v3270 = vcombine.high %v3268, %v3268
      %v3271 = vcombine.high %v2823, %v2823
      %v3273 = vunpack.c.l.s4 1983009808
      %v3274 = vunpack.c.0.s8 %v3273
      %v3275 = vlaneseq
      %v3276 = vshrl.u32 %v3275, 7
      %v3277 = vsub.s32 %v3274, %v3276
      %v3278 = vrot.slane %v2823, %v3277
      %v3280 = vunpack.c.l.s4 1983009808
      %v3281 = vunpack.c.0.s8 %v3280
      %v3282 = vlaneseq
      %v3283 = vshrl.u32 %v3282, 7
      %v3284 = vsub.s32 %v3281, %v3283
      %v3285 = vrot.slane %v3271, %v3284
      %v3286 = vcombine.high %v3278, %v3278
      %v3287 = vcombine.high %v3285, %v3285
      %v3288 = vcombine.high %v2824, %v2824
      %v3290 = vunpack.c.l.s4 1983009808
      %v3291 = vunpack.c.0.s8 %v3290
      %v3292 = vlaneseq
      %v3293 = vshrl.u32 %v3292, 7
      %v3294 = vsub.s32 %v3291, %v3293
      %v3295 = vrot.slane %v2824, %v3294
      %v3297 = vunpack.c.l.s4 1983009808
      %v3298 = vunpack.c.0.s8 %v3297
      %v3299 = vlaneseq
      %v3300 = vshrl.u32 %v3299, 7
      %v3301 = vsub.s32 %v3298, %v3300
      %v3302 = vrot.slane %v3288, %v3301
      %v3303 = vcombine.high %v3295, %v3295
      %v3304 = vcombine.high %v3302, %v3302
      %v3305 = vcombine.high %v2825, %v2825
      %v3307 = vunpack.c.l.s4 1983009808
      %v3308 = vunpack.c.0.s8 %v3307
      %v3309 = vlaneseq
      %v3310 = vshrl.u32 %v3309, 7
      %v3311 = vsub.s32 %v3308, %v3310
      %v3312 = vrot.slane %v2825, %v3311
      %v3314 = vunpack.c.l.s4 1983009808
      %v3315 = vunpack.c.0.s8 %v3314
      %v3316 = vlaneseq
      %v3317 = vshrl.u32 %v3316, 7
      %v3318 = vsub.s32 %v3315, %v3317
      %v3319 = vrot.slane %v3305, %v3318
      %v3320 = vcombine.high %v3312, %v3312
      %v3321 = vcombine.high %v3319, %v3319
      %v3322 = vcombine.high %v2826, %v2826
      %v3324 = vunpack.c.l.s4 1983009808
      %v3325 = vunpack.c.0.s8 %v3324
      %v3326 = vlaneseq
      %v3327 = vshrl.u32 %v3326, 7
      %v3328 = vsub.s32 %v3325, %v3327
      %v3329 = vrot.slane %v2826, %v3328
      %v3331 = vunpack.c.l.s4 1983009808
      %v3332 = vunpack.c.0.s8 %v3331
      %v3333 = vlaneseq
      %v3334 = vshrl.u32 %v3333, 7
      %v3335 = vsub.s32 %v3332, %v3334
      %v3336 = vrot.slane %v3322, %v3335
      %v3337 = vcombine.high %v3329, %v3329
      %v3338 = vcombine.high %v3336, %v3336
      %v3339 = vcombine.high %v2827, %v2827
      %v3341 = vunpack.c.l.s4 1983009808
      %v3342 = vunpack.c.0.s8 %v3341
      %v3343 = vlaneseq
      %v3344 = vshrl.u32 %v3343, 7
      %v3345 = vsub.s32 %v3342, %v3344
      %v3346 = vrot.slane %v2827, %v3345
      %v3348 = vunpack.c.l.s4 1983009808
      %v3349 = vunpack.c.0.s8 %v3348
      %v3350 = vlaneseq
      %v3351 = vshrl.u32 %v3350, 7
      %v3352 = vsub.s32 %v3349, %v3351
      %v3353 = vrot.slane %v3339, %v3352
      %v3354 = vcombine.high %v3346, %v3346
      %v3355 = vcombine.high %v3353, %v3353
      %v3356 = vcombine.high %v2828, %v2828
      %v3358 = vunpack.c.l.s4 1983009808
      %v3359 = vunpack.c.0.s8 %v3358
      %v3360 = vlaneseq
      %v3361 = vshrl.u32 %v3360, 7
      %v3362 = vsub.s32 %v3359, %v3361
      %v3363 = vrot.slane %v2828, %v3362
      %v3365 = vunpack.c.l.s4 1983009808
      %v3366 = vunpack.c.0.s8 %v3365
      %v3367 = vlaneseq
      %v3368 = vshrl.u32 %v3367, 7
      %v3369 = vsub.s32 %v3366, %v3368
      %v3370 = vrot.slane %v3356, %v3369
      %v3371 = vcombine.high %v3363, %v3363
      %v3372 = vcombine.high %v3370, %v3370
      %v3373 = vcombine.high %v2829, %v2829
      %v3375 = vunpack.c.l.s4 1983009808
      %v3376 = vunpack.c.0.s8 %v3375
      %v3377 = vlaneseq
      %v3378 = vshrl.u32 %v3377, 7
      %v3379 = vsub.s32 %v3376, %v3378
      %v3380 = vrot.slane %v2829, %v3379
      %v3382 = vunpack.c.l.s4 1983009808
      %v3383 = vunpack.c.0.s8 %v3382
      %v3384 = vlaneseq
      %v3385 = vshrl.u32 %v3384, 7
      %v3386 = vsub.s32 %v3383, %v3385
      %v3387 = vrot.slane %v3373, %v3386
      %v3388 = vcombine.high %v3380, %v3380
      %v3389 = vcombine.high %v3387, %v3387
      %v3390 = vcombine.high %v2830, %v2830
      %v3392 = vunpack.c.l.s4 1983009808
      %v3393 = vunpack.c.0.s8 %v3392
      %v3394 = vlaneseq
      %v3395 = vshrl.u32 %v3394, 7
      %v3396 = vsub.s32 %v3393, %v3395
      %v3397 = vrot.slane %v2830, %v3396
      %v3399 = vunpack.c.l.s4 1983009808
      %v3400 = vunpack.c.0.s8 %v3399
      %v3401 = vlaneseq
      %v3402 = vshrl.u32 %v3401, 7
      %v3403 = vsub.s32 %v3400, %v3402
      %v3404 = vrot.slane %v3390, %v3403
      %v3405 = vcombine.high %v3397, %v3397
      %v3406 = vcombine.high %v3404, %v3404
      %v3535 = vrot.slane %v2870, 7
      %v3536 = vrot.slane %v3535, 2
      %v3537 = vrot.slane %v2878, 7
      %v3538 = vrot.slane %v3537, 2
      %v3539 = vrot.slane %v2877, 7
      %v3540 = vrot.slane %v3539, 2
      %v3541 = vrot.slane %v2879, 7
      %v3542 = vrot.slane %v3541, 2
      %v3543 = vrot.slane %v2887, 7
      %v3544 = vrot.slane %v3543, 2
      %v3545 = vrot.slane %v2895, 7
      %v3546 = vrot.slane %v3545, 2
      %v3547 = vrot.slane %v2894, 7
      %v3548 = vrot.slane %v3547, 2
      %v3549 = vrot.slane %v2896, 7
      %v3550 = vrot.slane %v3549, 2
      %v3551 = vrot.slane %v2904, 7
      %v3552 = vrot.slane %v3551, 2
      %v3553 = vrot.slane %v2912, 7
      %v3554 = vrot.slane %v3553, 2
      %v3555 = vrot.slane %v2911, 7
      %v3556 = vrot.slane %v3555, 2
      %v3557 = vrot.slane %v2913, 7
      %v3558 = vrot.slane %v3557, 2
      %v3559 = vrot.slane %v2921, 7
      %v3560 = vrot.slane %v3559, 2
      %v3561 = vrot.slane %v2929, 7
      %v3562 = vrot.slane %v3561, 2
      %v3563 = vrot.slane %v2928, 7
      %v3564 = vrot.slane %v3563, 2
      %v3565 = vrot.slane %v2930, 7
      %v3566 = vrot.slane %v3565, 2
      %v3567 = vrot.slane %v2938, 7
      %v3568 = vrot.slane %v3567, 2
      %v3569 = vrot.slane %v2946, 7
      %v3570 = vrot.slane %v3569, 2
      %v3571 = vrot.slane %v2945, 7
      %v3572 = vrot.slane %v3571, 2
      %v3573 = vrot.slane %v2947, 7
      %v3574 = vrot.slane %v3573, 2
      %v3575 = vrot.slane %v2955, 7
      %v3576 = vrot.slane %v3575, 2
      %v3577 = vrot.slane %v2963, 7
      %v3578 = vrot.slane %v3577, 2
      %v3579 = vrot.slane %v2962, 7
      %v3580 = vrot.slane %v3579, 2
      %v3581 = vrot.slane %v2964, 7
      %v3582 = vrot.slane %v3581, 2
      %v3583 = vrot.slane %v2972, 7
      %v3584 = vrot.slane %v3583, 2
      %v3585 = vrot.slane %v2980, 7
      %v3586 = vrot.slane %v3585, 2
      %v3587 = vrot.slane %v2979, 7
      %v3588 = vrot.slane %v3587, 2
      %v3589 = vrot.slane %v2981, 7
      %v3590 = vrot.slane %v3589, 2
      %v3591 = vrot.slane %v2989, 7
      %v3592 = vrot.slane %v3591, 2
      %v3593 = vrot.slane %v2997, 7
      %v3594 = vrot.slane %v3593, 2
      %v3595 = vrot.slane %v2996, 7
      %v3596 = vrot.slane %v3595, 2
      %v3597 = vrot.slane %v2998, 7
      %v3598 = vrot.slane %v3597, 2
      %v3599 = vrot.slane %v3006, 7
      %v3600 = vrot.slane %v3599, 2
      %v3601 = vrot.slane %v3014, 7
      %v3602 = vrot.slane %v3601, 2
      %v3603 = vrot.slane %v3013, 7
      %v3604 = vrot.slane %v3603, 2
      %v3605 = vrot.slane %v3015, 7
      %v3606 = vrot.slane %v3605, 2
      %v3607 = vrot.slane %v3023, 7
      %v3608 = vrot.slane %v3607, 2
      %v3609 = vrot.slane %v3031, 7
      %v3610 = vrot.slane %v3609, 2
      %v3611 = vrot.slane %v3030, 7
      %v3612 = vrot.slane %v3611, 2
      %v3613 = vrot.slane %v3032, 7
      %v3614 = vrot.slane %v3613, 2
      %v3615 = vrot.slane %v3040, 7
      %v3616 = vrot.slane %v3615, 2
      %v3617 = vrot.slane %v3048, 7
      %v3618 = vrot.slane %v3617, 2
      %v3619 = vrot.slane %v3047, 7
      %v3620 = vrot.slane %v3619, 2
      %v3621 = vrot.slane %v3049, 7
      %v3622 = vrot.slane %v3621, 2
      %v3623 = vrot.slane %v3057, 7
      %v3624 = vrot.slane %v3623, 2
      %v3625 = vrot.slane %v3065, 7
      %v3626 = vrot.slane %v3625, 2
      %v3627 = vrot.slane %v3064, 7
      %v3628 = vrot.slane %v3627, 2
      %v3629 = vrot.slane %v3066, 7
      %v3630 = vrot.slane %v3629, 2
      %v3631 = vrot.slane %v3074, 7
      %v3632 = vrot.slane %v3631, 2
      %v3633 = vrot.slane %v3082, 7
      %v3634 = vrot.slane %v3633, 2
      %v3635 = vrot.slane %v3081, 7
      %v3636 = vrot.slane %v3635, 2
      %v3637 = vrot.slane %v3083, 7
      %v3638 = vrot.slane %v3637, 2
      %v3639 = vrot.slane %v3091, 7
      %v3640 = vrot.slane %v3639, 2
      %v3641 = vrot.slane %v3099, 7
      %v3642 = vrot.slane %v3641, 2
      %v3643 = vrot.slane %v3098, 7
      %v3644 = vrot.slane %v3643, 2
      %v3645 = vrot.slane %v3100, 7
      %v3646 = vrot.slane %v3645, 2
      %v3647 = vrot.slane %v3108, 7
      %v3648 = vrot.slane %v3647, 2
      %v3649 = vrot.slane %v3116, 7
      %v3650 = vrot.slane %v3649, 2
      %v3651 = vrot.slane %v3115, 7
      %v3652 = vrot.slane %v3651, 2
      %v3653 = vrot.slane %v3117, 7
      %v3654 = vrot.slane %v3653, 2
      %v3655 = vrot.slane %v3125, 7
      %v3656 = vrot.slane %v3655, 2
      %v3657 = vrot.slane %v3133, 7
      %v3658 = vrot.slane %v3657, 2
      %v3659 = vrot.slane %v3132, 7
      %v3660 = vrot.slane %v3659, 2
      %v3661 = vrot.slane %v3134, 7
      %v3662 = vrot.slane %v3661, 2
      %v3663 = vrot.slane %v3142, 7
      %v3664 = vrot.slane %v3663, 2
      %v3665 = vrot.slane %v3150, 7
      %v3666 = vrot.slane %v3665, 2
      %v3667 = vrot.slane %v3149, 7
      %v3668 = vrot.slane %v3667, 2
      %v3669 = vrot.slane %v3151, 7
      %v3670 = vrot.slane %v3669, 2
      %v3671 = vrot.slane %v3159, 7
      %v3672 = vrot.slane %v3671, 2
      %v3673 = vrot.slane %v3167, 7
      %v3674 = vrot.slane %v3673, 2
      %v3675 = vrot.slane %v3166, 7
      %v3676 = vrot.slane %v3675, 2
      %v3677 = vrot.slane %v3168, 7
      %v3678 = vrot.slane %v3677, 2
      %v3679 = vrot.slane %v3176, 7
      %v3680 = vrot.slane %v3679, 2
      %v3681 = vrot.slane %v3184, 7
      %v3682 = vrot.slane %v3681, 2
      %v3683 = vrot.slane %v3183, 7
      %v3684 = vrot.slane %v3683, 2
      %v3685 = vrot.slane %v3185, 7
      %v3686 = vrot.slane %v3685, 2
      %v3687 = vrot.slane %v3193, 7
      %v3688 = vrot.slane %v3687, 2
      %v3689 = vrot.slane %v3201, 7
      %v3690 = vrot.slane %v3689, 2
      %v3691 = vrot.slane %v3200, 7
      %v3692 = vrot.slane %v3691, 2
      %v3693 = vrot.slane %v3202, 7
      %v3694 = vrot.slane %v3693, 2
      %v3695 = vrot.slane %v3210, 7
      %v3696 = vrot.slane %v3695, 2
      %v3697 = vrot.slane %v3218, 7
      %v3698 = vrot.slane %v3697, 2
      %v3699 = vrot.slane %v3217, 7
      %v3700 = vrot.slane %v3699, 2
      %v3701 = vrot.slane %v3219, 7
      %v3702 = vrot.slane %v3701, 2
      %v3703 = vrot.slane %v3227, 7
      %v3704 = vrot.slane %v3703, 2
      %v3705 = vrot.slane %v3235, 7
      %v3706 = vrot.slane %v3705, 2
      %v3707 = vrot.slane %v3234, 7
      %v3708 = vrot.slane %v3707, 2
      %v3709 = vrot.slane %v3236, 7
      %v3710 = vrot.slane %v3709, 2
      %v3711 = vrot.slane %v3244, 7
      %v3712 = vrot.slane %v3711, 2
      %v3713 = vrot.slane %v3252, 7
      %v3714 = vrot.slane %v3713, 2
      %v3715 = vrot.slane %v3251, 7
      %v3716 = vrot.slane %v3715, 2
      %v3717 = vrot.slane %v3253, 7
      %v3718 = vrot.slane %v3717, 2
      %v3719 = vrot.slane %v3261, 7
      %v3720 = vrot.slane %v3719, 2
      %v3721 = vrot.slane %v3269, 7
      %v3722 = vrot.slane %v3721, 2
      %v3723 = vrot.slane %v3268, 7
      %v3724 = vrot.slane %v3723, 2
      %v3725 = vrot.slane %v3270, 7
      %v3726 = vrot.slane %v3725, 2
      %v3727 = vrot.slane %v3278, 7
      %v3728 = vrot.slane %v3727, 2
      %v3729 = vrot.slane %v3286, 7
      %v3730 = vrot.slane %v3729, 2
      %v3731 = vrot.slane %v3285, 7
      %v3732 = vrot.slane %v3731, 2
      %v3733 = vrot.slane %v3287, 7
      %v3734 = vrot.slane %v3733, 2
      %v3735 = vrot.slane %v3295, 7
      %v3736 = vrot.slane %v3735, 2
      %v3737 = vrot.slane %v3303, 7
      %v3738 = vrot.slane %v3737, 2
      %v3739 = vrot.slane %v3302, 7
      %v3740 = vrot.slane %v3739, 2
      %v3741 = vrot.slane %v3304, 7
      %v3742 = vrot.slane %v3741, 2
      %v3743 = vrot.slane %v3312, 7
      %v3744 = vrot.slane %v3743, 2
      %v3745 = vrot.slane %v3320, 7
      %v3746 = vrot.slane %v3745, 2
      %v3747 = vrot.slane %v3319, 7
      %v3748 = vrot.slane %v3747, 2
      %v3749 = vrot.slane %v3321, 7
      %v3750 = vrot.slane %v3749, 2
      %v3751 = vrot.slane %v3329, 7
      %v3752 = vrot.slane %v3751, 2
      %v3753 = vrot.slane %v3337, 7
      %v3754 = vrot.slane %v3753, 2
      %v3755 = vrot.slane %v3336, 7
      %v3756 = vrot.slane %v3755, 2
      %v3757 = vrot.slane %v3338, 7
      %v3758 = vrot.slane %v3757, 2
      %v3759 = vrot.slane %v3346, 7
      %v3760 = vrot.slane %v3759, 2
      %v3761 = vrot.slane %v3354, 7
      %v3762 = vrot.slane %v3761, 2
      %v3763 = vrot.slane %v3353, 7
      %v3764 = vrot.slane %v3763, 2
      %v3765 = vrot.slane %v3355, 7
      %v3766 = vrot.slane %v3765, 2
      %v3767 = vrot.slane %v3363, 7
      %v3768 = vrot.slane %v3767, 2
      %v3769 = vrot.slane %v3371, 7
      %v3770 = vrot.slane %v3769, 2
      %v3771 = vrot.slane %v3370, 7
      %v3772 = vrot.slane %v3771, 2
      %v3773 = vrot.slane %v3372, 7
      %v3774 = vrot.slane %v3773, 2
      %v3775 = vrot.slane %v3380, 7
      %v3776 = vrot.slane %v3775, 2
      %v3777 = vrot.slane %v3388, 7
      %v3778 = vrot.slane %v3777, 2
      %v3779 = vrot.slane %v3387, 7
      %v3780 = vrot.slane %v3779, 2
      %v3781 = vrot.slane %v3389, 7
      %v3782 = vrot.slane %v3781, 2
      %v3783 = vrot.slane %v3397, 7
      %v3784 = vrot.slane %v3783, 2
      %v3785 = vrot.slane %v3405, 7
      %v3786 = vrot.slane %v3785, 2
      %v3787 = vrot.slane %v3404, 7
      %v3788 = vrot.slane %v3787, 2
      %v3789 = vrot.slane %v3406, 7
      %v3790 = vrot.slane %v3789, 2
      %v3919 = vmax.f32 %v2870, %v3536
      %v3920 = vmax.f32 %v2878, %v3538
      %v3921 = vmax.f32 %v2877, %v3540
      %v3922 = vmax.f32 %v2879, %v3542
      %v3923 = vmax.f32 %v2887, %v3544
      %v3924 = vmax.f32 %v2895, %v3546
      %v3925 = vmax.f32 %v2894, %v3548
      %v3926 = vmax.f32 %v2896, %v3550
      %v3927 = vmax.f32 %v2904, %v3552
      %v3928 = vmax.f32 %v2912, %v3554
      %v3929 = vmax.f32 %v2911, %v3556
      %v3930 = vmax.f32 %v2913, %v3558
      %v3931 = vmax.f32 %v2921, %v3560
      %v3932 = vmax.f32 %v2929, %v3562
      %v3933 = vmax.f32 %v2928, %v3564
      %v3934 = vmax.f32 %v2930, %v3566
      %v3935 = vmax.f32 %v2938, %v3568
      %v3936 = vmax.f32 %v2946, %v3570
      %v3937 = vmax.f32 %v2945, %v3572
      %v3938 = vmax.f32 %v2947, %v3574
      %v3939 = vmax.f32 %v2955, %v3576
      %v3940 = vmax.f32 %v2963, %v3578
      %v3941 = vmax.f32 %v2962, %v3580
      %v3942 = vmax.f32 %v2964, %v3582
      %v3943 = vmax.f32 %v2972, %v3584
      %v3944 = vmax.f32 %v2980, %v3586
      %v3945 = vmax.f32 %v2979, %v3588
      %v3946 = vmax.f32 %v2981, %v3590
      %v3947 = vmax.f32 %v2989, %v3592
      %v3948 = vmax.f32 %v2997, %v3594
      %v3949 = vmax.f32 %v2996, %v3596
      %v3950 = vmax.f32 %v2998, %v3598
      %v3951 = vmax.f32 %v3006, %v3600
      %v3952 = vmax.f32 %v3014, %v3602
      %v3953 = vmax.f32 %v3013, %v3604
      %v3954 = vmax.f32 %v3015, %v3606
      %v3955 = vmax.f32 %v3023, %v3608
      %v3956 = vmax.f32 %v3031, %v3610
      %v3957 = vmax.f32 %v3030, %v3612
      %v3958 = vmax.f32 %v3032, %v3614
      %v3959 = vmax.f32 %v3040, %v3616
      %v3960 = vmax.f32 %v3048, %v3618
      %v3961 = vmax.f32 %v3047, %v3620
      %v3962 = vmax.f32 %v3049, %v3622
      %v3963 = vmax.f32 %v3057, %v3624
      %v3964 = vmax.f32 %v3065, %v3626
      %v3965 = vmax.f32 %v3064, %v3628
      %v3966 = vmax.f32 %v3066, %v3630
      %v3967 = vmax.f32 %v3074, %v3632
      %v3968 = vmax.f32 %v3082, %v3634
      %v3969 = vmax.f32 %v3081, %v3636
      %v3970 = vmax.f32 %v3083, %v3638
      %v3971 = vmax.f32 %v3091, %v3640
      %v3972 = vmax.f32 %v3099, %v3642
      %v3973 = vmax.f32 %v3098, %v3644
      %v3974 = vmax.f32 %v3100, %v3646
      %v3975 = vmax.f32 %v3108, %v3648
      %v3976 = vmax.f32 %v3116, %v3650
      %v3977 = vmax.f32 %v3115, %v3652
      %v3978 = vmax.f32 %v3117, %v3654
      %v3979 = vmax.f32 %v3125, %v3656
      %v3980 = vmax.f32 %v3133, %v3658
      %v3981 = vmax.f32 %v3132, %v3660
      %v3982 = vmax.f32 %v3134, %v3662
      %v3983 = vmax.f32 %v3142, %v3664
      %v3984 = vmax.f32 %v3150, %v3666
      %v3985 = vmax.f32 %v3149, %v3668
      %v3986 = vmax.f32 %v3151, %v3670
      %v3987 = vmax.f32 %v3159, %v3672
      %v3988 = vmax.f32 %v3167, %v3674
      %v3989 = vmax.f32 %v3166, %v3676
      %v3990 = vmax.f32 %v3168, %v3678
      %v3991 = vmax.f32 %v3176, %v3680
      %v3992 = vmax.f32 %v3184, %v3682
      %v3993 = vmax.f32 %v3183, %v3684
      %v3994 = vmax.f32 %v3185, %v3686
      %v3995 = vmax.f32 %v3193, %v3688
      %v3996 = vmax.f32 %v3201, %v3690
      %v3997 = vmax.f32 %v3200, %v3692
      %v3998 = vmax.f32 %v3202, %v3694
      %v3999 = vmax.f32 %v3210, %v3696
      %v4000 = vmax.f32 %v3218, %v3698
      %v4001 = vmax.f32 %v3217, %v3700
      %v4002 = vmax.f32 %v3219, %v3702
      %v4003 = vmax.f32 %v3227, %v3704
      %v4004 = vmax.f32 %v3235, %v3706
      %v4005 = vmax.f32 %v3234, %v3708
      %v4006 = vmax.f32 %v3236, %v3710
      %v4007 = vmax.f32 %v3244, %v3712
      %v4008 = vmax.f32 %v3252, %v3714
      %v4009 = vmax.f32 %v3251, %v3716
      %v4010 = vmax.f32 %v3253, %v3718
      %v4011 = vmax.f32 %v3261, %v3720
      %v4012 = vmax.f32 %v3269, %v3722
      %v4013 = vmax.f32 %v3268, %v3724
      %v4014 = vmax.f32 %v3270, %v3726
      %v4015 = vmax.f32 %v3278, %v3728
      %v4016 = vmax.f32 %v3286, %v3730
      %v4017 = vmax.f32 %v3285, %v3732
      %v4018 = vmax.f32 %v3287, %v3734
      %v4019 = vmax.f32 %v3295, %v3736
      %v4020 = vmax.f32 %v3303, %v3738
      %v4021 = vmax.f32 %v3302, %v3740
      %v4022 = vmax.f32 %v3304, %v3742
      %v4023 = vmax.f32 %v3312, %v3744
      %v4024 = vmax.f32 %v3320, %v3746
      %v4025 = vmax.f32 %v3319, %v3748
      %v4026 = vmax.f32 %v3321, %v3750
      %v4027 = vmax.f32 %v3329, %v3752
      %v4028 = vmax.f32 %v3337, %v3754
      %v4029 = vmax.f32 %v3336, %v3756
      %v4030 = vmax.f32 %v3338, %v3758
      %v4031 = vmax.f32 %v3346, %v3760
      %v4032 = vmax.f32 %v3354, %v3762
      %v4033 = vmax.f32 %v3353, %v3764
      %v4034 = vmax.f32 %v3355, %v3766
      %v4035 = vmax.f32 %v3363, %v3768
      %v4036 = vmax.f32 %v3371, %v3770
      %v4037 = vmax.f32 %v3370, %v3772
      %v4038 = vmax.f32 %v3372, %v3774
      %v4039 = vmax.f32 %v3380, %v3776
      %v4040 = vmax.f32 %v3388, %v3778
      %v4041 = vmax.f32 %v3387, %v3780
      %v4042 = vmax.f32 %v3389, %v3782
      %v4043 = vmax.f32 %v3397, %v3784
      %v4044 = vmax.f32 %v3405, %v3786
      %v4045 = vmax.f32 %v3404, %v3788
      %v4046 = vmax.f32 %v3406, %v3790
      %v4047 = vmax.f32 %v3919, %v3927
      %v4048 = vmax.f32 %v3920, %v3928
      %v4049 = vmax.f32 %v3921, %v3929
      %v4050 = vmax.f32 %v3922, %v3930
      %v4051 = vmax.f32 %v3923, %v3931
      %v4052 = vmax.f32 %v3924, %v3932
      %v4053 = vmax.f32 %v3925, %v3933
      %v4054 = vmax.f32 %v3926, %v3934
      %v4055 = vmax.f32 %v3935, %v3943
      %v4056 = vmax.f32 %v3936, %v3944
      %v4057 = vmax.f32 %v3937, %v3945
      %v4058 = vmax.f32 %v3938, %v3946
      %v4059 = vmax.f32 %v3939, %v3947
      %v4060 = vmax.f32 %v3940, %v3948
      %v4061 = vmax.f32 %v3941, %v3949
      %v4062 = vmax.f32 %v3942, %v3950
      %v4063 = vmax.f32 %v3951, %v3959
      %v4064 = vmax.f32 %v3952, %v3960
      %v4065 = vmax.f32 %v3953, %v3961
      %v4066 = vmax.f32 %v3954, %v3962
      %v4067 = vmax.f32 %v3955, %v3963
      %v4068 = vmax.f32 %v3956, %v3964
      %v4069 = vmax.f32 %v3957, %v3965
      %v4070 = vmax.f32 %v3958, %v3966
      %v4071 = vmax.f32 %v3967, %v3975
      %v4072 = vmax.f32 %v3968, %v3976
      %v4073 = vmax.f32 %v3969, %v3977
      %v4074 = vmax.f32 %v3970, %v3978
      %v4075 = vmax.f32 %v3971, %v3979
      %v4076 = vmax.f32 %v3972, %v3980
      %v4077 = vmax.f32 %v3973, %v3981
      %v4078 = vmax.f32 %v3974, %v3982
      %v4079 = vmax.f32 %v3983, %v3991
      %v4080 = vmax.f32 %v3984, %v3992
      %v4081 = vmax.f32 %v3985, %v3993
      %v4082 = vmax.f32 %v3986, %v3994
      %v4083 = vmax.f32 %v3987, %v3995
      %v4084 = vmax.f32 %v3988, %v3996
      %v4085 = vmax.f32 %v3989, %v3997
      %v4086 = vmax.f32 %v3990, %v3998
      %v4087 = vmax.f32 %v3999, %v4007
      %v4088 = vmax.f32 %v4000, %v4008
      %v4089 = vmax.f32 %v4001, %v4009
      %v4090 = vmax.f32 %v4002, %v4010
      %v4091 = vmax.f32 %v4003, %v4011
      %v4092 = vmax.f32 %v4004, %v4012
      %v4093 = vmax.f32 %v4005, %v4013
      %v4094 = vmax.f32 %v4006, %v4014
      %v4095 = vmax.f32 %v4015, %v4023
      %v4096 = vmax.f32 %v4016, %v4024
      %v4097 = vmax.f32 %v4017, %v4025
      %v4098 = vmax.f32 %v4018, %v4026
      %v4099 = vmax.f32 %v4019, %v4027
      %v4100 = vmax.f32 %v4020, %v4028
      %v4101 = vmax.f32 %v4021, %v4029
      %v4102 = vmax.f32 %v4022, %v4030
      %v4103 = vmax.f32 %v4031, %v4039
      %v4104 = vmax.f32 %v4032, %v4040
      %v4105 = vmax.f32 %v4033, %v4041
      %v4106 = vmax.f32 %v4034, %v4042
      %v4107 = vmax.f32 %v4035, %v4043
      %v4108 = vmax.f32 %v4036, %v4044
      %v4109 = vmax.f32 %v4037, %v4045
      %v4110 = vmax.f32 %v4038, %v4046
      %v4111 = vpack.c.bf16 %v4047, %v4047
      %v4112 = vpack.c.bf16 %v4048, %v4048
      %v4113 = vpack.c.bf16 %v4049, %v4049
      %v4114 = vpack.c.bf16 %v4050, %v4050
      %v4115 = vpack.c.bf16 %v4051, %v4051
      %v4116 = vpack.c.bf16 %v4052, %v4052
      %v4117 = vpack.c.bf16 %v4053, %v4053
      %v4118 = vpack.c.bf16 %v4054, %v4054
      %v4119 = vpack.c.bf16 %v4055, %v4055
      %v4120 = vpack.c.bf16 %v4056, %v4056
      %v4121 = vpack.c.bf16 %v4057, %v4057
      %v4122 = vpack.c.bf16 %v4058, %v4058
      %v4123 = vpack.c.bf16 %v4059, %v4059
      %v4124 = vpack.c.bf16 %v4060, %v4060
      %v4125 = vpack.c.bf16 %v4061, %v4061
      %v4126 = vpack.c.bf16 %v4062, %v4062
      %v4127 = vpack.c.bf16 %v4063, %v4063
      %v4128 = vpack.c.bf16 %v4064, %v4064
      %v4129 = vpack.c.bf16 %v4065, %v4065
      %v4130 = vpack.c.bf16 %v4066, %v4066
      %v4131 = vpack.c.bf16 %v4067, %v4067
      %v4132 = vpack.c.bf16 %v4068, %v4068
      %v4133 = vpack.c.bf16 %v4069, %v4069
      %v4134 = vpack.c.bf16 %v4070, %v4070
      %v4135 = vpack.c.bf16 %v4071, %v4071
      %v4136 = vpack.c.bf16 %v4072, %v4072
      %v4137 = vpack.c.bf16 %v4073, %v4073
      %v4138 = vpack.c.bf16 %v4074, %v4074
      %v4139 = vpack.c.bf16 %v4075, %v4075
      %v4140 = vpack.c.bf16 %v4076, %v4076
      %v4141 = vpack.c.bf16 %v4077, %v4077
      %v4142 = vpack.c.bf16 %v4078, %v4078
      %v4143 = vpack.c.bf16 %v4079, %v4079
      %v4144 = vpack.c.bf16 %v4080, %v4080
      %v4145 = vpack.c.bf16 %v4081, %v4081
      %v4146 = vpack.c.bf16 %v4082, %v4082
      %v4147 = vpack.c.bf16 %v4083, %v4083
      %v4148 = vpack.c.bf16 %v4084, %v4084
      %v4149 = vpack.c.bf16 %v4085, %v4085
      %v4150 = vpack.c.bf16 %v4086, %v4086
      %v4151 = vpack.c.bf16 %v4087, %v4087
      %v4152 = vpack.c.bf16 %v4088, %v4088
      %v4153 = vpack.c.bf16 %v4089, %v4089
      %v4154 = vpack.c.bf16 %v4090, %v4090
      %v4155 = vpack.c.bf16 %v4091, %v4091
      %v4156 = vpack.c.bf16 %v4092, %v4092
      %v4157 = vpack.c.bf16 %v4093, %v4093
      %v4158 = vpack.c.bf16 %v4094, %v4094
      %v4159 = vpack.c.bf16 %v4095, %v4095
      %v4160 = vpack.c.bf16 %v4096, %v4096
      %v4161 = vpack.c.bf16 %v4097, %v4097
      %v4162 = vpack.c.bf16 %v4098, %v4098
      %v4163 = vpack.c.bf16 %v4099, %v4099
      %v4164 = vpack.c.bf16 %v4100, %v4100
      %v4165 = vpack.c.bf16 %v4101, %v4101
      %v4166 = vpack.c.bf16 %v4102, %v4102
      %v4167 = vpack.c.bf16 %v4103, %v4103
      %v4168 = vpack.c.bf16 %v4104, %v4104
      %v4169 = vpack.c.bf16 %v4105, %v4105
      %v4170 = vpack.c.bf16 %v4106, %v4106
      %v4171 = vpack.c.bf16 %v4107, %v4107
      %v4172 = vpack.c.bf16 %v4108, %v4108
      %v4173 = vpack.c.bf16 %v4109, %v4109
      %v4174 = vpack.c.bf16 %v4110, %v4110
      %v4239 = vunpack.c.l.b16 %v4111
      %v4240 = vunpack.c.l.b16 %v4112
      %v4241 = vunpack.c.l.b16 %v4113
      %v4242 = vunpack.c.l.b16 %v4114
      %v4243 = vunpack.c.l.b16 %v4115
      %v4244 = vunpack.c.l.b16 %v4116
      %v4245 = vunpack.c.l.b16 %v4117
      %v4246 = vunpack.c.l.b16 %v4118
      %v4247 = vunpack.c.l.b16 %v4119
      %v4248 = vunpack.c.l.b16 %v4120
      %v4249 = vunpack.c.l.b16 %v4121
      %v4250 = vunpack.c.l.b16 %v4122
      %v4251 = vunpack.c.l.b16 %v4123
      %v4252 = vunpack.c.l.b16 %v4124
      %v4253 = vunpack.c.l.b16 %v4125
      %v4254 = vunpack.c.l.b16 %v4126
      %v4255 = vunpack.c.l.b16 %v4127
      %v4256 = vunpack.c.l.b16 %v4128
      %v4257 = vunpack.c.l.b16 %v4129
      %v4258 = vunpack.c.l.b16 %v4130
      %v4259 = vunpack.c.l.b16 %v4131
      %v4260 = vunpack.c.l.b16 %v4132
      %v4261 = vunpack.c.l.b16 %v4133
      %v4262 = vunpack.c.l.b16 %v4134
      %v4263 = vunpack.c.l.b16 %v4135
      %v4264 = vunpack.c.l.b16 %v4136
      %v4265 = vunpack.c.l.b16 %v4137
      %v4266 = vunpack.c.l.b16 %v4138
      %v4267 = vunpack.c.l.b16 %v4139
      %v4268 = vunpack.c.l.b16 %v4140
      %v4269 = vunpack.c.l.b16 %v4141
      %v4270 = vunpack.c.l.b16 %v4142
      %v4271 = vunpack.c.l.b16 %v4143
      %v4272 = vunpack.c.l.b16 %v4144
      %v4273 = vunpack.c.l.b16 %v4145
      %v4274 = vunpack.c.l.b16 %v4146
      %v4275 = vunpack.c.l.b16 %v4147
      %v4276 = vunpack.c.l.b16 %v4148
      %v4277 = vunpack.c.l.b16 %v4149
      %v4278 = vunpack.c.l.b16 %v4150
      %v4279 = vunpack.c.l.b16 %v4151
      %v4280 = vunpack.c.l.b16 %v4152
      %v4281 = vunpack.c.l.b16 %v4153
      %v4282 = vunpack.c.l.b16 %v4154
      %v4283 = vunpack.c.l.b16 %v4155
      %v4284 = vunpack.c.l.b16 %v4156
      %v4285 = vunpack.c.l.b16 %v4157
      %v4286 = vunpack.c.l.b16 %v4158
      %v4287 = vunpack.c.l.b16 %v4159
      %v4288 = vunpack.c.l.b16 %v4160
      %v4289 = vunpack.c.l.b16 %v4161
      %v4290 = vunpack.c.l.b16 %v4162
      %v4291 = vunpack.c.l.b16 %v4163
      %v4292 = vunpack.c.l.b16 %v4164
      %v4293 = vunpack.c.l.b16 %v4165
      %v4294 = vunpack.c.l.b16 %v4166
      %v4295 = vunpack.c.l.b16 %v4167
      %v4296 = vunpack.c.l.b16 %v4168
      %v4297 = vunpack.c.l.b16 %v4169
      %v4298 = vunpack.c.l.b16 %v4170
      %v4299 = vunpack.c.l.b16 %v4171
      %v4300 = vunpack.c.l.b16 %v4172
      %v4301 = vunpack.c.l.b16 %v4173
      %v4302 = vunpack.c.l.b16 %v4174
      %v4303 = vpack.c.b16 %v4239, %v4239
      %v4304 = vpack.c.b16 %v4240, %v4240
      %v4305 = vpack.c.b16 %v4241, %v4241
      %v4306 = vpack.c.b16 %v4242, %v4242
      %v4307 = vpack.c.b16 %v4243, %v4243
      %v4308 = vpack.c.b16 %v4244, %v4244
      %v4309 = vpack.c.b16 %v4245, %v4245
      %v4310 = vpack.c.b16 %v4246, %v4246
      %v4311 = vpack.c.b16 %v4247, %v4247
      %v4312 = vpack.c.b16 %v4248, %v4248
      %v4313 = vpack.c.b16 %v4249, %v4249
      %v4314 = vpack.c.b16 %v4250, %v4250
      %v4315 = vpack.c.b16 %v4251, %v4251
      %v4316 = vpack.c.b16 %v4252, %v4252
      %v4317 = vpack.c.b16 %v4253, %v4253
      %v4318 = vpack.c.b16 %v4254, %v4254
      %v4319 = vpack.c.b16 %v4255, %v4255
      %v4320 = vpack.c.b16 %v4256, %v4256
      %v4321 = vpack.c.b16 %v4257, %v4257
      %v4322 = vpack.c.b16 %v4258, %v4258
      %v4323 = vpack.c.b16 %v4259, %v4259
      %v4324 = vpack.c.b16 %v4260, %v4260
      %v4325 = vpack.c.b16 %v4261, %v4261
      %v4326 = vpack.c.b16 %v4262, %v4262
      %v4327 = vpack.c.b16 %v4263, %v4263
      %v4328 = vpack.c.b16 %v4264, %v4264
      %v4329 = vpack.c.b16 %v4265, %v4265
      %v4330 = vpack.c.b16 %v4266, %v4266
      %v4331 = vpack.c.b16 %v4267, %v4267
      %v4332 = vpack.c.b16 %v4268, %v4268
      %v4333 = vpack.c.b16 %v4269, %v4269
      %v4334 = vpack.c.b16 %v4270, %v4270
      %v4335 = vpack.c.b16 %v4271, %v4271
      %v4336 = vpack.c.b16 %v4272, %v4272
      %v4337 = vpack.c.b16 %v4273, %v4273
      %v4338 = vpack.c.b16 %v4274, %v4274
      %v4339 = vpack.c.b16 %v4275, %v4275
      %v4340 = vpack.c.b16 %v4276, %v4276
      %v4341 = vpack.c.b16 %v4277, %v4277
      %v4342 = vpack.c.b16 %v4278, %v4278
      %v4343 = vpack.c.b16 %v4279, %v4279
      %v4344 = vpack.c.b16 %v4280, %v4280
      %v4345 = vpack.c.b16 %v4281, %v4281
      %v4346 = vpack.c.b16 %v4282, %v4282
      %v4347 = vpack.c.b16 %v4283, %v4283
      %v4348 = vpack.c.b16 %v4284, %v4284
      %v4349 = vpack.c.b16 %v4285, %v4285
      %v4350 = vpack.c.b16 %v4286, %v4286
      %v4351 = vpack.c.b16 %v4287, %v4287
      %v4352 = vpack.c.b16 %v4288, %v4288
      %v4353 = vpack.c.b16 %v4289, %v4289
      %v4354 = vpack.c.b16 %v4290, %v4290
      %v4355 = vpack.c.b16 %v4291, %v4291
      %v4356 = vpack.c.b16 %v4292, %v4292
      %v4357 = vpack.c.b16 %v4293, %v4293
      %v4358 = vpack.c.b16 %v4294, %v4294
      %v4359 = vpack.c.b16 %v4295, %v4295
      %v4360 = vpack.c.b16 %v4296, %v4296
      %v4361 = vpack.c.b16 %v4297, %v4297
      %v4362 = vpack.c.b16 %v4298, %v4298
      %v4363 = vpack.c.b16 %v4299, %v4299
      %v4364 = vpack.c.b16 %v4300, %v4300
      %v4365 = vpack.c.b16 %v4301, %v4301
      %v4366 = vpack.c.b16 %v4302, %v4302
      %v4367 = vunpack.c.l.b16 %v4303
      %v4368 = vunpack.c.l.b16 %v4304
      %v4369 = vunpack.c.l.b16 %v4305
      %v4370 = vunpack.c.l.b16 %v4306
      %v4371 = vunpack.c.l.b16 %v4307
      %v4372 = vunpack.c.l.b16 %v4308
      %v4373 = vunpack.c.l.b16 %v4309
      %v4374 = vunpack.c.l.b16 %v4310
      %v4375 = vunpack.c.l.b16 %v4311
      %v4376 = vunpack.c.l.b16 %v4312
      %v4377 = vunpack.c.l.b16 %v4313
      %v4378 = vunpack.c.l.b16 %v4314
      %v4379 = vunpack.c.l.b16 %v4315
      %v4380 = vunpack.c.l.b16 %v4316
      %v4381 = vunpack.c.l.b16 %v4317
      %v4382 = vunpack.c.l.b16 %v4318
      %v4383 = vunpack.c.l.b16 %v4319
      %v4384 = vunpack.c.l.b16 %v4320
      %v4385 = vunpack.c.l.b16 %v4321
      %v4386 = vunpack.c.l.b16 %v4322
      %v4387 = vunpack.c.l.b16 %v4323
      %v4388 = vunpack.c.l.b16 %v4324
      %v4389 = vunpack.c.l.b16 %v4325
      %v4390 = vunpack.c.l.b16 %v4326
      %v4391 = vunpack.c.l.b16 %v4327
      %v4392 = vunpack.c.l.b16 %v4328
      %v4393 = vunpack.c.l.b16 %v4329
      %v4394 = vunpack.c.l.b16 %v4330
      %v4395 = vunpack.c.l.b16 %v4331
      %v4396 = vunpack.c.l.b16 %v4332
      %v4397 = vunpack.c.l.b16 %v4333
      %v4398 = vunpack.c.l.b16 %v4334
      %v4399 = vunpack.c.l.b16 %v4335
      %v4400 = vunpack.c.l.b16 %v4336
      %v4401 = vunpack.c.l.b16 %v4337
      %v4402 = vunpack.c.l.b16 %v4338
      %v4403 = vunpack.c.l.b16 %v4339
      %v4404 = vunpack.c.l.b16 %v4340
      %v4405 = vunpack.c.l.b16 %v4341
      %v4406 = vunpack.c.l.b16 %v4342
      %v4407 = vunpack.c.l.b16 %v4343
      %v4408 = vunpack.c.l.b16 %v4344
      %v4409 = vunpack.c.l.b16 %v4345
      %v4410 = vunpack.c.l.b16 %v4346
      %v4411 = vunpack.c.l.b16 %v4347
      %v4412 = vunpack.c.l.b16 %v4348
      %v4413 = vunpack.c.l.b16 %v4349
      %v4414 = vunpack.c.l.b16 %v4350
      %v4415 = vunpack.c.l.b16 %v4351
      %v4416 = vunpack.c.l.b16 %v4352
      %v4417 = vunpack.c.l.b16 %v4353
      %v4418 = vunpack.c.l.b16 %v4354
      %v4419 = vunpack.c.l.b16 %v4355
      %v4420 = vunpack.c.l.b16 %v4356
      %v4421 = vunpack.c.l.b16 %v4357
      %v4422 = vunpack.c.l.b16 %v4358
      %v4423 = vunpack.c.l.b16 %v4359
      %v4424 = vunpack.c.l.b16 %v4360
      %v4425 = vunpack.c.l.b16 %v4361
      %v4426 = vunpack.c.l.b16 %v4362
      %v4427 = vunpack.c.l.b16 %v4363
      %v4428 = vunpack.c.l.b16 %v4364
      %v4429 = vunpack.c.l.b16 %v4365
      %v4430 = vunpack.c.l.b16 %v4366
      %v4431 = vrot.slane %v4368, 7
      %vm4432 = vcmask 1041409
      %v4433 = vsel %vm4432, %v4431, %v4367
      %v4434 = vrot.slane %v4369, 6
      %vm4435 = vcmask 1042434
      %v4436 = vsel %vm4435, %v4434, %v4433
      %v4437 = vrot.slane %v4370, 5
      %vm4438 = vcmask 1043459
      %v4439 = vsel %vm4438, %v4437, %v4436
      %v4440 = vrot.slane %v4371, 4
      %vm4441 = vcmask 1044484
      %v4442 = vsel %vm4441, %v4440, %v4439
      %v4443 = vrot.slane %v4372, 3
      %vm4444 = vcmask 1045509
      %v4445 = vsel %vm4444, %v4443, %v4442
      %v4446 = vrot.slane %v4373, 2
      %vm4447 = vcmask 1046534
      %v4448 = vsel %vm4447, %v4446, %v4445
      %v4449 = vrot.slane %v4374, 1
      %vm4450 = vcmask 1047559
      %v4451 = vsel %vm4450, %v4449, %v4448
      %v4452 = vrot.slane %v4376, 7
      %v4453 = vsel %vm4432, %v4452, %v4375
      %v4454 = vrot.slane %v4377, 6
      %v4455 = vsel %vm4435, %v4454, %v4453
      %v4456 = vrot.slane %v4378, 5
      %v4457 = vsel %vm4438, %v4456, %v4455
      %v4458 = vrot.slane %v4379, 4
      %v4459 = vsel %vm4441, %v4458, %v4457
      %v4460 = vrot.slane %v4380, 3
      %v4461 = vsel %vm4444, %v4460, %v4459
      %v4462 = vrot.slane %v4381, 2
      %v4463 = vsel %vm4447, %v4462, %v4461
      %v4464 = vrot.slane %v4382, 1
      %v4465 = vsel %vm4450, %v4464, %v4463
      %v4466 = vrot.slane %v4384, 7
      %v4467 = vsel %vm4432, %v4466, %v4383
      %v4468 = vrot.slane %v4385, 6
      %v4469 = vsel %vm4435, %v4468, %v4467
      %v4470 = vrot.slane %v4386, 5
      %v4471 = vsel %vm4438, %v4470, %v4469
      %v4472 = vrot.slane %v4387, 4
      %v4473 = vsel %vm4441, %v4472, %v4471
      %v4474 = vrot.slane %v4388, 3
      %v4475 = vsel %vm4444, %v4474, %v4473
      %v4476 = vrot.slane %v4389, 2
      %v4477 = vsel %vm4447, %v4476, %v4475
      %v4478 = vrot.slane %v4390, 1
      %v4479 = vsel %vm4450, %v4478, %v4477
      %v4480 = vrot.slane %v4392, 7
      %v4481 = vsel %vm4432, %v4480, %v4391
      %v4482 = vrot.slane %v4393, 6
      %v4483 = vsel %vm4435, %v4482, %v4481
      %v4484 = vrot.slane %v4394, 5
      %v4485 = vsel %vm4438, %v4484, %v4483
      %v4486 = vrot.slane %v4395, 4
      %v4487 = vsel %vm4441, %v4486, %v4485
      %v4488 = vrot.slane %v4396, 3
      %v4489 = vsel %vm4444, %v4488, %v4487
      %v4490 = vrot.slane %v4397, 2
      %v4491 = vsel %vm4447, %v4490, %v4489
      %v4492 = vrot.slane %v4398, 1
      %v4493 = vsel %vm4450, %v4492, %v4491
      %v4494 = vrot.slane %v4400, 7
      %v4495 = vsel %vm4432, %v4494, %v4399
      %v4496 = vrot.slane %v4401, 6
      %v4497 = vsel %vm4435, %v4496, %v4495
      %v4498 = vrot.slane %v4402, 5
      %v4499 = vsel %vm4438, %v4498, %v4497
      %v4500 = vrot.slane %v4403, 4
      %v4501 = vsel %vm4441, %v4500, %v4499
      %v4502 = vrot.slane %v4404, 3
      %v4503 = vsel %vm4444, %v4502, %v4501
      %v4504 = vrot.slane %v4405, 2
      %v4505 = vsel %vm4447, %v4504, %v4503
      %v4506 = vrot.slane %v4406, 1
      %v4507 = vsel %vm4450, %v4506, %v4505
      %v4508 = vrot.slane %v4408, 7
      %v4509 = vsel %vm4432, %v4508, %v4407
      %v4510 = vrot.slane %v4409, 6
      %v4511 = vsel %vm4435, %v4510, %v4509
      %v4512 = vrot.slane %v4410, 5
      %v4513 = vsel %vm4438, %v4512, %v4511
      %v4514 = vrot.slane %v4411, 4
      %v4515 = vsel %vm4441, %v4514, %v4513
      %v4516 = vrot.slane %v4412, 3
      %v4517 = vsel %vm4444, %v4516, %v4515
      %v4518 = vrot.slane %v4413, 2
      %v4519 = vsel %vm4447, %v4518, %v4517
      %v4520 = vrot.slane %v4414, 1
      %v4521 = vsel %vm4450, %v4520, %v4519
      %v4522 = vrot.slane %v4416, 7
      %v4523 = vsel %vm4432, %v4522, %v4415
      %v4524 = vrot.slane %v4417, 6
      %v4525 = vsel %vm4435, %v4524, %v4523
      %v4526 = vrot.slane %v4418, 5
      %v4527 = vsel %vm4438, %v4526, %v4525
      %v4528 = vrot.slane %v4419, 4
      %v4529 = vsel %vm4441, %v4528, %v4527
      %v4530 = vrot.slane %v4420, 3
      %v4531 = vsel %vm4444, %v4530, %v4529
      %v4532 = vrot.slane %v4421, 2
      %v4533 = vsel %vm4447, %v4532, %v4531
      %v4534 = vrot.slane %v4422, 1
      %v4535 = vsel %vm4450, %v4534, %v4533
      %v4536 = vrot.slane %v4424, 7
      %v4537 = vsel %vm4432, %v4536, %v4423
      %v4538 = vrot.slane %v4425, 6
      %v4539 = vsel %vm4435, %v4538, %v4537
      %v4540 = vrot.slane %v4426, 5
      %v4541 = vsel %vm4438, %v4540, %v4539
      %v4542 = vrot.slane %v4427, 4
      %v4543 = vsel %vm4441, %v4542, %v4541
      %v4544 = vrot.slane %v4428, 3
      %v4545 = vsel %vm4444, %v4544, %v4543
      %v4546 = vrot.slane %v4429, 2
      %v4547 = vsel %vm4447, %v4546, %v4545
      %v4548 = vrot.slane %v4430, 1
      %v4549 = vsel %vm4450, %v4548, %v4547
      %v4550 = vpack.c.b16 %v4451, %v4451
      %v4551 = vpack.c.b16 %v4465, %v4465
      %v4552 = vpack.c.b16 %v4479, %v4479
      %v4553 = vpack.c.b16 %v4493, %v4493
      %v4554 = vpack.c.b16 %v4507, %v4507
      %v4555 = vpack.c.b16 %v4521, %v4521
      %v4556 = vpack.c.b16 %v4535, %v4535
      %v4557 = vpack.c.b16 %v4549, %v4549
      %4566 = vst [vmem:[%s170] sm:$0xf] %v4550
      %4567 = vst [vmem:[%s170 + $0x4] sm:$0xf] %v4551
      %4568 = vst [vmem:[%s170 + $0x8] sm:$0xf] %v4552
      %4569 = vst [vmem:[%s170 + $0xc] sm:$0xf] %v4553
      %4570 = vst [vmem:[%s170 + $0x10] sm:$0xf] %v4554
      %4571 = vst [vmem:[%s170 + $0x14] sm:$0xf] %v4555
      %4572 = vst [vmem:[%s170 + $0x18] sm:$0xf] %v4556
      %4573 = vst [vmem:[%s170 + $0x1c] sm:$0xf] %v4557
      %p4574 = scmp.lt.s32.totalorder %s14, 1
      %s4575 = scalar_select %p4574, %s14, 1
      %s4576 = smul.addr %s4575, 8
      %s4577 = smul.addr %s4576, 4
      %s4578 = scalar_lea.vmem %s3, %s4577
      // Predicated region
      $region33: #{vgg_forward.5} parent=31 // pred_check
        %p4579 = pneg %p100
      $region34: #{vgg_forward.5} parent=31 // pred_check_branch
        %4581 = sbr.rel (%p4579) target = $region36
      $region35: #{vgg_forward.5} parent=31 // pred_region
        _
      $region36: #{vgg_forward.5} parent=31 // pred_fallthru
        _
    $region32: #{vgg_forward.5} parent=5 // pred_fallthru
      _
    %p4582 = scmp.le.s32.totalorder 2, %s9
    // Predicated region
    $region37: #{vgg_forward.5} parent=5 // pred_check
      %p4583 = pneg %p4582
    $region38: #{vgg_forward.5} parent=5 // pred_check_branch
      %4585 = sbr.rel (%p4583) target = $region40
    $region39: #{vgg_forward.5} parent=5 // pred_region
      %s4586 = ssub.s32 %s9, 2
      // Predicated region
      $region41: #{vgg_forward.5} parent=39 // pred_check
        %p4587 = pneg %p106
      $region42: #{vgg_forward.5} parent=39 // pred_check_branch
        %4589 = sbr.rel (%p4587) target = $region44
      $region43: #{vgg_forward.5} parent=39 // pred_region
        %p4590 = scmp.lt.s32.totalorder %s15, 1
        %s4591 = scalar_select %p4590, %s15, 1
        %s4592 = smul.addr %s4591, 8
        %s4593 = smul.addr %s4592, 4
        %s4594 = scalar_lea.vmem %s3, %s4593
      $region44: #{vgg_forward.5} parent=39 // pred_fallthru
        _
    $region40: #{vgg_forward.5} parent=5 // pred_fallthru
      _
  $region6: #{vgg_forward.5} parent=0 // loop_footer
    %s13 = sadd.s32 1, %s9
  $region7: #{vgg_forward.5} parent=0 // loop_footer_branch
    %8 = sbr.rel target = $region3
  $region8: #{vgg_forward.5} parent=0 // loop_exit
    _

// kernel: vgg_forward.9
$region0: #{vgg_forward.9}
  #allocation0 [shape = 'u32[]', space=smem, size = 0x4, offset = 0x4, fixed_abs, tag = 'smem constant byte address 0x4 - core index']
  #allocation1 [shape = 'u32[144,128]{1,0:T(1,128)}', space=vmem, size = 0x12000, scoped, tag = 'internal scratch']
  %s0 = inlined_call_operand.vmem [shape: f32[2,512], index: 0, kind: input, shape index: {}]
  %s1 = inlined_call_operand.vmem [shape: bf16[512,10], index: 1, kind: input, shape index: {}]
  %s2 = inlined_call_operand.vmem [shape: f32[1,10], index: 2, kind: input, shape index: {}]
  %s3 = inlined_call_operand.hbm [shape: f32[2,10], index: 3, kind: output, shape index: {}]
  %s4 = sld [smem:[#allocation0]]
  $region22: #{vgg_forward.9} parent=0
    _
  %s6 = ssub.s32 1, %s4
  %s7 = scalar_select 0, %s6, %s4
  $region1: #{vgg_forward.9} parent=0
    #allocation2 [shape = 'u8[1024]{0}', space=vmem, size = 0x400, scoped, tag = 'output window, operand 0, single buffered']
    #allocation3 [shape = 's32[1]{0}', space=sflag, size = 0x4, scoped, tag = 'scoped memory for vgg_forward.9']
    %8 = vsyncpa [#allocation3], 0
    // Predicated region
    $region2: #{vgg_forward.9} parent=1 // pred_check
      _
    $region3: #{vgg_forward.9} parent=1 // pred_check_branch
      %10 = sbr.rel (0) target = $region5
    $region4: #{vgg_forward.9} parent=1 // pred_region
      _
    $region5: #{vgg_forward.9} parent=1 // pred_fallthru
      _
    // Predicated region
    $region6: #{vgg_forward.9} parent=1 // pred_check
      _
    $region7: #{vgg_forward.9} parent=1 // pred_check_branch
      %12 = sbr.rel (0) target = $region9
    $region8: #{vgg_forward.9} parent=1 // pred_region
      _
    $region9: #{vgg_forward.9} parent=1 // pred_fallthru
      _
    // Predicated region
    $region10: #{vgg_forward.9} parent=1 // pred_check
      _
    $region11: #{vgg_forward.9} parent=1 // pred_check_branch
      %14 = sbr.rel (0) target = $region13
    $region12: #{vgg_forward.9} parent=1 // pred_region
      _
    $region13: #{vgg_forward.9} parent=1 // pred_fallthru
      _
    %v16 = vld [vmem:[%s0] sm:$0xff]
    %v18 = vcombine.high %v16, %v16
    %v20 = vunpack.c.l.s4 1983009808
    %v21 = vunpack.c.0.s8 %v20
    %v22 = vlaneseq
    %v23 = vshrl.u32 %v22, 7
    %v24 = vsub.s32 %v21, %v23
    %v25 = vrot.slane %v16, %v24
    %v27 = vunpack.c.l.s4 1983009808
    %v28 = vunpack.c.0.s8 %v27
    %v29 = vlaneseq
    %v30 = vshrl.u32 %v29, 7
    %v31 = vsub.s32 %v28, %v30
    %v32 = vrot.slane %v18, %v31
    %v33 = vcombine.high %v25, %v25
    %v34 = vcombine.high %v32, %v32
    %v39 = vpack.c.bf16 %v25, %v25
    %v40 = vpack.c.bf16 %v33, %v33
    %v41 = vpack.c.bf16 %v32, %v32
    %v42 = vpack.c.bf16 %v34, %v34
    %v43 = vld [vmem:[%s1] sm:$0xf]
    %v44 = vld [vmem:[%s1 + $0x4] sm:$0xf]
    %v45 = vld [vmem:[%s1 + $0x8] sm:$0xf]
    %v46 = vld [vmem:[%s1 + $0xc] sm:$0xf]
    %v47 = vld [vmem:[%s1 + $0x10] sm:$0xf]
    %v48 = vld [vmem:[%s1 + $0x14] sm:$0xf]
    %v49 = vld [vmem:[%s1 + $0x18] sm:$0xf]
    %v50 = vld [vmem:[%s1 + $0x1c] sm:$0xf]
    %v51 = vld [vmem:[%s1 + $0x20] sm:$0xf]
    %v52 = vld [vmem:[%s1 + $0x24] sm:$0xf]
    %v53 = vld [vmem:[%s1 + $0x28] sm:$0xf]
    %v54 = vld [vmem:[%s1 + $0x2c] sm:$0xf]
    %v55 = vld [vmem:[%s1 + $0x30] sm:$0xf]
    %v56 = vld [vmem:[%s1 + $0x34] sm:$0xf]
    %v57 = vld [vmem:[%s1 + $0x38] sm:$0xf]
    %v58 = vld [vmem:[%s1 + $0x3c] sm:$0xf]
    %v59 = vld [vmem:[%s1 + $0x40] sm:$0xf]
    %v60 = vld [vmem:[%s1 + $0x44] sm:$0xf]
    %v61 = vld [vmem:[%s1 + $0x48] sm:$0xf]
    %v62 = vld [vmem:[%s1 + $0x4c] sm:$0xf]
    %v63 = vld [vmem:[%s1 + $0x50] sm:$0xf]
    %v64 = vld [vmem:[%s1 + $0x54] sm:$0xf]
    %v65 = vld [vmem:[%s1 + $0x58] sm:$0xf]
    %v66 = vld [vmem:[%s1 + $0x5c] sm:$0xf]
    %v67 = vld [vmem:[%s1 + $0x60] sm:$0xf]
    %v68 = vld [vmem:[%s1 + $0x64] sm:$0xf]
    %v69 = vld [vmem:[%s1 + $0x68] sm:$0xf]
    %v70 = vld [vmem:[%s1 + $0x6c] sm:$0xf]
    %v71 = vld [vmem:[%s1 + $0x70] sm:$0xf]
    %v72 = vld [vmem:[%s1 + $0x74] sm:$0xf]
    %v73 = vld [vmem:[%s1 + $0x78] sm:$0xf]
    %v74 = vld [vmem:[%s1 + $0x7c] sm:$0xf]
    %v75 = vld [vmem:[%s1 + $0x80] sm:$0xf]
    %v76 = vld [vmem:[%s1 + $0x84] sm:$0xf]
    %v77 = vld [vmem:[%s1 + $0x88] sm:$0xf]
    %v78 = vld [vmem:[%s1 + $0x8c] sm:$0xf]
    %v79 = vld [vmem:[%s1 + $0x90] sm:$0xf]
    %v80 = vld [vmem:[%s1 + $0x94] sm:$0xf]
    %v81 = vld [vmem:[%s1 + $0x98] sm:$0xf]
    %v82 = vld [vmem:[%s1 + $0x9c] sm:$0xf]
    %v83 = vld [vmem:[%s1 + $0xa0] sm:$0xf]
    %v84 = vld [vmem:[%s1 + $0xa4] sm:$0xf]
    %v85 = vld [vmem:[%s1 + $0xa8] sm:$0xf]
    %v86 = vld [vmem:[%s1 + $0xac] sm:$0xf]
    %v87 = vld [vmem:[%s1 + $0xb0] sm:$0xf]
    %v88 = vld [vmem:[%s1 + $0xb4] sm:$0xf]
    %v89 = vld [vmem:[%s1 + $0xb8] sm:$0xf]
    %v90 = vld [vmem:[%s1 + $0xbc] sm:$0xf]
    %v91 = vld [vmem:[%s1 + $0xc0] sm:$0xf]
    %v92 = vld [vmem:[%s1 + $0xc4] sm:$0xf]
    %v93 = vld [vmem:[%s1 + $0xc8] sm:$0xf]
    %v94 = vld [vmem:[%s1 + $0xcc] sm:$0xf]
    %v95 = vld [vmem:[%s1 + $0xd0] sm:$0xf]
    %v96 = vld [vmem:[%s1 + $0xd4] sm:$0xf]
    %v97 = vld [vmem:[%s1 + $0xd8] sm:$0xf]
    %v98 = vld [vmem:[%s1 + $0xdc] sm:$0xf]
    %v99 = vld [vmem:[%s1 + $0xe0] sm:$0xf]
    %v100 = vld [vmem:[%s1 + $0xe4] sm:$0xf]
    %v101 = vld [vmem:[%s1 + $0xe8] sm:$0xf]
    %v102 = vld [vmem:[%s1 + $0xec] sm:$0xf]
    %v103 = vld [vmem:[%s1 + $0xf0] sm:$0xf]
    %v104 = vld [vmem:[%s1 + $0xf4] sm:$0xf]
    %v105 = vld [vmem:[%s1 + $0xf8] sm:$0xf]
    %v106 = vld [vmem:[%s1 + $0xfc] sm:$0xf]
    %v107 = vld [vmem:[%s2] sm:$0x1]
    %v109 = vlaneseq
    %v110 = vshrl.u32 %v109, 7
    %v111 = vsub.s32 0, %v110
    %v112 = vrot.slane %v107, %v111
    %v178 = vunpack.c.l.b16 %v43
    %v179 = vunpack.c.l.b16 %v44
    %v180 = vunpack.c.l.b16 %v45
    %v181 = vunpack.c.l.b16 %v46
    %v182 = vunpack.c.l.b16 %v47
    %v183 = vunpack.c.l.b16 %v48
    %v184 = vunpack.c.l.b16 %v49
    %v185 = vunpack.c.l.b16 %v50
    %v186 = vunpack.c.l.b16 %v51
    %v187 = vunpack.c.l.b16 %v52
    %v188 = vunpack.c.l.b16 %v53
    %v189 = vunpack.c.l.b16 %v54
    %v190 = vunpack.c.l.b16 %v55
    %v191 = vunpack.c.l.b16 %v56
    %v192 = vunpack.c.l.b16 %v57
    %v193 = vunpack.c.l.b16 %v58
    %v194 = vunpack.c.l.b16 %v59
    %v195 = vunpack.c.l.b16 %v60
    %v196 = vunpack.c.l.b16 %v61
    %v197 = vunpack.c.l.b16 %v62
    %v198 = vunpack.c.l.b16 %v63
    %v199 = vunpack.c.l.b16 %v64
    %v200 = vunpack.c.l.b16 %v65
    %v201 = vunpack.c.l.b16 %v66
    %v202 = vunpack.c.l.b16 %v67
    %v203 = vunpack.c.l.b16 %v68
    %v204 = vunpack.c.l.b16 %v69
    %v205 = vunpack.c.l.b16 %v70
    %v206 = vunpack.c.l.b16 %v71
    %v207 = vunpack.c.l.b16 %v72
    %v208 = vunpack.c.l.b16 %v73
    %v209 = vunpack.c.l.b16 %v74
    %v210 = vunpack.c.l.b16 %v75
    %v211 = vunpack.c.l.b16 %v76
    %v212 = vunpack.c.l.b16 %v77
    %v213 = vunpack.c.l.b16 %v78
    %v214 = vunpack.c.l.b16 %v79
    %v215 = vunpack.c.l.b16 %v80
    %v216 = vunpack.c.l.b16 %v81
    %v217 = vunpack.c.l.b16 %v82
    %v218 = vunpack.c.l.b16 %v83
    %v219 = vunpack.c.l.b16 %v84
    %v220 = vunpack.c.l.b16 %v85
    %v221 = vunpack.c.l.b16 %v86
    %v222 = vunpack.c.l.b16 %v87
    %v223 = vunpack.c.l.b16 %v88
    %v224 = vunpack.c.l.b16 %v89
    %v225 = vunpack.c.l.b16 %v90
    %v226 = vunpack.c.l.b16 %v91
    %v227 = vunpack.c.l.b16 %v92
    %v228 = vunpack.c.l.b16 %v93
    %v229 = vunpack.c.l.b16 %v94
    %v230 = vunpack.c.l.b16 %v95
    %v231 = vunpack.c.l.b16 %v96
    %v232 = vunpack.c.l.b16 %v97
    %v233 = vunpack.c.l.b16 %v98
    %v234 = vunpack.c.l.b16 %v99
    %v235 = vunpack.c.l.b16 %v100
    %v236 = vunpack.c.l.b16 %v101
    %v237 = vunpack.c.l.b16 %v102
    %v238 = vunpack.c.l.b16 %v103
    %v239 = vunpack.c.l.b16 %v104
    %v240 = vunpack.c.l.b16 %v105
    %v241 = vunpack.c.l.b16 %v106
    %v242 = vpack.c.b16 %v179, %v178
    %v243 = vpack.c.b16 %v181, %v180
    %v244 = vpack.c.b16 %v183, %v182
    %v245 = vpack.c.b16 %v185, %v184
    %v246 = vpack.c.b16 %v187, %v186
    %v247 = vpack.c.b16 %v189, %v188
    %v248 = vpack.c.b16 %v191, %v190
    %v249 = vpack.c.b16 %v193, %v192
    %v250 = vpack.c.b16 %v195, %v194
    %v251 = vpack.c.b16 %v197, %v196
    %v252 = vpack.c.b16 %v199, %v198
    %v253 = vpack.c.b16 %v201, %v200
    %v254 = vpack.c.b16 %v203, %v202
    %v255 = vpack.c.b16 %v205, %v204
    %v256 = vpack.c.b16 %v207, %v206
    %v257 = vpack.c.b16 %v209, %v208
    %v258 = vpack.c.b16 %v211, %v210
    %v259 = vpack.c.b16 %v213, %v212
    %v260 = vpack.c.b16 %v215, %v214
    %v261 = vpack.c.b16 %v217, %v216
    %v262 = vpack.c.b16 %v219, %v218
    %v263 = vpack.c.b16 %v221, %v220
    %v264 = vpack.c.b16 %v223, %v222
    %v265 = vpack.c.b16 %v225, %v224
    %v266 = vpack.c.b16 %v227, %v226
    %v267 = vpack.c.b16 %v229, %v228
    %v268 = vpack.c.b16 %v231, %v230
    %v269 = vpack.c.b16 %v233, %v232
    %v270 = vpack.c.b16 %v235, %v234
    %v271 = vpack.c.b16 %v237, %v236
    %v272 = vpack.c.b16 %v239, %v238
    %v273 = vpack.c.b16 %v241, %v240
    %306 = vmatprep.subr.bf16.mxu0 0
    %307 = vmatpush1.bf16.msra.mxu0 %v249
    %308 = vmatprep.subr.bf16.mxu0 0
    %309 = vmatpush1.bf16.msra.mxu0 %v248
    %310 = vmatprep.subr.bf16.mxu0 0
    %311 = vmatpush1.bf16.msra.mxu0 %v247
    %312 = vmatprep.subr.bf16.mxu0 0
    %313 = vmatpush1.bf16.msra.mxu0 %v246
    %314 = vmatprep.subr.bf16.mxu0 0
    %315 = vmatpush1.bf16.msra.mxu0 %v245
    %316 = vmatprep.subr.bf16.mxu0 0
    %317 = vmatpush1.bf16.msra.mxu0 %v244
    %318 = vmatprep.subr.bf16.mxu0 0
    %319 = vmatpush1.bf16.msra.mxu0 %v243
    %320 = vmatprep.subr.bf16.mxu0 0
    %321 = vmatpush1.bf16.msra.mxu0 %v242
    %322 = vmatprep.subr.bf16.mxu0 0
    %323 = vmatpush2.bf16.msra.mxu0 %v257
    %324 = vmatprep.subr.bf16.mxu0 0
    %325 = vmatpush2.bf16.msra.mxu0 %v256
    %326 = vmatprep.subr.bf16.mxu0 0
    %327 = vmatpush2.bf16.msra.mxu0 %v255
    %328 = vmatprep.subr.bf16.mxu0 0
    %329 = vmatpush2.bf16.msra.mxu0 %v254
    %330 = vmatprep.subr.bf16.mxu0 0
    %331 = vmatpush2.bf16.msra.mxu0 %v253
    %332 = vmatprep.subr.bf16.mxu0 0
    %333 = vmatpush2.bf16.msra.mxu0 %v252
    %334 = vmatprep.subr.bf16.mxu0 0
    %335 = vmatpush2.bf16.msra.mxu0 %v251
    %336 = vmatprep.subr.bf16.mxu0 0
    %337 = vmatpush2.bf16.msra.mxu0 %v250
    %338 = vmatprep.mubr.bf16.mxu0 %v40
    %339 = vmatmul.mubr.bf16.gmra.mxu0 %v39
    %v340 = vpop.f32.mrf.mxu0
    %v341 = vadd.f32 %v112, %v340
    %v342 = vpop.f32.mrf.mxu0
    %v343 = vpop.f32.mrf.mxu0
    %v344 = vpop.f32.mrf.mxu0
    %345 = vdwg.mxu0
    %346 = vmatprep.subr.bf16.mxu0 0
    %347 = vmatpush1.bf16.msra.mxu0 %v265
    %348 = vmatprep.subr.bf16.mxu0 0
    %349 = vmatpush1.bf16.msra.mxu0 %v264
    %350 = vmatprep.subr.bf16.mxu0 0
    %351 = vmatpush1.bf16.msra.mxu0 %v263
    %352 = vmatprep.subr.bf16.mxu0 0
    %353 = vmatpush1.bf16.msra.mxu0 %v262
    %354 = vmatprep.subr.bf16.mxu0 0
    %355 = vmatpush1.bf16.msra.mxu0 %v261
    %356 = vmatprep.subr.bf16.mxu0 0
    %357 = vmatpush1.bf16.msra.mxu0 %v260
    %358 = vmatprep.subr.bf16.mxu0 0
    %359 = vmatpush1.bf16.msra.mxu0 %v259
    %360 = vmatprep.subr.bf16.mxu0 0
    %361 = vmatpush1.bf16.msra.mxu0 %v258
    %362 = vmatprep.subr.bf16.mxu0 0
    %363 = vmatpush2.bf16.msra.mxu0 %v273
    %364 = vmatprep.subr.bf16.mxu0 0
    %365 = vmatpush2.bf16.msra.mxu0 %v272
    %366 = vmatprep.subr.bf16.mxu0 0
    %367 = vmatpush2.bf16.msra.mxu0 %v271
    %368 = vmatprep.subr.bf16.mxu0 0
    %369 = vmatpush2.bf16.msra.mxu0 %v270
    %370 = vmatprep.subr.bf16.mxu0 0
    %371 = vmatpush2.bf16.msra.mxu0 %v269
    %372 = vmatprep.subr.bf16.mxu0 0
    %373 = vmatpush2.bf16.msra.mxu0 %v268
    %374 = vmatprep.subr.bf16.mxu0 0
    %375 = vmatpush2.bf16.msra.mxu0 %v267
    %376 = vmatprep.subr.bf16.mxu0 0
    %377 = vmatpush2.bf16.msra.mxu0 %v266
    %378 = vmatprep.mubr.bf16.mxu0 %v42
    %379 = vmatmul.mubr.bf16.gmra.mxu0 %v41
    %v380 = vpop.f32.mrf.mxu0
    %v381 = vadd.f32 %v341, %v380
    %v382 = vpop.f32.mrf.mxu0
    %v383 = vpop.f32.mrf.mxu0
    %v384 = vpop.f32.mrf.mxu0
    %385 = vdwg.mxu0
    %vm386 = vcmask 74752
    %387 = vst.msk [vmem:[#allocation2] sm:$0x3] %vm386, %v381
    // Predicated region
    $region14: #{vgg_forward.9} parent=1 // pred_check
      _
    $region15: #{vgg_forward.9} parent=1 // pred_check_branch
      %389 = sbr.rel (0) target = $region17
    $region16: #{vgg_forward.9} parent=1 // pred_region
      %s391 = ssub.s32 32, 32
      %392 = vsyncadd [#allocation3], %s391
      %s394 = sshll.u32 [#allocation2], 4
      %s395 = int_to_ptr.vmem [resolvable:$true] %s394
      %397 = dma.vmem_to_hbm [thread:$0]  %s395, 32, %s3, [#allocation3]
    $region17: #{vgg_forward.9} parent=1 // pred_fallthru
      _
    // Predicated region
    $region18: #{vgg_forward.9} parent=1 // pred_check
      _
    $region19: #{vgg_forward.9} parent=1 // pred_check_branch
      %399 = sbr.rel (0) target = $region21
    $region20: #{vgg_forward.9} parent=1 // pred_region
      %400 = dma.done [#allocation3], 32
    $region21: #{vgg_forward.9} parent=1 // pred_fallthru
      _
    %401 = vsyncpa [#allocation3], 1

// kernel: vgg_forward.8
$region0: #{vgg_forward.8}
  #allocation0 [shape = 'u32[]', space=smem, size = 0x4, offset = 0x4, fixed_abs, tag = 'smem constant byte address 0x4 - core index']
  #allocation1 [shape = 'u32[144,128]{1,0:T(1,128)}', space=vmem, size = 0x12000, scoped, tag = 'internal scratch']
  %s0 = inlined_call_operand.vmem [shape: bf16[2,4,4,128], index: 0, kind: input, shape index: {}]
  %s1 = inlined_call_operand.vmem [shape: bf16[9,128,512], index: 1, kind: input, shape index: {}]
  %s2 = inlined_call_operand.vmem [shape: f32[1,512], index: 2, kind: input, shape index: {}]
  %s3 = inlined_call_operand.vmem [shape: f32[2,1,1,512], index: 3, kind: output, shape index: {}]
  %s4 = sld [smem:[#allocation0]]
  $region45: #{vgg_forward.8} parent=0
    _
  %s6 = ssub.s32 1, %s4
  %s7 = scalar_select 0, %s6, %s4
  loop: start=0, step=1, limit=4
  $region2: #{vgg_forward.8} parent=0 // loop_pre_header
    _
  $region3: #{vgg_forward.8} parent=0 // loop_header
    %s9 = sphi 0, %s13
    %p10 = scmp.ge.s32.totalorder %s9, 4
    %s19 = sphi 0, %s21
    %s22 = sphi 0, %s19
    %s23 = sphi 0, %s22
    %s39 = sphi 0, %s23
    %s43 = sphi 0, %s43
    %s45 = sphi 0, %s43
    %s46 = sphi 0, %s45
    %s60 = sphi 0, %s46
    %s64 = sphi 0, %s64
    %s66 = sphi 0, %s64
    %s67 = sphi 0, %s66
    %s81 = sphi 0, %s67
    %s87 = sphi 0, %s89
    %s90 = sphi 0, %s87
    %s91 = sphi 0, %s90
    %s107 = sphi 0, %s91
  $region4: #{vgg_forward.8} parent=0 // loop_header_branch
    %12 = sbr.rel (%p10) target = $region8
  $region5: #{vgg_forward.8} parent=0 // loop_body
    %s14 = ssub.s32 %s9, 1
    %s15 = ssub.s32 %s9, 2
    %s16 = sadd.s32 %s9, 1
    %s17 = ssub.s32 %s9, %s16
    %p18 = scmp.eq.s32.totalorder %s17, 0
    %s20 = sadd.s32 %s19, 1
    %s21 = scalar_select %p18, %s19, %s20
    %p24 = pneg %p18
    %p25 = scmp.eq.s32.totalorder %s9, 1
    %p26 = por %p24, %p25
    %p27 = scmp.ne.s32.totalorder %s19, %s22
    %p28 = scmp.eq.s32.totalorder %s9, 0
    %p29 = por %p27, %p28
    %p30 = scmp.ne.s32.totalorder %s19, %s22
    %p31 = scmp.eq.s32.totalorder %s14, 1
    %p32 = por %p30, %p31
    %p33 = scmp.ne.s32.totalorder %s22, %s23
    %p34 = scmp.eq.s32.totalorder %s14, 0
    %p35 = por %p33, %p34
    %p36 = scmp.ne.s32.totalorder %s22, %s23
    %p37 = scmp.eq.s32.totalorder %s15, 1
    %p38 = por %p36, %p37
    %p40 = scmp.ne.s32.totalorder %s23, %s39
    %p41 = scmp.eq.s32.totalorder %s15, 0
    %p42 = por %p40, %p41
    %s44 = sadd.s32 %s43, 1
    %p47 = scmp.eq.s32.totalorder %s9, 1
    %p48 = scmp.ne.s32.totalorder %s43, %s45
    %p49 = scmp.eq.s32.totalorder %s9, 0
    %p50 = por %p48, %p49
    %p51 = scmp.ne.s32.totalorder %s43, %s45
    %p52 = scmp.eq.s32.totalorder %s14, 1
    %p53 = por %p51, %p52
    %p54 = scmp.ne.s32.totalorder %s45, %s46
    %p55 = scmp.eq.s32.totalorder %s14, 0
    %p56 = por %p54, %p55
    %p57 = scmp.ne.s32.totalorder %s45, %s46
    %p58 = scmp.eq.s32.totalorder %s15, 1
    %p59 = por %p57, %p58
    %p61 = scmp.ne.s32.totalorder %s46, %s60
    %p62 = scmp.eq.s32.totalorder %s15, 0
    %p63 = por %p61, %p62
    %s65 = sadd.s32 %s64, 1
    %p68 = scmp.eq.s32.totalorder %s9, 1
    %p69 = scmp.ne.s32.totalorder %s64, %s66
    %p70 = scmp.eq.s32.totalorder %s9, 0
    %p71 = por %p69, %p70
    %p72 = scmp.ne.s32.totalorder %s64, %s66
    %p73 = scmp.eq.s32.totalorder %s14, 1
    %p74 = por %p72, %p73
    %p75 = scmp.ne.s32.totalorder %s66, %s67
    %p76 = scmp.eq.s32.totalorder %s14, 0
    %p77 = por %p75, %p76
    %p78 = scmp.ne.s32.totalorder %s66, %s67
    %p79 = scmp.eq.s32.totalorder %s15, 1
    %p80 = por %p78, %p79
    %p82 = scmp.ne.s32.totalorder %s67, %s81
    %p83 = scmp.eq.s32.totalorder %s15, 0
    %p84 = por %p82, %p83
    %s85 = ssub.s32 %s9, %s16
    %p86 = scmp.eq.s32.totalorder %s85, 0
    %s88 = sadd.s32 %s87, 1
    %s89 = scalar_select %p86, %s87, %s88
    %p92 = pneg %p86
    %p93 = scmp.eq.s32.totalorder %s9, 1
    %p94 = por %p92, %p93
    %p95 = scmp.ne.s32.totalorder %s87, %s90
    %p96 = scmp.eq.s32.totalorder %s9, 0
    %p97 = por %p95, %p96
    %p98 = scmp.ne.s32.totalorder %s87, %s90
    %p99 = scmp.eq.s32.totalorder %s14, 1
    %p100 = por %p98, %p99
    %p101 = scmp.ne.s32.totalorder %s90, %s91
    %p102 = scmp.eq.s32.totalorder %s14, 0
    %p103 = por %p101, %p102
    %p104 = scmp.ne.s32.totalorder %s90, %s91
    %p105 = scmp.eq.s32.totalorder %s15, 1
    %p106 = por %p104, %p105
    %p108 = scmp.ne.s32.totalorder %s91, %s107
    %p109 = scmp.eq.s32.totalorder %s15, 0
    %p110 = por %p108, %p109
    %p111 = scmp.le.s32.totalorder 1, %s9
    %p112 = scmp.lt.s32.totalorder %s9, 3
    %p113 = pnand %p111, %p112
    %p114 = pneg %p113
    // Predicated region
    $region9: #{vgg_forward.8} parent=5 // pred_check
      _
    $region10: #{vgg_forward.8} parent=5 // pred_check_branch
      %116 = sbr.rel (%p113) target = $region12
    $region11: #{vgg_forward.8} parent=5 // pred_region
      %s117 = ssub.s32 %s9, 1
      // Predicated region
      $region13: #{vgg_forward.8} parent=11 // pred_check
        %p118 = pneg %p56
      $region14: #{vgg_forward.8} parent=11 // pred_check_branch
        %120 = sbr.rel (%p118) target = $region16
      $region15: #{vgg_forward.8} parent=11 // pred_region
        _
      $region16: #{vgg_forward.8} parent=11 // pred_fallthru
        _
      // Predicated region
      $region17: #{vgg_forward.8} parent=11 // pred_check
        %p121 = pneg %p77
      $region18: #{vgg_forward.8} parent=11 // pred_check_branch
        %123 = sbr.rel (%p121) target = $region20
      $region19: #{vgg_forward.8} parent=11 // pred_region
        _
      $region20: #{vgg_forward.8} parent=11 // pred_fallthru
        _
    $region12: #{vgg_forward.8} parent=5 // pred_fallthru
      _
    %p124 = scmp.lt.s32.totalorder %s9, 2
    // Predicated region
    $region21: #{vgg_forward.8} parent=5 // pred_check
      %p125 = pneg %p124
    $region22: #{vgg_forward.8} parent=5 // pred_check_branch
      %127 = sbr.rel (%p125) target = $region24
    $region23: #{vgg_forward.8} parent=5 // pred_region
      // Predicated region
      $region25: #{vgg_forward.8} parent=23 // pred_check
        %p128 = pneg %p29
      $region26: #{vgg_forward.8} parent=23 // pred_check_branch
        %130 = sbr.rel (%p128) target = $region28
      $region27: #{vgg_forward.8} parent=23 // pred_region
        %p131 = scmp.lt.s32.totalorder %s9, 1
        %s132 = scalar_select %p131, %s9, 1
        %s133 = smul.addr %s132, 4
        %s134 = smul.addr %s133, 2
        %s135 = scalar_lea.vmem %s0, %s134
      $region28: #{vgg_forward.8} parent=23 // pred_fallthru
        _
    $region24: #{vgg_forward.8} parent=5 // pred_fallthru
      _
    %p136 = scmp.le.s32.totalorder 1, %s9
    %p137 = scmp.lt.s32.totalorder %s9, 3
    %p138 = pnand %p136, %p137
    %p139 = pneg %p138
    // Predicated region
    $region29: #{vgg_forward.8} parent=5 // pred_check
      _
    $region30: #{vgg_forward.8} parent=5 // pred_check_branch
      %141 = sbr.rel (%p138) target = $region32
    $region31: #{vgg_forward.8} parent=5 // pred_region
      %s142 = ssub.s32 %s9, 1
      %p143 = scmp.lt.s32.totalorder %s14, 1
      %s144 = scalar_select %p143, %s14, 1
      %s145 = smul.addr %s144, 4
      %s146 = smul.addr %s145, 2
      %s147 = scalar_lea.vmem %s0, %s146
      %p148 = pneg %p35
      %p149 = pneg %p32
      %p150 = pneg %p56
      %p151 = pneg %p53
      %p152 = pneg %p77
      %p153 = pneg %p74
      %p154 = pneg %p103
      %p155 = pneg %p100
      %p156 = scmp.lt.s32.totalorder %s14, 1
      %s157 = scalar_select %p156, %s14, 1
      %s158 = smul.addr %s157, 4
      %s159 = scalar_lea.vmem %s3, %s158
      %p160 = scmp.lt.s32.totalorder %s14, 1
      %s161 = scalar_select %p160, %s14, 1
      %s162 = smul.addr %s161, 4
      %s163 = smul.addr %s162, 2
      %s164 = scalar_lea.vmem %s0, %s163
      %p165 = scmp.lt.s32.totalorder %s14, 1
      %s166 = scalar_select %p165, %s14, 1
      %s167 = smul.addr %s166, 4
      %s168 = scalar_lea.vmem %s3, %s167
      %v170 = vld [vmem:[%s164] sm:$0x1]
      %v171 = vld [vmem:[%s164 + $0x2] sm:$0x1]
      %v172 = vld [vmem:[%s1] sm:$0xff]
      %v173 = vld [vmem:[%s1 + $0x8] sm:$0xff]
      %v174 = vld [vmem:[%s1 + $0x10] sm:$0xff]
      %v175 = vld [vmem:[%s1 + $0x18] sm:$0xff]
      %v176 = vld [vmem:[%s1 + $0x20] sm:$0xff]
      %v177 = vld [vmem:[%s1 + $0x28] sm:$0xff]
      %v178 = vld [vmem:[%s1 + $0x30] sm:$0xff]
      %v179 = vld [vmem:[%s1 + $0x38] sm:$0xff]
      %v180 = vld [vmem:[%s1 + $0x40] sm:$0xff]
      %v181 = vld [vmem:[%s1 + $0x48] sm:$0xff]
      %v182 = vld [vmem:[%s1 + $0x50] sm:$0xff]
      %v183 = vld [vmem:[%s1 + $0x58] sm:$0xff]
      %v184 = vld [vmem:[%s1 + $0x60] sm:$0xff]
      %v185 = vld [vmem:[%s1 + $0x68] sm:$0xff]
      %v186 = vld [vmem:[%s1 + $0x70] sm:$0xff]
      %v187 = vld [vmem:[%s1 + $0x78] sm:$0xff]
      %v188 = vld [vmem:[%s1 + $0x80] sm:$0xff]
      %v189 = vld [vmem:[%s1 + $0x88] sm:$0xff]
      %v190 = vld [vmem:[%s1 + $0x90] sm:$0xff]
      %v191 = vld [vmem:[%s1 + $0x98] sm:$0xff]
      %v192 = vld [vmem:[%s1 + $0xa0] sm:$0xff]
      %v193 = vld [vmem:[%s1 + $0xa8] sm:$0xff]
      %v194 = vld [vmem:[%s1 + $0xb0] sm:$0xff]
      %v195 = vld [vmem:[%s1 + $0xb8] sm:$0xff]
      %v196 = vld [vmem:[%s1 + $0xc0] sm:$0xff]
      %v197 = vld [vmem:[%s1 + $0xc8] sm:$0xff]
      %v198 = vld [vmem:[%s1 + $0xd0] sm:$0xff]
      %v199 = vld [vmem:[%s1 + $0xd8] sm:$0xff]
      %v200 = vld [vmem:[%s1 + $0xe0] sm:$0xff]
      %v201 = vld [vmem:[%s1 + $0xe8] sm:$0xff]
      %v202 = vld [vmem:[%s1 + $0xf0] sm:$0xff]
      %v203 = vld [vmem:[%s1 + $0xf8] sm:$0xff]
      %v204 = vld [vmem:[%s164] sm:$0x3]
      %v205 = vld [vmem:[%s164 + $0x2] sm:$0x3]
      %v209 = vunpack.c.l.s4 1966171168
      %v210 = vunpack.c.0.s8 %v209
      %v211 = vlaneseq
      %v212 = vshrl.u32 %v211, 7
      %v213 = vsub.s32 %v210, %v212
      %v214 = vrot.slane %v204, %v213
      %v215 = vcombine.high %v214, %v214
      %v217 = vunpack.c.l.s4 1966171168
      %v218 = vunpack.c.0.s8 %v217
      %v219 = vlaneseq
      %v220 = vshrl.u32 %v219, 7
      %v221 = vsub.s32 %v218, %v220
      %v222 = vrot.slane %v205, %v221
      %v223 = vcombine.high %v222, %v222
      %vm224 = vsmask.f32 256
      %vm225 = vsmask.f32 1284
      %vm226 = vmor %vm224, %vm225
      %vm227 = vsmask.f32 2312
      %vm228 = vmor %vm226, %vm227
      %vm229 = vsmask.f32 3340
      %vm230 = vmor %vm228, %vm229
      %vm231 = vsmask.f32 4368
      %vm232 = vmor %vm230, %vm231
      %vm233 = vsmask.f32 5396
      %vm234 = vmor %vm232, %vm233
      %vm235 = vsmask.f32 6424
      %vm236 = vmor %vm234, %vm235
      %vm237 = vsmask.f32 7452
      %vm238 = vmor %vm236, %vm237
      %v240 = vshrl.u32 %v214, 16
      %v242 = vrot.slane %v240, 7
      %v243 = vrot.slane %v242, 1
      %v245 = vshll.u32 %v215, 16
      %v247 = vsel %vm238, %v243, %v245
      %v249 = vshrl.u32 %v222, 16
      %v251 = vrot.slane %v249, 7
      %v252 = vrot.slane %v251, 1
      %v254 = vshll.u32 %v223, 16
      %v256 = vsel %vm238, %v252, %v254
      %s257 = scalar_lea.vmem %s1, 256
      %v258 = vld [vmem:[%s257] sm:$0xff]
      %v259 = vld [vmem:[%s257 + $0x8] sm:$0xff]
      %v260 = vld [vmem:[%s257 + $0x10] sm:$0xff]
      %v261 = vld [vmem:[%s257 + $0x18] sm:$0xff]
      %v262 = vld [vmem:[%s257 + $0x20] sm:$0xff]
      %v263 = vld [vmem:[%s257 + $0x28] sm:$0xff]
      %v264 = vld [vmem:[%s257 + $0x30] sm:$0xff]
      %v265 = vld [vmem:[%s257 + $0x38] sm:$0xff]
      %v266 = vld [vmem:[%s257 + $0x40] sm:$0xff]
      %v267 = vld [vmem:[%s257 + $0x48] sm:$0xff]
      %v268 = vld [vmem:[%s257 + $0x50] sm:$0xff]
      %v269 = vld [vmem:[%s257 + $0x58] sm:$0xff]
      %v270 = vld [vmem:[%s257 + $0x60] sm:$0xff]
      %v271 = vld [vmem:[%s257 + $0x68] sm:$0xff]
      %v272 = vld [vmem:[%s257 + $0x70] sm:$0xff]
      %v273 = vld [vmem:[%s257 + $0x78] sm:$0xff]
      %v274 = vld [vmem:[%s257 + $0x80] sm:$0xff]
      %v275 = vld [vmem:[%s257 + $0x88] sm:$0xff]
      %v276 = vld [vmem:[%s257 + $0x90] sm:$0xff]
      %v277 = vld [vmem:[%s257 + $0x98] sm:$0xff]
      %v278 = vld [vmem:[%s257 + $0xa0] sm:$0xff]
      %v279 = vld [vmem:[%s257 + $0xa8] sm:$0xff]
      %v280 = vld [vmem:[%s257 + $0xb0] sm:$0xff]
      %v281 = vld [vmem:[%s257 + $0xb8] sm:$0xff]
      %v282 = vld [vmem:[%s257 + $0xc0] sm:$0xff]
      %v283 = vld [vmem:[%s257 + $0xc8] sm:$0xff]
      %v284 = vld [vmem:[%s257 + $0xd0] sm:$0xff]
      %v285 = vld [vmem:[%s257 + $0xd8] sm:$0xff]
      %v286 = vld [vmem:[%s257 + $0xe0] sm:$0xff]
      %v287 = vld [vmem:[%s257 + $0xe8] sm:$0xff]
      %v288 = vld [vmem:[%s257 + $0xf0] sm:$0xff]
      %v289 = vld [vmem:[%s257 + $0xf8] sm:$0xff]
      %v290 = vcombine.low %v247, %v256
      %v292 = vunpack.c.l.s4 1966171168
      %v293 = vunpack.c.0.s8 %v292
      %v294 = vlaneseq
      %v295 = vshrl.u32 %v294, 7
      %v296 = vsub.s32 %v293, %v295
      %v297 = vrot.slane %v290, %v296
      %v299 = vunpack.c.l.s4 1966171168
      %v300 = vunpack.c.0.s8 %v299
      %v301 = vlaneseq
      %v302 = vshrl.u32 %v301, 7
      %v303 = vsub.s32 %v300, %v302
      %v304 = vrot.slane %v297, %v303
      %v338 = vunpack.c.l.b16 %v258
      %v339 = vunpack.c.h.b16 %v258
      %v340 = vunpack.c.l.b16 %v259
      %v341 = vunpack.c.h.b16 %v259
      %v342 = vunpack.c.l.b16 %v260
      %v343 = vunpack.c.h.b16 %v260
      %v344 = vunpack.c.l.b16 %v261
      %v345 = vunpack.c.h.b16 %v261
      %v346 = vunpack.c.l.b16 %v262
      %v347 = vunpack.c.h.b16 %v262
      %v348 = vunpack.c.l.b16 %v263
      %v349 = vunpack.c.h.b16 %v263
      %v350 = vunpack.c.l.b16 %v264
      %v351 = vunpack.c.h.b16 %v264
      %v352 = vunpack.c.l.b16 %v265
      %v353 = vunpack.c.h.b16 %v265
      %v354 = vunpack.c.l.b16 %v266
      %v355 = vunpack.c.h.b16 %v266
      %v356 = vunpack.c.l.b16 %v267
      %v357 = vunpack.c.h.b16 %v267
      %v358 = vunpack.c.l.b16 %v268
      %v359 = vunpack.c.h.b16 %v268
      %v360 = vunpack.c.l.b16 %v269
      %v361 = vunpack.c.h.b16 %v269
      %v362 = vunpack.c.l.b16 %v270
      %v363 = vunpack.c.h.b16 %v270
      %v364 = vunpack.c.l.b16 %v271
      %v365 = vunpack.c.h.b16 %v271
      %v366 = vunpack.c.l.b16 %v272
      %v367 = vunpack.c.h.b16 %v272
      %v368 = vunpack.c.l.b16 %v273
      %v369 = vunpack.c.h.b16 %v273
      %v370 = vunpack.c.l.b16 %v274
      %v371 = vunpack.c.h.b16 %v274
      %v372 = vunpack.c.l.b16 %v275
      %v373 = vunpack.c.h.b16 %v275
      %v374 = vunpack.c.l.b16 %v276
      %v375 = vunpack.c.h.b16 %v276
      %v376 = vunpack.c.l.b16 %v277
      %v377 = vunpack.c.h.b16 %v277
      %v378 = vunpack.c.l.b16 %v278
      %v379 = vunpack.c.h.b16 %v278
      %v380 = vunpack.c.l.b16 %v279
      %v381 = vunpack.c.h.b16 %v279
      %v382 = vunpack.c.l.b16 %v280
      %v383 = vunpack.c.h.b16 %v280
      %v384 = vunpack.c.l.b16 %v281
      %v385 = vunpack.c.h.b16 %v281
      %v386 = vunpack.c.l.b16 %v282
      %v387 = vunpack.c.h.b16 %v282
      %v388 = vunpack.c.l.b16 %v283
      %v389 = vunpack.c.h.b16 %v283
      %v390 = vunpack.c.l.b16 %v284
      %v391 = vunpack.c.h.b16 %v284
      %v392 = vunpack.c.l.b16 %v285
      %v393 = vunpack.c.h.b16 %v285
      %v394 = vunpack.c.l.b16 %v286
      %v395 = vunpack.c.h.b16 %v286
      %v396 = vunpack.c.l.b16 %v287
      %v397 = vunpack.c.h.b16 %v287
      %v398 = vunpack.c.l.b16 %v288
      %v399 = vunpack.c.h.b16 %v288
      %v400 = vunpack.c.l.b16 %v289
      %v401 = vunpack.c.h.b16 %v289
      %v402 = vpack.c.b16 %v342, %v338
      %v403 = vpack.c.b16 %v343, %v339
      %v404 = vpack.c.b16 %v344, %v340
      %v405 = vpack.c.b16 %v345, %v341
      %v406 = vpack.c.b16 %v350, %v346
      %v407 = vpack.c.b16 %v351, %v347
      %v408 = vpack.c.b16 %v352, %v348
      %v409 = vpack.c.b16 %v353, %v349
      %v410 = vpack.c.b16 %v358, %v354
      %v411 = vpack.c.b16 %v359, %v355
      %v412 = vpack.c.b16 %v360, %v356
      %v413 = vpack.c.b16 %v361, %v357
      %v414 = vpack.c.b16 %v366, %v362
      %v415 = vpack.c.b16 %v367, %v363
      %v416 = vpack.c.b16 %v368, %v364
      %v417 = vpack.c.b16 %v369, %v365
      %v418 = vpack.c.b16 %v374, %v370
      %v419 = vpack.c.b16 %v375, %v371
      %v420 = vpack.c.b16 %v376, %v372
      %v421 = vpack.c.b16 %v377, %v373
      %v422 = vpack.c.b16 %v382, %v378
      %v423 = vpack.c.b16 %v383, %v379
      %v424 = vpack.c.b16 %v384, %v380
      %v425 = vpack.c.b16 %v385, %v381
      %v426 = vpack.c.b16 %v390, %v386
      %v427 = vpack.c.b16 %v391, %v387
      %v428 = vpack.c.b16 %v392, %v388
      %v429 = vpack.c.b16 %v393, %v389
      %v430 = vpack.c.b16 %v398, %v394
      %v431 = vpack.c.b16 %v399, %v395
      %v432 = vpack.c.b16 %v400, %v396
      %v433 = vpack.c.b16 %v401, %v397
      %466 = vmatprep.subr.bf16.mxu0 %v431
      %467 = vmatpush1.bf16.msra.mxu0 %v430
      %468 = vmatprep.subr.bf16.mxu0 %v427
      %469 = vmatpush1.bf16.msra.mxu0 %v426
      %470 = vmatprep.subr.bf16.mxu0 %v423
      %471 = vmatpush1.bf16.msra.mxu0 %v422
      %472 = vmatprep.subr.bf16.mxu0 %v419
      %473 = vmatpush1.bf16.msra.mxu0 %v418
      %474 = vmatprep.subr.bf16.mxu0 %v415
      %475 = vmatpush1.bf16.msra.mxu0 %v414
      %476 = vmatprep.subr.bf16.mxu0 %v411
      %477 = vmatpush1.bf16.msra.mxu0 %v410
      %478 = vmatprep.subr.bf16.mxu0 %v407
      %479 = vmatpush1.bf16.msra.mxu0 %v406
      %480 = vmatprep.subr.bf16.mxu0 %v403
      %481 = vmatpush1.bf16.msra.mxu0 %v402
      %482 = vmatprep.subr.bf16.mxu0 0
      %483 = vmatpush2.bf16.msra.mxu0 0
      %484 = vmatprep.subr.bf16.mxu0 0
      %485 = vmatpush2.bf16.msra.mxu0 0
      %486 = vmatprep.subr.bf16.mxu0 0
      %487 = vmatpush2.bf16.msra.mxu0 0
      %488 = vmatprep.subr.bf16.mxu0 0
      %489 = vmatpush2.bf16.msra.mxu0 0
      %490 = vmatprep.subr.bf16.mxu0 0
      %491 = vmatpush2.bf16.msra.mxu0 0
      %492 = vmatprep.subr.bf16.mxu0 0
      %493 = vmatpush2.bf16.msra.mxu0 0
      %494 = vmatprep.subr.bf16.mxu0 0
      %495 = vmatpush2.bf16.msra.mxu0 0
      %496 = vmatprep.subr.bf16.mxu0 0
      %497 = vmatpush2.bf16.msra.mxu0 0
      %498 = vmatprep.mubr.bf16.mxu0 0
      %499 = vmatmul.mubr.bf16.gmra.mxu0 %v304
      %v500 = vpop.f32.mrf.mxu0
      %v501 = vadd.f32 0.0, %v500
      %v502 = vpop.f32.mrf.mxu0
      %v503 = vadd.f32 0.0, %v502
      %v504 = vpop.f32.mrf.mxu0
      %v505 = vpop.f32.mrf.mxu0
      %506 = vdwg.mxu0
      %507 = vmatprep.subr.bf16.mxu0 %v433
      %508 = vmatpush1.bf16.msra.mxu0 %v432
      %509 = vmatprep.subr.bf16.mxu0 %v429
      %510 = vmatpush1.bf16.msra.mxu0 %v428
      %511 = vmatprep.subr.bf16.mxu0 %v425
      %512 = vmatpush1.bf16.msra.mxu0 %v424
      %513 = vmatprep.subr.bf16.mxu0 %v421
      %514 = vmatpush1.bf16.msra.mxu0 %v420
      %515 = vmatprep.subr.bf16.mxu0 %v417
      %516 = vmatpush1.bf16.msra.mxu0 %v416
      %517 = vmatprep.subr.bf16.mxu0 %v413
      %518 = vmatpush1.bf16.msra.mxu0 %v412
      %519 = vmatprep.subr.bf16.mxu0 %v409
      %520 = vmatpush1.bf16.msra.mxu0 %v408
      %521 = vmatprep.subr.bf16.mxu0 %v405
      %522 = vmatpush1.bf16.msra.mxu0 %v404
      %523 = vmatprep.subr.bf16.mxu0 0
      %524 = vmatpush2.bf16.msra.mxu0 0
      %525 = vmatprep.subr.bf16.mxu0 0
      %526 = vmatpush2.bf16.msra.mxu0 0
      %527 = vmatprep.subr.bf16.mxu0 0
      %528 = vmatpush2.bf16.msra.mxu0 0
      %529 = vmatprep.subr.bf16.mxu0 0
      %530 = vmatpush2.bf16.msra.mxu0 0
      %531 = vmatprep.subr.bf16.mxu0 0
      %532 = vmatpush2.bf16.msra.mxu0 0
      %533 = vmatprep.subr.bf16.mxu0 0
      %534 = vmatpush2.bf16.msra.mxu0 0
      %535 = vmatprep.subr.bf16.mxu0 0
      %536 = vmatpush2.bf16.msra.mxu0 0
      %537 = vmatprep.subr.bf16.mxu0 0
      %538 = vmatpush2.bf16.msra.mxu0 0
      %539 = vmatprep.mubr.bf16.mxu0 0
      %540 = vmatmul.mubr.bf16.gmra.mxu0 %v304
      %v541 = vpop.f32.mrf.mxu0
      %v542 = vadd.f32 0.0, %v541
      %v543 = vpop.f32.mrf.mxu0
      %v544 = vadd.f32 0.0, %v543
      %v545 = vpop.f32.mrf.mxu0
      %v546 = vpop.f32.mrf.mxu0
      %547 = vdwg.mxu0
      %v550 = vcombine.low %v170, %v171
      %v552 = vunpack.c.l.s4 1966171168
      %v553 = vunpack.c.0.s8 %v552
      %v554 = vlaneseq
      %v555 = vshrl.u32 %v554, 7
      %v556 = vsub.s32 %v553, %v555
      %v557 = vrot.slane %v550, %v556
      %v559 = vunpack.c.l.s4 1966171168
      %v560 = vunpack.c.0.s8 %v559
      %v561 = vlaneseq
      %v562 = vshrl.u32 %v561, 7
      %v563 = vsub.s32 %v560, %v562
      %v564 = vrot.slane %v557, %v563
      %v598 = vunpack.c.l.b16 %v172
      %v599 = vunpack.c.h.b16 %v172
      %v600 = vunpack.c.l.b16 %v173
      %v601 = vunpack.c.h.b16 %v173
      %v602 = vunpack.c.l.b16 %v174
      %v603 = vunpack.c.h.b16 %v174
      %v604 = vunpack.c.l.b16 %v175
      %v605 = vunpack.c.h.b16 %v175
      %v606 = vunpack.c.l.b16 %v176
      %v607 = vunpack.c.h.b16 %v176
      %v608 = vunpack.c.l.b16 %v177
      %v609 = vunpack.c.h.b16 %v177
      %v610 = vunpack.c.l.b16 %v178
      %v611 = vunpack.c.h.b16 %v178
      %v612 = vunpack.c.l.b16 %v179
      %v613 = vunpack.c.h.b16 %v179
      %v614 = vunpack.c.l.b16 %v180
      %v615 = vunpack.c.h.b16 %v180
      %v616 = vunpack.c.l.b16 %v181
      %v617 = vunpack.c.h.b16 %v181
      %v618 = vunpack.c.l.b16 %v182
      %v619 = vunpack.c.h.b16 %v182
      %v620 = vunpack.c.l.b16 %v183
      %v621 = vunpack.c.h.b16 %v183
      %v622 = vunpack.c.l.b16 %v184
      %v623 = vunpack.c.h.b16 %v184
      %v624 = vunpack.c.l.b16 %v185
      %v625 = vunpack.c.h.b16 %v185
      %v626 = vunpack.c.l.b16 %v186
      %v627 = vunpack.c.h.b16 %v186
      %v628 = vunpack.c.l.b16 %v187
      %v629 = vunpack.c.h.b16 %v187
      %v630 = vunpack.c.l.b16 %v188
      %v631 = vunpack.c.h.b16 %v188
      %v632 = vunpack.c.l.b16 %v189
      %v633 = vunpack.c.h.b16 %v189
      %v634 = vunpack.c.l.b16 %v190
      %v635 = vunpack.c.h.b16 %v190
      %v636 = vunpack.c.l.b16 %v191
      %v637 = vunpack.c.h.b16 %v191
      %v638 = vunpack.c.l.b16 %v192
      %v639 = vunpack.c.h.b16 %v192
      %v640 = vunpack.c.l.b16 %v193
      %v641 = vunpack.c.h.b16 %v193
      %v642 = vunpack.c.l.b16 %v194
      %v643 = vunpack.c.h.b16 %v194
      %v644 = vunpack.c.l.b16 %v195
      %v645 = vunpack.c.h.b16 %v195
      %v646 = vunpack.c.l.b16 %v196
      %v647 = vunpack.c.h.b16 %v196
      %v648 = vunpack.c.l.b16 %v197
      %v649 = vunpack.c.h.b16 %v197
      %v650 = vunpack.c.l.b16 %v198
      %v651 = vunpack.c.h.b16 %v198
      %v652 = vunpack.c.l.b16 %v199
      %v653 = vunpack.c.h.b16 %v199
      %v654 = vunpack.c.l.b16 %v200
      %v655 = vunpack.c.h.b16 %v200
      %v656 = vunpack.c.l.b16 %v201
      %v657 = vunpack.c.h.b16 %v201
      %v658 = vunpack.c.l.b16 %v202
      %v659 = vunpack.c.h.b16 %v202
      %v660 = vunpack.c.l.b16 %v203
      %v661 = vunpack.c.h.b16 %v203
      %v662 = vpack.c.b16 %v602, %v598
      %v663 = vpack.c.b16 %v603, %v599
      %v664 = vpack.c.b16 %v604, %v600
      %v665 = vpack.c.b16 %v605, %v601
      %v666 = vpack.c.b16 %v610, %v606
      %v667 = vpack.c.b16 %v611, %v607
      %v668 = vpack.c.b16 %v612, %v608
      %v669 = vpack.c.b16 %v613, %v609
      %v670 = vpack.c.b16 %v618, %v614
      %v671 = vpack.c.b16 %v619, %v615
      %v672 = vpack.c.b16 %v620, %v616
      %v673 = vpack.c.b16 %v621, %v617
      %v674 = vpack.c.b16 %v626, %v622
      %v675 = vpack.c.b16 %v627, %v623
      %v676 = vpack.c.b16 %v628, %v624
      %v677 = vpack.c.b16 %v629, %v625
      %v678 = vpack.c.b16 %v634, %v630
      %v679 = vpack.c.b16 %v635, %v631
      %v680 = vpack.c.b16 %v636, %v632
      %v681 = vpack.c.b16 %v637, %v633
      %v682 = vpack.c.b16 %v642, %v638
      %v683 = vpack.c.b16 %v643, %v639
      %v684 = vpack.c.b16 %v644, %v640
      %v685 = vpack.c.b16 %v645, %v641
      %v686 = vpack.c.b16 %v650, %v646
      %v687 = vpack.c.b16 %v651, %v647
      %v688 = vpack.c.b16 %v652, %v648
      %v689 = vpack.c.b16 %v653, %v649
      %v690 = vpack.c.b16 %v658, %v654
      %v691 = vpack.c.b16 %v659, %v655
      %v692 = vpack.c.b16 %v660, %v656
      %v693 = vpack.c.b16 %v661, %v657
      %726 = vmatprep.subr.bf16.mxu0 %v691
      %727 = vmatpush1.bf16.msra.mxu0 %v690
      %728 = vmatprep.subr.bf16.mxu0 %v687
      %729 = vmatpush1.bf16.msra.mxu0 %v686
      %730 = vmatprep.subr.bf16.mxu0 %v683
      %731 = vmatpush1.bf16.msra.mxu0 %v682
      %732 = vmatprep.subr.bf16.mxu0 %v679
      %733 = vmatpush1.bf16.msra.mxu0 %v678
      %734 = vmatprep.subr.bf16.mxu0 %v675
      %735 = vmatpush1.bf16.msra.mxu0 %v674
      %736 = vmatprep.subr.bf16.mxu0 %v671
      %737 = vmatpush1.bf16.msra.mxu0 %v670
      %738 = vmatprep.subr.bf16.mxu0 %v667
      %739 = vmatpush1.bf16.msra.mxu0 %v666
      %740 = vmatprep.subr.bf16.mxu0 %v663
      %741 = vmatpush1.bf16.msra.mxu0 %v662
      %742 = vmatprep.subr.bf16.mxu0 0
      %743 = vmatpush2.bf16.msra.mxu0 0
      %744 = vmatprep.subr.bf16.mxu0 0
      %745 = vmatpush2.bf16.msra.mxu0 0
      %746 = vmatprep.subr.bf16.mxu0 0
      %747 = vmatpush2.bf16.msra.mxu0 0
      %748 = vmatprep.subr.bf16.mxu0 0
      %749 = vmatpush2.bf16.msra.mxu0 0
      %750 = vmatprep.subr.bf16.mxu0 0
      %751 = vmatpush2.bf16.msra.mxu0 0
      %752 = vmatprep.subr.bf16.mxu0 0
      %753 = vmatpush2.bf16.msra.mxu0 0
      %754 = vmatprep.subr.bf16.mxu0 0
      %755 = vmatpush2.bf16.msra.mxu0 0
      %756 = vmatprep.subr.bf16.mxu0 0
      %757 = vmatpush2.bf16.msra.mxu0 0
      %758 = vmatprep.mubr.bf16.mxu0 0
      %759 = vmatmul.mubr.bf16.gmra.mxu0 %v564
      %v760 = vpop.f32.mrf.mxu0
      %v761 = vadd.f32 %v501, %v760
      %v762 = vpop.f32.mrf.mxu0
      %v763 = vadd.f32 %v503, %v762
      %v764 = vpop.f32.mrf.mxu0
      %v765 = vpop.f32.mrf.mxu0
      %766 = vdwg.mxu0
      %767 = vmatprep.subr.bf16.mxu0 %v693
      %768 = vmatpush1.bf16.msra.mxu0 %v692
      %769 = vmatprep.subr.bf16.mxu0 %v689
      %770 = vmatpush1.bf16.msra.mxu0 %v688
      %771 = vmatprep.subr.bf16.mxu0 %v685
      %772 = vmatpush1.bf16.msra.mxu0 %v684
      %773 = vmatprep.subr.bf16.mxu0 %v681
      %774 = vmatpush1.bf16.msra.mxu0 %v680
      %775 = vmatprep.subr.bf16.mxu0 %v677
      %776 = vmatpush1.bf16.msra.mxu0 %v676
      %777 = vmatprep.subr.bf16.mxu0 %v673
      %778 = vmatpush1.bf16.msra.mxu0 %v672
      %779 = vmatprep.subr.bf16.mxu0 %v669
      %780 = vmatpush1.bf16.msra.mxu0 %v668
      %781 = vmatprep.subr.bf16.mxu0 %v665
      %782 = vmatpush1.bf16.msra.mxu0 %v664
      %783 = vmatprep.subr.bf16.mxu0 0
      %784 = vmatpush2.bf16.msra.mxu0 0
      %785 = vmatprep.subr.bf16.mxu0 0
      %786 = vmatpush2.bf16.msra.mxu0 0
      %787 = vmatprep.subr.bf16.mxu0 0
      %788 = vmatpush2.bf16.msra.mxu0 0
      %789 = vmatprep.subr.bf16.mxu0 0
      %790 = vmatpush2.bf16.msra.mxu0 0
      %791 = vmatprep.subr.bf16.mxu0 0
      %792 = vmatpush2.bf16.msra.mxu0 0
      %793 = vmatprep.subr.bf16.mxu0 0
      %794 = vmatpush2.bf16.msra.mxu0 0
      %795 = vmatprep.subr.bf16.mxu0 0
      %796 = vmatpush2.bf16.msra.mxu0 0
      %797 = vmatprep.subr.bf16.mxu0 0
      %798 = vmatpush2.bf16.msra.mxu0 0
      %799 = vmatprep.mubr.bf16.mxu0 0
      %800 = vmatmul.mubr.bf16.gmra.mxu0 %v564
      %v801 = vpop.f32.mrf.mxu0
      %v802 = vadd.f32 %v542, %v801
      %v803 = vpop.f32.mrf.mxu0
      %v804 = vadd.f32 %v544, %v803
      %v805 = vpop.f32.mrf.mxu0
      %v806 = vpop.f32.mrf.mxu0
      %807 = vdwg.mxu0
      %v808 = vld [vmem:[%s164] sm:$0x2]
      %v809 = vld [vmem:[%s164 + $0x2] sm:$0x2]
      %v813 = vunpack.c.l.s4 1966171168
      %v814 = vunpack.c.0.s8 %v813
      %v815 = vlaneseq
      %v816 = vshrl.u32 %v815, 7
      %v817 = vsub.s32 %v814, %v816
      %v818 = vrot.slane %v808, %v817
      %v819 = vcombine.high %v818, %v818
      %v821 = vunpack.c.l.s4 1966171168
      %v822 = vunpack.c.0.s8 %v821
      %v823 = vlaneseq
      %v824 = vshrl.u32 %v823, 7
      %v825 = vsub.s32 %v822, %v824
      %v826 = vrot.slane %v809, %v825
      %v827 = vcombine.high %v826, %v826
      %s828 = scalar_lea.vmem %s1, 512
      %v829 = vld [vmem:[%s828] sm:$0xff]
      %v830 = vld [vmem:[%s828 + $0x8] sm:$0xff]
      %v831 = vld [vmem:[%s828 + $0x10] sm:$0xff]
      %v832 = vld [vmem:[%s828 + $0x18] sm:$0xff]
      %v833 = vld [vmem:[%s828 + $0x20] sm:$0xff]
      %v834 = vld [vmem:[%s828 + $0x28] sm:$0xff]
      %v835 = vld [vmem:[%s828 + $0x30] sm:$0xff]
      %v836 = vld [vmem:[%s828 + $0x38] sm:$0xff]
      %v837 = vld [vmem:[%s828 + $0x40] sm:$0xff]
      %v838 = vld [vmem:[%s828 + $0x48] sm:$0xff]
      %v839 = vld [vmem:[%s828 + $0x50] sm:$0xff]
      %v840 = vld [vmem:[%s828 + $0x58] sm:$0xff]
      %v841 = vld [vmem:[%s828 + $0x60] sm:$0xff]
      %v842 = vld [vmem:[%s828 + $0x68] sm:$0xff]
      %v843 = vld [vmem:[%s828 + $0x70] sm:$0xff]
      %v844 = vld [vmem:[%s828 + $0x78] sm:$0xff]
      %v845 = vld [vmem:[%s828 + $0x80] sm:$0xff]
      %v846 = vld [vmem:[%s828 + $0x88] sm:$0xff]
      %v847 = vld [vmem:[%s828 + $0x90] sm:$0xff]
      %v848 = vld [vmem:[%s828 + $0x98] sm:$0xff]
      %v849 = vld [vmem:[%s828 + $0xa0] sm:$0xff]
      %v850 = vld [vmem:[%s828 + $0xa8] sm:$0xff]
      %v851 = vld [vmem:[%s828 + $0xb0] sm:$0xff]
      %v852 = vld [vmem:[%s828 + $0xb8] sm:$0xff]
      %v853 = vld [vmem:[%s828 + $0xc0] sm:$0xff]
      %v854 = vld [vmem:[%s828 + $0xc8] sm:$0xff]
      %v855 = vld [vmem:[%s828 + $0xd0] sm:$0xff]
      %v856 = vld [vmem:[%s828 + $0xd8] sm:$0xff]
      %v857 = vld [vmem:[%s828 + $0xe0] sm:$0xff]
      %v858 = vld [vmem:[%s828 + $0xe8] sm:$0xff]
      %v859 = vld [vmem:[%s828 + $0xf0] sm:$0xff]
      %v860 = vld [vmem:[%s828 + $0xf8] sm:$0xff]
      %v861 = vcombine.low %v819, %v827
      %v863 = vunpack.c.l.s4 1966171168
      %v864 = vunpack.c.0.s8 %v863
      %v865 = vlaneseq
      %v866 = vshrl.u32 %v865, 7
      %v867 = vsub.s32 %v864, %v866
      %v868 = vrot.slane %v861, %v867
      %v870 = vunpack.c.l.s4 1966171168
      %v871 = vunpack.c.0.s8 %v870
      %v872 = vlaneseq
      %v873 = vshrl.u32 %v872, 7
      %v874 = vsub.s32 %v871, %v873
      %v875 = vrot.slane %v868, %v874
      %v909 = vunpack.c.l.b16 %v829
      %v910 = vunpack.c.h.b16 %v829
      %v911 = vunpack.c.l.b16 %v830
      %v912 = vunpack.c.h.b16 %v830
      %v913 = vunpack.c.l.b16 %v831
      %v914 = vunpack.c.h.b16 %v831
      %v915 = vunpack.c.l.b16 %v832
      %v916 = vunpack.c.h.b16 %v832
      %v917 = vunpack.c.l.b16 %v833
      %v918 = vunpack.c.h.b16 %v833
      %v919 = vunpack.c.l.b16 %v834
      %v920 = vunpack.c.h.b16 %v834
      %v921 = vunpack.c.l.b16 %v835
      %v922 = vunpack.c.h.b16 %v835
      %v923 = vunpack.c.l.b16 %v836
      %v924 = vunpack.c.h.b16 %v836
      %v925 = vunpack.c.l.b16 %v837
      %v926 = vunpack.c.h.b16 %v837
      %v927 = vunpack.c.l.b16 %v838
      %v928 = vunpack.c.h.b16 %v838
      %v929 = vunpack.c.l.b16 %v839
      %v930 = vunpack.c.h.b16 %v839
      %v931 = vunpack.c.l.b16 %v840
      %v932 = vunpack.c.h.b16 %v840
      %v933 = vunpack.c.l.b16 %v841
      %v934 = vunpack.c.h.b16 %v841
      %v935 = vunpack.c.l.b16 %v842
      %v936 = vunpack.c.h.b16 %v842
      %v937 = vunpack.c.l.b16 %v843
      %v938 = vunpack.c.h.b16 %v843
      %v939 = vunpack.c.l.b16 %v844
      %v940 = vunpack.c.h.b16 %v844
      %v941 = vunpack.c.l.b16 %v845
      %v942 = vunpack.c.h.b16 %v845
      %v943 = vunpack.c.l.b16 %v846
      %v944 = vunpack.c.h.b16 %v846
      %v945 = vunpack.c.l.b16 %v847
      %v946 = vunpack.c.h.b16 %v847
      %v947 = vunpack.c.l.b16 %v848
      %v948 = vunpack.c.h.b16 %v848
      %v949 = vunpack.c.l.b16 %v849
      %v950 = vunpack.c.h.b16 %v849
      %v951 = vunpack.c.l.b16 %v850
      %v952 = vunpack.c.h.b16 %v850
      %v953 = vunpack.c.l.b16 %v851
      %v954 = vunpack.c.h.b16 %v851
      %v955 = vunpack.c.l.b16 %v852
      %v956 = vunpack.c.h.b16 %v852
      %v957 = vunpack.c.l.b16 %v853
      %v958 = vunpack.c.h.b16 %v853
      %v959 = vunpack.c.l.b16 %v854
      %v960 = vunpack.c.h.b16 %v854
      %v961 = vunpack.c.l.b16 %v855
      %v962 = vunpack.c.h.b16 %v855
      %v963 = vunpack.c.l.b16 %v856
      %v964 = vunpack.c.h.b16 %v856
      %v965 = vunpack.c.l.b16 %v857
      %v966 = vunpack.c.h.b16 %v857
      %v967 = vunpack.c.l.b16 %v858
      %v968 = vunpack.c.h.b16 %v858
      %v969 = vunpack.c.l.b16 %v859
      %v970 = vunpack.c.h.b16 %v859
      %v971 = vunpack.c.l.b16 %v860
      %v972 = vunpack.c.h.b16 %v860
      %v973 = vpack.c.b16 %v913, %v909
      %v974 = vpack.c.b16 %v914, %v910
      %v975 = vpack.c.b16 %v915, %v911
      %v976 = vpack.c.b16 %v916, %v912
      %v977 = vpack.c.b16 %v921, %v917
      %v978 = vpack.c.b16 %v922, %v918
      %v979 = vpack.c.b16 %v923, %v919
      %v980 = vpack.c.b16 %v924, %v920
      %v981 = vpack.c.b16 %v929, %v925
      %v982 = vpack.c.b16 %v930, %v926
      %v983 = vpack.c.b16 %v931, %v927
      %v984 = vpack.c.b16 %v932, %v928
      %v985 = vpack.c.b16 %v937, %v933
      %v986 = vpack.c.b16 %v938, %v934
      %v987 = vpack.c.b16 %v939, %v935
      %v988 = vpack.c.b16 %v940, %v936
      %v989 = vpack.c.b16 %v945, %v941
      %v990 = vpack.c.b16 %v946, %v942
      %v991 = vpack.c.b16 %v947, %v943
      %v992 = vpack.c.b16 %v948, %v944
      %v993 = vpack.c.b16 %v953, %v949
      %v994 = vpack.c.b16 %v954, %v950
      %v995 = vpack.c.b16 %v955, %v951
      %v996 = vpack.c.b16 %v956, %v952
      %v997 = vpack.c.b16 %v961, %v957
      %v998 = vpack.c.b16 %v962, %v958
      %v999 = vpack.c.b16 %v963, %v959
      %v1000 = vpack.c.b16 %v964, %v960
      %v1001 = vpack.c.b16 %v969, %v965
      %v1002 = vpack.c.b16 %v970, %v966
      %v1003 = vpack.c.b16 %v971, %v967
      %v1004 = vpack.c.b16 %v972, %v968
      %1037 = vmatprep.subr.bf16.mxu0 %v1002
      %1038 = vmatpush1.bf16.msra.mxu0 %v1001
      %1039 = vmatprep.subr.bf16.mxu0 %v998
      %1040 = vmatpush1.bf16.msra.mxu0 %v997
      %1041 = vmatprep.subr.bf16.mxu0 %v994
      %1042 = vmatpush1.bf16.msra.mxu0 %v993
      %1043 = vmatprep.subr.bf16.mxu0 %v990
      %1044 = vmatpush1.bf16.msra.mxu0 %v989
      %1045 = vmatprep.subr.bf16.mxu0 %v986
      %1046 = vmatpush1.bf16.msra.mxu0 %v985
      %1047 = vmatprep.subr.bf16.mxu0 %v982
      %1048 = vmatpush1.bf16.msra.mxu0 %v981
      %1049 = vmatprep.subr.bf16.mxu0 %v978
      %1050 = vmatpush1.bf16.msra.mxu0 %v977
      %1051 = vmatprep.subr.bf16.mxu0 %v974
      %1052 = vmatpush1.bf16.msra.mxu0 %v973
      %1053 = vmatprep.subr.bf16.mxu0 0
      %1054 = vmatpush2.bf16.msra.mxu0 0
      %1055 = vmatprep.subr.bf16.mxu0 0
      %1056 = vmatpush2.bf16.msra.mxu0 0
      %1057 = vmatprep.subr.bf16.mxu0 0
      %1058 = vmatpush2.bf16.msra.mxu0 0
      %1059 = vmatprep.subr.bf16.mxu0 0
      %1060 = vmatpush2.bf16.msra.mxu0 0
      %1061 = vmatprep.subr.bf16.mxu0 0
      %1062 = vmatpush2.bf16.msra.mxu0 0
      %1063 = vmatprep.subr.bf16.mxu0 0
      %1064 = vmatpush2.bf16.msra.mxu0 0
      %1065 = vmatprep.subr.bf16.mxu0 0
      %1066 = vmatpush2.bf16.msra.mxu0 0
      %1067 = vmatprep.subr.bf16.mxu0 0
      %1068 = vmatpush2.bf16.msra.mxu0 0
      %1069 = vmatprep.mubr.bf16.mxu0 0
      %1070 = vmatmul.mubr.bf16.gmra.mxu0 %v875
      %v1071 = vpop.f32.mrf.mxu0
      %v1072 = vadd.f32 0.0, %v1071
      %v1073 = vpop.f32.mrf.mxu0
      %v1074 = vadd.f32 0.0, %v1073
      %v1075 = vpop.f32.mrf.mxu0
      %v1076 = vpop.f32.mrf.mxu0
      %1077 = vdwg.mxu0
      %1078 = vmatprep.subr.bf16.mxu0 %v1004
      %1079 = vmatpush1.bf16.msra.mxu0 %v1003
      %1080 = vmatprep.subr.bf16.mxu0 %v1000
      %1081 = vmatpush1.bf16.msra.mxu0 %v999
      %1082 = vmatprep.subr.bf16.mxu0 %v996
      %1083 = vmatpush1.bf16.msra.mxu0 %v995
      %1084 = vmatprep.subr.bf16.mxu0 %v992
      %1085 = vmatpush1.bf16.msra.mxu0 %v991
      %1086 = vmatprep.subr.bf16.mxu0 %v988
      %1087 = vmatpush1.bf16.msra.mxu0 %v987
      %1088 = vmatprep.subr.bf16.mxu0 %v984
      %1089 = vmatpush1.bf16.msra.mxu0 %v983
      %1090 = vmatprep.subr.bf16.mxu0 %v980
      %1091 = vmatpush1.bf16.msra.mxu0 %v979
      %1092 = vmatprep.subr.bf16.mxu0 %v976
      %1093 = vmatpush1.bf16.msra.mxu0 %v975
      %1094 = vmatprep.subr.bf16.mxu0 0
      %1095 = vmatpush2.bf16.msra.mxu0 0
      %1096 = vmatprep.subr.bf16.mxu0 0
      %1097 = vmatpush2.bf16.msra.mxu0 0
      %1098 = vmatprep.subr.bf16.mxu0 0
      %1099 = vmatpush2.bf16.msra.mxu0 0
      %1100 = vmatprep.subr.bf16.mxu0 0
      %1101 = vmatpush2.bf16.msra.mxu0 0
      %1102 = vmatprep.subr.bf16.mxu0 0
      %1103 = vmatpush2.bf16.msra.mxu0 0
      %1104 = vmatprep.subr.bf16.mxu0 0
      %1105 = vmatpush2.bf16.msra.mxu0 0
      %1106 = vmatprep.subr.bf16.mxu0 0
      %1107 = vmatpush2.bf16.msra.mxu0 0
      %1108 = vmatprep.subr.bf16.mxu0 0
      %1109 = vmatpush2.bf16.msra.mxu0 0
      %1110 = vmatprep.mubr.bf16.mxu0 0
      %1111 = vmatmul.mubr.bf16.gmra.mxu0 %v875
      %v1112 = vpop.f32.mrf.mxu0
      %v1113 = vadd.f32 0.0, %v1112
      %v1114 = vpop.f32.mrf.mxu0
      %v1115 = vadd.f32 0.0, %v1114
      %v1116 = vpop.f32.mrf.mxu0
      %v1117 = vpop.f32.mrf.mxu0
      %1118 = vdwg.mxu0
      %v1119 = vadd.f32 %v761, %v1072
      %v1120 = vadd.f32 %v763, %v1074
      %v1121 = vadd.f32 %v802, %v1113
      %v1122 = vadd.f32 %v804, %v1115
      %s1123 = scalar_lea.vmem %s164, 2
      %v1124 = vld [vmem:[%s1123] sm:$0x1]
      %v1125 = vld [vmem:[%s1123 + $0x2] sm:$0x1]
      %s1126 = scalar_lea.vmem %s1, 768
      %v1127 = vld [vmem:[%s1126] sm:$0xff]
      %v1128 = vld [vmem:[%s1126 + $0x8] sm:$0xff]
      %v1129 = vld [vmem:[%s1126 + $0x10] sm:$0xff]
      %v1130 = vld [vmem:[%s1126 + $0x18] sm:$0xff]
      %v1131 = vld [vmem:[%s1126 + $0x20] sm:$0xff]
      %v1132 = vld [vmem:[%s1126 + $0x28] sm:$0xff]
      %v1133 = vld [vmem:[%s1126 + $0x30] sm:$0xff]
      %v1134 = vld [vmem:[%s1126 + $0x38] sm:$0xff]
      %v1135 = vld [vmem:[%s1126 + $0x40] sm:$0xff]
      %v1136 = vld [vmem:[%s1126 + $0x48] sm:$0xff]
      %v1137 = vld [vmem:[%s1126 + $0x50] sm:$0xff]
      %v1138 = vld [vmem:[%s1126 + $0x58] sm:$0xff]
      %v1139 = vld [vmem:[%s1126 + $0x60] sm:$0xff]
      %v1140 = vld [vmem:[%s1126 + $0x68] sm:$0xff]
      %v1141 = vld [vmem:[%s1126 + $0x70] sm:$0xff]
      %v1142 = vld [vmem:[%s1126 + $0x78] sm:$0xff]
      %v1143 = vld [vmem:[%s1126 + $0x80] sm:$0xff]
      %v1144 = vld [vmem:[%s1126 + $0x88] sm:$0xff]
      %v1145 = vld [vmem:[%s1126 + $0x90] sm:$0xff]
      %v1146 = vld [vmem:[%s1126 + $0x98] sm:$0xff]
      %v1147 = vld [vmem:[%s1126 + $0xa0] sm:$0xff]
      %v1148 = vld [vmem:[%s1126 + $0xa8] sm:$0xff]
      %v1149 = vld [vmem:[%s1126 + $0xb0] sm:$0xff]
      %v1150 = vld [vmem:[%s1126 + $0xb8] sm:$0xff]
      %v1151 = vld [vmem:[%s1126 + $0xc0] sm:$0xff]
      %v1152 = vld [vmem:[%s1126 + $0xc8] sm:$0xff]
      %v1153 = vld [vmem:[%s1126 + $0xd0] sm:$0xff]
      %v1154 = vld [vmem:[%s1126 + $0xd8] sm:$0xff]
      %v1155 = vld [vmem:[%s1126 + $0xe0] sm:$0xff]
      %v1156 = vld [vmem:[%s1126 + $0xe8] sm:$0xff]
      %v1157 = vld [vmem:[%s1126 + $0xf0] sm:$0xff]
      %v1158 = vld [vmem:[%s1126 + $0xf8] sm:$0xff]
      %v1161 = vcombine.low %v1124, %v1125
      %v1163 = vunpack.c.l.s4 1966171168
      %v1164 = vunpack.c.0.s8 %v1163
      %v1165 = vlaneseq
      %v1166 = vshrl.u32 %v1165, 7
      %v1167 = vsub.s32 %v1164, %v1166
      %v1168 = vrot.slane %v1161, %v1167
      %v1170 = vunpack.c.l.s4 1966171168
      %v1171 = vunpack.c.0.s8 %v1170
      %v1172 = vlaneseq
      %v1173 = vshrl.u32 %v1172, 7
      %v1174 = vsub.s32 %v1171, %v1173
      %v1175 = vrot.slane %v1168, %v1174
      %v1209 = vunpack.c.l.b16 %v1127
      %v1210 = vunpack.c.h.b16 %v1127
      %v1211 = vunpack.c.l.b16 %v1128
      %v1212 = vunpack.c.h.b16 %v1128
      %v1213 = vunpack.c.l.b16 %v1129
      %v1214 = vunpack.c.h.b16 %v1129
      %v1215 = vunpack.c.l.b16 %v1130
      %v1216 = vunpack.c.h.b16 %v1130
      %v1217 = vunpack.c.l.b16 %v1131
      %v1218 = vunpack.c.h.b16 %v1131
      %v1219 = vunpack.c.l.b16 %v1132
      %v1220 = vunpack.c.h.b16 %v1132
      %v1221 = vunpack.c.l.b16 %v1133
      %v1222 = vunpack.c.h.b16 %v1133
      %v1223 = vunpack.c.l.b16 %v1134
      %v1224 = vunpack.c.h.b16 %v1134
      %v1225 = vunpack.c.l.b16 %v1135
      %v1226 = vunpack.c.h.b16 %v1135
      %v1227 = vunpack.c.l.b16 %v1136
      %v1228 = vunpack.c.h.b16 %v1136
      %v1229 = vunpack.c.l.b16 %v1137
      %v1230 = vunpack.c.h.b16 %v1137
      %v1231 = vunpack.c.l.b16 %v1138
      %v1232 = vunpack.c.h.b16 %v1138
      %v1233 = vunpack.c.l.b16 %v1139
      %v1234 = vunpack.c.h.b16 %v1139
      %v1235 = vunpack.c.l.b16 %v1140
      %v1236 = vunpack.c.h.b16 %v1140
      %v1237 = vunpack.c.l.b16 %v1141
      %v1238 = vunpack.c.h.b16 %v1141
      %v1239 = vunpack.c.l.b16 %v1142
      %v1240 = vunpack.c.h.b16 %v1142
      %v1241 = vunpack.c.l.b16 %v1143
      %v1242 = vunpack.c.h.b16 %v1143
      %v1243 = vunpack.c.l.b16 %v1144
      %v1244 = vunpack.c.h.b16 %v1144
      %v1245 = vunpack.c.l.b16 %v1145
      %v1246 = vunpack.c.h.b16 %v1145
      %v1247 = vunpack.c.l.b16 %v1146
      %v1248 = vunpack.c.h.b16 %v1146
      %v1249 = vunpack.c.l.b16 %v1147
      %v1250 = vunpack.c.h.b16 %v1147
      %v1251 = vunpack.c.l.b16 %v1148
      %v1252 = vunpack.c.h.b16 %v1148
      %v1253 = vunpack.c.l.b16 %v1149
      %v1254 = vunpack.c.h.b16 %v1149
      %v1255 = vunpack.c.l.b16 %v1150
      %v1256 = vunpack.c.h.b16 %v1150
      %v1257 = vunpack.c.l.b16 %v1151
      %v1258 = vunpack.c.h.b16 %v1151
      %v1259 = vunpack.c.l.b16 %v1152
      %v1260 = vunpack.c.h.b16 %v1152
      %v1261 = vunpack.c.l.b16 %v1153
      %v1262 = vunpack.c.h.b16 %v1153
      %v1263 = vunpack.c.l.b16 %v1154
      %v1264 = vunpack.c.h.b16 %v1154
      %v1265 = vunpack.c.l.b16 %v1155
      %v1266 = vunpack.c.h.b16 %v1155
      %v1267 = vunpack.c.l.b16 %v1156
      %v1268 = vunpack.c.h.b16 %v1156
      %v1269 = vunpack.c.l.b16 %v1157
      %v1270 = vunpack.c.h.b16 %v1157
      %v1271 = vunpack.c.l.b16 %v1158
      %v1272 = vunpack.c.h.b16 %v1158
      %v1273 = vpack.c.b16 %v1213, %v1209
      %v1274 = vpack.c.b16 %v1214, %v1210
      %v1275 = vpack.c.b16 %v1215, %v1211
      %v1276 = vpack.c.b16 %v1216, %v1212
      %v1277 = vpack.c.b16 %v1221, %v1217
      %v1278 = vpack.c.b16 %v1222, %v1218
      %v1279 = vpack.c.b16 %v1223, %v1219
      %v1280 = vpack.c.b16 %v1224, %v1220
      %v1281 = vpack.c.b16 %v1229, %v1225
      %v1282 = vpack.c.b16 %v1230, %v1226
      %v1283 = vpack.c.b16 %v1231, %v1227
      %v1284 = vpack.c.b16 %v1232, %v1228
      %v1285 = vpack.c.b16 %v1237, %v1233
      %v1286 = vpack.c.b16 %v1238, %v1234
      %v1287 = vpack.c.b16 %v1239, %v1235
      %v1288 = vpack.c.b16 %v1240, %v1236
      %v1289 = vpack.c.b16 %v1245, %v1241
      %v1290 = vpack.c.b16 %v1246, %v1242
      %v1291 = vpack.c.b16 %v1247, %v1243
      %v1292 = vpack.c.b16 %v1248, %v1244
      %v1293 = vpack.c.b16 %v1253, %v1249
      %v1294 = vpack.c.b16 %v1254, %v1250
      %v1295 = vpack.c.b16 %v1255, %v1251
      %v1296 = vpack.c.b16 %v1256, %v1252
      %v1297 = vpack.c.b16 %v1261, %v1257
      %v1298 = vpack.c.b16 %v1262, %v1258
      %v1299 = vpack.c.b16 %v1263, %v1259
      %v1300 = vpack.c.b16 %v1264, %v1260
      %v1301 = vpack.c.b16 %v1269, %v1265
      %v1302 = vpack.c.b16 %v1270, %v1266
      %v1303 = vpack.c.b16 %v1271, %v1267
      %v1304 = vpack.c.b16 %v1272, %v1268
      %1337 = vmatprep.subr.bf16.mxu0 %v1302
      %1338 = vmatpush1.bf16.msra.mxu0 %v1301
      %1339 = vmatprep.subr.bf16.mxu0 %v1298
      %1340 = vmatpush1.bf16.msra.mxu0 %v1297
      %1341 = vmatprep.subr.bf16.mxu0 %v1294
      %1342 = vmatpush1.bf16.msra.mxu0 %v1293
      %1343 = vmatprep.subr.bf16.mxu0 %v1290
      %1344 = vmatpush1.bf16.msra.mxu0 %v1289
      %1345 = vmatprep.subr.bf16.mxu0 %v1286
      %1346 = vmatpush1.bf16.msra.mxu0 %v1285
      %1347 = vmatprep.subr.bf16.mxu0 %v1282
      %1348 = vmatpush1.bf16.msra.mxu0 %v1281
      %1349 = vmatprep.subr.bf16.mxu0 %v1278
      %1350 = vmatpush1.bf16.msra.mxu0 %v1277
      %1351 = vmatprep.subr.bf16.mxu0 %v1274
      %1352 = vmatpush1.bf16.msra.mxu0 %v1273
      %1353 = vmatprep.subr.bf16.mxu0 0
      %1354 = vmatpush2.bf16.msra.mxu0 0
      %1355 = vmatprep.subr.bf16.mxu0 0
      %1356 = vmatpush2.bf16.msra.mxu0 0
      %1357 = vmatprep.subr.bf16.mxu0 0
      %1358 = vmatpush2.bf16.msra.mxu0 0
      %1359 = vmatprep.subr.bf16.mxu0 0
      %1360 = vmatpush2.bf16.msra.mxu0 0
      %1361 = vmatprep.subr.bf16.mxu0 0
      %1362 = vmatpush2.bf16.msra.mxu0 0
      %1363 = vmatprep.subr.bf16.mxu0 0
      %1364 = vmatpush2.bf16.msra.mxu0 0
      %1365 = vmatprep.subr.bf16.mxu0 0
      %1366 = vmatpush2.bf16.msra.mxu0 0
      %1367 = vmatprep.subr.bf16.mxu0 0
      %1368 = vmatpush2.bf16.msra.mxu0 0
      %1369 = vmatprep.mubr.bf16.mxu0 0
      %1370 = vmatmul.mubr.bf16.gmra.mxu0 %v1175
      %v1371 = vpop.f32.mrf.mxu0
      %v1372 = vadd.f32 0.0, %v1371
      %v1373 = vpop.f32.mrf.mxu0
      %v1374 = vadd.f32 0.0, %v1373
      %v1375 = vpop.f32.mrf.mxu0
      %v1376 = vpop.f32.mrf.mxu0
      %1377 = vdwg.mxu0
      %1378 = vmatprep.subr.bf16.mxu0 %v1304
      %1379 = vmatpush1.bf16.msra.mxu0 %v1303
      %1380 = vmatprep.subr.bf16.mxu0 %v1300
      %1381 = vmatpush1.bf16.msra.mxu0 %v1299
      %1382 = vmatprep.subr.bf16.mxu0 %v1296
      %1383 = vmatpush1.bf16.msra.mxu0 %v1295
      %1384 = vmatprep.subr.bf16.mxu0 %v1292
      %1385 = vmatpush1.bf16.msra.mxu0 %v1291
      %1386 = vmatprep.subr.bf16.mxu0 %v1288
      %1387 = vmatpush1.bf16.msra.mxu0 %v1287
      %1388 = vmatprep.subr.bf16.mxu0 %v1284
      %1389 = vmatpush1.bf16.msra.mxu0 %v1283
      %1390 = vmatprep.subr.bf16.mxu0 %v1280
      %1391 = vmatpush1.bf16.msra.mxu0 %v1279
      %1392 = vmatprep.subr.bf16.mxu0 %v1276
      %1393 = vmatpush1.bf16.msra.mxu0 %v1275
      %1394 = vmatprep.subr.bf16.mxu0 0
      %1395 = vmatpush2.bf16.msra.mxu0 0
      %1396 = vmatprep.subr.bf16.mxu0 0
      %1397 = vmatpush2.bf16.msra.mxu0 0
      %1398 = vmatprep.subr.bf16.mxu0 0
      %1399 = vmatpush2.bf16.msra.mxu0 0
      %1400 = vmatprep.subr.bf16.mxu0 0
      %1401 = vmatpush2.bf16.msra.mxu0 0
      %1402 = vmatprep.subr.bf16.mxu0 0
      %1403 = vmatpush2.bf16.msra.mxu0 0
      %1404 = vmatprep.subr.bf16.mxu0 0
      %1405 = vmatpush2.bf16.msra.mxu0 0
      %1406 = vmatprep.subr.bf16.mxu0 0
      %1407 = vmatpush2.bf16.msra.mxu0 0
      %1408 = vmatprep.subr.bf16.mxu0 0
      %1409 = vmatpush2.bf16.msra.mxu0 0
      %1410 = vmatprep.mubr.bf16.mxu0 0
      %1411 = vmatmul.mubr.bf16.gmra.mxu0 %v1175
      %v1412 = vpop.f32.mrf.mxu0
      %v1413 = vadd.f32 0.0, %v1412
      %v1414 = vpop.f32.mrf.mxu0
      %v1415 = vadd.f32 0.0, %v1414
      %v1416 = vpop.f32.mrf.mxu0
      %v1417 = vpop.f32.mrf.mxu0
      %1418 = vdwg.mxu0
      %v1419 = vadd.f32 %v1119, %v1372
      %v1420 = vadd.f32 %v1120, %v1374
      %v1421 = vadd.f32 %v1121, %v1413
      %v1422 = vadd.f32 %v1122, %v1415
      %v1423 = vld [vmem:[%s1123] sm:$0x3]
      %v1424 = vld [vmem:[%s1123 + $0x2] sm:$0x3]
      %v1428 = vunpack.c.l.s4 1966171168
      %v1429 = vunpack.c.0.s8 %v1428
      %v1430 = vlaneseq
      %v1431 = vshrl.u32 %v1430, 7
      %v1432 = vsub.s32 %v1429, %v1431
      %v1433 = vrot.slane %v1423, %v1432
      %v1434 = vcombine.high %v1433, %v1433
      %v1436 = vunpack.c.l.s4 1966171168
      %v1437 = vunpack.c.0.s8 %v1436
      %v1438 = vlaneseq
      %v1439 = vshrl.u32 %v1438, 7
      %v1440 = vsub.s32 %v1437, %v1439
      %v1441 = vrot.slane %v1424, %v1440
      %v1442 = vcombine.high %v1441, %v1441
      %v1444 = vshrl.u32 %v1433, 16
      %v1446 = vrot.slane %v1444, 7
      %v1447 = vrot.slane %v1446, 1
      %v1449 = vshll.u32 %v1434, 16
      %v1451 = vsel %vm238, %v1447, %v1449
      %v1453 = vshrl.u32 %v1441, 16
      %v1455 = vrot.slane %v1453, 7
      %v1456 = vrot.slane %v1455, 1
      %v1458 = vshll.u32 %v1442, 16
      %v1460 = vsel %vm238, %v1456, %v1458
      %s1461 = scalar_lea.vmem %s1, 1024
      %v1462 = vld [vmem:[%s1461] sm:$0xff]
      %v1463 = vld [vmem:[%s1461 + $0x8] sm:$0xff]
      %v1464 = vld [vmem:[%s1461 + $0x10] sm:$0xff]
      %v1465 = vld [vmem:[%s1461 + $0x18] sm:$0xff]
      %v1466 = vld [vmem:[%s1461 + $0x20] sm:$0xff]
      %v1467 = vld [vmem:[%s1461 + $0x28] sm:$0xff]
      %v1468 = vld [vmem:[%s1461 + $0x30] sm:$0xff]
      %v1469 = vld [vmem:[%s1461 + $0x38] sm:$0xff]
      %v1470 = vld [vmem:[%s1461 + $0x40] sm:$0xff]
      %v1471 = vld [vmem:[%s1461 + $0x48] sm:$0xff]
      %v1472 = vld [vmem:[%s1461 + $0x50] sm:$0xff]
      %v1473 = vld [vmem:[%s1461 + $0x58] sm:$0xff]
      %v1474 = vld [vmem:[%s1461 + $0x60] sm:$0xff]
      %v1475 = vld [vmem:[%s1461 + $0x68] sm:$0xff]
      %v1476 = vld [vmem:[%s1461 + $0x70] sm:$0xff]
      %v1477 = vld [vmem:[%s1461 + $0x78] sm:$0xff]
      %v1478 = vld [vmem:[%s1461 + $0x80] sm:$0xff]
      %v1479 = vld [vmem:[%s1461 + $0x88] sm:$0xff]
      %v1480 = vld [vmem:[%s1461 + $0x90] sm:$0xff]
      %v1481 = vld [vmem:[%s1461 + $0x98] sm:$0xff]
      %v1482 = vld [vmem:[%s1461 + $0xa0] sm:$0xff]
      %v1483 = vld [vmem:[%s1461 + $0xa8] sm:$0xff]
      %v1484 = vld [vmem:[%s1461 + $0xb0] sm:$0xff]
      %v1485 = vld [vmem:[%s1461 + $0xb8] sm:$0xff]
      %v1486 = vld [vmem:[%s1461 + $0xc0] sm:$0xff]
      %v1487 = vld [vmem:[%s1461 + $0xc8] sm:$0xff]
      %v1488 = vld [vmem:[%s1461 + $0xd0] sm:$0xff]
      %v1489 = vld [vmem:[%s1461 + $0xd8] sm:$0xff]
      %v1490 = vld [vmem:[%s1461 + $0xe0] sm:$0xff]
      %v1491 = vld [vmem:[%s1461 + $0xe8] sm:$0xff]
      %v1492 = vld [vmem:[%s1461 + $0xf0] sm:$0xff]
      %v1493 = vld [vmem:[%s1461 + $0xf8] sm:$0xff]
      %v1494 = vcombine.low %v1451, %v1460
      %v1496 = vunpack.c.l.s4 1966171168
      %v1497 = vunpack.c.0.s8 %v1496
      %v1498 = vlaneseq
      %v1499 = vshrl.u32 %v1498, 7
      %v1500 = vsub.s32 %v1497, %v1499
      %v1501 = vrot.slane %v1494, %v1500
      %v1503 = vunpack.c.l.s4 1966171168
      %v1504 = vunpack.c.0.s8 %v1503
      %v1505 = vlaneseq
      %v1506 = vshrl.u32 %v1505, 7
      %v1507 = vsub.s32 %v1504, %v1506
      %v1508 = vrot.slane %v1501, %v1507
      %v1542 = vunpack.c.l.b16 %v1462
      %v1543 = vunpack.c.h.b16 %v1462
      %v1544 = vunpack.c.l.b16 %v1463
      %v1545 = vunpack.c.h.b16 %v1463
      %v1546 = vunpack.c.l.b16 %v1464
      %v1547 = vunpack.c.h.b16 %v1464
      %v1548 = vunpack.c.l.b16 %v1465
      %v1549 = vunpack.c.h.b16 %v1465
      %v1550 = vunpack.c.l.b16 %v1466
      %v1551 = vunpack.c.h.b16 %v1466
      %v1552 = vunpack.c.l.b16 %v1467
      %v1553 = vunpack.c.h.b16 %v1467
      %v1554 = vunpack.c.l.b16 %v1468
      %v1555 = vunpack.c.h.b16 %v1468
      %v1556 = vunpack.c.l.b16 %v1469
      %v1557 = vunpack.c.h.b16 %v1469
      %v1558 = vunpack.c.l.b16 %v1470
      %v1559 = vunpack.c.h.b16 %v1470
      %v1560 = vunpack.c.l.b16 %v1471
      %v1561 = vunpack.c.h.b16 %v1471
      %v1562 = vunpack.c.l.b16 %v1472
      %v1563 = vunpack.c.h.b16 %v1472
      %v1564 = vunpack.c.l.b16 %v1473
      %v1565 = vunpack.c.h.b16 %v1473
      %v1566 = vunpack.c.l.b16 %v1474
      %v1567 = vunpack.c.h.b16 %v1474
      %v1568 = vunpack.c.l.b16 %v1475
      %v1569 = vunpack.c.h.b16 %v1475
      %v1570 = vunpack.c.l.b16 %v1476
      %v1571 = vunpack.c.h.b16 %v1476
      %v1572 = vunpack.c.l.b16 %v1477
      %v1573 = vunpack.c.h.b16 %v1477
      %v1574 = vunpack.c.l.b16 %v1478
      %v1575 = vunpack.c.h.b16 %v1478
      %v1576 = vunpack.c.l.b16 %v1479
      %v1577 = vunpack.c.h.b16 %v1479
      %v1578 = vunpack.c.l.b16 %v1480
      %v1579 = vunpack.c.h.b16 %v1480
      %v1580 = vunpack.c.l.b16 %v1481
      %v1581 = vunpack.c.h.b16 %v1481
      %v1582 = vunpack.c.l.b16 %v1482
      %v1583 = vunpack.c.h.b16 %v1482
      %v1584 = vunpack.c.l.b16 %v1483
      %v1585 = vunpack.c.h.b16 %v1483
      %v1586 = vunpack.c.l.b16 %v1484
      %v1587 = vunpack.c.h.b16 %v1484
      %v1588 = vunpack.c.l.b16 %v1485
      %v1589 = vunpack.c.h.b16 %v1485
      %v1590 = vunpack.c.l.b16 %v1486
      %v1591 = vunpack.c.h.b16 %v1486
      %v1592 = vunpack.c.l.b16 %v1487
      %v1593 = vunpack.c.h.b16 %v1487
      %v1594 = vunpack.c.l.b16 %v1488
      %v1595 = vunpack.c.h.b16 %v1488
      %v1596 = vunpack.c.l.b16 %v1489
      %v1597 = vunpack.c.h.b16 %v1489
      %v1598 = vunpack.c.l.b16 %v1490
      %v1599 = vunpack.c.h.b16 %v1490
      %v1600 = vunpack.c.l.b16 %v1491
      %v1601 = vunpack.c.h.b16 %v1491
      %v1602 = vunpack.c.l.b16 %v1492
      %v1603 = vunpack.c.h.b16 %v1492
      %v1604 = vunpack.c.l.b16 %v1493
      %v1605 = vunpack.c.h.b16 %v1493
      %v1606 = vpack.c.b16 %v1546, %v1542
      %v1607 = vpack.c.b16 %v1547, %v1543
      %v1608 = vpack.c.b16 %v1548, %v1544
      %v1609 = vpack.c.b16 %v1549, %v1545
      %v1610 = vpack.c.b16 %v1554, %v1550
      %v1611 = vpack.c.b16 %v1555, %v1551
      %v1612 = vpack.c.b16 %v1556, %v1552
      %v1613 = vpack.c.b16 %v1557, %v1553
      %v1614 = vpack.c.b16 %v1562, %v1558
      %v1615 = vpack.c.b16 %v1563, %v1559
      %v1616 = vpack.c.b16 %v1564, %v1560
      %v1617 = vpack.c.b16 %v1565, %v1561
      %v1618 = vpack.c.b16 %v1570, %v1566
      %v1619 = vpack.c.b16 %v1571, %v1567
      %v1620 = vpack.c.b16 %v1572, %v1568
      %v1621 = vpack.c.b16 %v1573, %v1569
      %v1622 = vpack.c.b16 %v1578, %v1574
      %v1623 = vpack.c.b16 %v1579, %v1575
      %v1624 = vpack.c.b16 %v1580, %v1576
      %v1625 = vpack.c.b16 %v1581, %v1577
      %v1626 = vpack.c.b16 %v1586, %v1582
      %v1627 = vpack.c.b16 %v1587, %v1583
      %v1628 = vpack.c.b16 %v1588, %v1584
      %v1629 = vpack.c.b16 %v1589, %v1585
      %v1630 = vpack.c.b16 %v1594, %v1590
      %v1631 = vpack.c.b16 %v1595, %v1591
      %v1632 = vpack.c.b16 %v1596, %v1592
      %v1633 = vpack.c.b16 %v1597, %v1593
      %v1634 = vpack.c.b16 %v1602, %v1598
      %v1635 = vpack.c.b16 %v1603, %v1599
      %v1636 = vpack.c.b16 %v1604, %v1600
      %v1637 = vpack.c.b16 %v1605, %v1601
      %1670 = vmatprep.subr.bf16.mxu0 %v1635
      %1671 = vmatpush1.bf16.msra.mxu0 %v1634
      %1672 = vmatprep.subr.bf16.mxu0 %v1631
      %1673 = vmatpush1.bf16.msra.mxu0 %v1630
      %1674 = vmatprep.subr.bf16.mxu0 %v1627
      %1675 = vmatpush1.bf16.msra.mxu0 %v1626
      %1676 = vmatprep.subr.bf16.mxu0 %v1623
      %1677 = vmatpush1.bf16.msra.mxu0 %v1622
      %1678 = vmatprep.subr.bf16.mxu0 %v1619
      %1679 = vmatpush1.bf16.msra.mxu0 %v1618
      %1680 = vmatprep.subr.bf16.mxu0 %v1615
      %1681 = vmatpush1.bf16.msra.mxu0 %v1614
      %1682 = vmatprep.subr.bf16.mxu0 %v1611
      %1683 = vmatpush1.bf16.msra.mxu0 %v1610
      %1684 = vmatprep.subr.bf16.mxu0 %v1607
      %1685 = vmatpush1.bf16.msra.mxu0 %v1606
      %1686 = vmatprep.subr.bf16.mxu0 0
      %1687 = vmatpush2.bf16.msra.mxu0 0
      %1688 = vmatprep.subr.bf16.mxu0 0
      %1689 = vmatpush2.bf16.msra.mxu0 0
      %1690 = vmatprep.subr.bf16.mxu0 0
      %1691 = vmatpush2.bf16.msra.mxu0 0
      %1692 = vmatprep.subr.bf16.mxu0 0
      %1693 = vmatpush2.bf16.msra.mxu0 0
      %1694 = vmatprep.subr.bf16.mxu0 0
      %1695 = vmatpush2.bf16.msra.mxu0 0
      %1696 = vmatprep.subr.bf16.mxu0 0
      %1697 = vmatpush2.bf16.msra.mxu0 0
      %1698 = vmatprep.subr.bf16.mxu0 0
      %1699 = vmatpush2.bf16.msra.mxu0 0
      %1700 = vmatprep.subr.bf16.mxu0 0
      %1701 = vmatpush2.bf16.msra.mxu0 0
      %1702 = vmatprep.mubr.bf16.mxu0 0
      %1703 = vmatmul.mubr.bf16.gmra.mxu0 %v1508
      %v1704 = vpop.f32.mrf.mxu0
      %v1705 = vadd.f32 0.0, %v1704
      %v1706 = vpop.f32.mrf.mxu0
      %v1707 = vadd.f32 0.0, %v1706
      %v1708 = vpop.f32.mrf.mxu0
      %v1709 = vpop.f32.mrf.mxu0
      %1710 = vdwg.mxu0
      %1711 = vmatprep.subr.bf16.mxu0 %v1637
      %1712 = vmatpush1.bf16.msra.mxu0 %v1636
      %1713 = vmatprep.subr.bf16.mxu0 %v1633
      %1714 = vmatpush1.bf16.msra.mxu0 %v1632
      %1715 = vmatprep.subr.bf16.mxu0 %v1629
      %1716 = vmatpush1.bf16.msra.mxu0 %v1628
      %1717 = vmatprep.subr.bf16.mxu0 %v1625
      %1718 = vmatpush1.bf16.msra.mxu0 %v1624
      %1719 = vmatprep.subr.bf16.mxu0 %v1621
      %1720 = vmatpush1.bf16.msra.mxu0 %v1620
      %1721 = vmatprep.subr.bf16.mxu0 %v1617
      %1722 = vmatpush1.bf16.msra.mxu0 %v1616
      %1723 = vmatprep.subr.bf16.mxu0 %v1613
      %1724 = vmatpush1.bf16.msra.mxu0 %v1612
      %1725 = vmatprep.subr.bf16.mxu0 %v1609
      %1726 = vmatpush1.bf16.msra.mxu0 %v1608
      %1727 = vmatprep.subr.bf16.mxu0 0
      %1728 = vmatpush2.bf16.msra.mxu0 0
      %1729 = vmatprep.subr.bf16.mxu0 0
      %1730 = vmatpush2.bf16.msra.mxu0 0
      %1731 = vmatprep.subr.bf16.mxu0 0
      %1732 = vmatpush2.bf16.msra.mxu0 0
      %1733 = vmatprep.subr.bf16.mxu0 0
      %1734 = vmatpush2.bf16.msra.mxu0 0
      %1735 = vmatprep.subr.bf16.mxu0 0
      %1736 = vmatpush2.bf16.msra.mxu0 0
      %1737 = vmatprep.subr.bf16.mxu0 0
      %1738 = vmatpush2.bf16.msra.mxu0 0
      %1739 = vmatprep.subr.bf16.mxu0 0
      %1740 = vmatpush2.bf16.msra.mxu0 0
      %1741 = vmatprep.subr.bf16.mxu0 0
      %1742 = vmatpush2.bf16.msra.mxu0 0
      %1743 = vmatprep.mubr.bf16.mxu0 0
      %1744 = vmatmul.mubr.bf16.gmra.mxu0 %v1508
      %v1745 = vpop.f32.mrf.mxu0
      %v1746 = vadd.f32 0.0, %v1745
      %v1747 = vpop.f32.mrf.mxu0
      %v1748 = vadd.f32 0.0, %v1747
      %v1749 = vpop.f32.mrf.mxu0
      %v1750 = vpop.f32.mrf.mxu0
      %1751 = vdwg.mxu0
      %v1752 = vadd.f32 %v1419, %v1705
      %v1753 = vadd.f32 %v1420, %v1707
      %v1754 = vadd.f32 %v1421, %v1746
      %v1755 = vadd.f32 %v1422, %v1748
      %v1756 = vld [vmem:[%s1123] sm:$0x2]
      %v1757 = vld [vmem:[%s1123 + $0x2] sm:$0x2]
      %v1761 = vunpack.c.l.s4 1966171168
      %v1762 = vunpack.c.0.s8 %v1761
      %v1763 = vlaneseq
      %v1764 = vshrl.u32 %v1763, 7
      %v1765 = vsub.s32 %v1762, %v1764
      %v1766 = vrot.slane %v1756, %v1765
      %v1767 = vcombine.high %v1766, %v1766
      %v1769 = vunpack.c.l.s4 1966171168
      %v1770 = vunpack.c.0.s8 %v1769
      %v1771 = vlaneseq
      %v1772 = vshrl.u32 %v1771, 7
      %v1773 = vsub.s32 %v1770, %v1772
      %v1774 = vrot.slane %v1757, %v1773
      %v1775 = vcombine.high %v1774, %v1774
      %s1776 = scalar_lea.vmem %s1, 1280
      %v1777 = vld [vmem:[%s1776] sm:$0xff]
      %v1778 = vld [vmem:[%s1776 + $0x8] sm:$0xff]
      %v1779 = vld [vmem:[%s1776 + $0x10] sm:$0xff]
      %v1780 = vld [vmem:[%s1776 + $0x18] sm:$0xff]
      %v1781 = vld [vmem:[%s1776 + $0x20] sm:$0xff]
      %v1782 = vld [vmem:[%s1776 + $0x28] sm:$0xff]
      %v1783 = vld [vmem:[%s1776 + $0x30] sm:$0xff]
      %v1784 = vld [vmem:[%s1776 + $0x38] sm:$0xff]
      %v1785 = vld [vmem:[%s1776 + $0x40] sm:$0xff]
      %v1786 = vld [vmem:[%s1776 + $0x48] sm:$0xff]
      %v1787 = vld [vmem:[%s1776 + $0x50] sm:$0xff]
      %v1788 = vld [vmem:[%s1776 + $0x58] sm:$0xff]
      %v1789 = vld [vmem:[%s1776 + $0x60] sm:$0xff]
      %v1790 = vld [vmem:[%s1776 + $0x68] sm:$0xff]
      %v1791 = vld [vmem:[%s1776 + $0x70] sm:$0xff]
      %v1792 = vld [vmem:[%s1776 + $0x78] sm:$0xff]
      %v1793 = vld [vmem:[%s1776 + $0x80] sm:$0xff]
      %v1794 = vld [vmem:[%s1776 + $0x88] sm:$0xff]
      %v1795 = vld [vmem:[%s1776 + $0x90] sm:$0xff]
      %v1796 = vld [vmem:[%s1776 + $0x98] sm:$0xff]
      %v1797 = vld [vmem:[%s1776 + $0xa0] sm:$0xff]
      %v1798 = vld [vmem:[%s1776 + $0xa8] sm:$0xff]
      %v1799 = vld [vmem:[%s1776 + $0xb0] sm:$0xff]
      %v1800 = vld [vmem:[%s1776 + $0xb8] sm:$0xff]
      %v1801 = vld [vmem:[%s1776 + $0xc0] sm:$0xff]
      %v1802 = vld [vmem:[%s1776 + $0xc8] sm:$0xff]
      %v1803 = vld [vmem:[%s1776 + $0xd0] sm:$0xff]
      %v1804 = vld [vmem:[%s1776 + $0xd8] sm:$0xff]
      %v1805 = vld [vmem:[%s1776 + $0xe0] sm:$0xff]
      %v1806 = vld [vmem:[%s1776 + $0xe8] sm:$0xff]
      %v1807 = vld [vmem:[%s1776 + $0xf0] sm:$0xff]
      %v1808 = vld [vmem:[%s1776 + $0xf8] sm:$0xff]
      %v1809 = vcombine.low %v1767, %v1775
      %v1811 = vunpack.c.l.s4 1966171168
      %v1812 = vunpack.c.0.s8 %v1811
      %v1813 = vlaneseq
      %v1814 = vshrl.u32 %v1813, 7
      %v1815 = vsub.s32 %v1812, %v1814
      %v1816 = vrot.slane %v1809, %v1815
      %v1818 = vunpack.c.l.s4 1966171168
      %v1819 = vunpack.c.0.s8 %v1818
      %v1820 = vlaneseq
      %v1821 = vshrl.u32 %v1820, 7
      %v1822 = vsub.s32 %v1819, %v1821
      %v1823 = vrot.slane %v1816, %v1822
      %v1857 = vunpack.c.l.b16 %v1777
      %v1858 = vunpack.c.h.b16 %v1777
      %v1859 = vunpack.c.l.b16 %v1778
      %v1860 = vunpack.c.h.b16 %v1778
      %v1861 = vunpack.c.l.b16 %v1779
      %v1862 = vunpack.c.h.b16 %v1779
      %v1863 = vunpack.c.l.b16 %v1780
      %v1864 = vunpack.c.h.b16 %v1780
      %v1865 = vunpack.c.l.b16 %v1781
      %v1866 = vunpack.c.h.b16 %v1781
      %v1867 = vunpack.c.l.b16 %v1782
      %v1868 = vunpack.c.h.b16 %v1782
      %v1869 = vunpack.c.l.b16 %v1783
      %v1870 = vunpack.c.h.b16 %v1783
      %v1871 = vunpack.c.l.b16 %v1784
      %v1872 = vunpack.c.h.b16 %v1784
      %v1873 = vunpack.c.l.b16 %v1785
      %v1874 = vunpack.c.h.b16 %v1785
      %v1875 = vunpack.c.l.b16 %v1786
      %v1876 = vunpack.c.h.b16 %v1786
      %v1877 = vunpack.c.l.b16 %v1787
      %v1878 = vunpack.c.h.b16 %v1787
      %v1879 = vunpack.c.l.b16 %v1788
      %v1880 = vunpack.c.h.b16 %v1788
      %v1881 = vunpack.c.l.b16 %v1789
      %v1882 = vunpack.c.h.b16 %v1789
      %v1883 = vunpack.c.l.b16 %v1790
      %v1884 = vunpack.c.h.b16 %v1790
      %v1885 = vunpack.c.l.b16 %v1791
      %v1886 = vunpack.c.h.b16 %v1791
      %v1887 = vunpack.c.l.b16 %v1792
      %v1888 = vunpack.c.h.b16 %v1792
      %v1889 = vunpack.c.l.b16 %v1793
      %v1890 = vunpack.c.h.b16 %v1793
      %v1891 = vunpack.c.l.b16 %v1794
      %v1892 = vunpack.c.h.b16 %v1794
      %v1893 = vunpack.c.l.b16 %v1795
      %v1894 = vunpack.c.h.b16 %v1795
      %v1895 = vunpack.c.l.b16 %v1796
      %v1896 = vunpack.c.h.b16 %v1796
      %v1897 = vunpack.c.l.b16 %v1797
      %v1898 = vunpack.c.h.b16 %v1797
      %v1899 = vunpack.c.l.b16 %v1798
      %v1900 = vunpack.c.h.b16 %v1798
      %v1901 = vunpack.c.l.b16 %v1799
      %v1902 = vunpack.c.h.b16 %v1799
      %v1903 = vunpack.c.l.b16 %v1800
      %v1904 = vunpack.c.h.b16 %v1800
      %v1905 = vunpack.c.l.b16 %v1801
      %v1906 = vunpack.c.h.b16 %v1801
      %v1907 = vunpack.c.l.b16 %v1802
      %v1908 = vunpack.c.h.b16 %v1802
      %v1909 = vunpack.c.l.b16 %v1803
      %v1910 = vunpack.c.h.b16 %v1803
      %v1911 = vunpack.c.l.b16 %v1804
      %v1912 = vunpack.c.h.b16 %v1804
      %v1913 = vunpack.c.l.b16 %v1805
      %v1914 = vunpack.c.h.b16 %v1805
      %v1915 = vunpack.c.l.b16 %v1806
      %v1916 = vunpack.c.h.b16 %v1806
      %v1917 = vunpack.c.l.b16 %v1807
      %v1918 = vunpack.c.h.b16 %v1807
      %v1919 = vunpack.c.l.b16 %v1808
      %v1920 = vunpack.c.h.b16 %v1808
      %v1921 = vpack.c.b16 %v1861, %v1857
      %v1922 = vpack.c.b16 %v1862, %v1858
      %v1923 = vpack.c.b16 %v1863, %v1859
      %v1924 = vpack.c.b16 %v1864, %v1860
      %v1925 = vpack.c.b16 %v1869, %v1865
      %v1926 = vpack.c.b16 %v1870, %v1866
      %v1927 = vpack.c.b16 %v1871, %v1867
      %v1928 = vpack.c.b16 %v1872, %v1868
      %v1929 = vpack.c.b16 %v1877, %v1873
      %v1930 = vpack.c.b16 %v1878, %v1874
      %v1931 = vpack.c.b16 %v1879, %v1875
      %v1932 = vpack.c.b16 %v1880, %v1876
      %v1933 = vpack.c.b16 %v1885, %v1881
      %v1934 = vpack.c.b16 %v1886, %v1882
      %v1935 = vpack.c.b16 %v1887, %v1883
      %v1936 = vpack.c.b16 %v1888, %v1884
      %v1937 = vpack.c.b16 %v1893, %v1889
      %v1938 = vpack.c.b16 %v1894, %v1890
      %v1939 = vpack.c.b16 %v1895, %v1891
      %v1940 = vpack.c.b16 %v1896, %v1892
      %v1941 = vpack.c.b16 %v1901, %v1897
      %v1942 = vpack.c.b16 %v1902, %v1898
      %v1943 = vpack.c.b16 %v1903, %v1899
      %v1944 = vpack.c.b16 %v1904, %v1900
      %v1945 = vpack.c.b16 %v1909, %v1905
      %v1946 = vpack.c.b16 %v1910, %v1906
      %v1947 = vpack.c.b16 %v1911, %v1907
      %v1948 = vpack.c.b16 %v1912, %v1908
      %v1949 = vpack.c.b16 %v1917, %v1913
      %v1950 = vpack.c.b16 %v1918, %v1914
      %v1951 = vpack.c.b16 %v1919, %v1915
      %v1952 = vpack.c.b16 %v1920, %v1916
      %1985 = vmatprep.subr.bf16.mxu0 %v1950
      %1986 = vmatpush1.bf16.msra.mxu0 %v1949
      %1987 = vmatprep.subr.bf16.mxu0 %v1946
      %1988 = vmatpush1.bf16.msra.mxu0 %v1945
      %1989 = vmatprep.subr.bf16.mxu0 %v1942
      %1990 = vmatpush1.bf16.msra.mxu0 %v1941
      %1991 = vmatprep.subr.bf16.mxu0 %v1938
      %1992 = vmatpush1.bf16.msra.mxu0 %v1937
      %1993 = vmatprep.subr.bf16.mxu0 %v1934
      %1994 = vmatpush1.bf16.msra.mxu0 %v1933
      %1995 = vmatprep.subr.bf16.mxu0 %v1930
      %1996 = vmatpush1.bf16.msra.mxu0 %v1929
      %1997 = vmatprep.subr.bf16.mxu0 %v1926
      %1998 = vmatpush1.bf16.msra.mxu0 %v1925
      %1999 = vmatprep.subr.bf16.mxu0 %v1922
      %2000 = vmatpush1.bf16.msra.mxu0 %v1921
      %2001 = vmatprep.subr.bf16.mxu0 0
      %2002 = vmatpush2.bf16.msra.mxu0 0
      %2003 = vmatprep.subr.bf16.mxu0 0
      %2004 = vmatpush2.bf16.msra.mxu0 0
      %2005 = vmatprep.subr.bf16.mxu0 0
      %2006 = vmatpush2.bf16.msra.mxu0 0
      %2007 = vmatprep.subr.bf16.mxu0 0
      %2008 = vmatpush2.bf16.msra.mxu0 0
      %2009 = vmatprep.subr.bf16.mxu0 0
      %2010 = vmatpush2.bf16.msra.mxu0 0
      %2011 = vmatprep.subr.bf16.mxu0 0
      %2012 = vmatpush2.bf16.msra.mxu0 0
      %2013 = vmatprep.subr.bf16.mxu0 0
      %2014 = vmatpush2.bf16.msra.mxu0 0
      %2015 = vmatprep.subr.bf16.mxu0 0
      %2016 = vmatpush2.bf16.msra.mxu0 0
      %2017 = vmatprep.mubr.bf16.mxu0 0
      %2018 = vmatmul.mubr.bf16.gmra.mxu0 %v1823
      %v2019 = vpop.f32.mrf.mxu0
      %v2020 = vadd.f32 0.0, %v2019
      %v2021 = vpop.f32.mrf.mxu0
      %v2022 = vadd.f32 0.0, %v2021
      %v2023 = vpop.f32.mrf.mxu0
      %v2024 = vpop.f32.mrf.mxu0
      %2025 = vdwg.mxu0
      %2026 = vmatprep.subr.bf16.mxu0 %v1952
      %2027 = vmatpush1.bf16.msra.mxu0 %v1951
      %2028 = vmatprep.subr.bf16.mxu0 %v1948
      %2029 = vmatpush1.bf16.msra.mxu0 %v1947
      %2030 = vmatprep.subr.bf16.mxu0 %v1944
      %2031 = vmatpush1.bf16.msra.mxu0 %v1943
      %2032 = vmatprep.subr.bf16.mxu0 %v1940
      %2033 = vmatpush1.bf16.msra.mxu0 %v1939
      %2034 = vmatprep.subr.bf16.mxu0 %v1936
      %2035 = vmatpush1.bf16.msra.mxu0 %v1935
      %2036 = vmatprep.subr.bf16.mxu0 %v1932
      %2037 = vmatpush1.bf16.msra.mxu0 %v1931
      %2038 = vmatprep.subr.bf16.mxu0 %v1928
      %2039 = vmatpush1.bf16.msra.mxu0 %v1927
      %2040 = vmatprep.subr.bf16.mxu0 %v1924
      %2041 = vmatpush1.bf16.msra.mxu0 %v1923
      %2042 = vmatprep.subr.bf16.mxu0 0
      %2043 = vmatpush2.bf16.msra.mxu0 0
      %2044 = vmatprep.subr.bf16.mxu0 0
      %2045 = vmatpush2.bf16.msra.mxu0 0
      %2046 = vmatprep.subr.bf16.mxu0 0
      %2047 = vmatpush2.bf16.msra.mxu0 0
      %2048 = vmatprep.subr.bf16.mxu0 0
      %2049 = vmatpush2.bf16.msra.mxu0 0
      %2050 = vmatprep.subr.bf16.mxu0 0
      %2051 = vmatpush2.bf16.msra.mxu0 0
      %2052 = vmatprep.subr.bf16.mxu0 0
      %2053 = vmatpush2.bf16.msra.mxu0 0
      %2054 = vmatprep.subr.bf16.mxu0 0
      %2055 = vmatpush2.bf16.msra.mxu0 0
      %2056 = vmatprep.subr.bf16.mxu0 0
      %2057 = vmatpush2.bf16.msra.mxu0 0
      %2058 = vmatprep.mubr.bf16.mxu0 0
      %2059 = vmatmul.mubr.bf16.gmra.mxu0 %v1823
      %v2060 = vpop.f32.mrf.mxu0
      %v2061 = vadd.f32 0.0, %v2060
      %v2062 = vpop.f32.mrf.mxu0
      %v2063 = vadd.f32 0.0, %v2062
      %v2064 = vpop.f32.mrf.mxu0
      %v2065 = vpop.f32.mrf.mxu0
      %2066 = vdwg.mxu0
      %v2067 = vadd.f32 %v1752, %v2020
      %v2068 = vadd.f32 %v1753, %v2022
      %v2069 = vadd.f32 %v1754, %v2061
      %v2070 = vadd.f32 %v1755, %v2063
      %s2071 = scalar_lea.vmem %s164, 4
      %v2072 = vld [vmem:[%s2071] sm:$0x1]
      %v2073 = vld [vmem:[%s2071 + $0x2] sm:$0x1]
      %s2074 = scalar_lea.vmem %s1, 1536
      %v2075 = vld [vmem:[%s2074] sm:$0xff]
      %v2076 = vld [vmem:[%s2074 + $0x8] sm:$0xff]
      %v2077 = vld [vmem:[%s2074 + $0x10] sm:$0xff]
      %v2078 = vld [vmem:[%s2074 + $0x18] sm:$0xff]
      %v2079 = vld [vmem:[%s2074 + $0x20] sm:$0xff]
      %v2080 = vld [vmem:[%s2074 + $0x28] sm:$0xff]
      %v2081 = vld [vmem:[%s2074 + $0x30] sm:$0xff]
      %v2082 = vld [vmem:[%s2074 + $0x38] sm:$0xff]
      %v2083 = vld [vmem:[%s2074 + $0x40] sm:$0xff]
      %v2084 = vld [vmem:[%s2074 + $0x48] sm:$0xff]
      %v2085 = vld [vmem:[%s2074 + $0x50] sm:$0xff]
      %v2086 = vld [vmem:[%s2074 + $0x58] sm:$0xff]
      %v2087 = vld [vmem:[%s2074 + $0x60] sm:$0xff]
      %v2088 = vld [vmem:[%s2074 + $0x68] sm:$0xff]
      %v2089 = vld [vmem:[%s2074 + $0x70] sm:$0xff]
      %v2090 = vld [vmem:[%s2074 + $0x78] sm:$0xff]
      %v2091 = vld [vmem:[%s2074 + $0x80] sm:$0xff]
      %v2092 = vld [vmem:[%s2074 + $0x88] sm:$0xff]
      %v2093 = vld [vmem:[%s2074 + $0x90] sm:$0xff]
      %v2094 = vld [vmem:[%s2074 + $0x98] sm:$0xff]
      %v2095 = vld [vmem:[%s2074 + $0xa0] sm:$0xff]
      %v2096 = vld [vmem:[%s2074 + $0xa8] sm:$0xff]
      %v2097 = vld [vmem:[%s2074 + $0xb0] sm:$0xff]
      %v2098 = vld [vmem:[%s2074 + $0xb8] sm:$0xff]
      %v2099 = vld [vmem:[%s2074 + $0xc0] sm:$0xff]
      %v2100 = vld [vmem:[%s2074 + $0xc8] sm:$0xff]
      %v2101 = vld [vmem:[%s2074 + $0xd0] sm:$0xff]
      %v2102 = vld [vmem:[%s2074 + $0xd8] sm:$0xff]
      %v2103 = vld [vmem:[%s2074 + $0xe0] sm:$0xff]
      %v2104 = vld [vmem:[%s2074 + $0xe8] sm:$0xff]
      %v2105 = vld [vmem:[%s2074 + $0xf0] sm:$0xff]
      %v2106 = vld [vmem:[%s2074 + $0xf8] sm:$0xff]
      %v2109 = vcombine.low %v2072, %v2073
      %v2111 = vunpack.c.l.s4 1966171168
      %v2112 = vunpack.c.0.s8 %v2111
      %v2113 = vlaneseq
      %v2114 = vshrl.u32 %v2113, 7
      %v2115 = vsub.s32 %v2112, %v2114
      %v2116 = vrot.slane %v2109, %v2115
      %v2118 = vunpack.c.l.s4 1966171168
      %v2119 = vunpack.c.0.s8 %v2118
      %v2120 = vlaneseq
      %v2121 = vshrl.u32 %v2120, 7
      %v2122 = vsub.s32 %v2119, %v2121
      %v2123 = vrot.slane %v2116, %v2122
      %v2157 = vunpack.c.l.b16 %v2075
      %v2158 = vunpack.c.h.b16 %v2075
      %v2159 = vunpack.c.l.b16 %v2076
      %v2160 = vunpack.c.h.b16 %v2076
      %v2161 = vunpack.c.l.b16 %v2077
      %v2162 = vunpack.c.h.b16 %v2077
      %v2163 = vunpack.c.l.b16 %v2078
      %v2164 = vunpack.c.h.b16 %v2078
      %v2165 = vunpack.c.l.b16 %v2079
      %v2166 = vunpack.c.h.b16 %v2079
      %v2167 = vunpack.c.l.b16 %v2080
      %v2168 = vunpack.c.h.b16 %v2080
      %v2169 = vunpack.c.l.b16 %v2081
      %v2170 = vunpack.c.h.b16 %v2081
      %v2171 = vunpack.c.l.b16 %v2082
      %v2172 = vunpack.c.h.b16 %v2082
      %v2173 = vunpack.c.l.b16 %v2083
      %v2174 = vunpack.c.h.b16 %v2083
      %v2175 = vunpack.c.l.b16 %v2084
      %v2176 = vunpack.c.h.b16 %v2084
      %v2177 = vunpack.c.l.b16 %v2085
      %v2178 = vunpack.c.h.b16 %v2085
      %v2179 = vunpack.c.l.b16 %v2086
      %v2180 = vunpack.c.h.b16 %v2086
      %v2181 = vunpack.c.l.b16 %v2087
      %v2182 = vunpack.c.h.b16 %v2087
      %v2183 = vunpack.c.l.b16 %v2088
      %v2184 = vunpack.c.h.b16 %v2088
      %v2185 = vunpack.c.l.b16 %v2089
      %v2186 = vunpack.c.h.b16 %v2089
      %v2187 = vunpack.c.l.b16 %v2090
      %v2188 = vunpack.c.h.b16 %v2090
      %v2189 = vunpack.c.l.b16 %v2091
      %v2190 = vunpack.c.h.b16 %v2091
      %v2191 = vunpack.c.l.b16 %v2092
      %v2192 = vunpack.c.h.b16 %v2092
      %v2193 = vunpack.c.l.b16 %v2093
      %v2194 = vunpack.c.h.b16 %v2093
      %v2195 = vunpack.c.l.b16 %v2094
      %v2196 = vunpack.c.h.b16 %v2094
      %v2197 = vunpack.c.l.b16 %v2095
      %v2198 = vunpack.c.h.b16 %v2095
      %v2199 = vunpack.c.l.b16 %v2096
      %v2200 = vunpack.c.h.b16 %v2096
      %v2201 = vunpack.c.l.b16 %v2097
      %v2202 = vunpack.c.h.b16 %v2097
      %v2203 = vunpack.c.l.b16 %v2098
      %v2204 = vunpack.c.h.b16 %v2098
      %v2205 = vunpack.c.l.b16 %v2099
      %v2206 = vunpack.c.h.b16 %v2099
      %v2207 = vunpack.c.l.b16 %v2100
      %v2208 = vunpack.c.h.b16 %v2100
      %v2209 = vunpack.c.l.b16 %v2101
      %v2210 = vunpack.c.h.b16 %v2101
      %v2211 = vunpack.c.l.b16 %v2102
      %v2212 = vunpack.c.h.b16 %v2102
      %v2213 = vunpack.c.l.b16 %v2103
      %v2214 = vunpack.c.h.b16 %v2103
      %v2215 = vunpack.c.l.b16 %v2104
      %v2216 = vunpack.c.h.b16 %v2104
      %v2217 = vunpack.c.l.b16 %v2105
      %v2218 = vunpack.c.h.b16 %v2105
      %v2219 = vunpack.c.l.b16 %v2106
      %v2220 = vunpack.c.h.b16 %v2106
      %v2221 = vpack.c.b16 %v2161, %v2157
      %v2222 = vpack.c.b16 %v2162, %v2158
      %v2223 = vpack.c.b16 %v2163, %v2159
      %v2224 = vpack.c.b16 %v2164, %v2160
      %v2225 = vpack.c.b16 %v2169, %v2165
      %v2226 = vpack.c.b16 %v2170, %v2166
      %v2227 = vpack.c.b16 %v2171, %v2167
      %v2228 = vpack.c.b16 %v2172, %v2168
      %v2229 = vpack.c.b16 %v2177, %v2173
      %v2230 = vpack.c.b16 %v2178, %v2174
      %v2231 = vpack.c.b16 %v2179, %v2175
      %v2232 = vpack.c.b16 %v2180, %v2176
      %v2233 = vpack.c.b16 %v2185, %v2181
      %v2234 = vpack.c.b16 %v2186, %v2182
      %v2235 = vpack.c.b16 %v2187, %v2183
      %v2236 = vpack.c.b16 %v2188, %v2184
      %v2237 = vpack.c.b16 %v2193, %v2189
      %v2238 = vpack.c.b16 %v2194, %v2190
      %v2239 = vpack.c.b16 %v2195, %v2191
      %v2240 = vpack.c.b16 %v2196, %v2192
      %v2241 = vpack.c.b16 %v2201, %v2197
      %v2242 = vpack.c.b16 %v2202, %v2198
      %v2243 = vpack.c.b16 %v2203, %v2199
      %v2244 = vpack.c.b16 %v2204, %v2200
      %v2245 = vpack.c.b16 %v2209, %v2205
      %v2246 = vpack.c.b16 %v2210, %v2206
      %v2247 = vpack.c.b16 %v2211, %v2207
      %v2248 = vpack.c.b16 %v2212, %v2208
      %v2249 = vpack.c.b16 %v2217, %v2213
      %v2250 = vpack.c.b16 %v2218, %v2214
      %v2251 = vpack.c.b16 %v2219, %v2215
      %v2252 = vpack.c.b16 %v2220, %v2216
      %2285 = vmatprep.subr.bf16.mxu0 %v2250
      %2286 = vmatpush1.bf16.msra.mxu0 %v2249
      %2287 = vmatprep.subr.bf16.mxu0 %v2246
      %2288 = vmatpush1.bf16.msra.mxu0 %v2245
      %2289 = vmatprep.subr.bf16.mxu0 %v2242
      %2290 = vmatpush1.bf16.msra.mxu0 %v2241
      %2291 = vmatprep.subr.bf16.mxu0 %v2238
      %2292 = vmatpush1.bf16.msra.mxu0 %v2237
      %2293 = vmatprep.subr.bf16.mxu0 %v2234
      %2294 = vmatpush1.bf16.msra.mxu0 %v2233
      %2295 = vmatprep.subr.bf16.mxu0 %v2230
      %2296 = vmatpush1.bf16.msra.mxu0 %v2229
      %2297 = vmatprep.subr.bf16.mxu0 %v2226
      %2298 = vmatpush1.bf16.msra.mxu0 %v2225
      %2299 = vmatprep.subr.bf16.mxu0 %v2222
      %2300 = vmatpush1.bf16.msra.mxu0 %v2221
      %2301 = vmatprep.subr.bf16.mxu0 0
      %2302 = vmatpush2.bf16.msra.mxu0 0
      %2303 = vmatprep.subr.bf16.mxu0 0
      %2304 = vmatpush2.bf16.msra.mxu0 0
      %2305 = vmatprep.subr.bf16.mxu0 0
      %2306 = vmatpush2.bf16.msra.mxu0 0
      %2307 = vmatprep.subr.bf16.mxu0 0
      %2308 = vmatpush2.bf16.msra.mxu0 0
      %2309 = vmatprep.subr.bf16.mxu0 0
      %2310 = vmatpush2.bf16.msra.mxu0 0
      %2311 = vmatprep.subr.bf16.mxu0 0
      %2312 = vmatpush2.bf16.msra.mxu0 0
      %2313 = vmatprep.subr.bf16.mxu0 0
      %2314 = vmatpush2.bf16.msra.mxu0 0
      %2315 = vmatprep.subr.bf16.mxu0 0
      %2316 = vmatpush2.bf16.msra.mxu0 0
      %2317 = vmatprep.mubr.bf16.mxu0 0
      %2318 = vmatmul.mubr.bf16.gmra.mxu0 %v2123
      %v2319 = vpop.f32.mrf.mxu0
      %v2320 = vadd.f32 0.0, %v2319
      %v2321 = vpop.f32.mrf.mxu0
      %v2322 = vadd.f32 0.0, %v2321
      %v2323 = vpop.f32.mrf.mxu0
      %v2324 = vpop.f32.mrf.mxu0
      %2325 = vdwg.mxu0
      %2326 = vmatprep.subr.bf16.mxu0 %v2252
      %2327 = vmatpush1.bf16.msra.mxu0 %v2251
      %2328 = vmatprep.subr.bf16.mxu0 %v2248
      %2329 = vmatpush1.bf16.msra.mxu0 %v2247
      %2330 = vmatprep.subr.bf16.mxu0 %v2244
      %2331 = vmatpush1.bf16.msra.mxu0 %v2243
      %2332 = vmatprep.subr.bf16.mxu0 %v2240
      %2333 = vmatpush1.bf16.msra.mxu0 %v2239
      %2334 = vmatprep.subr.bf16.mxu0 %v2236
      %2335 = vmatpush1.bf16.msra.mxu0 %v2235
      %2336 = vmatprep.subr.bf16.mxu0 %v2232
      %2337 = vmatpush1.bf16.msra.mxu0 %v2231
      %2338 = vmatprep.subr.bf16.mxu0 %v2228
      %2339 = vmatpush1.bf16.msra.mxu0 %v2227
      %2340 = vmatprep.subr.bf16.mxu0 %v2224
      %2341 = vmatpush1.bf16.msra.mxu0 %v2223
      %2342 = vmatprep.subr.bf16.mxu0 0
      %2343 = vmatpush2.bf16.msra.mxu0 0
      %2344 = vmatprep.subr.bf16.mxu0 0
      %2345 = vmatpush2.bf16.msra.mxu0 0
      %2346 = vmatprep.subr.bf16.mxu0 0
      %2347 = vmatpush2.bf16.msra.mxu0 0
      %2348 = vmatprep.subr.bf16.mxu0 0
      %2349 = vmatpush2.bf16.msra.mxu0 0
      %2350 = vmatprep.subr.bf16.mxu0 0
      %2351 = vmatpush2.bf16.msra.mxu0 0
      %2352 = vmatprep.subr.bf16.mxu0 0
      %2353 = vmatpush2.bf16.msra.mxu0 0
      %2354 = vmatprep.subr.bf16.mxu0 0
      %2355 = vmatpush2.bf16.msra.mxu0 0
      %2356 = vmatprep.subr.bf16.mxu0 0
      %2357 = vmatpush2.bf16.msra.mxu0 0
      %2358 = vmatprep.mubr.bf16.mxu0 0
      %2359 = vmatmul.mubr.bf16.gmra.mxu0 %v2123
      %v2360 = vpop.f32.mrf.mxu0
      %v2361 = vadd.f32 0.0, %v2360
      %v2362 = vpop.f32.mrf.mxu0
      %v2363 = vadd.f32 0.0, %v2362
      %v2364 = vpop.f32.mrf.mxu0
      %v2365 = vpop.f32.mrf.mxu0
      %2366 = vdwg.mxu0
      %v2367 = vadd.f32 %v2067, %v2320
      %v2368 = vadd.f32 %v2068, %v2322
      %v2369 = vadd.f32 %v2069, %v2361
      %v2370 = vadd.f32 %v2070, %v2363
      %v2371 = vld [vmem:[%s2071] sm:$0x3]
      %v2372 = vld [vmem:[%s2071 + $0x2] sm:$0x3]
      %v2376 = vunpack.c.l.s4 1966171168
      %v2377 = vunpack.c.0.s8 %v2376
      %v2378 = vlaneseq
      %v2379 = vshrl.u32 %v2378, 7
      %v2380 = vsub.s32 %v2377, %v2379
      %v2381 = vrot.slane %v2371, %v2380
      %v2382 = vcombine.high %v2381, %v2381
      %v2384 = vunpack.c.l.s4 1966171168
      %v2385 = vunpack.c.0.s8 %v2384
      %v2386 = vlaneseq
      %v2387 = vshrl.u32 %v2386, 7
      %v2388 = vsub.s32 %v2385, %v2387
      %v2389 = vrot.slane %v2372, %v2388
      %v2390 = vcombine.high %v2389, %v2389
      %v2392 = vshrl.u32 %v2381, 16
      %v2394 = vrot.slane %v2392, 7
      %v2395 = vrot.slane %v2394, 1
      %v2397 = vshll.u32 %v2382, 16
      %v2399 = vsel %vm238, %v2395, %v2397
      %v2401 = vshrl.u32 %v2389, 16
      %v2403 = vrot.slane %v2401, 7
      %v2404 = vrot.slane %v2403, 1
      %v2406 = vshll.u32 %v2390, 16
      %v2408 = vsel %vm238, %v2404, %v2406
      %s2409 = scalar_lea.vmem %s1, 1792
      %v2410 = vld [vmem:[%s2409] sm:$0xff]
      %v2411 = vld [vmem:[%s2409 + $0x8] sm:$0xff]
      %v2412 = vld [vmem:[%s2409 + $0x10] sm:$0xff]
      %v2413 = vld [vmem:[%s2409 + $0x18] sm:$0xff]
      %v2414 = vld [vmem:[%s2409 + $0x20] sm:$0xff]
      %v2415 = vld [vmem:[%s2409 + $0x28] sm:$0xff]
      %v2416 = vld [vmem:[%s2409 + $0x30] sm:$0xff]
      %v2417 = vld [vmem:[%s2409 + $0x38] sm:$0xff]
      %v2418 = vld [vmem:[%s2409 + $0x40] sm:$0xff]
      %v2419 = vld [vmem:[%s2409 + $0x48] sm:$0xff]
      %v2420 = vld [vmem:[%s2409 + $0x50] sm:$0xff]
      %v2421 = vld [vmem:[%s2409 + $0x58] sm:$0xff]
      %v2422 = vld [vmem:[%s2409 + $0x60] sm:$0xff]
      %v2423 = vld [vmem:[%s2409 + $0x68] sm:$0xff]
      %v2424 = vld [vmem:[%s2409 + $0x70] sm:$0xff]
      %v2425 = vld [vmem:[%s2409 + $0x78] sm:$0xff]
      %v2426 = vld [vmem:[%s2409 + $0x80] sm:$0xff]
      %v2427 = vld [vmem:[%s2409 + $0x88] sm:$0xff]
      %v2428 = vld [vmem:[%s2409 + $0x90] sm:$0xff]
      %v2429 = vld [vmem:[%s2409 + $0x98] sm:$0xff]
      %v2430 = vld [vmem:[%s2409 + $0xa0] sm:$0xff]
      %v2431 = vld [vmem:[%s2409 + $0xa8] sm:$0xff]
      %v2432 = vld [vmem:[%s2409 + $0xb0] sm:$0xff]
      %v2433 = vld [vmem:[%s2409 + $0xb8] sm:$0xff]
      %v2434 = vld [vmem:[%s2409 + $0xc0] sm:$0xff]
      %v2435 = vld [vmem:[%s2409 + $0xc8] sm:$0xff]
      %v2436 = vld [vmem:[%s2409 + $0xd0] sm:$0xff]
      %v2437 = vld [vmem:[%s2409 + $0xd8] sm:$0xff]
      %v2438 = vld [vmem:[%s2409 + $0xe0] sm:$0xff]
      %v2439 = vld [vmem:[%s2409 + $0xe8] sm:$0xff]
      %v2440 = vld [vmem:[%s2409 + $0xf0] sm:$0xff]
      %v2441 = vld [vmem:[%s2409 + $0xf8] sm:$0xff]
      %v2442 = vcombine.low %v2399, %v2408
      %v2444 = vunpack.c.l.s4 1966171168
      %v2445 = vunpack.c.0.s8 %v2444
      %v2446 = vlaneseq
      %v2447 = vshrl.u32 %v2446, 7
      %v2448 = vsub.s32 %v2445, %v2447
      %v2449 = vrot.slane %v2442, %v2448
      %v2451 = vunpack.c.l.s4 1966171168
      %v2452 = vunpack.c.0.s8 %v2451
      %v2453 = vlaneseq
      %v2454 = vshrl.u32 %v2453, 7
      %v2455 = vsub.s32 %v2452, %v2454
      %v2456 = vrot.slane %v2449, %v2455
      %v2490 = vunpack.c.l.b16 %v2410
      %v2491 = vunpack.c.h.b16 %v2410
      %v2492 = vunpack.c.l.b16 %v2411
      %v2493 = vunpack.c.h.b16 %v2411
      %v2494 = vunpack.c.l.b16 %v2412
      %v2495 = vunpack.c.h.b16 %v2412
      %v2496 = vunpack.c.l.b16 %v2413
      %v2497 = vunpack.c.h.b16 %v2413
      %v2498 = vunpack.c.l.b16 %v2414
      %v2499 = vunpack.c.h.b16 %v2414
      %v2500 = vunpack.c.l.b16 %v2415
      %v2501 = vunpack.c.h.b16 %v2415
      %v2502 = vunpack.c.l.b16 %v2416
      %v2503 = vunpack.c.h.b16 %v2416
      %v2504 = vunpack.c.l.b16 %v2417
      %v2505 = vunpack.c.h.b16 %v2417
      %v2506 = vunpack.c.l.b16 %v2418
      %v2507 = vunpack.c.h.b16 %v2418
      %v2508 = vunpack.c.l.b16 %v2419
      %v2509 = vunpack.c.h.b16 %v2419
      %v2510 = vunpack.c.l.b16 %v2420
      %v2511 = vunpack.c.h.b16 %v2420
      %v2512 = vunpack.c.l.b16 %v2421
      %v2513 = vunpack.c.h.b16 %v2421
      %v2514 = vunpack.c.l.b16 %v2422
      %v2515 = vunpack.c.h.b16 %v2422
      %v2516 = vunpack.c.l.b16 %v2423
      %v2517 = vunpack.c.h.b16 %v2423
      %v2518 = vunpack.c.l.b16 %v2424
      %v2519 = vunpack.c.h.b16 %v2424
      %v2520 = vunpack.c.l.b16 %v2425
      %v2521 = vunpack.c.h.b16 %v2425
      %v2522 = vunpack.c.l.b16 %v2426
      %v2523 = vunpack.c.h.b16 %v2426
      %v2524 = vunpack.c.l.b16 %v2427
      %v2525 = vunpack.c.h.b16 %v2427
      %v2526 = vunpack.c.l.b16 %v2428
      %v2527 = vunpack.c.h.b16 %v2428
      %v2528 = vunpack.c.l.b16 %v2429
      %v2529 = vunpack.c.h.b16 %v2429
      %v2530 = vunpack.c.l.b16 %v2430
      %v2531 = vunpack.c.h.b16 %v2430
      %v2532 = vunpack.c.l.b16 %v2431
      %v2533 = vunpack.c.h.b16 %v2431
      %v2534 = vunpack.c.l.b16 %v2432
      %v2535 = vunpack.c.h.b16 %v2432
      %v2536 = vunpack.c.l.b16 %v2433
      %v2537 = vunpack.c.h.b16 %v2433
      %v2538 = vunpack.c.l.b16 %v2434
      %v2539 = vunpack.c.h.b16 %v2434
      %v2540 = vunpack.c.l.b16 %v2435
      %v2541 = vunpack.c.h.b16 %v2435
      %v2542 = vunpack.c.l.b16 %v2436
      %v2543 = vunpack.c.h.b16 %v2436
      %v2544 = vunpack.c.l.b16 %v2437
      %v2545 = vunpack.c.h.b16 %v2437
      %v2546 = vunpack.c.l.b16 %v2438
      %v2547 = vunpack.c.h.b16 %v2438
      %v2548 = vunpack.c.l.b16 %v2439
      %v2549 = vunpack.c.h.b16 %v2439
      %v2550 = vunpack.c.l.b16 %v2440
      %v2551 = vunpack.c.h.b16 %v2440
      %v2552 = vunpack.c.l.b16 %v2441
      %v2553 = vunpack.c.h.b16 %v2441
      %v2554 = vpack.c.b16 %v2494, %v2490
      %v2555 = vpack.c.b16 %v2495, %v2491
      %v2556 = vpack.c.b16 %v2496, %v2492
      %v2557 = vpack.c.b16 %v2497, %v2493
      %v2558 = vpack.c.b16 %v2502, %v2498
      %v2559 = vpack.c.b16 %v2503, %v2499
      %v2560 = vpack.c.b16 %v2504, %v2500
      %v2561 = vpack.c.b16 %v2505, %v2501
      %v2562 = vpack.c.b16 %v2510, %v2506
      %v2563 = vpack.c.b16 %v2511, %v2507
      %v2564 = vpack.c.b16 %v2512, %v2508
      %v2565 = vpack.c.b16 %v2513, %v2509
      %v2566 = vpack.c.b16 %v2518, %v2514
      %v2567 = vpack.c.b16 %v2519, %v2515
      %v2568 = vpack.c.b16 %v2520, %v2516
      %v2569 = vpack.c.b16 %v2521, %v2517
      %v2570 = vpack.c.b16 %v2526, %v2522
      %v2571 = vpack.c.b16 %v2527, %v2523
      %v2572 = vpack.c.b16 %v2528, %v2524
      %v2573 = vpack.c.b16 %v2529, %v2525
      %v2574 = vpack.c.b16 %v2534, %v2530
      %v2575 = vpack.c.b16 %v2535, %v2531
      %v2576 = vpack.c.b16 %v2536, %v2532
      %v2577 = vpack.c.b16 %v2537, %v2533
      %v2578 = vpack.c.b16 %v2542, %v2538
      %v2579 = vpack.c.b16 %v2543, %v2539
      %v2580 = vpack.c.b16 %v2544, %v2540
      %v2581 = vpack.c.b16 %v2545, %v2541
      %v2582 = vpack.c.b16 %v2550, %v2546
      %v2583 = vpack.c.b16 %v2551, %v2547
      %v2584 = vpack.c.b16 %v2552, %v2548
      %v2585 = vpack.c.b16 %v2553, %v2549
      %2618 = vmatprep.subr.bf16.mxu0 %v2583
      %2619 = vmatpush1.bf16.msra.mxu0 %v2582
      %2620 = vmatprep.subr.bf16.mxu0 %v2579
      %2621 = vmatpush1.bf16.msra.mxu0 %v2578
      %2622 = vmatprep.subr.bf16.mxu0 %v2575
      %2623 = vmatpush1.bf16.msra.mxu0 %v2574
      %2624 = vmatprep.subr.bf16.mxu0 %v2571
      %2625 = vmatpush1.bf16.msra.mxu0 %v2570
      %2626 = vmatprep.subr.bf16.mxu0 %v2567
      %2627 = vmatpush1.bf16.msra.mxu0 %v2566
      %2628 = vmatprep.subr.bf16.mxu0 %v2563
      %2629 = vmatpush1.bf16.msra.mxu0 %v2562
      %2630 = vmatprep.subr.bf16.mxu0 %v2559
      %2631 = vmatpush1.bf16.msra.mxu0 %v2558
      %2632 = vmatprep.subr.bf16.mxu0 %v2555
      %2633 = vmatpush1.bf16.msra.mxu0 %v2554
      %2634 = vmatprep.subr.bf16.mxu0 0
      %2635 = vmatpush2.bf16.msra.mxu0 0
      %2636 = vmatprep.subr.bf16.mxu0 0
      %2637 = vmatpush2.bf16.msra.mxu0 0
      %2638 = vmatprep.subr.bf16.mxu0 0
      %2639 = vmatpush2.bf16.msra.mxu0 0
      %2640 = vmatprep.subr.bf16.mxu0 0
      %2641 = vmatpush2.bf16.msra.mxu0 0
      %2642 = vmatprep.subr.bf16.mxu0 0
      %2643 = vmatpush2.bf16.msra.mxu0 0
      %2644 = vmatprep.subr.bf16.mxu0 0
      %2645 = vmatpush2.bf16.msra.mxu0 0
      %2646 = vmatprep.subr.bf16.mxu0 0
      %2647 = vmatpush2.bf16.msra.mxu0 0
      %2648 = vmatprep.subr.bf16.mxu0 0
      %2649 = vmatpush2.bf16.msra.mxu0 0
      %2650 = vmatprep.mubr.bf16.mxu0 0
      %2651 = vmatmul.mubr.bf16.gmra.mxu0 %v2456
      %v2652 = vpop.f32.mrf.mxu0
      %v2653 = vadd.f32 0.0, %v2652
      %v2654 = vpop.f32.mrf.mxu0
      %v2655 = vadd.f32 0.0, %v2654
      %v2656 = vpop.f32.mrf.mxu0
      %v2657 = vpop.f32.mrf.mxu0
      %2658 = vdwg.mxu0
      %2659 = vmatprep.subr.bf16.mxu0 %v2585
      %2660 = vmatpush1.bf16.msra.mxu0 %v2584
      %2661 = vmatprep.subr.bf16.mxu0 %v2581
      %2662 = vmatpush1.bf16.msra.mxu0 %v2580
      %2663 = vmatprep.subr.bf16.mxu0 %v2577
      %2664 = vmatpush1.bf16.msra.mxu0 %v2576
      %2665 = vmatprep.subr.bf16.mxu0 %v2573
      %2666 = vmatpush1.bf16.msra.mxu0 %v2572
      %2667 = vmatprep.subr.bf16.mxu0 %v2569
      %2668 = vmatpush1.bf16.msra.mxu0 %v2568
      %2669 = vmatprep.subr.bf16.mxu0 %v2565
      %2670 = vmatpush1.bf16.msra.mxu0 %v2564
      %2671 = vmatprep.subr.bf16.mxu0 %v2561
      %2672 = vmatpush1.bf16.msra.mxu0 %v2560
      %2673 = vmatprep.subr.bf16.mxu0 %v2557
      %2674 = vmatpush1.bf16.msra.mxu0 %v2556
      %2675 = vmatprep.subr.bf16.mxu0 0
      %2676 = vmatpush2.bf16.msra.mxu0 0
      %2677 = vmatprep.subr.bf16.mxu0 0
      %2678 = vmatpush2.bf16.msra.mxu0 0
      %2679 = vmatprep.subr.bf16.mxu0 0
      %2680 = vmatpush2.bf16.msra.mxu0 0
      %2681 = vmatprep.subr.bf16.mxu0 0
      %2682 = vmatpush2.bf16.msra.mxu0 0
      %2683 = vmatprep.subr.bf16.mxu0 0
      %2684 = vmatpush2.bf16.msra.mxu0 0
      %2685 = vmatprep.subr.bf16.mxu0 0
      %2686 = vmatpush2.bf16.msra.mxu0 0
      %2687 = vmatprep.subr.bf16.mxu0 0
      %2688 = vmatpush2.bf16.msra.mxu0 0
      %2689 = vmatprep.subr.bf16.mxu0 0
      %2690 = vmatpush2.bf16.msra.mxu0 0
      %2691 = vmatprep.mubr.bf16.mxu0 0
      %2692 = vmatmul.mubr.bf16.gmra.mxu0 %v2456
      %v2693 = vpop.f32.mrf.mxu0
      %v2694 = vadd.f32 0.0, %v2693
      %v2695 = vpop.f32.mrf.mxu0
      %v2696 = vadd.f32 0.0, %v2695
      %v2697 = vpop.f32.mrf.mxu0
      %v2698 = vpop.f32.mrf.mxu0
      %2699 = vdwg.mxu0
      %v2700 = vadd.f32 %v2367, %v2653
      %v2701 = vadd.f32 %v2368, %v2655
      %v2702 = vadd.f32 %v2369, %v2694
      %v2703 = vadd.f32 %v2370, %v2696
      %v2704 = vld [vmem:[%s2071] sm:$0x2]
      %v2705 = vld [vmem:[%s2071 + $0x2] sm:$0x2]
      %v2709 = vunpack.c.l.s4 1966171168
      %v2710 = vunpack.c.0.s8 %v2709
      %v2711 = vlaneseq
      %v2712 = vshrl.u32 %v2711, 7
      %v2713 = vsub.s32 %v2710, %v2712
      %v2714 = vrot.slane %v2704, %v2713
      %v2715 = vcombine.high %v2714, %v2714
      %v2717 = vunpack.c.l.s4 1966171168
      %v2718 = vunpack.c.0.s8 %v2717
      %v2719 = vlaneseq
      %v2720 = vshrl.u32 %v2719, 7
      %v2721 = vsub.s32 %v2718, %v2720
      %v2722 = vrot.slane %v2705, %v2721
      %v2723 = vcombine.high %v2722, %v2722
      %s2724 = scalar_lea.vmem %s1, 2048
      %v2725 = vld [vmem:[%s2724] sm:$0xff]
      %v2726 = vld [vmem:[%s2724 + $0x8] sm:$0xff]
      %v2727 = vld [vmem:[%s2724 + $0x10] sm:$0xff]
      %v2728 = vld [vmem:[%s2724 + $0x18] sm:$0xff]
      %v2729 = vld [vmem:[%s2724 + $0x20] sm:$0xff]
      %v2730 = vld [vmem:[%s2724 + $0x28] sm:$0xff]
      %v2731 = vld [vmem:[%s2724 + $0x30] sm:$0xff]
      %v2732 = vld [vmem:[%s2724 + $0x38] sm:$0xff]
      %v2733 = vld [vmem:[%s2724 + $0x40] sm:$0xff]
      %v2734 = vld [vmem:[%s2724 + $0x48] sm:$0xff]
      %v2735 = vld [vmem:[%s2724 + $0x50] sm:$0xff]
      %v2736 = vld [vmem:[%s2724 + $0x58] sm:$0xff]
      %v2737 = vld [vmem:[%s2724 + $0x60] sm:$0xff]
      %v2738 = vld [vmem:[%s2724 + $0x68] sm:$0xff]
      %v2739 = vld [vmem:[%s2724 + $0x70] sm:$0xff]
      %v2740 = vld [vmem:[%s2724 + $0x78] sm:$0xff]
      %v2741 = vld [vmem:[%s2724 + $0x80] sm:$0xff]
      %v2742 = vld [vmem:[%s2724 + $0x88] sm:$0xff]
      %v2743 = vld [vmem:[%s2724 + $0x90] sm:$0xff]
      %v2744 = vld [vmem:[%s2724 + $0x98] sm:$0xff]
      %v2745 = vld [vmem:[%s2724 + $0xa0] sm:$0xff]
      %v2746 = vld [vmem:[%s2724 + $0xa8] sm:$0xff]
      %v2747 = vld [vmem:[%s2724 + $0xb0] sm:$0xff]
      %v2748 = vld [vmem:[%s2724 + $0xb8] sm:$0xff]
      %v2749 = vld [vmem:[%s2724 + $0xc0] sm:$0xff]
      %v2750 = vld [vmem:[%s2724 + $0xc8] sm:$0xff]
      %v2751 = vld [vmem:[%s2724 + $0xd0] sm:$0xff]
      %v2752 = vld [vmem:[%s2724 + $0xd8] sm:$0xff]
      %v2753 = vld [vmem:[%s2724 + $0xe0] sm:$0xff]
      %v2754 = vld [vmem:[%s2724 + $0xe8] sm:$0xff]
      %v2755 = vld [vmem:[%s2724 + $0xf0] sm:$0xff]
      %v2756 = vld [vmem:[%s2724 + $0xf8] sm:$0xff]
      %v2757 = vcombine.low %v2715, %v2723
      %v2759 = vunpack.c.l.s4 1966171168
      %v2760 = vunpack.c.0.s8 %v2759
      %v2761 = vlaneseq
      %v2762 = vshrl.u32 %v2761, 7
      %v2763 = vsub.s32 %v2760, %v2762
      %v2764 = vrot.slane %v2757, %v2763
      %v2766 = vunpack.c.l.s4 1966171168
      %v2767 = vunpack.c.0.s8 %v2766
      %v2768 = vlaneseq
      %v2769 = vshrl.u32 %v2768, 7
      %v2770 = vsub.s32 %v2767, %v2769
      %v2771 = vrot.slane %v2764, %v2770
      %v2805 = vunpack.c.l.b16 %v2725
      %v2806 = vunpack.c.h.b16 %v2725
      %v2807 = vunpack.c.l.b16 %v2726
      %v2808 = vunpack.c.h.b16 %v2726
      %v2809 = vunpack.c.l.b16 %v2727
      %v2810 = vunpack.c.h.b16 %v2727
      %v2811 = vunpack.c.l.b16 %v2728
      %v2812 = vunpack.c.h.b16 %v2728
      %v2813 = vunpack.c.l.b16 %v2729
      %v2814 = vunpack.c.h.b16 %v2729
      %v2815 = vunpack.c.l.b16 %v2730
      %v2816 = vunpack.c.h.b16 %v2730
      %v2817 = vunpack.c.l.b16 %v2731
      %v2818 = vunpack.c.h.b16 %v2731
      %v2819 = vunpack.c.l.b16 %v2732
      %v2820 = vunpack.c.h.b16 %v2732
      %v2821 = vunpack.c.l.b16 %v2733
      %v2822 = vunpack.c.h.b16 %v2733
      %v2823 = vunpack.c.l.b16 %v2734
      %v2824 = vunpack.c.h.b16 %v2734
      %v2825 = vunpack.c.l.b16 %v2735
      %v2826 = vunpack.c.h.b16 %v2735
      %v2827 = vunpack.c.l.b16 %v2736
      %v2828 = vunpack.c.h.b16 %v2736
      %v2829 = vunpack.c.l.b16 %v2737
      %v2830 = vunpack.c.h.b16 %v2737
      %v2831 = vunpack.c.l.b16 %v2738
      %v2832 = vunpack.c.h.b16 %v2738
      %v2833 = vunpack.c.l.b16 %v2739
      %v2834 = vunpack.c.h.b16 %v2739
      %v2835 = vunpack.c.l.b16 %v2740
      %v2836 = vunpack.c.h.b16 %v2740
      %v2837 = vunpack.c.l.b16 %v2741
      %v2838 = vunpack.c.h.b16 %v2741
      %v2839 = vunpack.c.l.b16 %v2742
      %v2840 = vunpack.c.h.b16 %v2742
      %v2841 = vunpack.c.l.b16 %v2743
      %v2842 = vunpack.c.h.b16 %v2743
      %v2843 = vunpack.c.l.b16 %v2744
      %v2844 = vunpack.c.h.b16 %v2744
      %v2845 = vunpack.c.l.b16 %v2745
      %v2846 = vunpack.c.h.b16 %v2745
      %v2847 = vunpack.c.l.b16 %v2746
      %v2848 = vunpack.c.h.b16 %v2746
      %v2849 = vunpack.c.l.b16 %v2747
      %v2850 = vunpack.c.h.b16 %v2747
      %v2851 = vunpack.c.l.b16 %v2748
      %v2852 = vunpack.c.h.b16 %v2748
      %v2853 = vunpack.c.l.b16 %v2749
      %v2854 = vunpack.c.h.b16 %v2749
      %v2855 = vunpack.c.l.b16 %v2750
      %v2856 = vunpack.c.h.b16 %v2750
      %v2857 = vunpack.c.l.b16 %v2751
      %v2858 = vunpack.c.h.b16 %v2751
      %v2859 = vunpack.c.l.b16 %v2752
      %v2860 = vunpack.c.h.b16 %v2752
      %v2861 = vunpack.c.l.b16 %v2753
      %v2862 = vunpack.c.h.b16 %v2753
      %v2863 = vunpack.c.l.b16 %v2754
      %v2864 = vunpack.c.h.b16 %v2754
      %v2865 = vunpack.c.l.b16 %v2755
      %v2866 = vunpack.c.h.b16 %v2755
      %v2867 = vunpack.c.l.b16 %v2756
      %v2868 = vunpack.c.h.b16 %v2756
      %v2869 = vpack.c.b16 %v2809, %v2805
      %v2870 = vpack.c.b16 %v2810, %v2806
      %v2871 = vpack.c.b16 %v2811, %v2807
      %v2872 = vpack.c.b16 %v2812, %v2808
      %v2873 = vpack.c.b16 %v2817, %v2813
      %v2874 = vpack.c.b16 %v2818, %v2814
      %v2875 = vpack.c.b16 %v2819, %v2815
      %v2876 = vpack.c.b16 %v2820, %v2816
      %v2877 = vpack.c.b16 %v2825, %v2821
      %v2878 = vpack.c.b16 %v2826, %v2822
      %v2879 = vpack.c.b16 %v2827, %v2823
      %v2880 = vpack.c.b16 %v2828, %v2824
      %v2881 = vpack.c.b16 %v2833, %v2829
      %v2882 = vpack.c.b16 %v2834, %v2830
      %v2883 = vpack.c.b16 %v2835, %v2831
      %v2884 = vpack.c.b16 %v2836, %v2832
      %v2885 = vpack.c.b16 %v2841, %v2837
      %v2886 = vpack.c.b16 %v2842, %v2838
      %v2887 = vpack.c.b16 %v2843, %v2839
      %v2888 = vpack.c.b16 %v2844, %v2840
      %v2889 = vpack.c.b16 %v2849, %v2845
      %v2890 = vpack.c.b16 %v2850, %v2846
      %v2891 = vpack.c.b16 %v2851, %v2847
      %v2892 = vpack.c.b16 %v2852, %v2848
      %v2893 = vpack.c.b16 %v2857, %v2853
      %v2894 = vpack.c.b16 %v2858, %v2854
      %v2895 = vpack.c.b16 %v2859, %v2855
      %v2896 = vpack.c.b16 %v2860, %v2856
      %v2897 = vpack.c.b16 %v2865, %v2861
      %v2898 = vpack.c.b16 %v2866, %v2862
      %v2899 = vpack.c.b16 %v2867, %v2863
      %v2900 = vpack.c.b16 %v2868, %v2864
      %2933 = vmatprep.subr.bf16.mxu0 %v2898
      %2934 = vmatpush1.bf16.msra.mxu0 %v2897
      %2935 = vmatprep.subr.bf16.mxu0 %v2894
      %2936 = vmatpush1.bf16.msra.mxu0 %v2893
      %2937 = vmatprep.subr.bf16.mxu0 %v2890
      %2938 = vmatpush1.bf16.msra.mxu0 %v2889
      %2939 = vmatprep.subr.bf16.mxu0 %v2886
      %2940 = vmatpush1.bf16.msra.mxu0 %v2885
      %2941 = vmatprep.subr.bf16.mxu0 %v2882
      %2942 = vmatpush1.bf16.msra.mxu0 %v2881
      %2943 = vmatprep.subr.bf16.mxu0 %v2878
      %2944 = vmatpush1.bf16.msra.mxu0 %v2877
      %2945 = vmatprep.subr.bf16.mxu0 %v2874
      %2946 = vmatpush1.bf16.msra.mxu0 %v2873
      %2947 = vmatprep.subr.bf16.mxu0 %v2870
      %2948 = vmatpush1.bf16.msra.mxu0 %v2869
      %2949 = vmatprep.subr.bf16.mxu0 0
      %2950 = vmatpush2.bf16.msra.mxu0 0
      %2951 = vmatprep.subr.bf16.mxu0 0
      %2952 = vmatpush2.bf16.msra.mxu0 0
      %2953 = vmatprep.subr.bf16.mxu0 0
      %2954 = vmatpush2.bf16.msra.mxu0 0
      %2955 = vmatprep.subr.bf16.mxu0 0
      %2956 = vmatpush2.bf16.msra.mxu0 0
      %2957 = vmatprep.subr.bf16.mxu0 0
      %2958 = vmatpush2.bf16.msra.mxu0 0
      %2959 = vmatprep.subr.bf16.mxu0 0
      %2960 = vmatpush2.bf16.msra.mxu0 0
      %2961 = vmatprep.subr.bf16.mxu0 0
      %2962 = vmatpush2.bf16.msra.mxu0 0
      %2963 = vmatprep.subr.bf16.mxu0 0
      %2964 = vmatpush2.bf16.msra.mxu0 0
      %2965 = vmatprep.mubr.bf16.mxu0 0
      %2966 = vmatmul.mubr.bf16.gmra.mxu0 %v2771
      %v2967 = vpop.f32.mrf.mxu0
      %v2968 = vadd.f32 0.0, %v2967
      %v2969 = vpop.f32.mrf.mxu0
      %v2970 = vadd.f32 0.0, %v2969
      %v2971 = vpop.f32.mrf.mxu0
      %v2972 = vpop.f32.mrf.mxu0
      %2973 = vdwg.mxu0
      %2974 = vmatprep.subr.bf16.mxu0 %v2900
      %2975 = vmatpush1.bf16.msra.mxu0 %v2899
      %2976 = vmatprep.subr.bf16.mxu0 %v2896
      %2977 = vmatpush1.bf16.msra.mxu0 %v2895
      %2978 = vmatprep.subr.bf16.mxu0 %v2892
      %2979 = vmatpush1.bf16.msra.mxu0 %v2891
      %2980 = vmatprep.subr.bf16.mxu0 %v2888
      %2981 = vmatpush1.bf16.msra.mxu0 %v2887
      %2982 = vmatprep.subr.bf16.mxu0 %v2884
      %2983 = vmatpush1.bf16.msra.mxu0 %v2883
      %2984 = vmatprep.subr.bf16.mxu0 %v2880
      %2985 = vmatpush1.bf16.msra.mxu0 %v2879
      %2986 = vmatprep.subr.bf16.mxu0 %v2876
      %2987 = vmatpush1.bf16.msra.mxu0 %v2875
      %2988 = vmatprep.subr.bf16.mxu0 %v2872
      %2989 = vmatpush1.bf16.msra.mxu0 %v2871
      %2990 = vmatprep.subr.bf16.mxu0 0
      %2991 = vmatpush2.bf16.msra.mxu0 0
      %2992 = vmatprep.subr.bf16.mxu0 0
      %2993 = vmatpush2.bf16.msra.mxu0 0
      %2994 = vmatprep.subr.bf16.mxu0 0
      %2995 = vmatpush2.bf16.msra.mxu0 0
      %2996 = vmatprep.subr.bf16.mxu0 0
      %2997 = vmatpush2.bf16.msra.mxu0 0
      %2998 = vmatprep.subr.bf16.mxu0 0
      %2999 = vmatpush2.bf16.msra.mxu0 0
      %3000 = vmatprep.subr.bf16.mxu0 0
      %3001 = vmatpush2.bf16.msra.mxu0 0
      %3002 = vmatprep.subr.bf16.mxu0 0
      %3003 = vmatpush2.bf16.msra.mxu0 0
      %3004 = vmatprep.subr.bf16.mxu0 0
      %3005 = vmatpush2.bf16.msra.mxu0 0
      %3006 = vmatprep.mubr.bf16.mxu0 0
      %3007 = vmatmul.mubr.bf16.gmra.mxu0 %v2771
      %v3008 = vpop.f32.mrf.mxu0
      %v3009 = vadd.f32 0.0, %v3008
      %v3010 = vpop.f32.mrf.mxu0
      %v3011 = vadd.f32 0.0, %v3010
      %v3012 = vpop.f32.mrf.mxu0
      %v3013 = vpop.f32.mrf.mxu0
      %3014 = vdwg.mxu0
      %v3015 = vadd.f32 %v2700, %v2968
      %v3016 = vadd.f32 %v2701, %v2970
      %v3017 = vadd.f32 %v2702, %v3009
      %v3018 = vadd.f32 %v2703, %v3011
      %v3019 = vld [vmem:[%s2] sm:$0xf]
      %v3021 = vlaneseq
      %v3022 = vshrl.u32 %v3021, 7
      %v3023 = vsub.s32 0, %v3022
      %v3024 = vrot.slane %v3019, %v3023
      %v3025 = vlaneseq
      %v3026 = vshrl.u32 %v3025, 7
      %v3027 = vsub.s32 1, %v3026
      %v3028 = vrot.slane %v3019, %v3027
      %v3029 = vlaneseq
      %v3030 = vshrl.u32 %v3029, 7
      %v3031 = vsub.s32 2, %v3030
      %v3032 = vrot.slane %v3019, %v3031
      %v3033 = vlaneseq
      %v3034 = vshrl.u32 %v3033, 7
      %v3035 = vsub.s32 3, %v3034
      %v3036 = vrot.slane %v3019, %v3035
      %v3041 = vadd.f32 %v3015, %v3024
      %v3042 = vadd.f32 %v3016, %v3028
      %v3043 = vadd.f32 %v3017, %v3032
      %v3044 = vadd.f32 %v3018, %v3036
      %v3045 = vmax.f32 %v3041, 0.0
      %v3046 = vmax.f32 %v3042, 0.0
      %v3047 = vmax.f32 %v3043, 0.0
      %v3048 = vmax.f32 %v3044, 0.0
      %v3053 = vcombine.low %v3045, %v3046
      %v3054 = vcombine.low %v3047, %v3048
      %v3056 = vunpack.c.l.s4 1983009808
      %v3057 = vunpack.c.0.s8 %v3056
      %v3058 = vlaneseq
      %v3059 = vshrl.u32 %v3058, 7
      %v3060 = vsub.s32 %v3057, %v3059
      %v3061 = vrot.slane %v3053, %v3060
      %v3063 = vunpack.c.l.s4 1983009808
      %v3064 = vunpack.c.0.s8 %v3063
      %v3065 = vlaneseq
      %v3066 = vshrl.u32 %v3065, 7
      %v3067 = vsub.s32 %v3064, %v3066
      %v3068 = vrot.slane %v3054, %v3067
      %v3069 = vcombine.low %v3061, %v3068
      %v3070 = vcombine.high %v3061, %v3068
      %v3073 = vrot.slane %v3069, 7
      %v3074 = vrot.slane %v3073, 2
      %v3075 = vrot.slane %v3070, 7
      %v3076 = vrot.slane %v3075, 2
      %v3079 = vmax.f32 %v3069, %v3074
      %v3080 = vmax.f32 %v3070, %v3076
      %v3081 = vmax.f32 %v3079, %v3080
      %v3084 = vunpack.c.l.s4 1966171168
      %v3085 = vunpack.c.0.s8 %v3084
      %v3086 = vlaneseq
      %v3087 = vshrl.u32 %v3086, 7
      %v3088 = vsub.s32 %v3085, %v3087
      %v3089 = vrot.slane %v3081, %v3088
      %v3091 = vlaneseq
      %vm3092 = vcmp.ge.s32.totalorder %v3091, 0
      %vm3093 = vcmp.lt.s32.totalorder %v3091, 512
      %vm3094 = vmand %vm3092, %vm3093
      %3095 = vst.msk [vmem:[%s168] sm:$0xf] %vm3094, %v3089
      %p3096 = scmp.lt.s32.totalorder %s14, 1
      %s3097 = scalar_select %p3096, %s14, 1
      %s3098 = smul.addr %s3097, 4
      %s3099 = scalar_lea.vmem %s3, %s3098
      // Predicated region
      $region33: #{vgg_forward.8} parent=31 // pred_check
        %p3100 = pneg %p100
      $region34: #{vgg_forward.8} parent=31 // pred_check_branch
        %3102 = sbr.rel (%p3100) target = $region36
      $region35: #{vgg_forward.8} parent=31 // pred_region
        _
      $region36: #{vgg_forward.8} parent=31 // pred_fallthru
        _
    $region32: #{vgg_forward.8} parent=5 // pred_fallthru
      _
    %p3103 = scmp.le.s32.totalorder 2, %s9
    // Predicated region
    $region37: #{vgg_forward.8} parent=5 // pred_check
      %p3104 = pneg %p3103
    $region38: #{vgg_forward.8} parent=5 // pred_check_branch
      %3106 = sbr.rel (%p3104) target = $region40
    $region39: #{vgg_forward.8} parent=5 // pred_region
      %s3107 = ssub.s32 %s9, 2
      // Predicated region
      $region41: #{vgg_forward.8} parent=39 // pred_check
        %p3108 = pneg %p106
      $region42: #{vgg_forward.8} parent=39 // pred_check_branch
        %3110 = sbr.rel (%p3108) target = $region44
      $region43: #{vgg_forward.8} parent=39 // pred_region
        %p3111 = scmp.lt.s32.totalorder %s15, 1
        %s3112 = scalar_select %p3111, %s15, 1
        %s3113 = smul.addr %s3112, 4
        %s3114 = scalar_lea.vmem %s3, %s3113
      $region44: #{vgg_forward.8} parent=39 // pred_fallthru
        _
    $region40: #{vgg_forward.8} parent=5 // pred_fallthru
      _
  $region6: #{vgg_forward.8} parent=0 // loop_footer
    %s13 = sadd.s32 1, %s9
  $region7: #{vgg_forward.8} parent=0 // loop_footer_branch
    %8 = sbr.rel target = $region3
  $region8: #{vgg_forward.8} parent=0 // loop_exit
    _

</llo_original>
